<compile_context>
chip_gen: v7x
topology: tpu7x:2x2x1
jax: 0.10.0
libtpu: 0.0.40
codegen_flags: <defaults>
</compile_context>

<pallas_src>
import functools
from typing import NamedTuple

import jax
import jax.numpy as jnp
from jax.experimental import pallas as pl
from jax.experimental.pallas import tpu as pltpu

_VMEM_LIMIT_BYTES = 48 * 1024 * 1024   # < v7x 64 MiB physical, > 32 MiB scoped default
_USE_CORE_PARALLEL = False             # set True on v7x (2 TCs) when the batch grid has >= 2 steps


def _round_up(x, m):
    return ((x + m - 1) // m) * m


def _conv_out(n, k, s):
    return (n - k) // s + 1


# ----------------------------------------------------------------------------
# Static geometry
# ----------------------------------------------------------------------------
class _Geom(NamedTuple):
    hs: int          # space-to-depth height  = ceil(H/4)
    ws: int          # space-to-depth width   = ceil(W/4)  (also the row stride)
    sp: int          # per-image row stride in the flattened layout
    padc: int        # per-image tail padding rows
    oh1: int; ow1: int
    oh2: int; ow2: int
    oh3: int; ow3: int


def _geometry(c, h, w):
    oh1, ow1 = _conv_out(h, 8, 4), _conv_out(w, 8, 4)
    oh2, ow2 = _conv_out(oh1, 4, 2), _conv_out(ow1, 4, 2)
    oh3, ow3 = _conv_out(oh2, 3, 1), _conv_out(ow2, 3, 1)
    if oh3 < 1 or ow3 < 1:
        raise ValueError("state spatial dims too small for the Nature CNN")
    hs, ws = -(-h // 4), -(-w // 4)
    # padc must cover the largest tap offset of any layer: conv3 -> 2*(2*ws+2).
    padc = _round_up(4 * ws + 8, 8)
    sp = _round_up(hs * ws + padc, 32)   # multiple of 32 (uint8 sublane tiling)
    return _Geom(hs, ws, sp, padc, oh1, ow1, oh2, ow2, oh3, ow3)


class _Cfg(NamedTuple):
    tb: int          # images per grid step
    sp: int          # per-image row stride
    nc1: int; nc2: int; nc3: int        # rows computed per layer
    off1: tuple; off2: tuple; off3: tuple   # tap row offsets per layer
    positions: tuple                    # phys row offsets of valid conv3 positions
    npos: int                           # = oh3 * ow3
    na: int                             # number of actions (head output width)


def _make_cfg(g, tb, na):
    nc_cap = tb * g.sp - g.padc
    # image-relative index of the last valid output row + 1, per layer
    span1 = (g.oh1 - 1) * g.ws + (g.ow1 - 1) + 1
    span2 = 2 * ((g.oh2 - 1) * g.ws + (g.ow2 - 1)) + 1
    span3 = 2 * ((g.oh3 - 1) * g.ws + (g.ow3 - 1)) + 1

    def nc(span):
        return min(nc_cap, _round_up((tb - 1) * g.sp + span, 8))

    off1 = tuple(i * g.ws + j for i in range(2) for j in range(2))
    off2 = tuple(i * g.ws + j for i in range(4) for j in range(4))
    off3 = tuple(2 * (i * g.ws + j) for i in range(3) for j in range(3))
    positions = tuple(2 * (oh * g.ws + ow)
                      for oh in range(g.oh3) for ow in range(g.ow3))
    return _Cfg(tb, g.sp, nc(span1), nc(span2), nc(span3),
                off1, off2, off3, positions, len(positions), na)


def _pick_batch_tile(b, override):
    if override is not None:
        if b % override != 0:
            raise ValueError("batch_tile must divide the batch size")
        return override
    for t in (8, 4, 2, 1):
        if b % t == 0:
            return t
    return 1


# ----------------------------------------------------------------------------
# The fused Pallas kernel
# ----------------------------------------------------------------------------
def _nature_cnn_kernel(*refs, cfg, dueling):
    x_ref, w1, b1, w2, b2, w3, b3 = refs[:7]
    rest = refs[7:]
    nfc = 8 if dueling else 4
    fc = rest[:nfc]
    o_ref = rest[nfc]
    xbf, act1, act2, act3, feat = rest[nfc + 1:]

    # Single uint8/f32 -> bf16 cast of the whole input block (VPU), done once.
    xbf[...] = x_ref[...].astype(jnp.bfloat16)

    def conv_layer(in_ref, w_ref, b_ref, out_ref, offsets, nrows, cast_in):
        acc = None
        for t, off in enumerate(offsets):
            lhs = in_ref[pl.ds(off, nrows), :]
            if cast_in:
                lhs = lhs.astype(jnp.bfloat16)
            part = jnp.dot(lhs, w_ref[t], preferred_element_type=jnp.float32)
            acc = part if acc is None else acc + part
        out_ref[pl.ds(0, nrows), :] = jnp.maximum(acc + b_ref[...], 0.0)

    # conv1 (2x2/s1 on s2d input), conv2 (4x4/s2), conv3 (3x3/s1, dilation 2).
    conv_layer(xbf, w1, b1, act1, cfg.off1, cfg.nc1, cast_in=False)
    conv_layer(act1, w2, b2, act2, cfg.off2, cfg.nc2, cast_in=True)
    conv_layer(act2, w3, b3, act3, cfg.off3, cfg.nc3, cast_in=True)

    # Compact the dilated valid conv3 rows into a position-major (P*TB, 64) slab.
    for p, pos in enumerate(cfg.positions):
        for b in range(cfg.tb):
            feat[pl.ds(p * cfg.tb + b, 1), :] = act3[pl.ds(b * cfg.sp + pos, 1), :]

    def head(w1r, b1r, w2r, b2r):
        acc = None
        for p in range(cfg.npos):
            lhs = feat[pl.ds(p * cfg.tb, cfg.tb), :].astype(jnp.bfloat16)
            part = jnp.dot(lhs, w1r[pl.ds(p * 64, 64), :],
                           preferred_element_type=jnp.float32)
            acc = part if acc is None else acc + part
        h = jnp.maximum(acc + b1r[...], 0.0).astype(jnp.bfloat16)
        return jnp.dot(h, w2r[...], preferred_element_type=jnp.float32) + b2r[...]

    if not dueling:
        q = head(*fc)
    else:
        adv = head(*fc[:4])
        val = head(*fc[4:])
        q = val + (adv - jnp.mean(adv, axis=1, keepdims=True))
    o_ref[...] = q[None, :, :]


def _full_spec(arr):
    nd = arr.ndim
    return pl.BlockSpec(arr.shape, lambda i, _nd=nd: (0,) * _nd)


def _pallas_forward(x_rows, conv_arrays, fc_arrays, cfg, dueling, batch):
    n_tiles = batch // cfg.tb
    cin = x_rows.shape[1]
    feat_rows = max(cfg.npos * cfg.tb, 8)
    kernel = functools.partial(_nature_cnn_kernel, cfg=cfg, dueling=dueling)

    in_specs = [pl.BlockSpec((cfg.tb * cfg.sp, cin), lambda i: (i, 0))]
    in_specs += [_full_spec(a) for a in conv_arrays]
    in_specs += [_full_spec(a) for a in fc_arrays]

    out = pl.pallas_call(
        kernel,
        out_shape=jax.ShapeDtypeStruct((n_tiles, cfg.tb, cfg.na), jnp.float32),
        grid=(n_tiles,),
        in_specs=in_specs,
        out_specs=pl.BlockSpec((1, cfg.tb, cfg.na), lambda i: (i, 0, 0)),
        scratch_shapes=[
            pltpu.VMEM((cfg.tb * cfg.sp, cin), jnp.bfloat16),   # bf16 input copy
            pltpu.VMEM((cfg.tb * cfg.sp, 32), jnp.float32),     # conv1 activations
            pltpu.VMEM((cfg.tb * cfg.sp, 64), jnp.float32),     # conv2 activations
            pltpu.VMEM((cfg.tb * cfg.sp, 64), jnp.float32),     # conv3 activations
            pltpu.VMEM((feat_rows, 64), jnp.float32),           # compacted features
        ],
        compiler_params=pltpu.CompilerParams(
            dimension_semantics=(
                (pltpu.CORE_PARALLEL if _USE_CORE_PARALLEL else "parallel"),),
            vmem_limit_bytes=_VMEM_LIMIT_BYTES,
        ),
    )(x_rows, *conv_arrays, *fc_arrays)
    return out.reshape(batch, cfg.na)


# ----------------------------------------------------------------------------
# XLA glue: frame padding + space-to-depth into the flat row layout
# ----------------------------------------------------------------------------
def _s2d_rows(state, g):
    b, c, h, w = state.shape
    hp, wp = g.hs * 4, g.ws * 4
    x = state
    if (hp, wp) != (h, w):
        x = jnp.pad(x, ((0, 0), (0, 0), (0, hp - h), (0, wp - w)))
    x = x.reshape(b, c, g.hs, 4, g.ws, 4)
    x = jnp.transpose(x, (0, 2, 4, 3, 5, 1)).reshape(b, g.hs * g.ws, 16 * c)
    if x.dtype != jnp.uint8:
        x = x.astype(jnp.bfloat16)
    x = jnp.pad(x, ((0, 0), (0, g.sp - g.hs * g.ws), (0, 0)))
    return x.reshape(b * g.sp, 16 * c)


# ----------------------------------------------------------------------------
# Parameter preparation (one-time layout / dtype transforms)
# ----------------------------------------------------------------------------
def _conv1_s2d_taps(w_oihw):
    # 8x8/s4 conv == 2x2/s1 conv on the s2d tensor; channel index (dh*4+dw)*C + c.
    oc, ic, _, _ = w_oihw.shape
    w = w_oihw.reshape(oc, ic, 2, 4, 2, 4)          # (oc, ic, i2, dh, j2, dw)
    w = jnp.transpose(w, (2, 4, 3, 5, 1, 0))        # (i2, j2, dh, dw, ic, oc)
    return w.reshape(4, 16 * ic, oc)


def _conv_taps(w_oihw):
    oc, ic, kh, kw = w_oihw.shape
    return jnp.transpose(w_oihw, (2, 3, 1, 0)).reshape(kh * kw, ic, oc)


def prepare_params(params, state_shape):
    c, h, w = state_shape
    g = _geometry(c, h, w)
    bf = jnp.bfloat16
    w1 = params["conv1_w"]
    prep = {
        "conv1_w": _conv1_s2d_taps(w1).astype(bf),
        "conv1_w_u8": _conv1_s2d_taps(w1 / 255.0).astype(bf),   # /255 folded in
        "conv1_b": params["conv1_b"].reshape(1, -1).astype(jnp.float32),
        "conv2_w": _conv_taps(params["conv2_w"]).astype(bf),
        "conv2_b": params["conv2_b"].reshape(1, -1).astype(jnp.float32),
        "conv3_w": _conv_taps(params["conv3_w"]).astype(bf),
        "conv3_b": params["conv3_b"].reshape(1, -1).astype(jnp.float32),
    }
    # Permute fc1 rows from torch's NCHW-flatten order to our (position, channel)
    # order so the kernel never transposes the conv3 feature map.
    perm = jnp.transpose(
        jnp.arange(64 * g.oh3 * g.ow3).reshape(64, g.oh3, g.ow3), (1, 2, 0)).reshape(-1)
    for k in ("fc1", "fc1_adv", "fc1_val"):
        prep[k + "_w"] = params[k + "_w"][perm].astype(bf)
        prep[k + "_b"] = params[k + "_b"].reshape(1, -1).astype(jnp.float32)
    for k in ("fc2", "fc2_adv", "fc2_val"):
        prep[k + "_w"] = params[k + "_w"].astype(bf)
        prep[k + "_b"] = params[k + "_b"].reshape(1, -1).astype(jnp.float32)
    return prep


# ----------------------------------------------------------------------------
# NatureCNN forward (matches the PyTorch module semantics)
# ----------------------------------------------------------------------------
def nature_cnn_forward(prep, state, dueling=False, batch_tile=None):
    b, c, h, w = state.shape
    g = _geometry(c, h, w)
    tb = _pick_batch_tile(b, batch_tile)
    is_u8 = state.dtype == jnp.uint8

    x_rows = _s2d_rows(state, g)
    conv_arrays = [prep["conv1_w_u8"] if is_u8 else prep["conv1_w"], prep["conv1_b"],
                   prep["conv2_w"], prep["conv2_b"],
                   prep["conv3_w"], prep["conv3_b"]]
    if not dueling:
        fc_arrays = [prep["fc1_w"], prep["fc1_b"], prep["fc2_w"], prep["fc2_b"]]
        na = prep["fc2_w"].shape[1]
    else:
        fc_arrays = [prep["fc1_adv_w"], prep["fc1_adv_b"],
                     prep["fc2_adv_w"], prep["fc2_adv_b"],
                     prep["fc1_val_w"], prep["fc1_val_b"],
                     prep["fc2_val_w"], prep["fc2_val_b"]]
        na = prep["fc2_adv_w"].shape[1]

    cfg = _make_cfg(g, tb, na)
    return _pallas_forward(x_rows, conv_arrays, fc_arrays, cfg, dueling, b)


# ----------------------------------------------------------------------------
# Deterministic synthetic parameters (torch layout: OIHW convs, (in,out) linears)
# ----------------------------------------------------------------------------
def init_params(key, state_shape, action_len=4, feature_dim=32):
    c, h, w = state_shape
    h1, w1 = _conv_out(h, 8, 4), _conv_out(w, 8, 4)
    h2, w2 = _conv_out(h1, 4, 2), _conv_out(w1, 4, 2)
    h3, w3 = _conv_out(h2, 3, 1), _conv_out(w2, 3, 1)
    conv_out_dim = 64 * h3 * w3

    ks = jax.random.split(key, 18)

    def wmat(k, shape, fan_in):
        return jax.random.normal(k, shape, jnp.float32) / jnp.sqrt(jnp.float32(fan_in))

    return {
        "conv1_w": wmat(ks[0], (32, c, 8, 8), c * 64),
        "conv1_b": wmat(ks[1], (32,), c * 64),
        "conv2_w": wmat(ks[2], (64, 32, 4, 4), 32 * 16),
        "conv2_b": wmat(ks[3], (64,), 32 * 16),
        "conv3_w": wmat(ks[4], (64, 64, 3, 3), 64 * 9),
        "conv3_b": wmat(ks[5], (64,), 64 * 9),
        "fc1_w": wmat(ks[6], (conv_out_dim, feature_dim), conv_out_dim),
        "fc1_b": wmat(ks[7], (feature_dim,), conv_out_dim),
        "fc2_w": wmat(ks[8], (feature_dim, action_len), feature_dim),
        "fc2_b": wmat(ks[9], (action_len,), feature_dim),
        "fc1_adv_w": wmat(ks[10], (conv_out_dim, feature_dim), conv_out_dim),
        "fc1_adv_b": wmat(ks[11], (feature_dim,), conv_out_dim),
        "fc2_adv_w": wmat(ks[12], (feature_dim, action_len), feature_dim),
        "fc2_adv_b": wmat(ks[13], (action_len,), feature_dim),
        "fc1_val_w": wmat(ks[14], (conv_out_dim, feature_dim), conv_out_dim),
        "fc1_val_b": wmat(ks[15], (feature_dim,), conv_out_dim),
        "fc2_val_w": wmat(ks[16], (feature_dim, 1), feature_dim),
        "fc2_val_b": wmat(ks[17], (1,), feature_dim),
    }


# ----------------------------------------------------------------------------
# Pure-JAX f32 reference (correctness sanity check)
# ----------------------------------------------------------------------------
def reference_forward(params, state, dueling=False):
    x = state
    if x.dtype == jnp.uint8:
        x = x.astype(jnp.float32) / 255.0
    for name, stride in (("conv1", 4), ("conv2", 2), ("conv3", 1)):
        x = jax.lax.conv_general_dilated(
            x, params[name + "_w"], (stride, stride), "VALID",
            dimension_numbers=("NCHW", "OIHW", "NCHW"))
        x = jax.nn.relu(x + params[name + "_b"][None, :, None, None])
    x = x.reshape(x.shape[0], -1)
    if not dueling:
        h = jax.nn.relu(x @ params["fc1_w"] + params["fc1_b"])
        return h @ params["fc2_w"] + params["fc2_b"]
    adv = jax.nn.relu(x @ params["fc1_adv_w"] + params["fc1_adv_b"])
    adv = adv @ params["fc2_adv_w"] + params["fc2_adv_b"]
    val = jax.nn.relu(x @ params["fc1_val_w"] + params["fc1_val_b"])
    val = val @ params["fc2_val_w"] + params["fc2_val_b"]
    return val + (adv - adv.mean(axis=1, keepdims=True))


if __name__ == "__main__":
    key = jax.random.PRNGKey(0)
    pkey, xkey, x2key = jax.random.split(key, 3)

    # Primary config: (C,H,W)=(4,44,44): conv spatial 10 -> 4 -> 2, conv_out_dim=256.
    state_shape = (4, 44, 44)
    action_len, feature_dim = 4, 32
    batch = 2

    params = init_params(pkey, state_shape, action_len, feature_dim)
    prep = prepare_params(params, state_shape)

    fwd = jax.jit(nature_cnn_forward, static_argnames=("dueling", "batch_tile"))

    # uint8 frames: fused uint8 -> bf16 cast, /255 folded into conv1 weights.
    state_u8 = jax.random.randint(xkey, (batch,) + state_shape, 0, 256,
                                  dtype=jnp.int32).astype(jnp.uint8)

    out = jax.block_until_ready(fwd(prep, state_u8, dueling=False))
    ref = reference_forward(params, state_u8, dueling=False)
    assert out.shape == (batch, action_len)
    assert jnp.allclose(out, ref, rtol=5e-2, atol=5e-2), \
        float(jnp.max(jnp.abs(out - ref)))

    # Pre-scaled float input path.
    state_f = state_u8.astype(jnp.float32) / 255.0
    out_f = jax.block_until_ready(fwd(prep, state_f, dueling=False))
    assert jnp.allclose(out_f, ref, rtol=5e-2, atol=5e-2), \
        float(jnp.max(jnp.abs(out_f - ref)))

    # Dueling head.
    out_d = jax.block_until_ready(fwd(prep, state_u8, dueling=True))
    ref_d = reference_forward(params, state_u8, dueling=True)
    assert out_d.shape == (batch, action_len)
    assert jnp.allclose(out_d, ref_d, rtol=5e-2, atol=5e-2), \
        float(jnp.max(jnp.abs(out_d - ref_d)))

    # Secondary config: H,W not multiples of 4 (exercises frame padding) and a
    # multi-step batch grid (B=4, batch_tile=2 -> grid of 2).
    state_shape2 = (4, 42, 42)
    params2 = init_params(jax.random.PRNGKey(1), state_shape2, action_len, feature_dim)
    prep2 = prepare_params(params2, state_shape2)
    state2 = jax.random.randint(x2key, (4,) + state_shape2, 0, 256,
                                dtype=jnp.int32).astype(jnp.uint8)
    out2 = jax.block_until_ready(fwd(prep2, state2, dueling=False, batch_tile=2))
    ref2 = reference_forward(params2, state2, dueling=False)
    assert out2.shape == (4, action_len)
    assert jnp.allclose(out2, ref2, rtol=5e-2, atol=5e-2), \
        float(jnp.max(jnp.abs(out2 - ref2)))

    print("KERNEL_OK")
</pallas_src>

<mosaic_0001>
module attributes {stable_mosaic.version = 11 : i64} {
  func.func @_nature_cnn_kernel(%arg0: i32, %arg1: memref<384x64xi8, #tpu.memory_space<vmem>>, %arg2: memref<4x64x32xbf16, #tpu.memory_space<vmem>>, %arg3: memref<1x32xf32, #tpu.memory_space<vmem>>, %arg4: memref<16x32x64xbf16, #tpu.memory_space<vmem>>, %arg5: memref<1x64xf32, #tpu.memory_space<vmem>>, %arg6: memref<9x64x64xbf16, #tpu.memory_space<vmem>>, %arg7: memref<1x64xf32, #tpu.memory_space<vmem>>, %arg8: memref<256x32xbf16, #tpu.memory_space<vmem>>, %arg9: memref<1x32xf32, #tpu.memory_space<vmem>>, %arg10: memref<32x4xbf16, #tpu.memory_space<vmem>>, %arg11: memref<1x4xf32, #tpu.memory_space<vmem>>, %arg12: memref<1x2x4xf32, #tpu.memory_space<vmem>>, %arg13: memref<384x64xbf16, #tpu.memory_space<vmem>>, %arg14: memref<384x32xf32, #tpu.memory_space<vmem>>, %arg15: memref<384x64xf32, #tpu.memory_space<vmem>>, %arg16: memref<384x64xf32, #tpu.memory_space<vmem>>, %arg17: memref<8x64xf32, #tpu.memory_space<vmem>>) attributes {dimension_semantics = [#tpu.dimension_semantics<parallel>], iteration_bounds = array<i64: 1>, scalar_prefetch = 0 : i64, scratch_operands = 5 : i64, tpu.core_type = #tpu.core_type<tc>, window_params = [{transform_indices = @transform_0, window_bounds = array<i64: 384, 64>}, {pipeline_mode = #tpu.pipeline_mode<synchronous>, transform_indices = @transform_1, window_bounds = array<i64: 4, 64, 32>}, {pipeline_mode = #tpu.pipeline_mode<synchronous>, transform_indices = @transform_2, window_bounds = array<i64: 1, 32>}, {pipeline_mode = #tpu.pipeline_mode<synchronous>, transform_indices = @transform_3, window_bounds = array<i64: 16, 32, 64>}, {pipeline_mode = #tpu.pipeline_mode<synchronous>, transform_indices = @transform_4, window_bounds = array<i64: 1, 64>}, {pipeline_mode = #tpu.pipeline_mode<synchronous>, transform_indices = @transform_5, window_bounds = array<i64: 9, 64, 64>}, {pipeline_mode = #tpu.pipeline_mode<synchronous>, transform_indices = @transform_6, window_bounds = array<i64: 1, 64>}, {pipeline_mode = #tpu.pipeline_mode<synchronous>, transform_indices = @transform_7, window_bounds = array<i64: 256, 32>}, {pipeline_mode = #tpu.pipeline_mode<synchronous>, transform_indices = @transform_8, window_bounds = array<i64: 1, 32>}, {pipeline_mode = #tpu.pipeline_mode<synchronous>, transform_indices = @transform_9, window_bounds = array<i64: 32, 4>}, {pipeline_mode = #tpu.pipeline_mode<synchronous>, transform_indices = @transform_10, window_bounds = array<i64: 1, 4>}, {transform_indices = @transform_11, window_bounds = array<i64: 1, 2, 4>}]} {
    %c0 = arith.constant 0 : index
    %c0_0 = arith.constant 0 : index
    %0 = vector.load %arg1[%c0, %c0_0] : memref<384x64xi8, #tpu.memory_space<vmem>>, vector<384x64xi8>
    %1 = arith.uitofp %0 : vector<384x64xi8> to vector<384x64xbf16>
    %c0_1 = arith.constant 0 : index
    %c0_2 = arith.constant 0 : index
    %2 = vector.load %arg13[%c0_1, %c0_2] : memref<384x64xbf16, #tpu.memory_space<vmem>>, vector<384x64xbf16>
    tpu.vector_store %arg13[%c0_1, %c0_2], %1 {strides = array<i32>} : memref<384x64xbf16, #tpu.memory_space<vmem>>, vector<384x64xbf16>,
    %c0_3 = arith.constant 0 : index
    %c0_4 = arith.constant 0 : index
    %3 = vector.load %arg13[%c0_3, %c0_4] : memref<384x64xbf16, #tpu.memory_space<vmem>>, vector<304x64xbf16>
    %c0_5 = arith.constant 0 : index
    %c0_6 = arith.constant 0 : index
    %c0_7 = arith.constant 0 : index
    %4 = vector.load %arg2[%c0_5, %c0_6, %c0_7] : memref<4x64x32xbf16, #tpu.memory_space<vmem>>, vector<1x64x32xbf16>
    %5 = vector.shape_cast %4 : vector<1x64x32xbf16> to vector<64x32xbf16>
    %cst = arith.constant dense<0.000000e+00> : vector<304x32xf32>
    %6 = tpu.matmul %3, %5, %cst {dimension_numbers = #tpu.dot_dimension_numbers<[1], [0], [0], [1], [0, 0, 1, 1], [], []>} : vector<304x64xbf16>, vector<64x32xbf16>, vector<304x32xf32> -> vector<304x32xf32>
    %c1 = arith.constant 1 : index
    %c0_8 = arith.constant 0 : index
    %7 = vector.load %arg13[%c1, %c0_8] : memref<384x64xbf16, #tpu.memory_space<vmem>>, vector<304x64xbf16>
    %c1_9 = arith.constant 1 : index
    %c0_10 = arith.constant 0 : index
    %c0_11 = arith.constant 0 : index
    %8 = vector.load %arg2[%c1_9, %c0_10, %c0_11] : memref<4x64x32xbf16, #tpu.memory_space<vmem>>, vector<1x64x32xbf16>
    %9 = vector.shape_cast %8 : vector<1x64x32xbf16> to vector<64x32xbf16>
    %cst_12 = arith.constant dense<0.000000e+00> : vector<304x32xf32>
    %10 = tpu.matmul %7, %9, %cst_12 {dimension_numbers = #tpu.dot_dimension_numbers<[1], [0], [0], [1], [0, 0, 1, 1], [], []>} : vector<304x64xbf16>, vector<64x32xbf16>, vector<304x32xf32> -> vector<304x32xf32>
    %11 = arith.addf %6, %10 : vector<304x32xf32>
    %c11 = arith.constant 11 : index
    %c0_13 = arith.constant 0 : index
    %12 = vector.load %arg13[%c11, %c0_13] : memref<384x64xbf16, #tpu.memory_space<vmem>>, vector<304x64xbf16>
    %c2 = arith.constant 2 : index
    %c0_14 = arith.constant 0 : index
    %c0_15 = arith.constant 0 : index
    %13 = vector.load %arg2[%c2, %c0_14, %c0_15] : memref<4x64x32xbf16, #tpu.memory_space<vmem>>, vector<1x64x32xbf16>
    %14 = vector.shape_cast %13 : vector<1x64x32xbf16> to vector<64x32xbf16>
    %cst_16 = arith.constant dense<0.000000e+00> : vector<304x32xf32>
    %15 = tpu.matmul %12, %14, %cst_16 {dimension_numbers = #tpu.dot_dimension_numbers<[1], [0], [0], [1], [0, 0, 1, 1], [], []>} : vector<304x64xbf16>, vector<64x32xbf16>, vector<304x32xf32> -> vector<304x32xf32>
    %16 = arith.addf %11, %15 : vector<304x32xf32>
    %c12 = arith.constant 12 : index
    %c0_17 = arith.constant 0 : index
    %17 = vector.load %arg13[%c12, %c0_17] : memref<384x64xbf16, #tpu.memory_space<vmem>>, vector<304x64xbf16>
    %c3 = arith.constant 3 : index
    %c0_18 = arith.constant 0 : index
    %c0_19 = arith.constant 0 : index
    %18 = vector.load %arg2[%c3, %c0_18, %c0_19] : memref<4x64x32xbf16, #tpu.memory_space<vmem>>, vector<1x64x32xbf16>
    %19 = vector.shape_cast %18 : vector<1x64x32xbf16> to vector<64x32xbf16>
    %cst_20 = arith.constant dense<0.000000e+00> : vector<304x32xf32>
    %20 = tpu.matmul %17, %19, %cst_20 {dimension_numbers = #tpu.dot_dimension_numbers<[1], [0], [0], [1], [0, 0, 1, 1], [], []>} : vector<304x64xbf16>, vector<64x32xbf16>, vector<304x32xf32> -> vector<304x32xf32>
    %21 = arith.addf %16, %20 : vector<304x32xf32>
    %c0_21 = arith.constant 0 : index
    %c0_22 = arith.constant 0 : index
    %22 = vector.load %arg3[%c0_21, %c0_22] : memref<1x32xf32, #tpu.memory_space<vmem>>, vector<1x32xf32>
    %23 = vector.broadcast %22 : vector<1x32xf32> to vector<304x32xf32>
    %24 = arith.addf %21, %23 : vector<304x32xf32>
    %cst_23 = arith.constant 0.000000e+00 : f32
    %25 = vector.broadcast %cst_23 : f32 to vector<304x32xf32>
    %26 = arith.maximumf %24, %25 : vector<304x32xf32>
    %c0_24 = arith.constant 0 : index
    %c0_25 = arith.constant 0 : index
    %27 = vector.load %arg14[%c0_24, %c0_25] : memref<384x32xf32, #tpu.memory_space<vmem>>, vector<304x32xf32>
    tpu.vector_store %arg14[%c0_24, %c0_25], %26 {strides = array<i32>} : memref<384x32xf32, #tpu.memory_space<vmem>>, vector<304x32xf32>,
    %c0_26 = arith.constant 0 : index
    %c0_27 = arith.constant 0 : index
    %28 = vector.load %arg14[%c0_26, %c0_27] : memref<384x32xf32, #tpu.memory_space<vmem>>, vector<272x32xf32>
    %29 = arith.truncf %28 : vector<272x32xf32> to vector<272x32xbf16>
    %c0_28 = arith.constant 0 : index
    %c0_29 = arith.constant 0 : index
    %c0_30 = arith.constant 0 : index
    %30 = vector.load %arg4[%c0_28, %c0_29, %c0_30] : memref<16x32x64xbf16, #tpu.memory_space<vmem>>, vector<1x32x64xbf16>
    %31 = vector.shape_cast %30 : vector<1x32x64xbf16> to vector<32x64xbf16>
    %cst_31 = arith.constant dense<0.000000e+00> : vector<272x64xf32>
    %32 = tpu.matmul %29, %31, %cst_31 {dimension_numbers = #tpu.dot_dimension_numbers<[1], [0], [0], [1], [0, 0, 1, 1], [], []>} : vector<272x32xbf16>, vector<32x64xbf16>, vector<272x64xf32> -> vector<272x64xf32>
    %c1_32 = arith.constant 1 : index
    %c0_33 = arith.constant 0 : index
    %33 = vector.load %arg14[%c1_32, %c0_33] : memref<384x32xf32, #tpu.memory_space<vmem>>, vector<272x32xf32>
    %34 = arith.truncf %33 : vector<272x32xf32> to vector<272x32xbf16>
    %c1_34 = arith.constant 1 : index
    %c0_35 = arith.constant 0 : index
    %c0_36 = arith.constant 0 : index
    %35 = vector.load %arg4[%c1_34, %c0_35, %c0_36] : memref<16x32x64xbf16, #tpu.memory_space<vmem>>, vector<1x32x64xbf16>
    %36 = vector.shape_cast %35 : vector<1x32x64xbf16> to vector<32x64xbf16>
    %cst_37 = arith.constant dense<0.000000e+00> : vector<272x64xf32>
    %37 = tpu.matmul %34, %36, %cst_37 {dimension_numbers = #tpu.dot_dimension_numbers<[1], [0], [0], [1], [0, 0, 1, 1], [], []>} : vector<272x32xbf16>, vector<32x64xbf16>, vector<272x64xf32> -> vector<272x64xf32>
    %38 = arith.addf %32, %37 : vector<272x64xf32>
    %c2_38 = arith.constant 2 : index
    %c0_39 = arith.constant 0 : index
    %39 = vector.load %arg14[%c2_38, %c0_39] : memref<384x32xf32, #tpu.memory_space<vmem>>, vector<272x32xf32>
    %40 = arith.truncf %39 : vector<272x32xf32> to vector<272x32xbf16>
    %c2_40 = arith.constant 2 : index
    %c0_41 = arith.constant 0 : index
    %c0_42 = arith.constant 0 : index
    %41 = vector.load %arg4[%c2_40, %c0_41, %c0_42] : memref<16x32x64xbf16, #tpu.memory_space<vmem>>, vector<1x32x64xbf16>
    %42 = vector.shape_cast %41 : vector<1x32x64xbf16> to vector<32x64xbf16>
    %cst_43 = arith.constant dense<0.000000e+00> : vector<272x64xf32>
    %43 = tpu.matmul %40, %42, %cst_43 {dimension_numbers = #tpu.dot_dimension_numbers<[1], [0], [0], [1], [0, 0, 1, 1], [], []>} : vector<272x32xbf16>, vector<32x64xbf16>, vector<272x64xf32> -> vector<272x64xf32>
    %44 = arith.addf %38, %43 : vector<272x64xf32>
    %c3_44 = arith.constant 3 : index
    %c0_45 = arith.constant 0 : index
    %45 = vector.load %arg14[%c3_44, %c0_45] : memref<384x32xf32, #tpu.memory_space<vmem>>, vector<272x32xf32>
    %46 = arith.truncf %45 : vector<272x32xf32> to vector<272x32xbf16>
    %c3_46 = arith.constant 3 : index
    %c0_47 = arith.constant 0 : index
    %c0_48 = arith.constant 0 : index
    %47 = vector.load %arg4[%c3_46, %c0_47, %c0_48] : memref<16x32x64xbf16, #tpu.memory_space<vmem>>, vector<1x32x64xbf16>
    %48 = vector.shape_cast %47 : vector<1x32x64xbf16> to vector<32x64xbf16>
    %cst_49 = arith.constant dense<0.000000e+00> : vector<272x64xf32>
    %49 = tpu.matmul %46, %48, %cst_49 {dimension_numbers = #tpu.dot_dimension_numbers<[1], [0], [0], [1], [0, 0, 1, 1], [], []>} : vector<272x32xbf16>, vector<32x64xbf16>, vector<272x64xf32> -> vector<272x64xf32>
    %50 = arith.addf %44, %49 : vector<272x64xf32>
    %c11_50 = arith.constant 11 : index
    %c0_51 = arith.constant 0 : index
    %51 = vector.load %arg14[%c11_50, %c0_51] : memref<384x32xf32, #tpu.memory_space<vmem>>, vector<272x32xf32>
    %52 = arith.truncf %51 : vector<272x32xf32> to vector<272x32xbf16>
    %c4 = arith.constant 4 : index
    %c0_52 = arith.constant 0 : index
    %c0_53 = arith.constant 0 : index
    %53 = vector.load %arg4[%c4, %c0_52, %c0_53] : memref<16x32x64xbf16, #tpu.memory_space<vmem>>, vector<1x32x64xbf16>
    %54 = vector.shape_cast %53 : vector<1x32x64xbf16> to vector<32x64xbf16>
    %cst_54 = arith.constant dense<0.000000e+00> : vector<272x64xf32>
    %55 = tpu.matmul %52, %54, %cst_54 {dimension_numbers = #tpu.dot_dimension_numbers<[1], [0], [0], [1], [0, 0, 1, 1], [], []>} : vector<272x32xbf16>, vector<32x64xbf16>, vector<272x64xf32> -> vector<272x64xf32>
    %56 = arith.addf %50, %55 : vector<272x64xf32>
    %c12_55 = arith.constant 12 : index
    %c0_56 = arith.constant 0 : index
    %57 = vector.load %arg14[%c12_55, %c0_56] : memref<384x32xf32, #tpu.memory_space<vmem>>, vector<272x32xf32>
    %58 = arith.truncf %57 : vector<272x32xf32> to vector<272x32xbf16>
    %c5 = arith.constant 5 : index
    %c0_57 = arith.constant 0 : index
    %c0_58 = arith.constant 0 : index
    %59 = vector.load %arg4[%c5, %c0_57, %c0_58] : memref<16x32x64xbf16, #tpu.memory_space<vmem>>, vector<1x32x64xbf16>
    %60 = vector.shape_cast %59 : vector<1x32x64xbf16> to vector<32x64xbf16>
    %cst_59 = arith.constant dense<0.000000e+00> : vector<272x64xf32>
    %61 = tpu.matmul %58, %60, %cst_59 {dimension_numbers = #tpu.dot_dimension_numbers<[1], [0], [0], [1], [0, 0, 1, 1], [], []>} : vector<272x32xbf16>, vector<32x64xbf16>, vector<272x64xf32> -> vector<272x64xf32>
    %62 = arith.addf %56, %61 : vector<272x64xf32>
    %c13 = arith.constant 13 : index
    %c0_60 = arith.constant 0 : index
    %63 = vector.load %arg14[%c13, %c0_60] : memref<384x32xf32, #tpu.memory_space<vmem>>, vector<272x32xf32>
    %64 = arith.truncf %63 : vector<272x32xf32> to vector<272x32xbf16>
    %c6 = arith.constant 6 : index
    %c0_61 = arith.constant 0 : index
    %c0_62 = arith.constant 0 : index
    %65 = vector.load %arg4[%c6, %c0_61, %c0_62] : memref<16x32x64xbf16, #tpu.memory_space<vmem>>, vector<1x32x64xbf16>
    %66 = vector.shape_cast %65 : vector<1x32x64xbf16> to vector<32x64xbf16>
    %cst_63 = arith.constant dense<0.000000e+00> : vector<272x64xf32>
    %67 = tpu.matmul %64, %66, %cst_63 {dimension_numbers = #tpu.dot_dimension_numbers<[1], [0], [0], [1], [0, 0, 1, 1], [], []>} : vector<272x32xbf16>, vector<32x64xbf16>, vector<272x64xf32> -> vector<272x64xf32>
    %68 = arith.addf %62, %67 : vector<272x64xf32>
    %c14 = arith.constant 14 : index
    %c0_64 = arith.constant 0 : index
    %69 = vector.load %arg14[%c14, %c0_64] : memref<384x32xf32, #tpu.memory_space<vmem>>, vector<272x32xf32>
    %70 = arith.truncf %69 : vector<272x32xf32> to vector<272x32xbf16>
    %c7 = arith.constant 7 : index
    %c0_65 = arith.constant 0 : index
    %c0_66 = arith.constant 0 : index
    %71 = vector.load %arg4[%c7, %c0_65, %c0_66] : memref<16x32x64xbf16, #tpu.memory_space<vmem>>, vector<1x32x64xbf16>
    %72 = vector.shape_cast %71 : vector<1x32x64xbf16> to vector<32x64xbf16>
    %cst_67 = arith.constant dense<0.000000e+00> : vector<272x64xf32>
    %73 = tpu.matmul %70, %72, %cst_67 {dimension_numbers = #tpu.dot_dimension_numbers<[1], [0], [0], [1], [0, 0, 1, 1], [], []>} : vector<272x32xbf16>, vector<32x64xbf16>, vector<272x64xf32> -> vector<272x64xf32>
    %74 = arith.addf %68, %73 : vector<272x64xf32>
    %c22 = arith.constant 22 : index
    %c0_68 = arith.constant 0 : index
    %75 = vector.load %arg14[%c22, %c0_68] : memref<384x32xf32, #tpu.memory_space<vmem>>, vector<272x32xf32>
    %76 = arith.truncf %75 : vector<272x32xf32> to vector<272x32xbf16>
    %c8 = arith.constant 8 : index
    %c0_69 = arith.constant 0 : index
    %c0_70 = arith.constant 0 : index
    %77 = vector.load %arg4[%c8, %c0_69, %c0_70] : memref<16x32x64xbf16, #tpu.memory_space<vmem>>, vector<1x32x64xbf16>
    %78 = vector.shape_cast %77 : vector<1x32x64xbf16> to vector<32x64xbf16>
    %cst_71 = arith.constant dense<0.000000e+00> : vector<272x64xf32>
    %79 = tpu.matmul %76, %78, %cst_71 {dimension_numbers = #tpu.dot_dimension_numbers<[1], [0], [0], [1], [0, 0, 1, 1], [], []>} : vector<272x32xbf16>, vector<32x64xbf16>, vector<272x64xf32> -> vector<272x64xf32>
    %80 = arith.addf %74, %79 : vector<272x64xf32>
    %c23 = arith.constant 23 : index
    %c0_72 = arith.constant 0 : index
    %81 = vector.load %arg14[%c23, %c0_72] : memref<384x32xf32, #tpu.memory_space<vmem>>, vector<272x32xf32>
    %82 = arith.truncf %81 : vector<272x32xf32> to vector<272x32xbf16>
    %c9 = arith.constant 9 : index
    %c0_73 = arith.constant 0 : index
    %c0_74 = arith.constant 0 : index
    %83 = vector.load %arg4[%c9, %c0_73, %c0_74] : memref<16x32x64xbf16, #tpu.memory_space<vmem>>, vector<1x32x64xbf16>
    %84 = vector.shape_cast %83 : vector<1x32x64xbf16> to vector<32x64xbf16>
    %cst_75 = arith.constant dense<0.000000e+00> : vector<272x64xf32>
    %85 = tpu.matmul %82, %84, %cst_75 {dimension_numbers = #tpu.dot_dimension_numbers<[1], [0], [0], [1], [0, 0, 1, 1], [], []>} : vector<272x32xbf16>, vector<32x64xbf16>, vector<272x64xf32> -> vector<272x64xf32>
    %86 = arith.addf %80, %85 : vector<272x64xf32>
    %c24 = arith.constant 24 : index
    %c0_76 = arith.constant 0 : index
    %87 = vector.load %arg14[%c24, %c0_76] : memref<384x32xf32, #tpu.memory_space<vmem>>, vector<272x32xf32>
    %88 = arith.truncf %87 : vector<272x32xf32> to vector<272x32xbf16>
    %c10 = arith.constant 10 : index
    %c0_77 = arith.constant 0 : index
    %c0_78 = arith.constant 0 : index
    %89 = vector.load %arg4[%c10, %c0_77, %c0_78] : memref<16x32x64xbf16, #tpu.memory_space<vmem>>, vector<1x32x64xbf16>
    %90 = vector.shape_cast %89 : vector<1x32x64xbf16> to vector<32x64xbf16>
    %cst_79 = arith.constant dense<0.000000e+00> : vector<272x64xf32>
    %91 = tpu.matmul %88, %90, %cst_79 {dimension_numbers = #tpu.dot_dimension_numbers<[1], [0], [0], [1], [0, 0, 1, 1], [], []>} : vector<272x32xbf16>, vector<32x64xbf16>, vector<272x64xf32> -> vector<272x64xf32>
    %92 = arith.addf %86, %91 : vector<272x64xf32>
    %c25 = arith.constant 25 : index
    %c0_80 = arith.constant 0 : index
    %93 = vector.load %arg14[%c25, %c0_80] : memref<384x32xf32, #tpu.memory_space<vmem>>, vector<272x32xf32>
    %94 = arith.truncf %93 : vector<272x32xf32> to vector<272x32xbf16>
    %c11_81 = arith.constant 11 : index
    %c0_82 = arith.constant 0 : index
    %c0_83 = arith.constant 0 : index
    %95 = vector.load %arg4[%c11_81, %c0_82, %c0_83] : memref<16x32x64xbf16, #tpu.memory_space<vmem>>, vector<1x32x64xbf16>
    %96 = vector.shape_cast %95 : vector<1x32x64xbf16> to vector<32x64xbf16>
    %cst_84 = arith.constant dense<0.000000e+00> : vector<272x64xf32>
    %97 = tpu.matmul %94, %96, %cst_84 {dimension_numbers = #tpu.dot_dimension_numbers<[1], [0], [0], [1], [0, 0, 1, 1], [], []>} : vector<272x32xbf16>, vector<32x64xbf16>, vector<272x64xf32> -> vector<272x64xf32>
    %98 = arith.addf %92, %97 : vector<272x64xf32>
    %c33 = arith.constant 33 : index
    %c0_85 = arith.constant 0 : index
    %99 = vector.load %arg14[%c33, %c0_85] : memref<384x32xf32, #tpu.memory_space<vmem>>, vector<272x32xf32>
    %100 = arith.truncf %99 : vector<272x32xf32> to vector<272x32xbf16>
    %c12_86 = arith.constant 12 : index
    %c0_87 = arith.constant 0 : index
    %c0_88 = arith.constant 0 : index
    %101 = vector.load %arg4[%c12_86, %c0_87, %c0_88] : memref<16x32x64xbf16, #tpu.memory_space<vmem>>, vector<1x32x64xbf16>
    %102 = vector.shape_cast %101 : vector<1x32x64xbf16> to vector<32x64xbf16>
    %cst_89 = arith.constant dense<0.000000e+00> : vector<272x64xf32>
    %103 = tpu.matmul %100, %102, %cst_89 {dimension_numbers = #tpu.dot_dimension_numbers<[1], [0], [0], [1], [0, 0, 1, 1], [], []>} : vector<272x32xbf16>, vector<32x64xbf16>, vector<272x64xf32> -> vector<272x64xf32>
    %104 = arith.addf %98, %103 : vector<272x64xf32>
    %c34 = arith.constant 34 : index
    %c0_90 = arith.constant 0 : index
    %105 = vector.load %arg14[%c34, %c0_90] : memref<384x32xf32, #tpu.memory_space<vmem>>, vector<272x32xf32>
    %106 = arith.truncf %105 : vector<272x32xf32> to vector<272x32xbf16>
    %c13_91 = arith.constant 13 : index
    %c0_92 = arith.constant 0 : index
    %c0_93 = arith.constant 0 : index
    %107 = vector.load %arg4[%c13_91, %c0_92, %c0_93] : memref<16x32x64xbf16, #tpu.memory_space<vmem>>, vector<1x32x64xbf16>
    %108 = vector.shape_cast %107 : vector<1x32x64xbf16> to vector<32x64xbf16>
    %cst_94 = arith.constant dense<0.000000e+00> : vector<272x64xf32>
    %109 = tpu.matmul %106, %108, %cst_94 {dimension_numbers = #tpu.dot_dimension_numbers<[1], [0], [0], [1], [0, 0, 1, 1], [], []>} : vector<272x32xbf16>, vector<32x64xbf16>, vector<272x64xf32> -> vector<272x64xf32>
    %110 = arith.addf %104, %109 : vector<272x64xf32>
    %c35 = arith.constant 35 : index
    %c0_95 = arith.constant 0 : index
    %111 = vector.load %arg14[%c35, %c0_95] : memref<384x32xf32, #tpu.memory_space<vmem>>, vector<272x32xf32>
    %112 = arith.truncf %111 : vector<272x32xf32> to vector<272x32xbf16>
    %c14_96 = arith.constant 14 : index
    %c0_97 = arith.constant 0 : index
    %c0_98 = arith.constant 0 : index
    %113 = vector.load %arg4[%c14_96, %c0_97, %c0_98] : memref<16x32x64xbf16, #tpu.memory_space<vmem>>, vector<1x32x64xbf16>
    %114 = vector.shape_cast %113 : vector<1x32x64xbf16> to vector<32x64xbf16>
    %cst_99 = arith.constant dense<0.000000e+00> : vector<272x64xf32>
    %115 = tpu.matmul %112, %114, %cst_99 {dimension_numbers = #tpu.dot_dimension_numbers<[1], [0], [0], [1], [0, 0, 1, 1], [], []>} : vector<272x32xbf16>, vector<32x64xbf16>, vector<272x64xf32> -> vector<272x64xf32>
    %116 = arith.addf %110, %115 : vector<272x64xf32>
    %c36 = arith.constant 36 : index
    %c0_100 = arith.constant 0 : index
    %117 = vector.load %arg14[%c36, %c0_100] : memref<384x32xf32, #tpu.memory_space<vmem>>, vector<272x32xf32>
    %118 = arith.truncf %117 : vector<272x32xf32> to vector<272x32xbf16>
    %c15 = arith.constant 15 : index
    %c0_101 = arith.constant 0 : index
    %c0_102 = arith.constant 0 : index
    %119 = vector.load %arg4[%c15, %c0_101, %c0_102] : memref<16x32x64xbf16, #tpu.memory_space<vmem>>, vector<1x32x64xbf16>
    %120 = vector.shape_cast %119 : vector<1x32x64xbf16> to vector<32x64xbf16>
    %cst_103 = arith.constant dense<0.000000e+00> : vector<272x64xf32>
    %121 = tpu.matmul %118, %120, %cst_103 {dimension_numbers = #tpu.dot_dimension_numbers<[1], [0], [0], [1], [0, 0, 1, 1], [], []>} : vector<272x32xbf16>, vector<32x64xbf16>, vector<272x64xf32> -> vector<272x64xf32>
    %122 = arith.addf %116, %121 : vector<272x64xf32>
    %c0_104 = arith.constant 0 : index
    %c0_105 = arith.constant 0 : index
    %123 = vector.load %arg5[%c0_104, %c0_105] : memref<1x64xf32, #tpu.memory_space<vmem>>, vector<1x64xf32>
    %124 = vector.broadcast %123 : vector<1x64xf32> to vector<272x64xf32>
    %125 = arith.addf %122, %124 : vector<272x64xf32>
    %cst_106 = arith.constant 0.000000e+00 : f32
    %126 = vector.broadcast %cst_106 : f32 to vector<272x64xf32>
    %127 = arith.maximumf %125, %126 : vector<272x64xf32>
    %c0_107 = arith.constant 0 : index
    %c0_108 = arith.constant 0 : index
    %128 = vector.load %arg15[%c0_107, %c0_108] : memref<384x64xf32, #tpu.memory_space<vmem>>, vector<272x64xf32>
    tpu.vector_store %arg15[%c0_107, %c0_108], %127 {strides = array<i32>} : memref<384x64xf32, #tpu.memory_space<vmem>>, vector<272x64xf32>,
    %c0_109 = arith.constant 0 : index
    %c0_110 = arith.constant 0 : index
    %129 = vector.load %arg15[%c0_109, %c0_110] : memref<384x64xf32, #tpu.memory_space<vmem>>, vector<224x64xf32>
    %130 = arith.truncf %129 : vector<224x64xf32> to vector<224x64xbf16>
    %c0_111 = arith.constant 0 : index
    %c0_112 = arith.constant 0 : index
    %c0_113 = arith.constant 0 : index
    %131 = vector.load %arg6[%c0_111, %c0_112, %c0_113] : memref<9x64x64xbf16, #tpu.memory_space<vmem>>, vector<1x64x64xbf16>
    %132 = vector.shape_cast %131 : vector<1x64x64xbf16> to vector<64x64xbf16>
    %cst_114 = arith.constant dense<0.000000e+00> : vector<224x64xf32>
    %133 = tpu.matmul %130, %132, %cst_114 {dimension_numbers = #tpu.dot_dimension_numbers<[1], [0], [0], [1], [0, 0, 1, 1], [], []>} : vector<224x64xbf16>, vector<64x64xbf16>, vector<224x64xf32> -> vector<224x64xf32>
    %c2_115 = arith.constant 2 : index
    %c0_116 = arith.constant 0 : index
    %134 = vector.load %arg15[%c2_115, %c0_116] : memref<384x64xf32, #tpu.memory_space<vmem>>, vector<224x64xf32>
    %135 = arith.truncf %134 : vector<224x64xf32> to vector<224x64xbf16>
    %c1_117 = arith.constant 1 : index
    %c0_118 = arith.constant 0 : index
    %c0_119 = arith.constant 0 : index
    %136 = vector.load %arg6[%c1_117, %c0_118, %c0_119] : memref<9x64x64xbf16, #tpu.memory_space<vmem>>, vector<1x64x64xbf16>
    %137 = vector.shape_cast %136 : vector<1x64x64xbf16> to vector<64x64xbf16>
    %cst_120 = arith.constant dense<0.000000e+00> : vector<224x64xf32>
    %138 = tpu.matmul %135, %137, %cst_120 {dimension_numbers = #tpu.dot_dimension_numbers<[1], [0], [0], [1], [0, 0, 1, 1], [], []>} : vector<224x64xbf16>, vector<64x64xbf16>, vector<224x64xf32> -> vector<224x64xf32>
    %139 = arith.addf %133, %138 : vector<224x64xf32>
    %c4_121 = arith.constant 4 : index
    %c0_122 = arith.constant 0 : index
    %140 = vector.load %arg15[%c4_121, %c0_122] : memref<384x64xf32, #tpu.memory_space<vmem>>, vector<224x64xf32>
    %141 = arith.truncf %140 : vector<224x64xf32> to vector<224x64xbf16>
    %c2_123 = arith.constant 2 : index
    %c0_124 = arith.constant 0 : index
    %c0_125 = arith.constant 0 : index
    %142 = vector.load %arg6[%c2_123, %c0_124, %c0_125] : memref<9x64x64xbf16, #tpu.memory_space<vmem>>, vector<1x64x64xbf16>
    %143 = vector.shape_cast %142 : vector<1x64x64xbf16> to vector<64x64xbf16>
    %cst_126 = arith.constant dense<0.000000e+00> : vector<224x64xf32>
    %144 = tpu.matmul %141, %143, %cst_126 {dimension_numbers = #tpu.dot_dimension_numbers<[1], [0], [0], [1], [0, 0, 1, 1], [], []>} : vector<224x64xbf16>, vector<64x64xbf16>, vector<224x64xf32> -> vector<224x64xf32>
    %145 = arith.addf %139, %144 : vector<224x64xf32>
    %c22_127 = arith.constant 22 : index
    %c0_128 = arith.constant 0 : index
    %146 = vector.load %arg15[%c22_127, %c0_128] : memref<384x64xf32, #tpu.memory_space<vmem>>, vector<224x64xf32>
    %147 = arith.truncf %146 : vector<224x64xf32> to vector<224x64xbf16>
    %c3_129 = arith.constant 3 : index
    %c0_130 = arith.constant 0 : index
    %c0_131 = arith.constant 0 : index
    %148 = vector.load %arg6[%c3_129, %c0_130, %c0_131] : memref<9x64x64xbf16, #tpu.memory_space<vmem>>, vector<1x64x64xbf16>
    %149 = vector.shape_cast %148 : vector<1x64x64xbf16> to vector<64x64xbf16>
    %cst_132 = arith.constant dense<0.000000e+00> : vector<224x64xf32>
    %150 = tpu.matmul %147, %149, %cst_132 {dimension_numbers = #tpu.dot_dimension_numbers<[1], [0], [0], [1], [0, 0, 1, 1], [], []>} : vector<224x64xbf16>, vector<64x64xbf16>, vector<224x64xf32> -> vector<224x64xf32>
    %151 = arith.addf %145, %150 : vector<224x64xf32>
    %c24_133 = arith.constant 24 : index
    %c0_134 = arith.constant 0 : index
    %152 = vector.load %arg15[%c24_133, %c0_134] : memref<384x64xf32, #tpu.memory_space<vmem>>, vector<224x64xf32>
    %153 = arith.truncf %152 : vector<224x64xf32> to vector<224x64xbf16>
    %c4_135 = arith.constant 4 : index
    %c0_136 = arith.constant 0 : index
    %c0_137 = arith.constant 0 : index
    %154 = vector.load %arg6[%c4_135, %c0_136, %c0_137] : memref<9x64x64xbf16, #tpu.memory_space<vmem>>, vector<1x64x64xbf16>
    %155 = vector.shape_cast %154 : vector<1x64x64xbf16> to vector<64x64xbf16>
    %cst_138 = arith.constant dense<0.000000e+00> : vector<224x64xf32>
    %156 = tpu.matmul %153, %155, %cst_138 {dimension_numbers = #tpu.dot_dimension_numbers<[1], [0], [0], [1], [0, 0, 1, 1], [], []>} : vector<224x64xbf16>, vector<64x64xbf16>, vector<224x64xf32> -> vector<224x64xf32>
    %157 = arith.addf %151, %156 : vector<224x64xf32>
    %c26 = arith.constant 26 : index
    %c0_139 = arith.constant 0 : index
    %158 = vector.load %arg15[%c26, %c0_139] : memref<384x64xf32, #tpu.memory_space<vmem>>, vector<224x64xf32>
    %159 = arith.truncf %158 : vector<224x64xf32> to vector<224x64xbf16>
    %c5_140 = arith.constant 5 : index
    %c0_141 = arith.constant 0 : index
    %c0_142 = arith.constant 0 : index
    %160 = vector.load %arg6[%c5_140, %c0_141, %c0_142] : memref<9x64x64xbf16, #tpu.memory_space<vmem>>, vector<1x64x64xbf16>
    %161 = vector.shape_cast %160 : vector<1x64x64xbf16> to vector<64x64xbf16>
    %cst_143 = arith.constant dense<0.000000e+00> : vector<224x64xf32>
    %162 = tpu.matmul %159, %161, %cst_143 {dimension_numbers = #tpu.dot_dimension_numbers<[1], [0], [0], [1], [0, 0, 1, 1], [], []>} : vector<224x64xbf16>, vector<64x64xbf16>, vector<224x64xf32> -> vector<224x64xf32>
    %163 = arith.addf %157, %162 : vector<224x64xf32>
    %c44 = arith.constant 44 : index
    %c0_144 = arith.constant 0 : index
    %164 = vector.load %arg15[%c44, %c0_144] : memref<384x64xf32, #tpu.memory_space<vmem>>, vector<224x64xf32>
    %165 = arith.truncf %164 : vector<224x64xf32> to vector<224x64xbf16>
    %c6_145 = arith.constant 6 : index
    %c0_146 = arith.constant 0 : index
    %c0_147 = arith.constant 0 : index
    %166 = vector.load %arg6[%c6_145, %c0_146, %c0_147] : memref<9x64x64xbf16, #tpu.memory_space<vmem>>, vector<1x64x64xbf16>
    %167 = vector.shape_cast %166 : vector<1x64x64xbf16> to vector<64x64xbf16>
    %cst_148 = arith.constant dense<0.000000e+00> : vector<224x64xf32>
    %168 = tpu.matmul %165, %167, %cst_148 {dimension_numbers = #tpu.dot_dimension_numbers<[1], [0], [0], [1], [0, 0, 1, 1], [], []>} : vector<224x64xbf16>, vector<64x64xbf16>, vector<224x64xf32> -> vector<224x64xf32>
    %169 = arith.addf %163, %168 : vector<224x64xf32>
    %c46 = arith.constant 46 : index
    %c0_149 = arith.constant 0 : index
    %170 = vector.load %arg15[%c46, %c0_149] : memref<384x64xf32, #tpu.memory_space<vmem>>, vector<224x64xf32>
    %171 = arith.truncf %170 : vector<224x64xf32> to vector<224x64xbf16>
    %c7_150 = arith.constant 7 : index
    %c0_151 = arith.constant 0 : index
    %c0_152 = arith.constant 0 : index
    %172 = vector.load %arg6[%c7_150, %c0_151, %c0_152] : memref<9x64x64xbf16, #tpu.memory_space<vmem>>, vector<1x64x64xbf16>
    %173 = vector.shape_cast %172 : vector<1x64x64xbf16> to vector<64x64xbf16>
    %cst_153 = arith.constant dense<0.000000e+00> : vector<224x64xf32>
    %174 = tpu.matmul %171, %173, %cst_153 {dimension_numbers = #tpu.dot_dimension_numbers<[1], [0], [0], [1], [0, 0, 1, 1], [], []>} : vector<224x64xbf16>, vector<64x64xbf16>, vector<224x64xf32> -> vector<224x64xf32>
    %175 = arith.addf %169, %174 : vector<224x64xf32>
    %c48 = arith.constant 48 : index
    %c0_154 = arith.constant 0 : index
    %176 = vector.load %arg15[%c48, %c0_154] : memref<384x64xf32, #tpu.memory_space<vmem>>, vector<224x64xf32>
    %177 = arith.truncf %176 : vector<224x64xf32> to vector<224x64xbf16>
    %c8_155 = arith.constant 8 : index
    %c0_156 = arith.constant 0 : index
    %c0_157 = arith.constant 0 : index
    %178 = vector.load %arg6[%c8_155, %c0_156, %c0_157] : memref<9x64x64xbf16, #tpu.memory_space<vmem>>, vector<1x64x64xbf16>
    %179 = vector.shape_cast %178 : vector<1x64x64xbf16> to vector<64x64xbf16>
    %cst_158 = arith.constant dense<0.000000e+00> : vector<224x64xf32>
    %180 = tpu.matmul %177, %179, %cst_158 {dimension_numbers = #tpu.dot_dimension_numbers<[1], [0], [0], [1], [0, 0, 1, 1], [], []>} : vector<224x64xbf16>, vector<64x64xbf16>, vector<224x64xf32> -> vector<224x64xf32>
    %181 = arith.addf %175, %180 : vector<224x64xf32>
    %c0_159 = arith.constant 0 : index
    %c0_160 = arith.constant 0 : index
    %182 = vector.load %arg7[%c0_159, %c0_160] : memref<1x64xf32, #tpu.memory_space<vmem>>, vector<1x64xf32>
    %183 = vector.broadcast %182 : vector<1x64xf32> to vector<224x64xf32>
    %184 = arith.addf %181, %183 : vector<224x64xf32>
    %cst_161 = arith.constant 0.000000e+00 : f32
    %185 = vector.broadcast %cst_161 : f32 to vector<224x64xf32>
    %186 = arith.maximumf %184, %185 : vector<224x64xf32>
    %c0_162 = arith.constant 0 : index
    %c0_163 = arith.constant 0 : index
    %187 = vector.load %arg16[%c0_162, %c0_163] : memref<384x64xf32, #tpu.memory_space<vmem>>, vector<224x64xf32>
    tpu.vector_store %arg16[%c0_162, %c0_163], %186 {strides = array<i32>} : memref<384x64xf32, #tpu.memory_space<vmem>>, vector<224x64xf32>,
    %c0_164 = arith.constant 0 : index
    %c0_165 = arith.constant 0 : index
    %188 = vector.load %arg16[%c0_164, %c0_165] : memref<384x64xf32, #tpu.memory_space<vmem>>, vector<1x64xf32>
    %c0_166 = arith.constant 0 : index
    %c0_167 = arith.constant 0 : index
    %189 = vector.load %arg17[%c0_166, %c0_167] : memref<8x64xf32, #tpu.memory_space<vmem>>, vector<1x64xf32>
    tpu.vector_store %arg17[%c0_166, %c0_167], %188 {strides = array<i32>} : memref<8x64xf32, #tpu.memory_space<vmem>>, vector<1x64xf32>,
    %c192 = arith.constant 192 : index
    %c0_168 = arith.constant 0 : index
    %190 = vector.load %arg16[%c192, %c0_168] : memref<384x64xf32, #tpu.memory_space<vmem>>, vector<1x64xf32>
    %c1_169 = arith.constant 1 : index
    %c0_170 = arith.constant 0 : index
    %191 = vector.load %arg17[%c1_169, %c0_170] : memref<8x64xf32, #tpu.memory_space<vmem>>, vector<1x64xf32>
    tpu.vector_store %arg17[%c1_169, %c0_170], %190 {strides = array<i32>} : memref<8x64xf32, #tpu.memory_space<vmem>>, vector<1x64xf32>,
    %c2_171 = arith.constant 2 : index
    %c0_172 = arith.constant 0 : index
    %192 = vector.load %arg16[%c2_171, %c0_172] : memref<384x64xf32, #tpu.memory_space<vmem>>, vector<1x64xf32>
    %c2_173 = arith.constant 2 : index
    %c0_174 = arith.constant 0 : index
    %193 = vector.load %arg17[%c2_173, %c0_174] : memref<8x64xf32, #tpu.memory_space<vmem>>, vector<1x64xf32>
    tpu.vector_store %arg17[%c2_173, %c0_174], %192 {strides = array<i32>} : memref<8x64xf32, #tpu.memory_space<vmem>>, vector<1x64xf32>,
    %c194 = arith.constant 194 : index
    %c0_175 = arith.constant 0 : index
    %194 = vector.load %arg16[%c194, %c0_175] : memref<384x64xf32, #tpu.memory_space<vmem>>, vector<1x64xf32>
    %c3_176 = arith.constant 3 : index
    %c0_177 = arith.constant 0 : index
    %195 = vector.load %arg17[%c3_176, %c0_177] : memref<8x64xf32, #tpu.memory_space<vmem>>, vector<1x64xf32>
    tpu.vector_store %arg17[%c3_176, %c0_177], %194 {strides = array<i32>} : memref<8x64xf32, #tpu.memory_space<vmem>>, vector<1x64xf32>,
    %c22_178 = arith.constant 22 : index
    %c0_179 = arith.constant 0 : index
    %196 = vector.load %arg16[%c22_178, %c0_179] : memref<384x64xf32, #tpu.memory_space<vmem>>, vector<1x64xf32>
    %c4_180 = arith.constant 4 : index
    %c0_181 = arith.constant 0 : index
    %197 = vector.load %arg17[%c4_180, %c0_181] : memref<8x64xf32, #tpu.memory_space<vmem>>, vector<1x64xf32>
    tpu.vector_store %arg17[%c4_180, %c0_181], %196 {strides = array<i32>} : memref<8x64xf32, #tpu.memory_space<vmem>>, vector<1x64xf32>,
    %c214 = arith.constant 214 : index
    %c0_182 = arith.constant 0 : index
    %198 = vector.load %arg16[%c214, %c0_182] : memref<384x64xf32, #tpu.memory_space<vmem>>, vector<1x64xf32>
    %c5_183 = arith.constant 5 : index
    %c0_184 = arith.constant 0 : index
    %199 = vector.load %arg17[%c5_183, %c0_184] : memref<8x64xf32, #tpu.memory_space<vmem>>, vector<1x64xf32>
    tpu.vector_store %arg17[%c5_183, %c0_184], %198 {strides = array<i32>} : memref<8x64xf32, #tpu.memory_space<vmem>>, vector<1x64xf32>,
    %c24_185 = arith.constant 24 : index
    %c0_186 = arith.constant 0 : index
    %200 = vector.load %arg16[%c24_185, %c0_186] : memref<384x64xf32, #tpu.memory_space<vmem>>, vector<1x64xf32>
    %c6_187 = arith.constant 6 : index
    %c0_188 = arith.constant 0 : index
    %201 = vector.load %arg17[%c6_187, %c0_188] : memref<8x64xf32, #tpu.memory_space<vmem>>, vector<1x64xf32>
    tpu.vector_store %arg17[%c6_187, %c0_188], %200 {strides = array<i32>} : memref<8x64xf32, #tpu.memory_space<vmem>>, vector<1x64xf32>,
    %c216 = arith.constant 216 : index
    %c0_189 = arith.constant 0 : index
    %202 = vector.load %arg16[%c216, %c0_189] : memref<384x64xf32, #tpu.memory_space<vmem>>, vector<1x64xf32>
    %c7_190 = arith.constant 7 : index
    %c0_191 = arith.constant 0 : index
    %203 = vector.load %arg17[%c7_190, %c0_191] : memref<8x64xf32, #tpu.memory_space<vmem>>, vector<1x64xf32>
    tpu.vector_store %arg17[%c7_190, %c0_191], %202 {strides = array<i32>} : memref<8x64xf32, #tpu.memory_space<vmem>>, vector<1x64xf32>,
    %c0_192 = arith.constant 0 : index
    %c0_193 = arith.constant 0 : index
    %204 = vector.load %arg17[%c0_192, %c0_193] : memref<8x64xf32, #tpu.memory_space<vmem>>, vector<2x64xf32>
    %205 = arith.truncf %204 : vector<2x64xf32> to vector<2x64xbf16>
    %c0_194 = arith.constant 0 : index
    %c0_195 = arith.constant 0 : index
    %206 = vector.load %arg8[%c0_194, %c0_195] : memref<256x32xbf16, #tpu.memory_space<vmem>>, vector<64x32xbf16>
    %cst_196 = arith.constant dense<0.000000e+00> : vector<2x32xf32>
    %207 = tpu.matmul %205, %206, %cst_196 {dimension_numbers = #tpu.dot_dimension_numbers<[1], [0], [0], [1], [0, 0, 1, 1], [], []>} : vector<2x64xbf16>, vector<64x32xbf16>, vector<2x32xf32> -> vector<2x32xf32>
    %c2_197 = arith.constant 2 : index
    %c0_198 = arith.constant 0 : index
    %208 = vector.load %arg17[%c2_197, %c0_198] : memref<8x64xf32, #tpu.memory_space<vmem>>, vector<2x64xf32>
    %209 = arith.truncf %208 : vector<2x64xf32> to vector<2x64xbf16>
    %c64 = arith.constant 64 : index
    %c0_199 = arith.constant 0 : index
    %210 = vector.load %arg8[%c64, %c0_199] : memref<256x32xbf16, #tpu.memory_space<vmem>>, vector<64x32xbf16>
    %cst_200 = arith.constant dense<0.000000e+00> : vector<2x32xf32>
    %211 = tpu.matmul %209, %210, %cst_200 {dimension_numbers = #tpu.dot_dimension_numbers<[1], [0], [0], [1], [0, 0, 1, 1], [], []>} : vector<2x64xbf16>, vector<64x32xbf16>, vector<2x32xf32> -> vector<2x32xf32>
    %212 = arith.addf %207, %211 : vector<2x32xf32>
    %c4_201 = arith.constant 4 : index
    %c0_202 = arith.constant 0 : index
    %213 = vector.load %arg17[%c4_201, %c0_202] : memref<8x64xf32, #tpu.memory_space<vmem>>, vector<2x64xf32>
    %214 = arith.truncf %213 : vector<2x64xf32> to vector<2x64xbf16>
    %c128 = arith.constant 128 : index
    %c0_203 = arith.constant 0 : index
    %215 = vector.load %arg8[%c128, %c0_203] : memref<256x32xbf16, #tpu.memory_space<vmem>>, vector<64x32xbf16>
    %cst_204 = arith.constant dense<0.000000e+00> : vector<2x32xf32>
    %216 = tpu.matmul %214, %215, %cst_204 {dimension_numbers = #tpu.dot_dimension_numbers<[1], [0], [0], [1], [0, 0, 1, 1], [], []>} : vector<2x64xbf16>, vector<64x32xbf16>, vector<2x32xf32> -> vector<2x32xf32>
    %217 = arith.addf %212, %216 : vector<2x32xf32>
    %c6_205 = arith.constant 6 : index
    %c0_206 = arith.constant 0 : index
    %218 = vector.load %arg17[%c6_205, %c0_206] : memref<8x64xf32, #tpu.memory_space<vmem>>, vector<2x64xf32>
    %219 = arith.truncf %218 : vector<2x64xf32> to vector<2x64xbf16>
    %c192_207 = arith.constant 192 : index
    %c0_208 = arith.constant 0 : index
    %220 = vector.load %arg8[%c192_207, %c0_208] : memref<256x32xbf16, #tpu.memory_space<vmem>>, vector<64x32xbf16>
    %cst_209 = arith.constant dense<0.000000e+00> : vector<2x32xf32>
    %221 = tpu.matmul %219, %220, %cst_209 {dimension_numbers = #tpu.dot_dimension_numbers<[1], [0], [0], [1], [0, 0, 1, 1], [], []>} : vector<2x64xbf16>, vector<64x32xbf16>, vector<2x32xf32> -> vector<2x32xf32>
    %222 = arith.addf %217, %221 : vector<2x32xf32>
    %c0_210 = arith.constant 0 : index
    %c0_211 = arith.constant 0 : index
    %223 = vector.load %arg9[%c0_210, %c0_211] : memref<1x32xf32, #tpu.memory_space<vmem>>, vector<1x32xf32>
    %224 = vector.broadcast %223 : vector<1x32xf32> to vector<2x32xf32>
    %225 = arith.addf %222, %224 : vector<2x32xf32>
    %cst_212 = arith.constant 0.000000e+00 : f32
    %226 = vector.broadcast %cst_212 : f32 to vector<2x32xf32>
    %227 = arith.maximumf %225, %226 : vector<2x32xf32>
    %228 = arith.truncf %227 : vector<2x32xf32> to vector<2x32xbf16>
    %c0_213 = arith.constant 0 : index
    %c0_214 = arith.constant 0 : index
    %229 = vector.load %arg10[%c0_213, %c0_214] : memref<32x4xbf16, #tpu.memory_space<vmem>>, vector<32x4xbf16>
    %cst_215 = arith.constant dense<0.000000e+00> : vector<2x4xf32>
    %230 = tpu.matmul %228, %229, %cst_215 {dimension_numbers = #tpu.dot_dimension_numbers<[1], [0], [0], [1], [0, 0, 1, 1], [], []>} : vector<2x32xbf16>, vector<32x4xbf16>, vector<2x4xf32> -> vector<2x4xf32>
    %c0_216 = arith.constant 0 : index
    %c0_217 = arith.constant 0 : index
    %231 = vector.load %arg11[%c0_216, %c0_217] : memref<1x4xf32, #tpu.memory_space<vmem>>, vector<1x4xf32>
    %232 = vector.broadcast %231 : vector<1x4xf32> to vector<2x4xf32>
    %233 = arith.addf %230, %232 : vector<2x4xf32>
    %234 = vector.shape_cast %233 : vector<2x4xf32> to vector<1x2x4xf32>
    %c0_218 = arith.constant 0 : index
    %c0_219 = arith.constant 0 : index
    %c0_220 = arith.constant 0 : index
    %235 = vector.load %arg12[%c0_218, %c0_219, %c0_220] : memref<1x2x4xf32, #tpu.memory_space<vmem>>, vector<1x2x4xf32>
    tpu.vector_store %arg12[%c0_218, %c0_219, %c0_220], %234 {strides = array<i32>} : memref<1x2x4xf32, #tpu.memory_space<vmem>>, vector<1x2x4xf32>,
    return
  }
  func.func @transform_0(%arg0: i32) -> (i32, i32) {
    %c0_i32 = arith.constant 0 : i32
    %c0_i32_0 = arith.constant 0 : i32
    return %arg0, %c0_i32 : i32, i32
  }
  func.func @transform_1(%arg0: i32) -> (i32, i32, i32) {
    %c0_i32 = arith.constant 0 : i32
    %c0_i32_0 = arith.constant 0 : i32
    %c0_i32_1 = arith.constant 0 : i32
    %c0_i32_2 = arith.constant 0 : i32
    return %c0_i32, %c0_i32_0, %c0_i32_1 : i32, i32, i32
  }
  func.func @transform_2(%arg0: i32) -> (i32, i32) {
    %c0_i32 = arith.constant 0 : i32
    %c0_i32_0 = arith.constant 0 : i32
    %c0_i32_1 = arith.constant 0 : i32
    return %c0_i32, %c0_i32_0 : i32, i32
  }
  func.func @transform_3(%arg0: i32) -> (i32, i32, i32) {
    %c0_i32 = arith.constant 0 : i32
    %c0_i32_0 = arith.constant 0 : i32
    %c0_i32_1 = arith.constant 0 : i32
    %c0_i32_2 = arith.constant 0 : i32
    return %c0_i32, %c0_i32_0, %c0_i32_1 : i32, i32, i32
  }
  func.func @transform_4(%arg0: i32) -> (i32, i32) {
    %c0_i32 = arith.constant 0 : i32
    %c0_i32_0 = arith.constant 0 : i32
    %c0_i32_1 = arith.constant 0 : i32
    return %c0_i32, %c0_i32_0 : i32, i32
  }
  func.func @transform_5(%arg0: i32) -> (i32, i32, i32) {
    %c0_i32 = arith.constant 0 : i32
    %c0_i32_0 = arith.constant 0 : i32
    %c0_i32_1 = arith.constant 0 : i32
    %c0_i32_2 = arith.constant 0 : i32
    return %c0_i32, %c0_i32_0, %c0_i32_1 : i32, i32, i32
  }
  func.func @transform_6(%arg0: i32) -> (i32, i32) {
    %c0_i32 = arith.constant 0 : i32
    %c0_i32_0 = arith.constant 0 : i32
    %c0_i32_1 = arith.constant 0 : i32
    return %c0_i32, %c0_i32_0 : i32, i32
  }
  func.func @transform_7(%arg0: i32) -> (i32, i32) {
    %c0_i32 = arith.constant 0 : i32
    %c0_i32_0 = arith.constant 0 : i32
    %c0_i32_1 = arith.constant 0 : i32
    return %c0_i32, %c0_i32_0 : i32, i32
  }
  func.func @transform_8(%arg0: i32) -> (i32, i32) {
    %c0_i32 = arith.constant 0 : i32
    %c0_i32_0 = arith.constant 0 : i32
    %c0_i32_1 = arith.constant 0 : i32
    return %c0_i32, %c0_i32_0 : i32, i32
  }
  func.func @transform_9(%arg0: i32) -> (i32, i32) {
    %c0_i32 = arith.constant 0 : i32
    %c0_i32_0 = arith.constant 0 : i32
    %c0_i32_1 = arith.constant 0 : i32
    return %c0_i32, %c0_i32_0 : i32, i32
  }
  func.func @transform_10(%arg0: i32) -> (i32, i32) {
    %c0_i32 = arith.constant 0 : i32
    %c0_i32_0 = arith.constant 0 : i32
    %c0_i32_1 = arith.constant 0 : i32
    return %c0_i32, %c0_i32_0 : i32, i32
  }
  func.func @transform_11(%arg0: i32) -> (i32, i32, i32) {
    %c0_i32 = arith.constant 0 : i32
    %c0_i32_0 = arith.constant 0 : i32
    %c0_i32_1 = arith.constant 0 : i32
    return %arg0, %c0_i32, %c0_i32_0 : i32, i32, i32
  }
}

</mosaic_0001>

<llo_original>
// kernel: nature_cnn_forward.1
$region0: #{nature_cnn_forward.1}
  #allocation0 [shape = 'u32[]', space=smem, size = 0x4, offset = 0x4, fixed_abs, tag = 'smem constant byte address 0x4 - core index']
  #allocation1 [shape = 'u32[144,128]{1,0:T(1,128)}', space=vmem, size = 0x12000, scoped, tag = 'internal scratch']
  #allocation2 [shape = 'bf16[384,64]{1,0:T(16,128)(2,1)}', space=vmem, size = 0x18000, scoped, tag = 'scratch operand']
  #allocation3 [shape = 'f32[384,32]{1,0:T(8,128)}', space=vmem, size = 0x30000, scoped, tag = 'scratch operand']
  #allocation4 [shape = 'f32[384,64]{1,0:T(8,128)}', space=vmem, size = 0x30000, scoped, tag = 'scratch operand']
  #allocation5 [shape = 'f32[384,64]{1,0:T(8,128)}', space=vmem, size = 0x30000, scoped, tag = 'scratch operand']
  #allocation6 [shape = 'f32[8,64]{1,0:T(8,128)}', space=vmem, size = 0x1000, scoped, tag = 'scratch operand']
  %s0 = inlined_call_operand.vmem [shape: u8[384,64], index: 0, kind: input, shape index: {}]
  %s1 = inlined_call_operand.vmem [shape: bf16[4,64,32], index: 1, kind: input, shape index: {}]
  %s2 = inlined_call_operand.vmem [shape: f32[1,32], index: 2, kind: input, shape index: {}]
  %s3 = inlined_call_operand.vmem [shape: bf16[16,32,64], index: 3, kind: input, shape index: {}]
  %s4 = inlined_call_operand.vmem [shape: f32[1,64], index: 4, kind: input, shape index: {}]
  %s5 = inlined_call_operand.vmem [shape: bf16[9,64,64], index: 5, kind: input, shape index: {}]
  %s6 = inlined_call_operand.vmem [shape: f32[1,64], index: 6, kind: input, shape index: {}]
  %s7 = inlined_call_operand.vmem [shape: bf16[256,32], index: 7, kind: input, shape index: {}]
  %s8 = inlined_call_operand.vmem [shape: f32[1,32], index: 8, kind: input, shape index: {}]
  %s9 = inlined_call_operand.vmem [shape: bf16[32,4], index: 9, kind: input, shape index: {}]
  %s10 = inlined_call_operand.vmem [shape: f32[1,4], index: 10, kind: input, shape index: {}]
  %s11 = inlined_call_operand.hbm [shape: f32[1,2,4], index: 11, kind: output, shape index: {}]
  %s12 = sld [smem:[#allocation0]]
  $region54: #{nature_cnn_forward.1} parent=0
    _
  %s14 = ssub.s32 1, %s12
  %s15 = scalar_select 0, %s14, %s12
  $region1: #{nature_cnn_forward.1} parent=0
    #allocation7 [shape = 'u8[1024]{0}', space=vmem, size = 0x400, scoped, tag = 'output window, operand 0, single buffered']
    #allocation8 [shape = 's32[1]{0}', space=sflag, size = 0x4, scoped, tag = 'scoped memory for nature_cnn_forward.1']
    %16 = vsyncpa [#allocation8], 0
    // Predicated region
    $region2: #{nature_cnn_forward.1} parent=1 // pred_check
      _
    $region3: #{nature_cnn_forward.1} parent=1 // pred_check_branch
      %18 = sbr.rel (0) target = $region5
    $region4: #{nature_cnn_forward.1} parent=1 // pred_region
      _
    $region5: #{nature_cnn_forward.1} parent=1 // pred_fallthru
      _
    // Predicated region
    $region6: #{nature_cnn_forward.1} parent=1 // pred_check
      _
    $region7: #{nature_cnn_forward.1} parent=1 // pred_check_branch
      %20 = sbr.rel (0) target = $region9
    $region8: #{nature_cnn_forward.1} parent=1 // pred_region
      _
    $region9: #{nature_cnn_forward.1} parent=1 // pred_fallthru
      _
    // Predicated region
    $region10: #{nature_cnn_forward.1} parent=1 // pred_check
      _
    $region11: #{nature_cnn_forward.1} parent=1 // pred_check_branch
      %22 = sbr.rel (0) target = $region13
    $region12: #{nature_cnn_forward.1} parent=1 // pred_region
      _
    $region13: #{nature_cnn_forward.1} parent=1 // pred_fallthru
      _
    // Predicated region
    $region14: #{nature_cnn_forward.1} parent=1 // pred_check
      _
    $region15: #{nature_cnn_forward.1} parent=1 // pred_check_branch
      %24 = sbr.rel (0) target = $region17
    $region16: #{nature_cnn_forward.1} parent=1 // pred_region
      _
    $region17: #{nature_cnn_forward.1} parent=1 // pred_fallthru
      _
    // Predicated region
    $region18: #{nature_cnn_forward.1} parent=1 // pred_check
      _
    $region19: #{nature_cnn_forward.1} parent=1 // pred_check_branch
      %26 = sbr.rel (0) target = $region21
    $region20: #{nature_cnn_forward.1} parent=1 // pred_region
      _
    $region21: #{nature_cnn_forward.1} parent=1 // pred_fallthru
      _
    // Predicated region
    $region22: #{nature_cnn_forward.1} parent=1 // pred_check
      _
    $region23: #{nature_cnn_forward.1} parent=1 // pred_check_branch
      %28 = sbr.rel (0) target = $region25
    $region24: #{nature_cnn_forward.1} parent=1 // pred_region
      _
    $region25: #{nature_cnn_forward.1} parent=1 // pred_fallthru
      _
    // Predicated region
    $region26: #{nature_cnn_forward.1} parent=1 // pred_check
      _
    $region27: #{nature_cnn_forward.1} parent=1 // pred_check_branch
      %30 = sbr.rel (0) target = $region29
    $region28: #{nature_cnn_forward.1} parent=1 // pred_region
      _
    $region29: #{nature_cnn_forward.1} parent=1 // pred_fallthru
      _
    // Predicated region
    $region30: #{nature_cnn_forward.1} parent=1 // pred_check
      _
    $region31: #{nature_cnn_forward.1} parent=1 // pred_check_branch
      %32 = sbr.rel (0) target = $region33
    $region32: #{nature_cnn_forward.1} parent=1 // pred_region
      _
    $region33: #{nature_cnn_forward.1} parent=1 // pred_fallthru
      _
    // Predicated region
    $region34: #{nature_cnn_forward.1} parent=1 // pred_check
      _
    $region35: #{nature_cnn_forward.1} parent=1 // pred_check_branch
      %34 = sbr.rel (0) target = $region37
    $region36: #{nature_cnn_forward.1} parent=1 // pred_region
      _
    $region37: #{nature_cnn_forward.1} parent=1 // pred_fallthru
      _
    // Predicated region
    $region38: #{nature_cnn_forward.1} parent=1 // pred_check
      _
    $region39: #{nature_cnn_forward.1} parent=1 // pred_check_branch
      %36 = sbr.rel (0) target = $region41
    $region40: #{nature_cnn_forward.1} parent=1 // pred_region
      _
    $region41: #{nature_cnn_forward.1} parent=1 // pred_fallthru
      _
    // Predicated region
    $region42: #{nature_cnn_forward.1} parent=1 // pred_check
      _
    $region43: #{nature_cnn_forward.1} parent=1 // pred_check_branch
      %38 = sbr.rel (0) target = $region45
    $region44: #{nature_cnn_forward.1} parent=1 // pred_region
      _
    $region45: #{nature_cnn_forward.1} parent=1 // pred_fallthru
      _
    %v40 = vld [vmem:[%s0] sm:$0xff]
    %v41 = vld [vmem:[%s0 + $0x8] sm:$0xff]
    %v42 = vld [vmem:[%s0 + $0x10] sm:$0xff]
    %v43 = vld [vmem:[%s0 + $0x18] sm:$0xff]
    %v44 = vld [vmem:[%s0 + $0x20] sm:$0xff]
    %v45 = vld [vmem:[%s0 + $0x28] sm:$0xff]
    %v46 = vld [vmem:[%s0 + $0x30] sm:$0xff]
    %v47 = vld [vmem:[%s0 + $0x38] sm:$0xff]
    %v48 = vld [vmem:[%s0 + $0x40] sm:$0xff]
    %v49 = vld [vmem:[%s0 + $0x48] sm:$0xff]
    %v50 = vld [vmem:[%s0 + $0x50] sm:$0xff]
    %v51 = vld [vmem:[%s0 + $0x58] sm:$0xff]
    %v52 = vunpack.c.l.u8.bf16 %v40
    %v53 = vunpack.c.h.u8.bf16 %v40
    %v54 = vunpack.c.l.u8.bf16 %v41
    %v55 = vunpack.c.h.u8.bf16 %v41
    %v56 = vunpack.c.l.u8.bf16 %v42
    %v57 = vunpack.c.h.u8.bf16 %v42
    %v58 = vunpack.c.l.u8.bf16 %v43
    %v59 = vunpack.c.h.u8.bf16 %v43
    %v60 = vunpack.c.l.u8.bf16 %v44
    %v61 = vunpack.c.h.u8.bf16 %v44
    %v62 = vunpack.c.l.u8.bf16 %v45
    %v63 = vunpack.c.h.u8.bf16 %v45
    %v64 = vunpack.c.l.u8.bf16 %v46
    %v65 = vunpack.c.h.u8.bf16 %v46
    %v66 = vunpack.c.l.u8.bf16 %v47
    %v67 = vunpack.c.h.u8.bf16 %v47
    %v68 = vunpack.c.l.u8.bf16 %v48
    %v69 = vunpack.c.h.u8.bf16 %v48
    %v70 = vunpack.c.l.u8.bf16 %v49
    %v71 = vunpack.c.h.u8.bf16 %v49
    %v72 = vunpack.c.l.u8.bf16 %v50
    %v73 = vunpack.c.h.u8.bf16 %v50
    %v74 = vunpack.c.l.u8.bf16 %v51
    %v75 = vunpack.c.h.u8.bf16 %v51
    %vm76 = vcmask 523264
    %77 = vst.msk [vmem:[#allocation2] sm:$0xff] %vm76, %v52
    %78 = vst.msk [vmem:[#allocation2 + $0x8] sm:$0xff] %vm76, %v53
    %79 = vst.msk [vmem:[#allocation2 + $0x10] sm:$0xff] %vm76, %v54
    %80 = vst.msk [vmem:[#allocation2 + $0x18] sm:$0xff] %vm76, %v55
    %81 = vst.msk [vmem:[#allocation2 + $0x20] sm:$0xff] %vm76, %v56
    %82 = vst.msk [vmem:[#allocation2 + $0x28] sm:$0xff] %vm76, %v57
    %83 = vst.msk [vmem:[#allocation2 + $0x30] sm:$0xff] %vm76, %v58
    %84 = vst.msk [vmem:[#allocation2 + $0x38] sm:$0xff] %vm76, %v59
    %85 = vst.msk [vmem:[#allocation2 + $0x40] sm:$0xff] %vm76, %v60
    %86 = vst.msk [vmem:[#allocation2 + $0x48] sm:$0xff] %vm76, %v61
    %87 = vst.msk [vmem:[#allocation2 + $0x50] sm:$0xff] %vm76, %v62
    %88 = vst.msk [vmem:[#allocation2 + $0x58] sm:$0xff] %vm76, %v63
    %89 = vst.msk [vmem:[#allocation2 + $0x60] sm:$0xff] %vm76, %v64
    %90 = vst.msk [vmem:[#allocation2 + $0x68] sm:$0xff] %vm76, %v65
    %91 = vst.msk [vmem:[#allocation2 + $0x70] sm:$0xff] %vm76, %v66
    %92 = vst.msk [vmem:[#allocation2 + $0x78] sm:$0xff] %vm76, %v67
    %93 = vst.msk [vmem:[#allocation2 + $0x80] sm:$0xff] %vm76, %v68
    %94 = vst.msk [vmem:[#allocation2 + $0x88] sm:$0xff] %vm76, %v69
    %95 = vst.msk [vmem:[#allocation2 + $0x90] sm:$0xff] %vm76, %v70
    %96 = vst.msk [vmem:[#allocation2 + $0x98] sm:$0xff] %vm76, %v71
    %97 = vst.msk [vmem:[#allocation2 + $0xa0] sm:$0xff] %vm76, %v72
    %98 = vst.msk [vmem:[#allocation2 + $0xa8] sm:$0xff] %vm76, %v73
    %99 = vst.msk [vmem:[#allocation2 + $0xb0] sm:$0xff] %vm76, %v74
    %100 = vst.msk [vmem:[#allocation2 + $0xb8] sm:$0xff] %vm76, %v75
    %v101 = vld [vmem:[#allocation2] sm:$0xff]
    %v102 = vld [vmem:[#allocation2 + $0x8] sm:$0xff]
    %v103 = vld [vmem:[#allocation2 + $0x10] sm:$0xff]
    %v104 = vld [vmem:[#allocation2 + $0x18] sm:$0xff]
    %v105 = vld [vmem:[#allocation2 + $0x20] sm:$0xff]
    %v106 = vld [vmem:[#allocation2 + $0x28] sm:$0xff]
    %v107 = vld [vmem:[#allocation2 + $0x30] sm:$0xff]
    %v108 = vld [vmem:[#allocation2 + $0x38] sm:$0xff]
    %v109 = vld [vmem:[#allocation2 + $0x40] sm:$0xff]
    %v110 = vld [vmem:[#allocation2 + $0x48] sm:$0xff]
    %v111 = vld [vmem:[#allocation2 + $0x50] sm:$0xff]
    %v112 = vld [vmem:[#allocation2 + $0x58] sm:$0xff]
    %v113 = vld [vmem:[#allocation2 + $0x60] sm:$0xff]
    %v114 = vld [vmem:[#allocation2 + $0x68] sm:$0xff]
    %v115 = vld [vmem:[#allocation2 + $0x70] sm:$0xff]
    %v116 = vld [vmem:[#allocation2 + $0x78] sm:$0xff]
    %v117 = vld [vmem:[#allocation2 + $0x80] sm:$0xff]
    %v118 = vld [vmem:[#allocation2 + $0x88] sm:$0xff]
    %v119 = vld [vmem:[#allocation2 + $0x90] sm:$0xff]
    %v120 = vld [vmem:[%s1] sm:$0xf]
    %v121 = vld [vmem:[%s1 + $0x4] sm:$0xf]
    %v122 = vld [vmem:[%s1 + $0x8] sm:$0xf]
    %v123 = vld [vmem:[%s1 + $0xc] sm:$0xf]
    %v124 = vld [vmem:[%s1 + $0x10] sm:$0xf]
    %v125 = vld [vmem:[%s1 + $0x14] sm:$0xf]
    %v126 = vld [vmem:[%s1 + $0x18] sm:$0xf]
    %v127 = vld [vmem:[%s1 + $0x1c] sm:$0xf]
    %v128 = vld [vmem:[#allocation2 + $0x98] sm:$0x1]
    %s129 = scalar_lea.vmem %s1, 32
    %v130 = vld [vmem:[%s129] sm:$0xf]
    %v131 = vld [vmem:[%s129 + $0x4] sm:$0xf]
    %v132 = vld [vmem:[%s129 + $0x8] sm:$0xf]
    %v133 = vld [vmem:[%s129 + $0xc] sm:$0xf]
    %v134 = vld [vmem:[%s129 + $0x10] sm:$0xf]
    %v135 = vld [vmem:[%s129 + $0x14] sm:$0xf]
    %v136 = vld [vmem:[%s129 + $0x18] sm:$0xf]
    %v137 = vld [vmem:[%s129 + $0x1c] sm:$0xf]
    %vm138 = vsmask.f32 7424
    %v140 = vshrl.u32 %v101, 16
    %v142 = vshll.u32 %v101, 16
    %v144 = vrot.slane %v142, 1
    %v145 = vor.u32 %v140, %v144
    %v147 = vshll.u32 %v102, 16
    %v149 = vrot.slane %v147, 1
    %v150 = vsel %vm138, %v145, %v149
    %v151 = vshrl.u32 %v102, 16
    %v153 = vor.u32 %v151, %v149
    %v155 = vshll.u32 %v103, 16
    %v157 = vrot.slane %v155, 1
    %v158 = vsel %vm138, %v153, %v157
    %v159 = vshrl.u32 %v103, 16
    %v161 = vor.u32 %v159, %v157
    %v163 = vshll.u32 %v104, 16
    %v165 = vrot.slane %v163, 1
    %v166 = vsel %vm138, %v161, %v165
    %v167 = vshrl.u32 %v104, 16
    %v169 = vor.u32 %v167, %v165
    %v171 = vshll.u32 %v105, 16
    %v173 = vrot.slane %v171, 1
    %v174 = vsel %vm138, %v169, %v173
    %v175 = vshrl.u32 %v105, 16
    %v177 = vor.u32 %v175, %v173
    %v179 = vshll.u32 %v106, 16
    %v181 = vrot.slane %v179, 1
    %v182 = vsel %vm138, %v177, %v181
    %v183 = vshrl.u32 %v106, 16
    %v185 = vor.u32 %v183, %v181
    %v187 = vshll.u32 %v107, 16
    %v189 = vrot.slane %v187, 1
    %v190 = vsel %vm138, %v185, %v189
    %v191 = vshrl.u32 %v107, 16
    %v193 = vor.u32 %v191, %v189
    %v195 = vshll.u32 %v108, 16
    %v197 = vrot.slane %v195, 1
    %v198 = vsel %vm138, %v193, %v197
    %v199 = vshrl.u32 %v108, 16
    %v201 = vor.u32 %v199, %v197
    %v203 = vshll.u32 %v109, 16
    %v205 = vrot.slane %v203, 1
    %v206 = vsel %vm138, %v201, %v205
    %v207 = vshrl.u32 %v109, 16
    %v209 = vor.u32 %v207, %v205
    %v211 = vshll.u32 %v110, 16
    %v213 = vrot.slane %v211, 1
    %v214 = vsel %vm138, %v209, %v213
    %v215 = vshrl.u32 %v110, 16
    %v217 = vor.u32 %v215, %v213
    %v219 = vshll.u32 %v111, 16
    %v221 = vrot.slane %v219, 1
    %v222 = vsel %vm138, %v217, %v221
    %v223 = vshrl.u32 %v111, 16
    %v225 = vor.u32 %v223, %v221
    %v227 = vshll.u32 %v112, 16
    %v229 = vrot.slane %v227, 1
    %v230 = vsel %vm138, %v225, %v229
    %v231 = vshrl.u32 %v112, 16
    %v233 = vor.u32 %v231, %v229
    %v235 = vshll.u32 %v113, 16
    %v237 = vrot.slane %v235, 1
    %v238 = vsel %vm138, %v233, %v237
    %v239 = vshrl.u32 %v113, 16
    %v241 = vor.u32 %v239, %v237
    %v243 = vshll.u32 %v114, 16
    %v245 = vrot.slane %v243, 1
    %v246 = vsel %vm138, %v241, %v245
    %v247 = vshrl.u32 %v114, 16
    %v249 = vor.u32 %v247, %v245
    %v251 = vshll.u32 %v115, 16
    %v253 = vrot.slane %v251, 1
    %v254 = vsel %vm138, %v249, %v253
    %v255 = vshrl.u32 %v115, 16
    %v257 = vor.u32 %v255, %v253
    %v259 = vshll.u32 %v116, 16
    %v261 = vrot.slane %v259, 1
    %v262 = vsel %vm138, %v257, %v261
    %v263 = vshrl.u32 %v116, 16
    %v265 = vor.u32 %v263, %v261
    %v267 = vshll.u32 %v117, 16
    %v269 = vrot.slane %v267, 1
    %v270 = vsel %vm138, %v265, %v269
    %v271 = vshrl.u32 %v117, 16
    %v273 = vor.u32 %v271, %v269
    %v275 = vshll.u32 %v118, 16
    %v277 = vrot.slane %v275, 1
    %v278 = vsel %vm138, %v273, %v277
    %v279 = vshrl.u32 %v118, 16
    %v281 = vor.u32 %v279, %v277
    %v283 = vshll.u32 %v119, 16
    %v285 = vrot.slane %v283, 1
    %v286 = vsel %vm138, %v281, %v285
    %v287 = vshrl.u32 %v119, 16
    %v289 = vor.u32 %v287, %v285
    %v291 = vshll.u32 %v128, 16
    %v293 = vrot.slane %v291, 1
    %v294 = vsel %vm138, %v289, %v293
    %v303 = vunpack.c.l.b16 %v130
    %v304 = vunpack.c.l.b16 %v131
    %v305 = vunpack.c.l.b16 %v132
    %v306 = vunpack.c.l.b16 %v133
    %v307 = vunpack.c.l.b16 %v134
    %v308 = vunpack.c.l.b16 %v135
    %v309 = vunpack.c.l.b16 %v136
    %v310 = vunpack.c.l.b16 %v137
    %v311 = vpack.c.b16 %v304, %v303
    %v312 = vpack.c.b16 %v306, %v305
    %v313 = vpack.c.b16 %v308, %v307
    %v314 = vpack.c.b16 %v310, %v309
    %v320 = vsel %vm76, %v150, 0
    %v323 = vsel %vm76, %v158, 0
    %v326 = vsel %vm76, %v166, 0
    %v329 = vsel %vm76, %v174, 0
    %v332 = vsel %vm76, %v182, 0
    %v335 = vsel %vm76, %v190, 0
    %v338 = vsel %vm76, %v198, 0
    %v341 = vsel %vm76, %v206, 0
    %v344 = vsel %vm76, %v214, 0
    %v347 = vsel %vm76, %v222, 0
    %v350 = vsel %vm76, %v230, 0
    %v353 = vsel %vm76, %v238, 0
    %v356 = vsel %vm76, %v246, 0
    %v359 = vsel %vm76, %v254, 0
    %v362 = vsel %vm76, %v262, 0
    %v365 = vsel %vm76, %v270, 0
    %v368 = vsel %vm76, %v278, 0
    %v371 = vsel %vm76, %v286, 0
    %v374 = vsel %vm76, %v294, 0
    %376 = vmatprep.subr.bf16.mxu0 0
    %377 = vmatpush1.bf16.msra.mxu0 %v311
    %378 = vmatprep.subr.bf16.mxu0 0
    %379 = vmatpush1.bf16.msra.mxu0 %v312
    %380 = vmatprep.subr.bf16.mxu0 0
    %381 = vmatpush1.bf16.msra.mxu0 %v313
    %382 = vmatprep.subr.bf16.mxu0 0
    %383 = vmatpush1.bf16.msra.mxu0 %v314
    %384 = vmatprep.subr.bf16.mxu0 0
    %385 = vmatpush1.bf16.msra.mxu0 0
    %386 = vmatprep.subr.bf16.mxu0 0
    %387 = vmatpush1.bf16.msra.mxu0 0
    %388 = vmatprep.subr.bf16.mxu0 0
    %389 = vmatpush1.bf16.msra.mxu0 0
    %390 = vmatprep.subr.bf16.mxu0 0
    %391 = vmatpush1.bf16.msra.mxu0 0
    %392 = vmatprep.subr.bf16.mxu0 0
    %393 = vmatpush1.bf16.msra.mxu0 0
    %394 = vmatprep.subr.bf16.mxu0 0
    %395 = vmatpush1.bf16.msra.mxu0 0
    %396 = vmatprep.subr.bf16.mxu0 0
    %397 = vmatpush1.bf16.msra.mxu0 0
    %398 = vmatprep.subr.bf16.mxu0 0
    %399 = vmatpush1.bf16.msra.mxu0 0
    %400 = vmatprep.subr.bf16.mxu0 0
    %401 = vmatpush1.bf16.msra.mxu0 0
    %402 = vmatprep.subr.bf16.mxu0 0
    %403 = vmatpush1.bf16.msra.mxu0 0
    %404 = vmatprep.subr.bf16.mxu0 0
    %405 = vmatpush1.bf16.msra.mxu0 0
    %406 = vmatprep.subr.bf16.mxu0 0
    %407 = vmatpush1.bf16.msra.mxu0 0
    %408 = vmatprep.mubr.bf16.mxu0 0
    %409 = vmatmul.mubr.bf16.gmra.mrb[0].mxu0 %v320
    %v410 = vpop.f32.mrb[0].mxu0
    %v411 = vadd.f32 0.0, %v410
    %v412 = vpop.f32.mrb[0].mxu0
    %v413 = vpop.f32.mrb[0].mxu0
    %v414 = vadd.f32 0.0, %v413
    %v415 = vpop.f32.mrb[0].mxu0
    %416 = vmatprep.mubr.bf16.mxu0 0
    %417 = vmatmul.mubr.bf16.gmra.mrb[0].mxu0 %v323
    %v418 = vpop.f32.mrb[0].mxu0
    %v419 = vadd.f32 0.0, %v418
    %v420 = vpop.f32.mrb[0].mxu0
    %v421 = vpop.f32.mrb[0].mxu0
    %v422 = vadd.f32 0.0, %v421
    %v423 = vpop.f32.mrb[0].mxu0
    %424 = vmatprep.mubr.bf16.mxu0 0
    %425 = vmatmul.mubr.bf16.gmra.mrb[0].mxu0 %v326
    %v426 = vpop.f32.mrb[0].mxu0
    %v427 = vadd.f32 0.0, %v426
    %v428 = vpop.f32.mrb[0].mxu0
    %v429 = vpop.f32.mrb[0].mxu0
    %v430 = vadd.f32 0.0, %v429
    %v431 = vpop.f32.mrb[0].mxu0
    %432 = vmatprep.mubr.bf16.mxu0 0
    %433 = vmatmul.mubr.bf16.gmra.mrb[0].mxu0 %v329
    %v434 = vpop.f32.mrb[0].mxu0
    %v435 = vadd.f32 0.0, %v434
    %v436 = vpop.f32.mrb[0].mxu0
    %v437 = vpop.f32.mrb[0].mxu0
    %v438 = vadd.f32 0.0, %v437
    %v439 = vpop.f32.mrb[0].mxu0
    %440 = vmatprep.mubr.bf16.mxu0 0
    %441 = vmatmul.mubr.bf16.gmra.mrb[0].mxu0 %v332
    %v442 = vpop.f32.mrb[0].mxu0
    %v443 = vadd.f32 0.0, %v442
    %v444 = vpop.f32.mrb[0].mxu0
    %v445 = vpop.f32.mrb[0].mxu0
    %v446 = vadd.f32 0.0, %v445
    %v447 = vpop.f32.mrb[0].mxu0
    %448 = vmatprep.mubr.bf16.mxu0 0
    %449 = vmatmul.mubr.bf16.gmra.mrb[0].mxu0 %v335
    %v450 = vpop.f32.mrb[0].mxu0
    %v451 = vadd.f32 0.0, %v450
    %v452 = vpop.f32.mrb[0].mxu0
    %v453 = vpop.f32.mrb[0].mxu0
    %v454 = vadd.f32 0.0, %v453
    %v455 = vpop.f32.mrb[0].mxu0
    %456 = vmatprep.mubr.bf16.mxu0 0
    %457 = vmatmul.mubr.bf16.gmra.mrb[0].mxu0 %v338
    %v458 = vpop.f32.mrb[0].mxu0
    %v459 = vadd.f32 0.0, %v458
    %v460 = vpop.f32.mrb[0].mxu0
    %v461 = vpop.f32.mrb[0].mxu0
    %v462 = vadd.f32 0.0, %v461
    %v463 = vpop.f32.mrb[0].mxu0
    %464 = vmatprep.mubr.bf16.mxu0 0
    %465 = vmatmul.mubr.bf16.gmra.mrb[0].mxu0 %v341
    %v466 = vpop.f32.mrb[0].mxu0
    %v467 = vadd.f32 0.0, %v466
    %v468 = vpop.f32.mrb[0].mxu0
    %v469 = vpop.f32.mrb[0].mxu0
    %v470 = vadd.f32 0.0, %v469
    %v471 = vpop.f32.mrb[0].mxu0
    %472 = vmatprep.mubr.bf16.mxu0 0
    %473 = vmatmul.mubr.bf16.gmra.mrb[0].mxu0 %v344
    %v474 = vpop.f32.mrb[0].mxu0
    %v475 = vadd.f32 0.0, %v474
    %v476 = vpop.f32.mrb[0].mxu0
    %v477 = vpop.f32.mrb[0].mxu0
    %v478 = vadd.f32 0.0, %v477
    %v479 = vpop.f32.mrb[0].mxu0
    %480 = vmatprep.mubr.bf16.mxu0 0
    %481 = vmatmul.mubr.bf16.gmra.mrb[0].mxu0 %v347
    %v482 = vpop.f32.mrb[0].mxu0
    %v483 = vadd.f32 0.0, %v482
    %v484 = vpop.f32.mrb[0].mxu0
    %v485 = vpop.f32.mrb[0].mxu0
    %v486 = vadd.f32 0.0, %v485
    %v487 = vpop.f32.mrb[0].mxu0
    %488 = vmatprep.mubr.bf16.mxu0 0
    %489 = vmatmul.mubr.bf16.gmra.mrb[0].mxu0 %v350
    %v490 = vpop.f32.mrb[0].mxu0
    %v491 = vadd.f32 0.0, %v490
    %v492 = vpop.f32.mrb[0].mxu0
    %v493 = vpop.f32.mrb[0].mxu0
    %v494 = vadd.f32 0.0, %v493
    %v495 = vpop.f32.mrb[0].mxu0
    %496 = vmatprep.mubr.bf16.mxu0 0
    %497 = vmatmul.mubr.bf16.gmra.mrb[0].mxu0 %v353
    %v498 = vpop.f32.mrb[0].mxu0
    %v499 = vadd.f32 0.0, %v498
    %v500 = vpop.f32.mrb[0].mxu0
    %v501 = vpop.f32.mrb[0].mxu0
    %v502 = vadd.f32 0.0, %v501
    %v503 = vpop.f32.mrb[0].mxu0
    %504 = vmatprep.mubr.bf16.mxu0 0
    %505 = vmatmul.mubr.bf16.gmra.mrb[0].mxu0 %v356
    %v506 = vpop.f32.mrb[0].mxu0
    %v507 = vadd.f32 0.0, %v506
    %v508 = vpop.f32.mrb[0].mxu0
    %v509 = vpop.f32.mrb[0].mxu0
    %v510 = vadd.f32 0.0, %v509
    %v511 = vpop.f32.mrb[0].mxu0
    %512 = vmatprep.mubr.bf16.mxu0 0
    %513 = vmatmul.mubr.bf16.gmra.mrb[0].mxu0 %v359
    %v514 = vpop.f32.mrb[0].mxu0
    %v515 = vadd.f32 0.0, %v514
    %v516 = vpop.f32.mrb[0].mxu0
    %v517 = vpop.f32.mrb[0].mxu0
    %v518 = vadd.f32 0.0, %v517
    %v519 = vpop.f32.mrb[0].mxu0
    %520 = vmatprep.mubr.bf16.mxu0 0
    %521 = vmatmul.mubr.bf16.gmra.mrb[0].mxu0 %v362
    %v522 = vpop.f32.mrb[0].mxu0
    %v523 = vadd.f32 0.0, %v522
    %v524 = vpop.f32.mrb[0].mxu0
    %v525 = vpop.f32.mrb[0].mxu0
    %v526 = vadd.f32 0.0, %v525
    %v527 = vpop.f32.mrb[0].mxu0
    %528 = vmatprep.mubr.bf16.mxu0 0
    %529 = vmatmul.mubr.bf16.gmra.mrb[0].mxu0 %v365
    %v530 = vpop.f32.mrb[0].mxu0
    %v531 = vadd.f32 0.0, %v530
    %v532 = vpop.f32.mrb[0].mxu0
    %v533 = vpop.f32.mrb[0].mxu0
    %v534 = vadd.f32 0.0, %v533
    %v535 = vpop.f32.mrb[0].mxu0
    %536 = vmatprep.mubr.bf16.mxu0 0
    %537 = vmatmul.mubr.bf16.gmra.mrb[0].mxu0 %v368
    %v538 = vpop.f32.mrb[0].mxu0
    %v539 = vadd.f32 0.0, %v538
    %v540 = vpop.f32.mrb[0].mxu0
    %v541 = vpop.f32.mrb[0].mxu0
    %v542 = vadd.f32 0.0, %v541
    %v543 = vpop.f32.mrb[0].mxu0
    %544 = vmatprep.mubr.bf16.mxu0 0
    %545 = vmatmul.mubr.bf16.gmra.mrb[0].mxu0 %v371
    %v546 = vpop.f32.mrb[0].mxu0
    %v547 = vadd.f32 0.0, %v546
    %v548 = vpop.f32.mrb[0].mxu0
    %v549 = vpop.f32.mrb[0].mxu0
    %v550 = vadd.f32 0.0, %v549
    %v551 = vpop.f32.mrb[0].mxu0
    %552 = vmatprep.mubr.bf16.mxu0 0
    %553 = vmatmul.mubr.bf16.gmra.mrb[0].mxu0 %v374
    %v554 = vpop.f32.mrb[0].mxu0
    %v555 = vadd.f32 0.0, %v554
    %v556 = vpop.f32.mrb[0].mxu0
    %v557 = vpop.f32.mrb[0].mxu0
    %v558 = vadd.f32 0.0, %v557
    %v559 = vpop.f32.mrb[0].mxu0
    %560 = vdwg.mxu0
    %v569 = vunpack.c.l.b16 %v120
    %v570 = vunpack.c.l.b16 %v121
    %v571 = vunpack.c.l.b16 %v122
    %v572 = vunpack.c.l.b16 %v123
    %v573 = vunpack.c.l.b16 %v124
    %v574 = vunpack.c.l.b16 %v125
    %v575 = vunpack.c.l.b16 %v126
    %v576 = vunpack.c.l.b16 %v127
    %v577 = vpack.c.b16 %v570, %v569
    %v578 = vpack.c.b16 %v572, %v571
    %v579 = vpack.c.b16 %v574, %v573
    %v580 = vpack.c.b16 %v576, %v575
    %v585 = vsel %vm76, %v101, 0
    %v587 = vsel %vm76, %v102, 0
    %v589 = vsel %vm76, %v103, 0
    %v591 = vsel %vm76, %v104, 0
    %v593 = vsel %vm76, %v105, 0
    %v595 = vsel %vm76, %v106, 0
    %v597 = vsel %vm76, %v107, 0
    %v599 = vsel %vm76, %v108, 0
    %v601 = vsel %vm76, %v109, 0
    %v603 = vsel %vm76, %v110, 0
    %v605 = vsel %vm76, %v111, 0
    %v607 = vsel %vm76, %v112, 0
    %v609 = vsel %vm76, %v113, 0
    %v611 = vsel %vm76, %v114, 0
    %v613 = vsel %vm76, %v115, 0
    %v615 = vsel %vm76, %v116, 0
    %v617 = vsel %vm76, %v117, 0
    %v619 = vsel %vm76, %v118, 0
    %v621 = vsel %vm76, %v119, 0
    %623 = vmatprep.subr.bf16.mxu0 0
    %624 = vmatpush1.bf16.msra.mxu0 %v577
    %625 = vmatprep.subr.bf16.mxu0 0
    %626 = vmatpush1.bf16.msra.mxu0 %v578
    %627 = vmatprep.subr.bf16.mxu0 0
    %628 = vmatpush1.bf16.msra.mxu0 %v579
    %629 = vmatprep.subr.bf16.mxu0 0
    %630 = vmatpush1.bf16.msra.mxu0 %v580
    %631 = vmatprep.subr.bf16.mxu0 0
    %632 = vmatpush1.bf16.msra.mxu0 0
    %633 = vmatprep.subr.bf16.mxu0 0
    %634 = vmatpush1.bf16.msra.mxu0 0
    %635 = vmatprep.subr.bf16.mxu0 0
    %636 = vmatpush1.bf16.msra.mxu0 0
    %637 = vmatprep.subr.bf16.mxu0 0
    %638 = vmatpush1.bf16.msra.mxu0 0
    %639 = vmatprep.subr.bf16.mxu0 0
    %640 = vmatpush1.bf16.msra.mxu0 0
    %641 = vmatprep.subr.bf16.mxu0 0
    %642 = vmatpush1.bf16.msra.mxu0 0
    %643 = vmatprep.subr.bf16.mxu0 0
    %644 = vmatpush1.bf16.msra.mxu0 0
    %645 = vmatprep.subr.bf16.mxu0 0
    %646 = vmatpush1.bf16.msra.mxu0 0
    %647 = vmatprep.subr.bf16.mxu0 0
    %648 = vmatpush1.bf16.msra.mxu0 0
    %649 = vmatprep.subr.bf16.mxu0 0
    %650 = vmatpush1.bf16.msra.mxu0 0
    %651 = vmatprep.subr.bf16.mxu0 0
    %652 = vmatpush1.bf16.msra.mxu0 0
    %653 = vmatprep.subr.bf16.mxu0 0
    %654 = vmatpush1.bf16.msra.mxu0 0
    %655 = vmatprep.mubr.bf16.mxu0 0
    %656 = vmatmul.mubr.bf16.gmra.mrb[0].mxu0 %v585
    %v657 = vpop.f32.mrb[0].mxu0
    %v658 = vadd.f32 %v411, %v657
    %v659 = vpop.f32.mrb[0].mxu0
    %v660 = vpop.f32.mrb[0].mxu0
    %v661 = vadd.f32 %v414, %v660
    %v662 = vpop.f32.mrb[0].mxu0
    %663 = vmatprep.mubr.bf16.mxu0 0
    %664 = vmatmul.mubr.bf16.gmra.mrb[0].mxu0 %v587
    %v665 = vpop.f32.mrb[0].mxu0
    %v666 = vadd.f32 %v419, %v665
    %v667 = vpop.f32.mrb[0].mxu0
    %v668 = vpop.f32.mrb[0].mxu0
    %v669 = vadd.f32 %v422, %v668
    %v670 = vpop.f32.mrb[0].mxu0
    %671 = vmatprep.mubr.bf16.mxu0 0
    %672 = vmatmul.mubr.bf16.gmra.mrb[0].mxu0 %v589
    %v673 = vpop.f32.mrb[0].mxu0
    %v674 = vadd.f32 %v427, %v673
    %v675 = vpop.f32.mrb[0].mxu0
    %v676 = vpop.f32.mrb[0].mxu0
    %v677 = vadd.f32 %v430, %v676
    %v678 = vpop.f32.mrb[0].mxu0
    %679 = vmatprep.mubr.bf16.mxu0 0
    %680 = vmatmul.mubr.bf16.gmra.mrb[0].mxu0 %v591
    %v681 = vpop.f32.mrb[0].mxu0
    %v682 = vadd.f32 %v435, %v681
    %v683 = vpop.f32.mrb[0].mxu0
    %v684 = vpop.f32.mrb[0].mxu0
    %v685 = vadd.f32 %v438, %v684
    %v686 = vpop.f32.mrb[0].mxu0
    %687 = vmatprep.mubr.bf16.mxu0 0
    %688 = vmatmul.mubr.bf16.gmra.mrb[0].mxu0 %v593
    %v689 = vpop.f32.mrb[0].mxu0
    %v690 = vadd.f32 %v443, %v689
    %v691 = vpop.f32.mrb[0].mxu0
    %v692 = vpop.f32.mrb[0].mxu0
    %v693 = vadd.f32 %v446, %v692
    %v694 = vpop.f32.mrb[0].mxu0
    %695 = vmatprep.mubr.bf16.mxu0 0
    %696 = vmatmul.mubr.bf16.gmra.mrb[0].mxu0 %v595
    %v697 = vpop.f32.mrb[0].mxu0
    %v698 = vadd.f32 %v451, %v697
    %v699 = vpop.f32.mrb[0].mxu0
    %v700 = vpop.f32.mrb[0].mxu0
    %v701 = vadd.f32 %v454, %v700
    %v702 = vpop.f32.mrb[0].mxu0
    %703 = vmatprep.mubr.bf16.mxu0 0
    %704 = vmatmul.mubr.bf16.gmra.mrb[0].mxu0 %v597
    %v705 = vpop.f32.mrb[0].mxu0
    %v706 = vadd.f32 %v459, %v705
    %v707 = vpop.f32.mrb[0].mxu0
    %v708 = vpop.f32.mrb[0].mxu0
    %v709 = vadd.f32 %v462, %v708
    %v710 = vpop.f32.mrb[0].mxu0
    %711 = vmatprep.mubr.bf16.mxu0 0
    %712 = vmatmul.mubr.bf16.gmra.mrb[0].mxu0 %v599
    %v713 = vpop.f32.mrb[0].mxu0
    %v714 = vadd.f32 %v467, %v713
    %v715 = vpop.f32.mrb[0].mxu0
    %v716 = vpop.f32.mrb[0].mxu0
    %v717 = vadd.f32 %v470, %v716
    %v718 = vpop.f32.mrb[0].mxu0
    %719 = vmatprep.mubr.bf16.mxu0 0
    %720 = vmatmul.mubr.bf16.gmra.mrb[0].mxu0 %v601
    %v721 = vpop.f32.mrb[0].mxu0
    %v722 = vadd.f32 %v475, %v721
    %v723 = vpop.f32.mrb[0].mxu0
    %v724 = vpop.f32.mrb[0].mxu0
    %v725 = vadd.f32 %v478, %v724
    %v726 = vpop.f32.mrb[0].mxu0
    %727 = vmatprep.mubr.bf16.mxu0 0
    %728 = vmatmul.mubr.bf16.gmra.mrb[0].mxu0 %v603
    %v729 = vpop.f32.mrb[0].mxu0
    %v730 = vadd.f32 %v483, %v729
    %v731 = vpop.f32.mrb[0].mxu0
    %v732 = vpop.f32.mrb[0].mxu0
    %v733 = vadd.f32 %v486, %v732
    %v734 = vpop.f32.mrb[0].mxu0
    %735 = vmatprep.mubr.bf16.mxu0 0
    %736 = vmatmul.mubr.bf16.gmra.mrb[0].mxu0 %v605
    %v737 = vpop.f32.mrb[0].mxu0
    %v738 = vadd.f32 %v491, %v737
    %v739 = vpop.f32.mrb[0].mxu0
    %v740 = vpop.f32.mrb[0].mxu0
    %v741 = vadd.f32 %v494, %v740
    %v742 = vpop.f32.mrb[0].mxu0
    %743 = vmatprep.mubr.bf16.mxu0 0
    %744 = vmatmul.mubr.bf16.gmra.mrb[0].mxu0 %v607
    %v745 = vpop.f32.mrb[0].mxu0
    %v746 = vadd.f32 %v499, %v745
    %v747 = vpop.f32.mrb[0].mxu0
    %v748 = vpop.f32.mrb[0].mxu0
    %v749 = vadd.f32 %v502, %v748
    %v750 = vpop.f32.mrb[0].mxu0
    %751 = vmatprep.mubr.bf16.mxu0 0
    %752 = vmatmul.mubr.bf16.gmra.mrb[0].mxu0 %v609
    %v753 = vpop.f32.mrb[0].mxu0
    %v754 = vadd.f32 %v507, %v753
    %v755 = vpop.f32.mrb[0].mxu0
    %v756 = vpop.f32.mrb[0].mxu0
    %v757 = vadd.f32 %v510, %v756
    %v758 = vpop.f32.mrb[0].mxu0
    %759 = vmatprep.mubr.bf16.mxu0 0
    %760 = vmatmul.mubr.bf16.gmra.mrb[0].mxu0 %v611
    %v761 = vpop.f32.mrb[0].mxu0
    %v762 = vadd.f32 %v515, %v761
    %v763 = vpop.f32.mrb[0].mxu0
    %v764 = vpop.f32.mrb[0].mxu0
    %v765 = vadd.f32 %v518, %v764
    %v766 = vpop.f32.mrb[0].mxu0
    %767 = vmatprep.mubr.bf16.mxu0 0
    %768 = vmatmul.mubr.bf16.gmra.mrb[0].mxu0 %v613
    %v769 = vpop.f32.mrb[0].mxu0
    %v770 = vadd.f32 %v523, %v769
    %v771 = vpop.f32.mrb[0].mxu0
    %v772 = vpop.f32.mrb[0].mxu0
    %v773 = vadd.f32 %v526, %v772
    %v774 = vpop.f32.mrb[0].mxu0
    %775 = vmatprep.mubr.bf16.mxu0 0
    %776 = vmatmul.mubr.bf16.gmra.mrb[0].mxu0 %v615
    %v777 = vpop.f32.mrb[0].mxu0
    %v778 = vadd.f32 %v531, %v777
    %v779 = vpop.f32.mrb[0].mxu0
    %v780 = vpop.f32.mrb[0].mxu0
    %v781 = vadd.f32 %v534, %v780
    %v782 = vpop.f32.mrb[0].mxu0
    %783 = vmatprep.mubr.bf16.mxu0 0
    %784 = vmatmul.mubr.bf16.gmra.mrb[0].mxu0 %v617
    %v785 = vpop.f32.mrb[0].mxu0
    %v786 = vadd.f32 %v539, %v785
    %v787 = vpop.f32.mrb[0].mxu0
    %v788 = vpop.f32.mrb[0].mxu0
    %v789 = vadd.f32 %v542, %v788
    %v790 = vpop.f32.mrb[0].mxu0
    %791 = vmatprep.mubr.bf16.mxu0 0
    %792 = vmatmul.mubr.bf16.gmra.mrb[0].mxu0 %v619
    %v793 = vpop.f32.mrb[0].mxu0
    %v794 = vadd.f32 %v547, %v793
    %v795 = vpop.f32.mrb[0].mxu0
    %v796 = vpop.f32.mrb[0].mxu0
    %v797 = vadd.f32 %v550, %v796
    %v798 = vpop.f32.mrb[0].mxu0
    %799 = vmatprep.mubr.bf16.mxu0 0
    %800 = vmatmul.mubr.bf16.gmra.mrb[0].mxu0 %v621
    %v801 = vpop.f32.mrb[0].mxu0
    %v802 = vadd.f32 %v555, %v801
    %v803 = vpop.f32.mrb[0].mxu0
    %v804 = vpop.f32.mrb[0].mxu0
    %v805 = vadd.f32 %v558, %v804
    %v806 = vpop.f32.mrb[0].mxu0
    %807 = vdwg.mxu0
    %v808 = vld [vmem:[#allocation2] sm:$0xe0]
    %v809 = vld [vmem:[#allocation2 + $0x98] sm:$0x3f]
    %s810 = scalar_lea.vmem %s1, 64
    %v811 = vld [vmem:[%s810] sm:$0xf]
    %v812 = vld [vmem:[%s810 + $0x4] sm:$0xf]
    %v813 = vld [vmem:[%s810 + $0x8] sm:$0xf]
    %v814 = vld [vmem:[%s810 + $0xc] sm:$0xf]
    %v815 = vld [vmem:[%s810 + $0x10] sm:$0xf]
    %v816 = vld [vmem:[%s810 + $0x14] sm:$0xf]
    %v817 = vld [vmem:[%s810 + $0x18] sm:$0xf]
    %v818 = vld [vmem:[%s810 + $0x1c] sm:$0xf]
    %vm819 = vsmask.f32 2304
    %v821 = vshrl.u32 %v808, 16
    %v823 = vrot.slane %v821, 5
    %v824 = vshll.u32 %v808, 16
    %v826 = vrot.slane %v824, 6
    %v827 = vor.u32 %v823, %v826
    %v828 = vrot.slane %v151, 5
    %v829 = vrot.slane %v147, 6
    %v830 = vor.u32 %v828, %v829
    %v831 = vsel %vm819, %v827, %v830
    %v832 = vrot.slane %v159, 5
    %v833 = vrot.slane %v155, 6
    %v834 = vor.u32 %v832, %v833
    %v835 = vsel %vm819, %v830, %v834
    %v836 = vrot.slane %v167, 5
    %v837 = vrot.slane %v163, 6
    %v838 = vor.u32 %v836, %v837
    %v839 = vsel %vm819, %v834, %v838
    %v840 = vrot.slane %v175, 5
    %v841 = vrot.slane %v171, 6
    %v842 = vor.u32 %v840, %v841
    %v843 = vsel %vm819, %v838, %v842
    %v844 = vrot.slane %v183, 5
    %v845 = vrot.slane %v179, 6
    %v846 = vor.u32 %v844, %v845
    %v847 = vsel %vm819, %v842, %v846
    %v848 = vrot.slane %v191, 5
    %v849 = vrot.slane %v187, 6
    %v850 = vor.u32 %v848, %v849
    %v851 = vsel %vm819, %v846, %v850
    %v852 = vrot.slane %v199, 5
    %v853 = vrot.slane %v195, 6
    %v854 = vor.u32 %v852, %v853
    %v855 = vsel %vm819, %v850, %v854
    %v856 = vrot.slane %v207, 5
    %v857 = vrot.slane %v203, 6
    %v858 = vor.u32 %v856, %v857
    %v859 = vsel %vm819, %v854, %v858
    %v860 = vrot.slane %v215, 5
    %v861 = vrot.slane %v211, 6
    %v862 = vor.u32 %v860, %v861
    %v863 = vsel %vm819, %v858, %v862
    %v864 = vrot.slane %v223, 5
    %v865 = vrot.slane %v219, 6
    %v866 = vor.u32 %v864, %v865
    %v867 = vsel %vm819, %v862, %v866
    %v868 = vrot.slane %v231, 5
    %v869 = vrot.slane %v227, 6
    %v870 = vor.u32 %v868, %v869
    %v871 = vsel %vm819, %v866, %v870
    %v872 = vrot.slane %v239, 5
    %v873 = vrot.slane %v235, 6
    %v874 = vor.u32 %v872, %v873
    %v875 = vsel %vm819, %v870, %v874
    %v876 = vrot.slane %v247, 5
    %v877 = vrot.slane %v243, 6
    %v878 = vor.u32 %v876, %v877
    %v879 = vsel %vm819, %v874, %v878
    %v880 = vrot.slane %v255, 5
    %v881 = vrot.slane %v251, 6
    %v882 = vor.u32 %v880, %v881
    %v883 = vsel %vm819, %v878, %v882
    %v884 = vrot.slane %v263, 5
    %v885 = vrot.slane %v259, 6
    %v886 = vor.u32 %v884, %v885
    %v887 = vsel %vm819, %v882, %v886
    %v888 = vrot.slane %v271, 5
    %v889 = vrot.slane %v267, 6
    %v890 = vor.u32 %v888, %v889
    %v891 = vsel %vm819, %v886, %v890
    %v892 = vrot.slane %v279, 5
    %v893 = vrot.slane %v275, 6
    %v894 = vor.u32 %v892, %v893
    %v895 = vsel %vm819, %v890, %v894
    %v896 = vrot.slane %v287, 5
    %v897 = vrot.slane %v283, 6
    %v898 = vor.u32 %v896, %v897
    %v899 = vsel %vm819, %v894, %v898
    %v901 = vshrl.u32 %v809, 16
    %v903 = vrot.slane %v901, 5
    %v904 = vshll.u32 %v809, 16
    %v906 = vrot.slane %v904, 6
    %v907 = vor.u32 %v903, %v906
    %v908 = vsel %vm819, %v898, %v907
    %v917 = vunpack.c.l.b16 %v811
    %v918 = vunpack.c.l.b16 %v812
    %v919 = vunpack.c.l.b16 %v813
    %v920 = vunpack.c.l.b16 %v814
    %v921 = vunpack.c.l.b16 %v815
    %v922 = vunpack.c.l.b16 %v816
    %v923 = vunpack.c.l.b16 %v817
    %v924 = vunpack.c.l.b16 %v818
    %v925 = vpack.c.b16 %v918, %v917
    %v926 = vpack.c.b16 %v920, %v919
    %v927 = vpack.c.b16 %v922, %v921
    %v928 = vpack.c.b16 %v924, %v923
    %v934 = vsel %vm76, %v831, 0
    %v937 = vsel %vm76, %v835, 0
    %v940 = vsel %vm76, %v839, 0
    %v943 = vsel %vm76, %v843, 0
    %v946 = vsel %vm76, %v847, 0
    %v949 = vsel %vm76, %v851, 0
    %v952 = vsel %vm76, %v855, 0
    %v955 = vsel %vm76, %v859, 0
    %v958 = vsel %vm76, %v863, 0
    %v961 = vsel %vm76, %v867, 0
    %v964 = vsel %vm76, %v871, 0
    %v967 = vsel %vm76, %v875, 0
    %v970 = vsel %vm76, %v879, 0
    %v973 = vsel %vm76, %v883, 0
    %v976 = vsel %vm76, %v887, 0
    %v979 = vsel %vm76, %v891, 0
    %v982 = vsel %vm76, %v895, 0
    %v985 = vsel %vm76, %v899, 0
    %v988 = vsel %vm76, %v908, 0
    %990 = vmatprep.subr.bf16.mxu0 0
    %991 = vmatpush1.bf16.msra.mxu0 %v925
    %992 = vmatprep.subr.bf16.mxu0 0
    %993 = vmatpush1.bf16.msra.mxu0 %v926
    %994 = vmatprep.subr.bf16.mxu0 0
    %995 = vmatpush1.bf16.msra.mxu0 %v927
    %996 = vmatprep.subr.bf16.mxu0 0
    %997 = vmatpush1.bf16.msra.mxu0 %v928
    %998 = vmatprep.subr.bf16.mxu0 0
    %999 = vmatpush1.bf16.msra.mxu0 0
    %1000 = vmatprep.subr.bf16.mxu0 0
    %1001 = vmatpush1.bf16.msra.mxu0 0
    %1002 = vmatprep.subr.bf16.mxu0 0
    %1003 = vmatpush1.bf16.msra.mxu0 0
    %1004 = vmatprep.subr.bf16.mxu0 0
    %1005 = vmatpush1.bf16.msra.mxu0 0
    %1006 = vmatprep.subr.bf16.mxu0 0
    %1007 = vmatpush1.bf16.msra.mxu0 0
    %1008 = vmatprep.subr.bf16.mxu0 0
    %1009 = vmatpush1.bf16.msra.mxu0 0
    %1010 = vmatprep.subr.bf16.mxu0 0
    %1011 = vmatpush1.bf16.msra.mxu0 0
    %1012 = vmatprep.subr.bf16.mxu0 0
    %1013 = vmatpush1.bf16.msra.mxu0 0
    %1014 = vmatprep.subr.bf16.mxu0 0
    %1015 = vmatpush1.bf16.msra.mxu0 0
    %1016 = vmatprep.subr.bf16.mxu0 0
    %1017 = vmatpush1.bf16.msra.mxu0 0
    %1018 = vmatprep.subr.bf16.mxu0 0
    %1019 = vmatpush1.bf16.msra.mxu0 0
    %1020 = vmatprep.subr.bf16.mxu0 0
    %1021 = vmatpush1.bf16.msra.mxu0 0
    %1022 = vmatprep.mubr.bf16.mxu0 0
    %1023 = vmatmul.mubr.bf16.gmra.mrb[0].mxu0 %v934
    %v1024 = vpop.f32.mrb[0].mxu0
    %v1025 = vadd.f32 0.0, %v1024
    %v1026 = vpop.f32.mrb[0].mxu0
    %v1027 = vpop.f32.mrb[0].mxu0
    %v1028 = vadd.f32 0.0, %v1027
    %v1029 = vpop.f32.mrb[0].mxu0
    %1030 = vmatprep.mubr.bf16.mxu0 0
    %1031 = vmatmul.mubr.bf16.gmra.mrb[0].mxu0 %v937
    %v1032 = vpop.f32.mrb[0].mxu0
    %v1033 = vadd.f32 0.0, %v1032
    %v1034 = vpop.f32.mrb[0].mxu0
    %v1035 = vpop.f32.mrb[0].mxu0
    %v1036 = vadd.f32 0.0, %v1035
    %v1037 = vpop.f32.mrb[0].mxu0
    %1038 = vmatprep.mubr.bf16.mxu0 0
    %1039 = vmatmul.mubr.bf16.gmra.mrb[0].mxu0 %v940
    %v1040 = vpop.f32.mrb[0].mxu0
    %v1041 = vadd.f32 0.0, %v1040
    %v1042 = vpop.f32.mrb[0].mxu0
    %v1043 = vpop.f32.mrb[0].mxu0
    %v1044 = vadd.f32 0.0, %v1043
    %v1045 = vpop.f32.mrb[0].mxu0
    %1046 = vmatprep.mubr.bf16.mxu0 0
    %1047 = vmatmul.mubr.bf16.gmra.mrb[0].mxu0 %v943
    %v1048 = vpop.f32.mrb[0].mxu0
    %v1049 = vadd.f32 0.0, %v1048
    %v1050 = vpop.f32.mrb[0].mxu0
    %v1051 = vpop.f32.mrb[0].mxu0
    %v1052 = vadd.f32 0.0, %v1051
    %v1053 = vpop.f32.mrb[0].mxu0
    %1054 = vmatprep.mubr.bf16.mxu0 0
    %1055 = vmatmul.mubr.bf16.gmra.mrb[0].mxu0 %v946
    %v1056 = vpop.f32.mrb[0].mxu0
    %v1057 = vadd.f32 0.0, %v1056
    %v1058 = vpop.f32.mrb[0].mxu0
    %v1059 = vpop.f32.mrb[0].mxu0
    %v1060 = vadd.f32 0.0, %v1059
    %v1061 = vpop.f32.mrb[0].mxu0
    %1062 = vmatprep.mubr.bf16.mxu0 0
    %1063 = vmatmul.mubr.bf16.gmra.mrb[0].mxu0 %v949
    %v1064 = vpop.f32.mrb[0].mxu0
    %v1065 = vadd.f32 0.0, %v1064
    %v1066 = vpop.f32.mrb[0].mxu0
    %v1067 = vpop.f32.mrb[0].mxu0
    %v1068 = vadd.f32 0.0, %v1067
    %v1069 = vpop.f32.mrb[0].mxu0
    %1070 = vmatprep.mubr.bf16.mxu0 0
    %1071 = vmatmul.mubr.bf16.gmra.mrb[0].mxu0 %v952
    %v1072 = vpop.f32.mrb[0].mxu0
    %v1073 = vadd.f32 0.0, %v1072
    %v1074 = vpop.f32.mrb[0].mxu0
    %v1075 = vpop.f32.mrb[0].mxu0
    %v1076 = vadd.f32 0.0, %v1075
    %v1077 = vpop.f32.mrb[0].mxu0
    %1078 = vmatprep.mubr.bf16.mxu0 0
    %1079 = vmatmul.mubr.bf16.gmra.mrb[0].mxu0 %v955
    %v1080 = vpop.f32.mrb[0].mxu0
    %v1081 = vadd.f32 0.0, %v1080
    %v1082 = vpop.f32.mrb[0].mxu0
    %v1083 = vpop.f32.mrb[0].mxu0
    %v1084 = vadd.f32 0.0, %v1083
    %v1085 = vpop.f32.mrb[0].mxu0
    %1086 = vmatprep.mubr.bf16.mxu0 0
    %1087 = vmatmul.mubr.bf16.gmra.mrb[0].mxu0 %v958
    %v1088 = vpop.f32.mrb[0].mxu0
    %v1089 = vadd.f32 0.0, %v1088
    %v1090 = vpop.f32.mrb[0].mxu0
    %v1091 = vpop.f32.mrb[0].mxu0
    %v1092 = vadd.f32 0.0, %v1091
    %v1093 = vpop.f32.mrb[0].mxu0
    %1094 = vmatprep.mubr.bf16.mxu0 0
    %1095 = vmatmul.mubr.bf16.gmra.mrb[0].mxu0 %v961
    %v1096 = vpop.f32.mrb[0].mxu0
    %v1097 = vadd.f32 0.0, %v1096
    %v1098 = vpop.f32.mrb[0].mxu0
    %v1099 = vpop.f32.mrb[0].mxu0
    %v1100 = vadd.f32 0.0, %v1099
    %v1101 = vpop.f32.mrb[0].mxu0
    %1102 = vmatprep.mubr.bf16.mxu0 0
    %1103 = vmatmul.mubr.bf16.gmra.mrb[0].mxu0 %v964
    %v1104 = vpop.f32.mrb[0].mxu0
    %v1105 = vadd.f32 0.0, %v1104
    %v1106 = vpop.f32.mrb[0].mxu0
    %v1107 = vpop.f32.mrb[0].mxu0
    %v1108 = vadd.f32 0.0, %v1107
    %v1109 = vpop.f32.mrb[0].mxu0
    %1110 = vmatprep.mubr.bf16.mxu0 0
    %1111 = vmatmul.mubr.bf16.gmra.mrb[0].mxu0 %v967
    %v1112 = vpop.f32.mrb[0].mxu0
    %v1113 = vadd.f32 0.0, %v1112
    %v1114 = vpop.f32.mrb[0].mxu0
    %v1115 = vpop.f32.mrb[0].mxu0
    %v1116 = vadd.f32 0.0, %v1115
    %v1117 = vpop.f32.mrb[0].mxu0
    %1118 = vmatprep.mubr.bf16.mxu0 0
    %1119 = vmatmul.mubr.bf16.gmra.mrb[0].mxu0 %v970
    %v1120 = vpop.f32.mrb[0].mxu0
    %v1121 = vadd.f32 0.0, %v1120
    %v1122 = vpop.f32.mrb[0].mxu0
    %v1123 = vpop.f32.mrb[0].mxu0
    %v1124 = vadd.f32 0.0, %v1123
    %v1125 = vpop.f32.mrb[0].mxu0
    %1126 = vmatprep.mubr.bf16.mxu0 0
    %1127 = vmatmul.mubr.bf16.gmra.mrb[0].mxu0 %v973
    %v1128 = vpop.f32.mrb[0].mxu0
    %v1129 = vadd.f32 0.0, %v1128
    %v1130 = vpop.f32.mrb[0].mxu0
    %v1131 = vpop.f32.mrb[0].mxu0
    %v1132 = vadd.f32 0.0, %v1131
    %v1133 = vpop.f32.mrb[0].mxu0
    %1134 = vmatprep.mubr.bf16.mxu0 0
    %1135 = vmatmul.mubr.bf16.gmra.mrb[0].mxu0 %v976
    %v1136 = vpop.f32.mrb[0].mxu0
    %v1137 = vadd.f32 0.0, %v1136
    %v1138 = vpop.f32.mrb[0].mxu0
    %v1139 = vpop.f32.mrb[0].mxu0
    %v1140 = vadd.f32 0.0, %v1139
    %v1141 = vpop.f32.mrb[0].mxu0
    %1142 = vmatprep.mubr.bf16.mxu0 0
    %1143 = vmatmul.mubr.bf16.gmra.mrb[0].mxu0 %v979
    %v1144 = vpop.f32.mrb[0].mxu0
    %v1145 = vadd.f32 0.0, %v1144
    %v1146 = vpop.f32.mrb[0].mxu0
    %v1147 = vpop.f32.mrb[0].mxu0
    %v1148 = vadd.f32 0.0, %v1147
    %v1149 = vpop.f32.mrb[0].mxu0
    %1150 = vmatprep.mubr.bf16.mxu0 0
    %1151 = vmatmul.mubr.bf16.gmra.mrb[0].mxu0 %v982
    %v1152 = vpop.f32.mrb[0].mxu0
    %v1153 = vadd.f32 0.0, %v1152
    %v1154 = vpop.f32.mrb[0].mxu0
    %v1155 = vpop.f32.mrb[0].mxu0
    %v1156 = vadd.f32 0.0, %v1155
    %v1157 = vpop.f32.mrb[0].mxu0
    %1158 = vmatprep.mubr.bf16.mxu0 0
    %1159 = vmatmul.mubr.bf16.gmra.mrb[0].mxu0 %v985
    %v1160 = vpop.f32.mrb[0].mxu0
    %v1161 = vadd.f32 0.0, %v1160
    %v1162 = vpop.f32.mrb[0].mxu0
    %v1163 = vpop.f32.mrb[0].mxu0
    %v1164 = vadd.f32 0.0, %v1163
    %v1165 = vpop.f32.mrb[0].mxu0
    %1166 = vmatprep.mubr.bf16.mxu0 0
    %1167 = vmatmul.mubr.bf16.gmra.mrb[0].mxu0 %v988
    %v1168 = vpop.f32.mrb[0].mxu0
    %v1169 = vadd.f32 0.0, %v1168
    %v1170 = vpop.f32.mrb[0].mxu0
    %v1171 = vpop.f32.mrb[0].mxu0
    %v1172 = vadd.f32 0.0, %v1171
    %v1173 = vpop.f32.mrb[0].mxu0
    %1174 = vdwg.mxu0
    %v1175 = vadd.f32 %v658, %v1025
    %v1176 = vadd.f32 %v661, %v1028
    %v1177 = vadd.f32 %v666, %v1033
    %v1178 = vadd.f32 %v669, %v1036
    %v1179 = vadd.f32 %v674, %v1041
    %v1180 = vadd.f32 %v677, %v1044
    %v1181 = vadd.f32 %v682, %v1049
    %v1182 = vadd.f32 %v685, %v1052
    %v1183 = vadd.f32 %v690, %v1057
    %v1184 = vadd.f32 %v693, %v1060
    %v1185 = vadd.f32 %v698, %v1065
    %v1186 = vadd.f32 %v701, %v1068
    %v1187 = vadd.f32 %v706, %v1073
    %v1188 = vadd.f32 %v709, %v1076
    %v1189 = vadd.f32 %v714, %v1081
    %v1190 = vadd.f32 %v717, %v1084
    %v1191 = vadd.f32 %v722, %v1089
    %v1192 = vadd.f32 %v725, %v1092
    %v1193 = vadd.f32 %v730, %v1097
    %v1194 = vadd.f32 %v733, %v1100
    %v1195 = vadd.f32 %v738, %v1105
    %v1196 = vadd.f32 %v741, %v1108
    %v1197 = vadd.f32 %v746, %v1113
    %v1198 = vadd.f32 %v749, %v1116
    %v1199 = vadd.f32 %v754, %v1121
    %v1200 = vadd.f32 %v757, %v1124
    %v1201 = vadd.f32 %v762, %v1129
    %v1202 = vadd.f32 %v765, %v1132
    %v1203 = vadd.f32 %v770, %v1137
    %v1204 = vadd.f32 %v773, %v1140
    %v1205 = vadd.f32 %v778, %v1145
    %v1206 = vadd.f32 %v781, %v1148
    %v1207 = vadd.f32 %v786, %v1153
    %v1208 = vadd.f32 %v789, %v1156
    %v1209 = vadd.f32 %v794, %v1161
    %v1210 = vadd.f32 %v797, %v1164
    %v1211 = vadd.f32 %v802, %v1169
    %v1212 = vadd.f32 %v805, %v1172
    %v1213 = vld [vmem:[#allocation2] sm:$0xc0]
    %s1214 = scalar_lea.vmem %s1, 96
    %v1215 = vld [vmem:[%s1214] sm:$0xf]
    %v1216 = vld [vmem:[%s1214 + $0x4] sm:$0xf]
    %v1217 = vld [vmem:[%s1214 + $0x8] sm:$0xf]
    %v1218 = vld [vmem:[%s1214 + $0xc] sm:$0xf]
    %v1219 = vld [vmem:[%s1214 + $0x10] sm:$0xf]
    %v1220 = vld [vmem:[%s1214 + $0x14] sm:$0xf]
    %v1221 = vld [vmem:[%s1214 + $0x18] sm:$0xf]
    %v1222 = vld [vmem:[%s1214 + $0x1c] sm:$0xf]
    %vm1243 = vcmask 1041408
    %v1244 = vrot.slane %v1213, 6
    %v1245 = vrot.slane %v102, 6
    %v1246 = vsel %vm1243, %v1244, %v1245
    %v1247 = vrot.slane %v103, 6
    %v1248 = vsel %vm1243, %v1245, %v1247
    %v1249 = vrot.slane %v104, 6
    %v1250 = vsel %vm1243, %v1247, %v1249
    %v1251 = vrot.slane %v105, 6
    %v1252 = vsel %vm1243, %v1249, %v1251
    %v1253 = vrot.slane %v106, 6
    %v1254 = vsel %vm1243, %v1251, %v1253
    %v1255 = vrot.slane %v107, 6
    %v1256 = vsel %vm1243, %v1253, %v1255
    %v1257 = vrot.slane %v108, 6
    %v1258 = vsel %vm1243, %v1255, %v1257
    %v1259 = vrot.slane %v109, 6
    %v1260 = vsel %vm1243, %v1257, %v1259
    %v1261 = vrot.slane %v110, 6
    %v1262 = vsel %vm1243, %v1259, %v1261
    %v1263 = vrot.slane %v111, 6
    %v1264 = vsel %vm1243, %v1261, %v1263
    %v1265 = vrot.slane %v112, 6
    %v1266 = vsel %vm1243, %v1263, %v1265
    %v1267 = vrot.slane %v113, 6
    %v1268 = vsel %vm1243, %v1265, %v1267
    %v1269 = vrot.slane %v114, 6
    %v1270 = vsel %vm1243, %v1267, %v1269
    %v1271 = vrot.slane %v115, 6
    %v1272 = vsel %vm1243, %v1269, %v1271
    %v1273 = vrot.slane %v116, 6
    %v1274 = vsel %vm1243, %v1271, %v1273
    %v1275 = vrot.slane %v117, 6
    %v1276 = vsel %vm1243, %v1273, %v1275
    %v1277 = vrot.slane %v118, 6
    %v1278 = vsel %vm1243, %v1275, %v1277
    %v1279 = vrot.slane %v119, 6
    %v1280 = vsel %vm1243, %v1277, %v1279
    %v1281 = vrot.slane %v809, 6
    %v1282 = vsel %vm1243, %v1279, %v1281
    %v1291 = vunpack.c.l.b16 %v1215
    %v1292 = vunpack.c.l.b16 %v1216
    %v1293 = vunpack.c.l.b16 %v1217
    %v1294 = vunpack.c.l.b16 %v1218
    %v1295 = vunpack.c.l.b16 %v1219
    %v1296 = vunpack.c.l.b16 %v1220
    %v1297 = vunpack.c.l.b16 %v1221
    %v1298 = vunpack.c.l.b16 %v1222
    %v1299 = vpack.c.b16 %v1292, %v1291
    %v1300 = vpack.c.b16 %v1294, %v1293
    %v1301 = vpack.c.b16 %v1296, %v1295
    %v1302 = vpack.c.b16 %v1298, %v1297
    %v1308 = vsel %vm76, %v1246, 0
    %v1311 = vsel %vm76, %v1248, 0
    %v1314 = vsel %vm76, %v1250, 0
    %v1317 = vsel %vm76, %v1252, 0
    %v1320 = vsel %vm76, %v1254, 0
    %v1323 = vsel %vm76, %v1256, 0
    %v1326 = vsel %vm76, %v1258, 0
    %v1329 = vsel %vm76, %v1260, 0
    %v1332 = vsel %vm76, %v1262, 0
    %v1335 = vsel %vm76, %v1264, 0
    %v1338 = vsel %vm76, %v1266, 0
    %v1341 = vsel %vm76, %v1268, 0
    %v1344 = vsel %vm76, %v1270, 0
    %v1347 = vsel %vm76, %v1272, 0
    %v1350 = vsel %vm76, %v1274, 0
    %v1353 = vsel %vm76, %v1276, 0
    %v1356 = vsel %vm76, %v1278, 0
    %v1359 = vsel %vm76, %v1280, 0
    %v1362 = vsel %vm76, %v1282, 0
    %1364 = vmatprep.subr.bf16.mxu0 0
    %1365 = vmatpush1.bf16.msra.mxu0 %v1299
    %1366 = vmatprep.subr.bf16.mxu0 0
    %1367 = vmatpush1.bf16.msra.mxu0 %v1300
    %1368 = vmatprep.subr.bf16.mxu0 0
    %1369 = vmatpush1.bf16.msra.mxu0 %v1301
    %1370 = vmatprep.subr.bf16.mxu0 0
    %1371 = vmatpush1.bf16.msra.mxu0 %v1302
    %1372 = vmatprep.subr.bf16.mxu0 0
    %1373 = vmatpush1.bf16.msra.mxu0 0
    %1374 = vmatprep.subr.bf16.mxu0 0
    %1375 = vmatpush1.bf16.msra.mxu0 0
    %1376 = vmatprep.subr.bf16.mxu0 0
    %1377 = vmatpush1.bf16.msra.mxu0 0
    %1378 = vmatprep.subr.bf16.mxu0 0
    %1379 = vmatpush1.bf16.msra.mxu0 0
    %1380 = vmatprep.subr.bf16.mxu0 0
    %1381 = vmatpush1.bf16.msra.mxu0 0
    %1382 = vmatprep.subr.bf16.mxu0 0
    %1383 = vmatpush1.bf16.msra.mxu0 0
    %1384 = vmatprep.subr.bf16.mxu0 0
    %1385 = vmatpush1.bf16.msra.mxu0 0
    %1386 = vmatprep.subr.bf16.mxu0 0
    %1387 = vmatpush1.bf16.msra.mxu0 0
    %1388 = vmatprep.subr.bf16.mxu0 0
    %1389 = vmatpush1.bf16.msra.mxu0 0
    %1390 = vmatprep.subr.bf16.mxu0 0
    %1391 = vmatpush1.bf16.msra.mxu0 0
    %1392 = vmatprep.subr.bf16.mxu0 0
    %1393 = vmatpush1.bf16.msra.mxu0 0
    %1394 = vmatprep.subr.bf16.mxu0 0
    %1395 = vmatpush1.bf16.msra.mxu0 0
    %1396 = vmatprep.mubr.bf16.mxu0 0
    %1397 = vmatmul.mubr.bf16.gmra.mrb[0].mxu0 %v1308
    %v1398 = vpop.f32.mrb[0].mxu0
    %v1399 = vadd.f32 0.0, %v1398
    %v1400 = vpop.f32.mrb[0].mxu0
    %v1401 = vpop.f32.mrb[0].mxu0
    %v1402 = vadd.f32 0.0, %v1401
    %v1403 = vpop.f32.mrb[0].mxu0
    %1404 = vmatprep.mubr.bf16.mxu0 0
    %1405 = vmatmul.mubr.bf16.gmra.mrb[0].mxu0 %v1311
    %v1406 = vpop.f32.mrb[0].mxu0
    %v1407 = vadd.f32 0.0, %v1406
    %v1408 = vpop.f32.mrb[0].mxu0
    %v1409 = vpop.f32.mrb[0].mxu0
    %v1410 = vadd.f32 0.0, %v1409
    %v1411 = vpop.f32.mrb[0].mxu0
    %1412 = vmatprep.mubr.bf16.mxu0 0
    %1413 = vmatmul.mubr.bf16.gmra.mrb[0].mxu0 %v1314
    %v1414 = vpop.f32.mrb[0].mxu0
    %v1415 = vadd.f32 0.0, %v1414
    %v1416 = vpop.f32.mrb[0].mxu0
    %v1417 = vpop.f32.mrb[0].mxu0
    %v1418 = vadd.f32 0.0, %v1417
    %v1419 = vpop.f32.mrb[0].mxu0
    %1420 = vmatprep.mubr.bf16.mxu0 0
    %1421 = vmatmul.mubr.bf16.gmra.mrb[0].mxu0 %v1317
    %v1422 = vpop.f32.mrb[0].mxu0
    %v1423 = vadd.f32 0.0, %v1422
    %v1424 = vpop.f32.mrb[0].mxu0
    %v1425 = vpop.f32.mrb[0].mxu0
    %v1426 = vadd.f32 0.0, %v1425
    %v1427 = vpop.f32.mrb[0].mxu0
    %1428 = vmatprep.mubr.bf16.mxu0 0
    %1429 = vmatmul.mubr.bf16.gmra.mrb[0].mxu0 %v1320
    %v1430 = vpop.f32.mrb[0].mxu0
    %v1431 = vadd.f32 0.0, %v1430
    %v1432 = vpop.f32.mrb[0].mxu0
    %v1433 = vpop.f32.mrb[0].mxu0
    %v1434 = vadd.f32 0.0, %v1433
    %v1435 = vpop.f32.mrb[0].mxu0
    %1436 = vmatprep.mubr.bf16.mxu0 0
    %1437 = vmatmul.mubr.bf16.gmra.mrb[0].mxu0 %v1323
    %v1438 = vpop.f32.mrb[0].mxu0
    %v1439 = vadd.f32 0.0, %v1438
    %v1440 = vpop.f32.mrb[0].mxu0
    %v1441 = vpop.f32.mrb[0].mxu0
    %v1442 = vadd.f32 0.0, %v1441
    %v1443 = vpop.f32.mrb[0].mxu0
    %1444 = vmatprep.mubr.bf16.mxu0 0
    %1445 = vmatmul.mubr.bf16.gmra.mrb[0].mxu0 %v1326
    %v1446 = vpop.f32.mrb[0].mxu0
    %v1447 = vadd.f32 0.0, %v1446
    %v1448 = vpop.f32.mrb[0].mxu0
    %v1449 = vpop.f32.mrb[0].mxu0
    %v1450 = vadd.f32 0.0, %v1449
    %v1451 = vpop.f32.mrb[0].mxu0
    %1452 = vmatprep.mubr.bf16.mxu0 0
    %1453 = vmatmul.mubr.bf16.gmra.mrb[0].mxu0 %v1329
    %v1454 = vpop.f32.mrb[0].mxu0
    %v1455 = vadd.f32 0.0, %v1454
    %v1456 = vpop.f32.mrb[0].mxu0
    %v1457 = vpop.f32.mrb[0].mxu0
    %v1458 = vadd.f32 0.0, %v1457
    %v1459 = vpop.f32.mrb[0].mxu0
    %1460 = vmatprep.mubr.bf16.mxu0 0
    %1461 = vmatmul.mubr.bf16.gmra.mrb[0].mxu0 %v1332
    %v1462 = vpop.f32.mrb[0].mxu0
    %v1463 = vadd.f32 0.0, %v1462
    %v1464 = vpop.f32.mrb[0].mxu0
    %v1465 = vpop.f32.mrb[0].mxu0
    %v1466 = vadd.f32 0.0, %v1465
    %v1467 = vpop.f32.mrb[0].mxu0
    %1468 = vmatprep.mubr.bf16.mxu0 0
    %1469 = vmatmul.mubr.bf16.gmra.mrb[0].mxu0 %v1335
    %v1470 = vpop.f32.mrb[0].mxu0
    %v1471 = vadd.f32 0.0, %v1470
    %v1472 = vpop.f32.mrb[0].mxu0
    %v1473 = vpop.f32.mrb[0].mxu0
    %v1474 = vadd.f32 0.0, %v1473
    %v1475 = vpop.f32.mrb[0].mxu0
    %1476 = vmatprep.mubr.bf16.mxu0 0
    %1477 = vmatmul.mubr.bf16.gmra.mrb[0].mxu0 %v1338
    %v1478 = vpop.f32.mrb[0].mxu0
    %v1479 = vadd.f32 0.0, %v1478
    %v1480 = vpop.f32.mrb[0].mxu0
    %v1481 = vpop.f32.mrb[0].mxu0
    %v1482 = vadd.f32 0.0, %v1481
    %v1483 = vpop.f32.mrb[0].mxu0
    %1484 = vmatprep.mubr.bf16.mxu0 0
    %1485 = vmatmul.mubr.bf16.gmra.mrb[0].mxu0 %v1341
    %v1486 = vpop.f32.mrb[0].mxu0
    %v1487 = vadd.f32 0.0, %v1486
    %v1488 = vpop.f32.mrb[0].mxu0
    %v1489 = vpop.f32.mrb[0].mxu0
    %v1490 = vadd.f32 0.0, %v1489
    %v1491 = vpop.f32.mrb[0].mxu0
    %1492 = vmatprep.mubr.bf16.mxu0 0
    %1493 = vmatmul.mubr.bf16.gmra.mrb[0].mxu0 %v1344
    %v1494 = vpop.f32.mrb[0].mxu0
    %v1495 = vadd.f32 0.0, %v1494
    %v1496 = vpop.f32.mrb[0].mxu0
    %v1497 = vpop.f32.mrb[0].mxu0
    %v1498 = vadd.f32 0.0, %v1497
    %v1499 = vpop.f32.mrb[0].mxu0
    %1500 = vmatprep.mubr.bf16.mxu0 0
    %1501 = vmatmul.mubr.bf16.gmra.mrb[0].mxu0 %v1347
    %v1502 = vpop.f32.mrb[0].mxu0
    %v1503 = vadd.f32 0.0, %v1502
    %v1504 = vpop.f32.mrb[0].mxu0
    %v1505 = vpop.f32.mrb[0].mxu0
    %v1506 = vadd.f32 0.0, %v1505
    %v1507 = vpop.f32.mrb[0].mxu0
    %1508 = vmatprep.mubr.bf16.mxu0 0
    %1509 = vmatmul.mubr.bf16.gmra.mrb[0].mxu0 %v1350
    %v1510 = vpop.f32.mrb[0].mxu0
    %v1511 = vadd.f32 0.0, %v1510
    %v1512 = vpop.f32.mrb[0].mxu0
    %v1513 = vpop.f32.mrb[0].mxu0
    %v1514 = vadd.f32 0.0, %v1513
    %v1515 = vpop.f32.mrb[0].mxu0
    %1516 = vmatprep.mubr.bf16.mxu0 0
    %1517 = vmatmul.mubr.bf16.gmra.mrb[0].mxu0 %v1353
    %v1518 = vpop.f32.mrb[0].mxu0
    %v1519 = vadd.f32 0.0, %v1518
    %v1520 = vpop.f32.mrb[0].mxu0
    %v1521 = vpop.f32.mrb[0].mxu0
    %v1522 = vadd.f32 0.0, %v1521
    %v1523 = vpop.f32.mrb[0].mxu0
    %1524 = vmatprep.mubr.bf16.mxu0 0
    %1525 = vmatmul.mubr.bf16.gmra.mrb[0].mxu0 %v1356
    %v1526 = vpop.f32.mrb[0].mxu0
    %v1527 = vadd.f32 0.0, %v1526
    %v1528 = vpop.f32.mrb[0].mxu0
    %v1529 = vpop.f32.mrb[0].mxu0
    %v1530 = vadd.f32 0.0, %v1529
    %v1531 = vpop.f32.mrb[0].mxu0
    %1532 = vmatprep.mubr.bf16.mxu0 0
    %1533 = vmatmul.mubr.bf16.gmra.mrb[0].mxu0 %v1359
    %v1534 = vpop.f32.mrb[0].mxu0
    %v1535 = vadd.f32 0.0, %v1534
    %v1536 = vpop.f32.mrb[0].mxu0
    %v1537 = vpop.f32.mrb[0].mxu0
    %v1538 = vadd.f32 0.0, %v1537
    %v1539 = vpop.f32.mrb[0].mxu0
    %1540 = vmatprep.mubr.bf16.mxu0 0
    %1541 = vmatmul.mubr.bf16.gmra.mrb[0].mxu0 %v1362
    %v1542 = vpop.f32.mrb[0].mxu0
    %v1543 = vadd.f32 0.0, %v1542
    %v1544 = vpop.f32.mrb[0].mxu0
    %v1545 = vpop.f32.mrb[0].mxu0
    %v1546 = vadd.f32 0.0, %v1545
    %v1547 = vpop.f32.mrb[0].mxu0
    %1548 = vdwg.mxu0
    %v1549 = vadd.f32 %v1175, %v1399
    %v1550 = vadd.f32 %v1176, %v1402
    %v1551 = vadd.f32 %v1177, %v1407
    %v1552 = vadd.f32 %v1178, %v1410
    %v1553 = vadd.f32 %v1179, %v1415
    %v1554 = vadd.f32 %v1180, %v1418
    %v1555 = vadd.f32 %v1181, %v1423
    %v1556 = vadd.f32 %v1182, %v1426
    %v1557 = vadd.f32 %v1183, %v1431
    %v1558 = vadd.f32 %v1184, %v1434
    %v1559 = vadd.f32 %v1185, %v1439
    %v1560 = vadd.f32 %v1186, %v1442
    %v1561 = vadd.f32 %v1187, %v1447
    %v1562 = vadd.f32 %v1188, %v1450
    %v1563 = vadd.f32 %v1189, %v1455
    %v1564 = vadd.f32 %v1190, %v1458
    %v1565 = vadd.f32 %v1191, %v1463
    %v1566 = vadd.f32 %v1192, %v1466
    %v1567 = vadd.f32 %v1193, %v1471
    %v1568 = vadd.f32 %v1194, %v1474
    %v1569 = vadd.f32 %v1195, %v1479
    %v1570 = vadd.f32 %v1196, %v1482
    %v1571 = vadd.f32 %v1197, %v1487
    %v1572 = vadd.f32 %v1198, %v1490
    %v1573 = vadd.f32 %v1199, %v1495
    %v1574 = vadd.f32 %v1200, %v1498
    %v1575 = vadd.f32 %v1201, %v1503
    %v1576 = vadd.f32 %v1202, %v1506
    %v1577 = vadd.f32 %v1203, %v1511
    %v1578 = vadd.f32 %v1204, %v1514
    %v1579 = vadd.f32 %v1205, %v1519
    %v1580 = vadd.f32 %v1206, %v1522
    %v1581 = vadd.f32 %v1207, %v1527
    %v1582 = vadd.f32 %v1208, %v1530
    %v1583 = vadd.f32 %v1209, %v1535
    %v1584 = vadd.f32 %v1210, %v1538
    %v1585 = vadd.f32 %v1211, %v1543
    %v1586 = vadd.f32 %v1212, %v1546
    %v1587 = vld [vmem:[%s2] sm:$0x1]
    %v1589 = vlaneseq
    %v1590 = vshrl.u32 %v1589, 7
    %v1591 = vsub.s32 0, %v1590
    %v1592 = vrot.slane %v1587, %v1591
    %v1594 = vadd.f32 %v1549, %v1592
    %v1595 = vadd.f32 %v1550, %v1592
    %v1596 = vadd.f32 %v1551, %v1592
    %v1597 = vadd.f32 %v1552, %v1592
    %v1598 = vadd.f32 %v1553, %v1592
    %v1599 = vadd.f32 %v1554, %v1592
    %v1600 = vadd.f32 %v1555, %v1592
    %v1601 = vadd.f32 %v1556, %v1592
    %v1602 = vadd.f32 %v1557, %v1592
    %v1603 = vadd.f32 %v1558, %v1592
    %v1604 = vadd.f32 %v1559, %v1592
    %v1605 = vadd.f32 %v1560, %v1592
    %v1606 = vadd.f32 %v1561, %v1592
    %v1607 = vadd.f32 %v1562, %v1592
    %v1608 = vadd.f32 %v1563, %v1592
    %v1609 = vadd.f32 %v1564, %v1592
    %v1610 = vadd.f32 %v1565, %v1592
    %v1611 = vadd.f32 %v1566, %v1592
    %v1612 = vadd.f32 %v1567, %v1592
    %v1613 = vadd.f32 %v1568, %v1592
    %v1614 = vadd.f32 %v1569, %v1592
    %v1615 = vadd.f32 %v1570, %v1592
    %v1616 = vadd.f32 %v1571, %v1592
    %v1617 = vadd.f32 %v1572, %v1592
    %v1618 = vadd.f32 %v1573, %v1592
    %v1619 = vadd.f32 %v1574, %v1592
    %v1620 = vadd.f32 %v1575, %v1592
    %v1621 = vadd.f32 %v1576, %v1592
    %v1622 = vadd.f32 %v1577, %v1592
    %v1623 = vadd.f32 %v1578, %v1592
    %v1624 = vadd.f32 %v1579, %v1592
    %v1625 = vadd.f32 %v1580, %v1592
    %v1626 = vadd.f32 %v1581, %v1592
    %v1627 = vadd.f32 %v1582, %v1592
    %v1628 = vadd.f32 %v1583, %v1592
    %v1629 = vadd.f32 %v1584, %v1592
    %v1630 = vadd.f32 %v1585, %v1592
    %v1631 = vadd.f32 %v1586, %v1592
    %v1632 = vmax.f32 %v1594, 0.0
    %v1633 = vmax.f32 %v1595, 0.0
    %v1634 = vmax.f32 %v1596, 0.0
    %v1635 = vmax.f32 %v1597, 0.0
    %v1636 = vmax.f32 %v1598, 0.0
    %v1637 = vmax.f32 %v1599, 0.0
    %v1638 = vmax.f32 %v1600, 0.0
    %v1639 = vmax.f32 %v1601, 0.0
    %v1640 = vmax.f32 %v1602, 0.0
    %v1641 = vmax.f32 %v1603, 0.0
    %v1642 = vmax.f32 %v1604, 0.0
    %v1643 = vmax.f32 %v1605, 0.0
    %v1644 = vmax.f32 %v1606, 0.0
    %v1645 = vmax.f32 %v1607, 0.0
    %v1646 = vmax.f32 %v1608, 0.0
    %v1647 = vmax.f32 %v1609, 0.0
    %v1648 = vmax.f32 %v1610, 0.0
    %v1649 = vmax.f32 %v1611, 0.0
    %v1650 = vmax.f32 %v1612, 0.0
    %v1651 = vmax.f32 %v1613, 0.0
    %v1652 = vmax.f32 %v1614, 0.0
    %v1653 = vmax.f32 %v1615, 0.0
    %v1654 = vmax.f32 %v1616, 0.0
    %v1655 = vmax.f32 %v1617, 0.0
    %v1656 = vmax.f32 %v1618, 0.0
    %v1657 = vmax.f32 %v1619, 0.0
    %v1658 = vmax.f32 %v1620, 0.0
    %v1659 = vmax.f32 %v1621, 0.0
    %v1660 = vmax.f32 %v1622, 0.0
    %v1661 = vmax.f32 %v1623, 0.0
    %v1662 = vmax.f32 %v1624, 0.0
    %v1663 = vmax.f32 %v1625, 0.0
    %v1664 = vmax.f32 %v1626, 0.0
    %v1665 = vmax.f32 %v1627, 0.0
    %v1666 = vmax.f32 %v1628, 0.0
    %v1667 = vmax.f32 %v1629, 0.0
    %v1668 = vmax.f32 %v1630, 0.0
    %v1669 = vmax.f32 %v1631, 0.0
    %vm1670 = vcmask 261120
    %1671 = vst.msk [vmem:[#allocation3] sm:$0xff] %vm1670, %v1632
    %1672 = vst.msk [vmem:[#allocation3 + $0x8] sm:$0xff] %vm1670, %v1633
    %1673 = vst.msk [vmem:[#allocation3 + $0x10] sm:$0xff] %vm1670, %v1634
    %1674 = vst.msk [vmem:[#allocation3 + $0x18] sm:$0xff] %vm1670, %v1635
    %1675 = vst.msk [vmem:[#allocation3 + $0x20] sm:$0xff] %vm1670, %v1636
    %1676 = vst.msk [vmem:[#allocation3 + $0x28] sm:$0xff] %vm1670, %v1637
    %1677 = vst.msk [vmem:[#allocation3 + $0x30] sm:$0xff] %vm1670, %v1638
    %1678 = vst.msk [vmem:[#allocation3 + $0x38] sm:$0xff] %vm1670, %v1639
    %1679 = vst.msk [vmem:[#allocation3 + $0x40] sm:$0xff] %vm1670, %v1640
    %1680 = vst.msk [vmem:[#allocation3 + $0x48] sm:$0xff] %vm1670, %v1641
    %1681 = vst.msk [vmem:[#allocation3 + $0x50] sm:$0xff] %vm1670, %v1642
    %1682 = vst.msk [vmem:[#allocation3 + $0x58] sm:$0xff] %vm1670, %v1643
    %1683 = vst.msk [vmem:[#allocation3 + $0x60] sm:$0xff] %vm1670, %v1644
    %1684 = vst.msk [vmem:[#allocation3 + $0x68] sm:$0xff] %vm1670, %v1645
    %1685 = vst.msk [vmem:[#allocation3 + $0x70] sm:$0xff] %vm1670, %v1646
    %1686 = vst.msk [vmem:[#allocation3 + $0x78] sm:$0xff] %vm1670, %v1647
    %1687 = vst.msk [vmem:[#allocation3 + $0x80] sm:$0xff] %vm1670, %v1648
    %1688 = vst.msk [vmem:[#allocation3 + $0x88] sm:$0xff] %vm1670, %v1649
    %1689 = vst.msk [vmem:[#allocation3 + $0x90] sm:$0xff] %vm1670, %v1650
    %1690 = vst.msk [vmem:[#allocation3 + $0x98] sm:$0xff] %vm1670, %v1651
    %1691 = vst.msk [vmem:[#allocation3 + $0xa0] sm:$0xff] %vm1670, %v1652
    %1692 = vst.msk [vmem:[#allocation3 + $0xa8] sm:$0xff] %vm1670, %v1653
    %1693 = vst.msk [vmem:[#allocation3 + $0xb0] sm:$0xff] %vm1670, %v1654
    %1694 = vst.msk [vmem:[#allocation3 + $0xb8] sm:$0xff] %vm1670, %v1655
    %1695 = vst.msk [vmem:[#allocation3 + $0xc0] sm:$0xff] %vm1670, %v1656
    %1696 = vst.msk [vmem:[#allocation3 + $0xc8] sm:$0xff] %vm1670, %v1657
    %1697 = vst.msk [vmem:[#allocation3 + $0xd0] sm:$0xff] %vm1670, %v1658
    %1698 = vst.msk [vmem:[#allocation3 + $0xd8] sm:$0xff] %vm1670, %v1659
    %1699 = vst.msk [vmem:[#allocation3 + $0xe0] sm:$0xff] %vm1670, %v1660
    %1700 = vst.msk [vmem:[#allocation3 + $0xe8] sm:$0xff] %vm1670, %v1661
    %1701 = vst.msk [vmem:[#allocation3 + $0xf0] sm:$0xff] %vm1670, %v1662
    %1702 = vst.msk [vmem:[#allocation3 + $0xf8] sm:$0xff] %vm1670, %v1663
    %1703 = vst.msk [vmem:[#allocation3 + $0x100] sm:$0xff] %vm1670, %v1664
    %1704 = vst.msk [vmem:[#allocation3 + $0x108] sm:$0xff] %vm1670, %v1665
    %1705 = vst.msk [vmem:[#allocation3 + $0x110] sm:$0xff] %vm1670, %v1666
    %1706 = vst.msk [vmem:[#allocation3 + $0x118] sm:$0xff] %vm1670, %v1667
    %1707 = vst.msk [vmem:[#allocation3 + $0x120] sm:$0xff] %vm1670, %v1668
    %1708 = vst.msk [vmem:[#allocation3 + $0x128] sm:$0xff] %vm1670, %v1669
    %v1709 = vld [vmem:[#allocation3] sm:$0xff]
    %v1710 = vld [vmem:[#allocation3 + $0x8] sm:$0xff]
    %v1711 = vld [vmem:[#allocation3 + $0x10] sm:$0xff]
    %v1712 = vld [vmem:[#allocation3 + $0x18] sm:$0xff]
    %v1713 = vld [vmem:[#allocation3 + $0x20] sm:$0xff]
    %v1714 = vld [vmem:[#allocation3 + $0x28] sm:$0xff]
    %v1715 = vld [vmem:[#allocation3 + $0x30] sm:$0xff]
    %v1716 = vld [vmem:[#allocation3 + $0x38] sm:$0xff]
    %v1717 = vld [vmem:[#allocation3 + $0x40] sm:$0xff]
    %v1718 = vld [vmem:[#allocation3 + $0x48] sm:$0xff]
    %v1719 = vld [vmem:[#allocation3 + $0x50] sm:$0xff]
    %v1720 = vld [vmem:[#allocation3 + $0x58] sm:$0xff]
    %v1721 = vld [vmem:[#allocation3 + $0x60] sm:$0xff]
    %v1722 = vld [vmem:[#allocation3 + $0x68] sm:$0xff]
    %v1723 = vld [vmem:[#allocation3 + $0x70] sm:$0xff]
    %v1724 = vld [vmem:[#allocation3 + $0x78] sm:$0xff]
    %v1725 = vld [vmem:[#allocation3 + $0x80] sm:$0xff]
    %v1726 = vld [vmem:[#allocation3 + $0x88] sm:$0xff]
    %v1727 = vld [vmem:[#allocation3 + $0x90] sm:$0xff]
    %v1728 = vld [vmem:[#allocation3 + $0x98] sm:$0xff]
    %v1729 = vld [vmem:[#allocation3 + $0xa0] sm:$0xff]
    %v1730 = vld [vmem:[#allocation3 + $0xa8] sm:$0xff]
    %v1731 = vld [vmem:[#allocation3 + $0xb0] sm:$0xff]
    %v1732 = vld [vmem:[#allocation3 + $0xb8] sm:$0xff]
    %v1733 = vld [vmem:[#allocation3 + $0xc0] sm:$0xff]
    %v1734 = vld [vmem:[#allocation3 + $0xc8] sm:$0xff]
    %v1735 = vld [vmem:[#allocation3 + $0xd0] sm:$0xff]
    %v1736 = vld [vmem:[#allocation3 + $0xd8] sm:$0xff]
    %v1737 = vld [vmem:[#allocation3 + $0xe0] sm:$0xff]
    %v1738 = vld [vmem:[#allocation3 + $0xe8] sm:$0xff]
    %v1739 = vld [vmem:[#allocation3 + $0xf0] sm:$0xff]
    %v1740 = vld [vmem:[#allocation3 + $0xf8] sm:$0xff]
    %v1741 = vld [vmem:[#allocation3 + $0x100] sm:$0xff]
    %v1742 = vld [vmem:[#allocation3 + $0x108] sm:$0xff]
    %v1743 = vpack.c.bf16 %v1710, %v1709
    %v1744 = vpack.c.bf16 %v1712, %v1711
    %v1745 = vpack.c.bf16 %v1714, %v1713
    %v1746 = vpack.c.bf16 %v1716, %v1715
    %v1747 = vpack.c.bf16 %v1718, %v1717
    %v1748 = vpack.c.bf16 %v1720, %v1719
    %v1749 = vpack.c.bf16 %v1722, %v1721
    %v1750 = vpack.c.bf16 %v1724, %v1723
    %v1751 = vpack.c.bf16 %v1726, %v1725
    %v1752 = vpack.c.bf16 %v1728, %v1727
    %v1753 = vpack.c.bf16 %v1730, %v1729
    %v1754 = vpack.c.bf16 %v1732, %v1731
    %v1755 = vpack.c.bf16 %v1734, %v1733
    %v1756 = vpack.c.bf16 %v1736, %v1735
    %v1757 = vpack.c.bf16 %v1738, %v1737
    %v1758 = vpack.c.bf16 %v1740, %v1739
    %v1759 = vpack.c.bf16 %v1742, %v1741
    %v1760 = vld [vmem:[%s3] sm:$0xf]
    %v1761 = vld [vmem:[%s3 + $0x4] sm:$0xf]
    %v1762 = vld [vmem:[%s3 + $0x8] sm:$0xf]
    %v1763 = vld [vmem:[%s3 + $0xc] sm:$0xf]
    %v1764 = vld [vmem:[#allocation3 + $0x1] sm:$0xff]
    %v1765 = vld [vmem:[#allocation3 + $0x9] sm:$0xff]
    %v1766 = vld [vmem:[#allocation3 + $0x11] sm:$0xff]
    %v1767 = vld [vmem:[#allocation3 + $0x19] sm:$0xff]
    %v1768 = vld [vmem:[#allocation3 + $0x21] sm:$0xff]
    %v1769 = vld [vmem:[#allocation3 + $0x29] sm:$0xff]
    %v1770 = vld [vmem:[#allocation3 + $0x31] sm:$0xff]
    %v1771 = vld [vmem:[#allocation3 + $0x39] sm:$0xff]
    %v1772 = vld [vmem:[#allocation3 + $0x41] sm:$0xff]
    %v1773 = vld [vmem:[#allocation3 + $0x49] sm:$0xff]
    %v1774 = vld [vmem:[#allocation3 + $0x51] sm:$0xff]
    %v1775 = vld [vmem:[#allocation3 + $0x59] sm:$0xff]
    %v1776 = vld [vmem:[#allocation3 + $0x61] sm:$0xff]
    %v1777 = vld [vmem:[#allocation3 + $0x69] sm:$0xff]
    %v1778 = vld [vmem:[#allocation3 + $0x71] sm:$0xff]
    %v1779 = vld [vmem:[#allocation3 + $0x79] sm:$0xff]
    %v1780 = vld [vmem:[#allocation3 + $0x81] sm:$0xff]
    %v1781 = vld [vmem:[#allocation3 + $0x89] sm:$0xff]
    %v1782 = vld [vmem:[#allocation3 + $0x91] sm:$0xff]
    %v1783 = vld [vmem:[#allocation3 + $0x99] sm:$0xff]
    %v1784 = vld [vmem:[#allocation3 + $0xa1] sm:$0xff]
    %v1785 = vld [vmem:[#allocation3 + $0xa9] sm:$0xff]
    %v1786 = vld [vmem:[#allocation3 + $0xb1] sm:$0xff]
    %v1787 = vld [vmem:[#allocation3 + $0xb9] sm:$0xff]
    %v1788 = vld [vmem:[#allocation3 + $0xc1] sm:$0xff]
    %v1789 = vld [vmem:[#allocation3 + $0xc9] sm:$0xff]
    %v1790 = vld [vmem:[#allocation3 + $0xd1] sm:$0xff]
    %v1791 = vld [vmem:[#allocation3 + $0xd9] sm:$0xff]
    %v1792 = vld [vmem:[#allocation3 + $0xe1] sm:$0xff]
    %v1793 = vld [vmem:[#allocation3 + $0xe9] sm:$0xff]
    %v1794 = vld [vmem:[#allocation3 + $0xf1] sm:$0xff]
    %v1795 = vld [vmem:[#allocation3 + $0xf9] sm:$0xff]
    %v1796 = vld [vmem:[#allocation3 + $0x101] sm:$0xff]
    %v1797 = vld [vmem:[#allocation3 + $0x109] sm:$0xff]
    %v1798 = vpack.c.bf16 %v1765, %v1764
    %v1799 = vpack.c.bf16 %v1767, %v1766
    %v1800 = vpack.c.bf16 %v1769, %v1768
    %v1801 = vpack.c.bf16 %v1771, %v1770
    %v1802 = vpack.c.bf16 %v1773, %v1772
    %v1803 = vpack.c.bf16 %v1775, %v1774
    %v1804 = vpack.c.bf16 %v1777, %v1776
    %v1805 = vpack.c.bf16 %v1779, %v1778
    %v1806 = vpack.c.bf16 %v1781, %v1780
    %v1807 = vpack.c.bf16 %v1783, %v1782
    %v1808 = vpack.c.bf16 %v1785, %v1784
    %v1809 = vpack.c.bf16 %v1787, %v1786
    %v1810 = vpack.c.bf16 %v1789, %v1788
    %v1811 = vpack.c.bf16 %v1791, %v1790
    %v1812 = vpack.c.bf16 %v1793, %v1792
    %v1813 = vpack.c.bf16 %v1795, %v1794
    %v1814 = vpack.c.bf16 %v1797, %v1796
    %s1815 = scalar_lea.vmem %s3, 16
    %v1816 = vld [vmem:[%s1815] sm:$0xf]
    %v1817 = vld [vmem:[%s1815 + $0x4] sm:$0xf]
    %v1818 = vld [vmem:[%s1815 + $0x8] sm:$0xf]
    %v1819 = vld [vmem:[%s1815 + $0xc] sm:$0xf]
    %v1824 = vunpack.c.l.b16 %v1816
    %v1825 = vunpack.c.l.b16 %v1817
    %v1826 = vunpack.c.l.b16 %v1818
    %v1827 = vunpack.c.l.b16 %v1819
    %v1828 = vpack.c.b16 %v1825, %v1824
    %v1829 = vpack.c.b16 %v1827, %v1826
    %v1833 = vsel %vm1670, %v1798, 0
    %v1836 = vsel %vm1670, %v1799, 0
    %v1839 = vsel %vm1670, %v1800, 0
    %v1842 = vsel %vm1670, %v1801, 0
    %v1845 = vsel %vm1670, %v1802, 0
    %v1848 = vsel %vm1670, %v1803, 0
    %v1851 = vsel %vm1670, %v1804, 0
    %v1854 = vsel %vm1670, %v1805, 0
    %v1857 = vsel %vm1670, %v1806, 0
    %v1860 = vsel %vm1670, %v1807, 0
    %v1863 = vsel %vm1670, %v1808, 0
    %v1866 = vsel %vm1670, %v1809, 0
    %v1869 = vsel %vm1670, %v1810, 0
    %v1872 = vsel %vm1670, %v1811, 0
    %v1875 = vsel %vm1670, %v1812, 0
    %v1878 = vsel %vm1670, %v1813, 0
    %v1881 = vsel %vm1670, %v1814, 0
    %1883 = vmatprep.subr.bf16.mxu0 0
    %1884 = vmatpush1.bf16.msra.mxu0 %v1828
    %1885 = vmatprep.subr.bf16.mxu0 0
    %1886 = vmatpush1.bf16.msra.mxu0 %v1829
    %1887 = vmatprep.subr.bf16.mxu0 0
    %1888 = vmatpush1.bf16.msra.mxu0 0
    %1889 = vmatprep.subr.bf16.mxu0 0
    %1890 = vmatpush1.bf16.msra.mxu0 0
    %1891 = vmatprep.subr.bf16.mxu0 0
    %1892 = vmatpush1.bf16.msra.mxu0 0
    %1893 = vmatprep.subr.bf16.mxu0 0
    %1894 = vmatpush1.bf16.msra.mxu0 0
    %1895 = vmatprep.subr.bf16.mxu0 0
    %1896 = vmatpush1.bf16.msra.mxu0 0
    %1897 = vmatprep.subr.bf16.mxu0 0
    %1898 = vmatpush1.bf16.msra.mxu0 0
    %1899 = vmatprep.subr.bf16.mxu0 0
    %1900 = vmatpush1.bf16.msra.mxu0 0
    %1901 = vmatprep.subr.bf16.mxu0 0
    %1902 = vmatpush1.bf16.msra.mxu0 0
    %1903 = vmatprep.subr.bf16.mxu0 0
    %1904 = vmatpush1.bf16.msra.mxu0 0
    %1905 = vmatprep.subr.bf16.mxu0 0
    %1906 = vmatpush1.bf16.msra.mxu0 0
    %1907 = vmatprep.subr.bf16.mxu0 0
    %1908 = vmatpush1.bf16.msra.mxu0 0
    %1909 = vmatprep.subr.bf16.mxu0 0
    %1910 = vmatpush1.bf16.msra.mxu0 0
    %1911 = vmatprep.subr.bf16.mxu0 0
    %1912 = vmatpush1.bf16.msra.mxu0 0
    %1913 = vmatprep.subr.bf16.mxu0 0
    %1914 = vmatpush1.bf16.msra.mxu0 0
    %1915 = vmatprep.mubr.bf16.mxu0 0
    %1916 = vmatmul.mubr.bf16.gmra.mrb[0].mxu0 %v1833
    %v1917 = vpop.f32.mrb[0].mxu0
    %v1918 = vadd.f32 0.0, %v1917
    %v1919 = vpop.f32.mrb[0].mxu0
    %v1920 = vpop.f32.mrb[0].mxu0
    %v1921 = vadd.f32 0.0, %v1920
    %v1922 = vpop.f32.mrb[0].mxu0
    %1923 = vmatprep.mubr.bf16.mxu0 0
    %1924 = vmatmul.mubr.bf16.gmra.mrb[0].mxu0 %v1836
    %v1925 = vpop.f32.mrb[0].mxu0
    %v1926 = vadd.f32 0.0, %v1925
    %v1927 = vpop.f32.mrb[0].mxu0
    %v1928 = vpop.f32.mrb[0].mxu0
    %v1929 = vadd.f32 0.0, %v1928
    %v1930 = vpop.f32.mrb[0].mxu0
    %1931 = vmatprep.mubr.bf16.mxu0 0
    %1932 = vmatmul.mubr.bf16.gmra.mrb[0].mxu0 %v1839
    %v1933 = vpop.f32.mrb[0].mxu0
    %v1934 = vadd.f32 0.0, %v1933
    %v1935 = vpop.f32.mrb[0].mxu0
    %v1936 = vpop.f32.mrb[0].mxu0
    %v1937 = vadd.f32 0.0, %v1936
    %v1938 = vpop.f32.mrb[0].mxu0
    %1939 = vmatprep.mubr.bf16.mxu0 0
    %1940 = vmatmul.mubr.bf16.gmra.mrb[0].mxu0 %v1842
    %v1941 = vpop.f32.mrb[0].mxu0
    %v1942 = vadd.f32 0.0, %v1941
    %v1943 = vpop.f32.mrb[0].mxu0
    %v1944 = vpop.f32.mrb[0].mxu0
    %v1945 = vadd.f32 0.0, %v1944
    %v1946 = vpop.f32.mrb[0].mxu0
    %1947 = vmatprep.mubr.bf16.mxu0 0
    %1948 = vmatmul.mubr.bf16.gmra.mrb[0].mxu0 %v1845
    %v1949 = vpop.f32.mrb[0].mxu0
    %v1950 = vadd.f32 0.0, %v1949
    %v1951 = vpop.f32.mrb[0].mxu0
    %v1952 = vpop.f32.mrb[0].mxu0
    %v1953 = vadd.f32 0.0, %v1952
    %v1954 = vpop.f32.mrb[0].mxu0
    %1955 = vmatprep.mubr.bf16.mxu0 0
    %1956 = vmatmul.mubr.bf16.gmra.mrb[0].mxu0 %v1848
    %v1957 = vpop.f32.mrb[0].mxu0
    %v1958 = vadd.f32 0.0, %v1957
    %v1959 = vpop.f32.mrb[0].mxu0
    %v1960 = vpop.f32.mrb[0].mxu0
    %v1961 = vadd.f32 0.0, %v1960
    %v1962 = vpop.f32.mrb[0].mxu0
    %1963 = vmatprep.mubr.bf16.mxu0 0
    %1964 = vmatmul.mubr.bf16.gmra.mrb[0].mxu0 %v1851
    %v1965 = vpop.f32.mrb[0].mxu0
    %v1966 = vadd.f32 0.0, %v1965
    %v1967 = vpop.f32.mrb[0].mxu0
    %v1968 = vpop.f32.mrb[0].mxu0
    %v1969 = vadd.f32 0.0, %v1968
    %v1970 = vpop.f32.mrb[0].mxu0
    %1971 = vmatprep.mubr.bf16.mxu0 0
    %1972 = vmatmul.mubr.bf16.gmra.mrb[0].mxu0 %v1854
    %v1973 = vpop.f32.mrb[0].mxu0
    %v1974 = vadd.f32 0.0, %v1973
    %v1975 = vpop.f32.mrb[0].mxu0
    %v1976 = vpop.f32.mrb[0].mxu0
    %v1977 = vadd.f32 0.0, %v1976
    %v1978 = vpop.f32.mrb[0].mxu0
    %1979 = vmatprep.mubr.bf16.mxu0 0
    %1980 = vmatmul.mubr.bf16.gmra.mrb[0].mxu0 %v1857
    %v1981 = vpop.f32.mrb[0].mxu0
    %v1982 = vadd.f32 0.0, %v1981
    %v1983 = vpop.f32.mrb[0].mxu0
    %v1984 = vpop.f32.mrb[0].mxu0
    %v1985 = vadd.f32 0.0, %v1984
    %v1986 = vpop.f32.mrb[0].mxu0
    %1987 = vmatprep.mubr.bf16.mxu0 0
    %1988 = vmatmul.mubr.bf16.gmra.mrb[0].mxu0 %v1860
    %v1989 = vpop.f32.mrb[0].mxu0
    %v1990 = vadd.f32 0.0, %v1989
    %v1991 = vpop.f32.mrb[0].mxu0
    %v1992 = vpop.f32.mrb[0].mxu0
    %v1993 = vadd.f32 0.0, %v1992
    %v1994 = vpop.f32.mrb[0].mxu0
    %1995 = vmatprep.mubr.bf16.mxu0 0
    %1996 = vmatmul.mubr.bf16.gmra.mrb[0].mxu0 %v1863
    %v1997 = vpop.f32.mrb[0].mxu0
    %v1998 = vadd.f32 0.0, %v1997
    %v1999 = vpop.f32.mrb[0].mxu0
    %v2000 = vpop.f32.mrb[0].mxu0
    %v2001 = vadd.f32 0.0, %v2000
    %v2002 = vpop.f32.mrb[0].mxu0
    %2003 = vmatprep.mubr.bf16.mxu0 0
    %2004 = vmatmul.mubr.bf16.gmra.mrb[0].mxu0 %v1866
    %v2005 = vpop.f32.mrb[0].mxu0
    %v2006 = vadd.f32 0.0, %v2005
    %v2007 = vpop.f32.mrb[0].mxu0
    %v2008 = vpop.f32.mrb[0].mxu0
    %v2009 = vadd.f32 0.0, %v2008
    %v2010 = vpop.f32.mrb[0].mxu0
    %2011 = vmatprep.mubr.bf16.mxu0 0
    %2012 = vmatmul.mubr.bf16.gmra.mrb[0].mxu0 %v1869
    %v2013 = vpop.f32.mrb[0].mxu0
    %v2014 = vadd.f32 0.0, %v2013
    %v2015 = vpop.f32.mrb[0].mxu0
    %v2016 = vpop.f32.mrb[0].mxu0
    %v2017 = vadd.f32 0.0, %v2016
    %v2018 = vpop.f32.mrb[0].mxu0
    %2019 = vmatprep.mubr.bf16.mxu0 0
    %2020 = vmatmul.mubr.bf16.gmra.mrb[0].mxu0 %v1872
    %v2021 = vpop.f32.mrb[0].mxu0
    %v2022 = vadd.f32 0.0, %v2021
    %v2023 = vpop.f32.mrb[0].mxu0
    %v2024 = vpop.f32.mrb[0].mxu0
    %v2025 = vadd.f32 0.0, %v2024
    %v2026 = vpop.f32.mrb[0].mxu0
    %2027 = vmatprep.mubr.bf16.mxu0 0
    %2028 = vmatmul.mubr.bf16.gmra.mrb[0].mxu0 %v1875
    %v2029 = vpop.f32.mrb[0].mxu0
    %v2030 = vadd.f32 0.0, %v2029
    %v2031 = vpop.f32.mrb[0].mxu0
    %v2032 = vpop.f32.mrb[0].mxu0
    %v2033 = vadd.f32 0.0, %v2032
    %v2034 = vpop.f32.mrb[0].mxu0
    %2035 = vmatprep.mubr.bf16.mxu0 0
    %2036 = vmatmul.mubr.bf16.gmra.mrb[0].mxu0 %v1878
    %v2037 = vpop.f32.mrb[0].mxu0
    %v2038 = vadd.f32 0.0, %v2037
    %v2039 = vpop.f32.mrb[0].mxu0
    %v2040 = vpop.f32.mrb[0].mxu0
    %v2041 = vadd.f32 0.0, %v2040
    %v2042 = vpop.f32.mrb[0].mxu0
    %2043 = vmatprep.mubr.bf16.mxu0 0
    %2044 = vmatmul.mubr.bf16.gmra.mrb[0].mxu0 %v1881
    %v2045 = vpop.f32.mrb[0].mxu0
    %v2046 = vadd.f32 0.0, %v2045
    %v2047 = vpop.f32.mrb[0].mxu0
    %v2048 = vpop.f32.mrb[0].mxu0
    %v2049 = vadd.f32 0.0, %v2048
    %v2050 = vpop.f32.mrb[0].mxu0
    %2051 = vdwg.mxu0
    %v2056 = vunpack.c.l.b16 %v1760
    %v2057 = vunpack.c.l.b16 %v1761
    %v2058 = vunpack.c.l.b16 %v1762
    %v2059 = vunpack.c.l.b16 %v1763
    %v2060 = vpack.c.b16 %v2057, %v2056
    %v2061 = vpack.c.b16 %v2059, %v2058
    %v2065 = vsel %vm1670, %v1743, 0
    %v2068 = vsel %vm1670, %v1744, 0
    %v2071 = vsel %vm1670, %v1745, 0
    %v2074 = vsel %vm1670, %v1746, 0
    %v2077 = vsel %vm1670, %v1747, 0
    %v2080 = vsel %vm1670, %v1748, 0
    %v2083 = vsel %vm1670, %v1749, 0
    %v2086 = vsel %vm1670, %v1750, 0
    %v2089 = vsel %vm1670, %v1751, 0
    %v2092 = vsel %vm1670, %v1752, 0
    %v2095 = vsel %vm1670, %v1753, 0
    %v2098 = vsel %vm1670, %v1754, 0
    %v2101 = vsel %vm1670, %v1755, 0
    %v2104 = vsel %vm1670, %v1756, 0
    %v2107 = vsel %vm1670, %v1757, 0
    %v2110 = vsel %vm1670, %v1758, 0
    %v2113 = vsel %vm1670, %v1759, 0
    %2115 = vmatprep.subr.bf16.mxu0 0
    %2116 = vmatpush1.bf16.msra.mxu0 %v2060
    %2117 = vmatprep.subr.bf16.mxu0 0
    %2118 = vmatpush1.bf16.msra.mxu0 %v2061
    %2119 = vmatprep.subr.bf16.mxu0 0
    %2120 = vmatpush1.bf16.msra.mxu0 0
    %2121 = vmatprep.subr.bf16.mxu0 0
    %2122 = vmatpush1.bf16.msra.mxu0 0
    %2123 = vmatprep.subr.bf16.mxu0 0
    %2124 = vmatpush1.bf16.msra.mxu0 0
    %2125 = vmatprep.subr.bf16.mxu0 0
    %2126 = vmatpush1.bf16.msra.mxu0 0
    %2127 = vmatprep.subr.bf16.mxu0 0
    %2128 = vmatpush1.bf16.msra.mxu0 0
    %2129 = vmatprep.subr.bf16.mxu0 0
    %2130 = vmatpush1.bf16.msra.mxu0 0
    %2131 = vmatprep.subr.bf16.mxu0 0
    %2132 = vmatpush1.bf16.msra.mxu0 0
    %2133 = vmatprep.subr.bf16.mxu0 0
    %2134 = vmatpush1.bf16.msra.mxu0 0
    %2135 = vmatprep.subr.bf16.mxu0 0
    %2136 = vmatpush1.bf16.msra.mxu0 0
    %2137 = vmatprep.subr.bf16.mxu0 0
    %2138 = vmatpush1.bf16.msra.mxu0 0
    %2139 = vmatprep.subr.bf16.mxu0 0
    %2140 = vmatpush1.bf16.msra.mxu0 0
    %2141 = vmatprep.subr.bf16.mxu0 0
    %2142 = vmatpush1.bf16.msra.mxu0 0
    %2143 = vmatprep.subr.bf16.mxu0 0
    %2144 = vmatpush1.bf16.msra.mxu0 0
    %2145 = vmatprep.subr.bf16.mxu0 0
    %2146 = vmatpush1.bf16.msra.mxu0 0
    %2147 = vmatprep.mubr.bf16.mxu0 0
    %2148 = vmatmul.mubr.bf16.gmra.mrb[0].mxu0 %v2065
    %v2149 = vpop.f32.mrb[0].mxu0
    %v2150 = vadd.f32 %v1918, %v2149
    %v2151 = vpop.f32.mrb[0].mxu0
    %v2152 = vpop.f32.mrb[0].mxu0
    %v2153 = vadd.f32 %v1921, %v2152
    %v2154 = vpop.f32.mrb[0].mxu0
    %2155 = vmatprep.mubr.bf16.mxu0 0
    %2156 = vmatmul.mubr.bf16.gmra.mrb[0].mxu0 %v2068
    %v2157 = vpop.f32.mrb[0].mxu0
    %v2158 = vadd.f32 %v1926, %v2157
    %v2159 = vpop.f32.mrb[0].mxu0
    %v2160 = vpop.f32.mrb[0].mxu0
    %v2161 = vadd.f32 %v1929, %v2160
    %v2162 = vpop.f32.mrb[0].mxu0
    %2163 = vmatprep.mubr.bf16.mxu0 0
    %2164 = vmatmul.mubr.bf16.gmra.mrb[0].mxu0 %v2071
    %v2165 = vpop.f32.mrb[0].mxu0
    %v2166 = vadd.f32 %v1934, %v2165
    %v2167 = vpop.f32.mrb[0].mxu0
    %v2168 = vpop.f32.mrb[0].mxu0
    %v2169 = vadd.f32 %v1937, %v2168
    %v2170 = vpop.f32.mrb[0].mxu0
    %2171 = vmatprep.mubr.bf16.mxu0 0
    %2172 = vmatmul.mubr.bf16.gmra.mrb[0].mxu0 %v2074
    %v2173 = vpop.f32.mrb[0].mxu0
    %v2174 = vadd.f32 %v1942, %v2173
    %v2175 = vpop.f32.mrb[0].mxu0
    %v2176 = vpop.f32.mrb[0].mxu0
    %v2177 = vadd.f32 %v1945, %v2176
    %v2178 = vpop.f32.mrb[0].mxu0
    %2179 = vmatprep.mubr.bf16.mxu0 0
    %2180 = vmatmul.mubr.bf16.gmra.mrb[0].mxu0 %v2077
    %v2181 = vpop.f32.mrb[0].mxu0
    %v2182 = vadd.f32 %v1950, %v2181
    %v2183 = vpop.f32.mrb[0].mxu0
    %v2184 = vpop.f32.mrb[0].mxu0
    %v2185 = vadd.f32 %v1953, %v2184
    %v2186 = vpop.f32.mrb[0].mxu0
    %2187 = vmatprep.mubr.bf16.mxu0 0
    %2188 = vmatmul.mubr.bf16.gmra.mrb[0].mxu0 %v2080
    %v2189 = vpop.f32.mrb[0].mxu0
    %v2190 = vadd.f32 %v1958, %v2189
    %v2191 = vpop.f32.mrb[0].mxu0
    %v2192 = vpop.f32.mrb[0].mxu0
    %v2193 = vadd.f32 %v1961, %v2192
    %v2194 = vpop.f32.mrb[0].mxu0
    %2195 = vmatprep.mubr.bf16.mxu0 0
    %2196 = vmatmul.mubr.bf16.gmra.mrb[0].mxu0 %v2083
    %v2197 = vpop.f32.mrb[0].mxu0
    %v2198 = vadd.f32 %v1966, %v2197
    %v2199 = vpop.f32.mrb[0].mxu0
    %v2200 = vpop.f32.mrb[0].mxu0
    %v2201 = vadd.f32 %v1969, %v2200
    %v2202 = vpop.f32.mrb[0].mxu0
    %2203 = vmatprep.mubr.bf16.mxu0 0
    %2204 = vmatmul.mubr.bf16.gmra.mrb[0].mxu0 %v2086
    %v2205 = vpop.f32.mrb[0].mxu0
    %v2206 = vadd.f32 %v1974, %v2205
    %v2207 = vpop.f32.mrb[0].mxu0
    %v2208 = vpop.f32.mrb[0].mxu0
    %v2209 = vadd.f32 %v1977, %v2208
    %v2210 = vpop.f32.mrb[0].mxu0
    %2211 = vmatprep.mubr.bf16.mxu0 0
    %2212 = vmatmul.mubr.bf16.gmra.mrb[0].mxu0 %v2089
    %v2213 = vpop.f32.mrb[0].mxu0
    %v2214 = vadd.f32 %v1982, %v2213
    %v2215 = vpop.f32.mrb[0].mxu0
    %v2216 = vpop.f32.mrb[0].mxu0
    %v2217 = vadd.f32 %v1985, %v2216
    %v2218 = vpop.f32.mrb[0].mxu0
    %2219 = vmatprep.mubr.bf16.mxu0 0
    %2220 = vmatmul.mubr.bf16.gmra.mrb[0].mxu0 %v2092
    %v2221 = vpop.f32.mrb[0].mxu0
    %v2222 = vadd.f32 %v1990, %v2221
    %v2223 = vpop.f32.mrb[0].mxu0
    %v2224 = vpop.f32.mrb[0].mxu0
    %v2225 = vadd.f32 %v1993, %v2224
    %v2226 = vpop.f32.mrb[0].mxu0
    %2227 = vmatprep.mubr.bf16.mxu0 0
    %2228 = vmatmul.mubr.bf16.gmra.mrb[0].mxu0 %v2095
    %v2229 = vpop.f32.mrb[0].mxu0
    %v2230 = vadd.f32 %v1998, %v2229
    %v2231 = vpop.f32.mrb[0].mxu0
    %v2232 = vpop.f32.mrb[0].mxu0
    %v2233 = vadd.f32 %v2001, %v2232
    %v2234 = vpop.f32.mrb[0].mxu0
    %2235 = vmatprep.mubr.bf16.mxu0 0
    %2236 = vmatmul.mubr.bf16.gmra.mrb[0].mxu0 %v2098
    %v2237 = vpop.f32.mrb[0].mxu0
    %v2238 = vadd.f32 %v2006, %v2237
    %v2239 = vpop.f32.mrb[0].mxu0
    %v2240 = vpop.f32.mrb[0].mxu0
    %v2241 = vadd.f32 %v2009, %v2240
    %v2242 = vpop.f32.mrb[0].mxu0
    %2243 = vmatprep.mubr.bf16.mxu0 0
    %2244 = vmatmul.mubr.bf16.gmra.mrb[0].mxu0 %v2101
    %v2245 = vpop.f32.mrb[0].mxu0
    %v2246 = vadd.f32 %v2014, %v2245
    %v2247 = vpop.f32.mrb[0].mxu0
    %v2248 = vpop.f32.mrb[0].mxu0
    %v2249 = vadd.f32 %v2017, %v2248
    %v2250 = vpop.f32.mrb[0].mxu0
    %2251 = vmatprep.mubr.bf16.mxu0 0
    %2252 = vmatmul.mubr.bf16.gmra.mrb[0].mxu0 %v2104
    %v2253 = vpop.f32.mrb[0].mxu0
    %v2254 = vadd.f32 %v2022, %v2253
    %v2255 = vpop.f32.mrb[0].mxu0
    %v2256 = vpop.f32.mrb[0].mxu0
    %v2257 = vadd.f32 %v2025, %v2256
    %v2258 = vpop.f32.mrb[0].mxu0
    %2259 = vmatprep.mubr.bf16.mxu0 0
    %2260 = vmatmul.mubr.bf16.gmra.mrb[0].mxu0 %v2107
    %v2261 = vpop.f32.mrb[0].mxu0
    %v2262 = vadd.f32 %v2030, %v2261
    %v2263 = vpop.f32.mrb[0].mxu0
    %v2264 = vpop.f32.mrb[0].mxu0
    %v2265 = vadd.f32 %v2033, %v2264
    %v2266 = vpop.f32.mrb[0].mxu0
    %2267 = vmatprep.mubr.bf16.mxu0 0
    %2268 = vmatmul.mubr.bf16.gmra.mrb[0].mxu0 %v2110
    %v2269 = vpop.f32.mrb[0].mxu0
    %v2270 = vadd.f32 %v2038, %v2269
    %v2271 = vpop.f32.mrb[0].mxu0
    %v2272 = vpop.f32.mrb[0].mxu0
    %v2273 = vadd.f32 %v2041, %v2272
    %v2274 = vpop.f32.mrb[0].mxu0
    %2275 = vmatprep.mubr.bf16.mxu0 0
    %2276 = vmatmul.mubr.bf16.gmra.mrb[0].mxu0 %v2113
    %v2277 = vpop.f32.mrb[0].mxu0
    %v2278 = vadd.f32 %v2046, %v2277
    %v2279 = vpop.f32.mrb[0].mxu0
    %v2280 = vpop.f32.mrb[0].mxu0
    %v2281 = vadd.f32 %v2049, %v2280
    %v2282 = vpop.f32.mrb[0].mxu0
    %2283 = vdwg.mxu0
    %v2284 = vld [vmem:[#allocation3 + $0x2] sm:$0xff]
    %v2285 = vld [vmem:[#allocation3 + $0xa] sm:$0xff]
    %v2286 = vld [vmem:[#allocation3 + $0x12] sm:$0xff]
    %v2287 = vld [vmem:[#allocation3 + $0x1a] sm:$0xff]
    %v2288 = vld [vmem:[#allocation3 + $0x22] sm:$0xff]
    %v2289 = vld [vmem:[#allocation3 + $0x2a] sm:$0xff]
    %v2290 = vld [vmem:[#allocation3 + $0x32] sm:$0xff]
    %v2291 = vld [vmem:[#allocation3 + $0x3a] sm:$0xff]
    %v2292 = vld [vmem:[#allocation3 + $0x42] sm:$0xff]
    %v2293 = vld [vmem:[#allocation3 + $0x4a] sm:$0xff]
    %v2294 = vld [vmem:[#allocation3 + $0x52] sm:$0xff]
    %v2295 = vld [vmem:[#allocation3 + $0x5a] sm:$0xff]
    %v2296 = vld [vmem:[#allocation3 + $0x62] sm:$0xff]
    %v2297 = vld [vmem:[#allocation3 + $0x6a] sm:$0xff]
    %v2298 = vld [vmem:[#allocation3 + $0x72] sm:$0xff]
    %v2299 = vld [vmem:[#allocation3 + $0x7a] sm:$0xff]
    %v2300 = vld [vmem:[#allocation3 + $0x82] sm:$0xff]
    %v2301 = vld [vmem:[#allocation3 + $0x8a] sm:$0xff]
    %v2302 = vld [vmem:[#allocation3 + $0x92] sm:$0xff]
    %v2303 = vld [vmem:[#allocation3 + $0x9a] sm:$0xff]
    %v2304 = vld [vmem:[#allocation3 + $0xa2] sm:$0xff]
    %v2305 = vld [vmem:[#allocation3 + $0xaa] sm:$0xff]
    %v2306 = vld [vmem:[#allocation3 + $0xb2] sm:$0xff]
    %v2307 = vld [vmem:[#allocation3 + $0xba] sm:$0xff]
    %v2308 = vld [vmem:[#allocation3 + $0xc2] sm:$0xff]
    %v2309 = vld [vmem:[#allocation3 + $0xca] sm:$0xff]
    %v2310 = vld [vmem:[#allocation3 + $0xd2] sm:$0xff]
    %v2311 = vld [vmem:[#allocation3 + $0xda] sm:$0xff]
    %v2312 = vld [vmem:[#allocation3 + $0xe2] sm:$0xff]
    %v2313 = vld [vmem:[#allocation3 + $0xea] sm:$0xff]
    %v2314 = vld [vmem:[#allocation3 + $0xf2] sm:$0xff]
    %v2315 = vld [vmem:[#allocation3 + $0xfa] sm:$0xff]
    %v2316 = vld [vmem:[#allocation3 + $0x102] sm:$0xff]
    %v2317 = vld [vmem:[#allocation3 + $0x10a] sm:$0xff]
    %v2318 = vpack.c.bf16 %v2285, %v2284
    %v2319 = vpack.c.bf16 %v2287, %v2286
    %v2320 = vpack.c.bf16 %v2289, %v2288
    %v2321 = vpack.c.bf16 %v2291, %v2290
    %v2322 = vpack.c.bf16 %v2293, %v2292
    %v2323 = vpack.c.bf16 %v2295, %v2294
    %v2324 = vpack.c.bf16 %v2297, %v2296
    %v2325 = vpack.c.bf16 %v2299, %v2298
    %v2326 = vpack.c.bf16 %v2301, %v2300
    %v2327 = vpack.c.bf16 %v2303, %v2302
    %v2328 = vpack.c.bf16 %v2305, %v2304
    %v2329 = vpack.c.bf16 %v2307, %v2306
    %v2330 = vpack.c.bf16 %v2309, %v2308
    %v2331 = vpack.c.bf16 %v2311, %v2310
    %v2332 = vpack.c.bf16 %v2313, %v2312
    %v2333 = vpack.c.bf16 %v2315, %v2314
    %v2334 = vpack.c.bf16 %v2317, %v2316
    %s2335 = scalar_lea.vmem %s3, 32
    %v2336 = vld [vmem:[%s2335] sm:$0xf]
    %v2337 = vld [vmem:[%s2335 + $0x4] sm:$0xf]
    %v2338 = vld [vmem:[%s2335 + $0x8] sm:$0xf]
    %v2339 = vld [vmem:[%s2335 + $0xc] sm:$0xf]
    %v2344 = vunpack.c.l.b16 %v2336
    %v2345 = vunpack.c.l.b16 %v2337
    %v2346 = vunpack.c.l.b16 %v2338
    %v2347 = vunpack.c.l.b16 %v2339
    %v2348 = vpack.c.b16 %v2345, %v2344
    %v2349 = vpack.c.b16 %v2347, %v2346
    %v2353 = vsel %vm1670, %v2318, 0
    %v2356 = vsel %vm1670, %v2319, 0
    %v2359 = vsel %vm1670, %v2320, 0
    %v2362 = vsel %vm1670, %v2321, 0
    %v2365 = vsel %vm1670, %v2322, 0
    %v2368 = vsel %vm1670, %v2323, 0
    %v2371 = vsel %vm1670, %v2324, 0
    %v2374 = vsel %vm1670, %v2325, 0
    %v2377 = vsel %vm1670, %v2326, 0
    %v2380 = vsel %vm1670, %v2327, 0
    %v2383 = vsel %vm1670, %v2328, 0
    %v2386 = vsel %vm1670, %v2329, 0
    %v2389 = vsel %vm1670, %v2330, 0
    %v2392 = vsel %vm1670, %v2331, 0
    %v2395 = vsel %vm1670, %v2332, 0
    %v2398 = vsel %vm1670, %v2333, 0
    %v2401 = vsel %vm1670, %v2334, 0
    %2403 = vmatprep.subr.bf16.mxu0 0
    %2404 = vmatpush1.bf16.msra.mxu0 %v2348
    %2405 = vmatprep.subr.bf16.mxu0 0
    %2406 = vmatpush1.bf16.msra.mxu0 %v2349
    %2407 = vmatprep.subr.bf16.mxu0 0
    %2408 = vmatpush1.bf16.msra.mxu0 0
    %2409 = vmatprep.subr.bf16.mxu0 0
    %2410 = vmatpush1.bf16.msra.mxu0 0
    %2411 = vmatprep.subr.bf16.mxu0 0
    %2412 = vmatpush1.bf16.msra.mxu0 0
    %2413 = vmatprep.subr.bf16.mxu0 0
    %2414 = vmatpush1.bf16.msra.mxu0 0
    %2415 = vmatprep.subr.bf16.mxu0 0
    %2416 = vmatpush1.bf16.msra.mxu0 0
    %2417 = vmatprep.subr.bf16.mxu0 0
    %2418 = vmatpush1.bf16.msra.mxu0 0
    %2419 = vmatprep.subr.bf16.mxu0 0
    %2420 = vmatpush1.bf16.msra.mxu0 0
    %2421 = vmatprep.subr.bf16.mxu0 0
    %2422 = vmatpush1.bf16.msra.mxu0 0
    %2423 = vmatprep.subr.bf16.mxu0 0
    %2424 = vmatpush1.bf16.msra.mxu0 0
    %2425 = vmatprep.subr.bf16.mxu0 0
    %2426 = vmatpush1.bf16.msra.mxu0 0
    %2427 = vmatprep.subr.bf16.mxu0 0
    %2428 = vmatpush1.bf16.msra.mxu0 0
    %2429 = vmatprep.subr.bf16.mxu0 0
    %2430 = vmatpush1.bf16.msra.mxu0 0
    %2431 = vmatprep.subr.bf16.mxu0 0
    %2432 = vmatpush1.bf16.msra.mxu0 0
    %2433 = vmatprep.subr.bf16.mxu0 0
    %2434 = vmatpush1.bf16.msra.mxu0 0
    %2435 = vmatprep.mubr.bf16.mxu0 0
    %2436 = vmatmul.mubr.bf16.gmra.mrb[0].mxu0 %v2353
    %v2437 = vpop.f32.mrb[0].mxu0
    %v2438 = vadd.f32 0.0, %v2437
    %v2439 = vpop.f32.mrb[0].mxu0
    %v2440 = vpop.f32.mrb[0].mxu0
    %v2441 = vadd.f32 0.0, %v2440
    %v2442 = vpop.f32.mrb[0].mxu0
    %2443 = vmatprep.mubr.bf16.mxu0 0
    %2444 = vmatmul.mubr.bf16.gmra.mrb[0].mxu0 %v2356
    %v2445 = vpop.f32.mrb[0].mxu0
    %v2446 = vadd.f32 0.0, %v2445
    %v2447 = vpop.f32.mrb[0].mxu0
    %v2448 = vpop.f32.mrb[0].mxu0
    %v2449 = vadd.f32 0.0, %v2448
    %v2450 = vpop.f32.mrb[0].mxu0
    %2451 = vmatprep.mubr.bf16.mxu0 0
    %2452 = vmatmul.mubr.bf16.gmra.mrb[0].mxu0 %v2359
    %v2453 = vpop.f32.mrb[0].mxu0
    %v2454 = vadd.f32 0.0, %v2453
    %v2455 = vpop.f32.mrb[0].mxu0
    %v2456 = vpop.f32.mrb[0].mxu0
    %v2457 = vadd.f32 0.0, %v2456
    %v2458 = vpop.f32.mrb[0].mxu0
    %2459 = vmatprep.mubr.bf16.mxu0 0
    %2460 = vmatmul.mubr.bf16.gmra.mrb[0].mxu0 %v2362
    %v2461 = vpop.f32.mrb[0].mxu0
    %v2462 = vadd.f32 0.0, %v2461
    %v2463 = vpop.f32.mrb[0].mxu0
    %v2464 = vpop.f32.mrb[0].mxu0
    %v2465 = vadd.f32 0.0, %v2464
    %v2466 = vpop.f32.mrb[0].mxu0
    %2467 = vmatprep.mubr.bf16.mxu0 0
    %2468 = vmatmul.mubr.bf16.gmra.mrb[0].mxu0 %v2365
    %v2469 = vpop.f32.mrb[0].mxu0
    %v2470 = vadd.f32 0.0, %v2469
    %v2471 = vpop.f32.mrb[0].mxu0
    %v2472 = vpop.f32.mrb[0].mxu0
    %v2473 = vadd.f32 0.0, %v2472
    %v2474 = vpop.f32.mrb[0].mxu0
    %2475 = vmatprep.mubr.bf16.mxu0 0
    %2476 = vmatmul.mubr.bf16.gmra.mrb[0].mxu0 %v2368
    %v2477 = vpop.f32.mrb[0].mxu0
    %v2478 = vadd.f32 0.0, %v2477
    %v2479 = vpop.f32.mrb[0].mxu0
    %v2480 = vpop.f32.mrb[0].mxu0
    %v2481 = vadd.f32 0.0, %v2480
    %v2482 = vpop.f32.mrb[0].mxu0
    %2483 = vmatprep.mubr.bf16.mxu0 0
    %2484 = vmatmul.mubr.bf16.gmra.mrb[0].mxu0 %v2371
    %v2485 = vpop.f32.mrb[0].mxu0
    %v2486 = vadd.f32 0.0, %v2485
    %v2487 = vpop.f32.mrb[0].mxu0
    %v2488 = vpop.f32.mrb[0].mxu0
    %v2489 = vadd.f32 0.0, %v2488
    %v2490 = vpop.f32.mrb[0].mxu0
    %2491 = vmatprep.mubr.bf16.mxu0 0
    %2492 = vmatmul.mubr.bf16.gmra.mrb[0].mxu0 %v2374
    %v2493 = vpop.f32.mrb[0].mxu0
    %v2494 = vadd.f32 0.0, %v2493
    %v2495 = vpop.f32.mrb[0].mxu0
    %v2496 = vpop.f32.mrb[0].mxu0
    %v2497 = vadd.f32 0.0, %v2496
    %v2498 = vpop.f32.mrb[0].mxu0
    %2499 = vmatprep.mubr.bf16.mxu0 0
    %2500 = vmatmul.mubr.bf16.gmra.mrb[0].mxu0 %v2377
    %v2501 = vpop.f32.mrb[0].mxu0
    %v2502 = vadd.f32 0.0, %v2501
    %v2503 = vpop.f32.mrb[0].mxu0
    %v2504 = vpop.f32.mrb[0].mxu0
    %v2505 = vadd.f32 0.0, %v2504
    %v2506 = vpop.f32.mrb[0].mxu0
    %2507 = vmatprep.mubr.bf16.mxu0 0
    %2508 = vmatmul.mubr.bf16.gmra.mrb[0].mxu0 %v2380
    %v2509 = vpop.f32.mrb[0].mxu0
    %v2510 = vadd.f32 0.0, %v2509
    %v2511 = vpop.f32.mrb[0].mxu0
    %v2512 = vpop.f32.mrb[0].mxu0
    %v2513 = vadd.f32 0.0, %v2512
    %v2514 = vpop.f32.mrb[0].mxu0
    %2515 = vmatprep.mubr.bf16.mxu0 0
    %2516 = vmatmul.mubr.bf16.gmra.mrb[0].mxu0 %v2383
    %v2517 = vpop.f32.mrb[0].mxu0
    %v2518 = vadd.f32 0.0, %v2517
    %v2519 = vpop.f32.mrb[0].mxu0
    %v2520 = vpop.f32.mrb[0].mxu0
    %v2521 = vadd.f32 0.0, %v2520
    %v2522 = vpop.f32.mrb[0].mxu0
    %2523 = vmatprep.mubr.bf16.mxu0 0
    %2524 = vmatmul.mubr.bf16.gmra.mrb[0].mxu0 %v2386
    %v2525 = vpop.f32.mrb[0].mxu0
    %v2526 = vadd.f32 0.0, %v2525
    %v2527 = vpop.f32.mrb[0].mxu0
    %v2528 = vpop.f32.mrb[0].mxu0
    %v2529 = vadd.f32 0.0, %v2528
    %v2530 = vpop.f32.mrb[0].mxu0
    %2531 = vmatprep.mubr.bf16.mxu0 0
    %2532 = vmatmul.mubr.bf16.gmra.mrb[0].mxu0 %v2389
    %v2533 = vpop.f32.mrb[0].mxu0
    %v2534 = vadd.f32 0.0, %v2533
    %v2535 = vpop.f32.mrb[0].mxu0
    %v2536 = vpop.f32.mrb[0].mxu0
    %v2537 = vadd.f32 0.0, %v2536
    %v2538 = vpop.f32.mrb[0].mxu0
    %2539 = vmatprep.mubr.bf16.mxu0 0
    %2540 = vmatmul.mubr.bf16.gmra.mrb[0].mxu0 %v2392
    %v2541 = vpop.f32.mrb[0].mxu0
    %v2542 = vadd.f32 0.0, %v2541
    %v2543 = vpop.f32.mrb[0].mxu0
    %v2544 = vpop.f32.mrb[0].mxu0
    %v2545 = vadd.f32 0.0, %v2544
    %v2546 = vpop.f32.mrb[0].mxu0
    %2547 = vmatprep.mubr.bf16.mxu0 0
    %2548 = vmatmul.mubr.bf16.gmra.mrb[0].mxu0 %v2395
    %v2549 = vpop.f32.mrb[0].mxu0
    %v2550 = vadd.f32 0.0, %v2549
    %v2551 = vpop.f32.mrb[0].mxu0
    %v2552 = vpop.f32.mrb[0].mxu0
    %v2553 = vadd.f32 0.0, %v2552
    %v2554 = vpop.f32.mrb[0].mxu0
    %2555 = vmatprep.mubr.bf16.mxu0 0
    %2556 = vmatmul.mubr.bf16.gmra.mrb[0].mxu0 %v2398
    %v2557 = vpop.f32.mrb[0].mxu0
    %v2558 = vadd.f32 0.0, %v2557
    %v2559 = vpop.f32.mrb[0].mxu0
    %v2560 = vpop.f32.mrb[0].mxu0
    %v2561 = vadd.f32 0.0, %v2560
    %v2562 = vpop.f32.mrb[0].mxu0
    %2563 = vmatprep.mubr.bf16.mxu0 0
    %2564 = vmatmul.mubr.bf16.gmra.mrb[0].mxu0 %v2401
    %v2565 = vpop.f32.mrb[0].mxu0
    %v2566 = vadd.f32 0.0, %v2565
    %v2567 = vpop.f32.mrb[0].mxu0
    %v2568 = vpop.f32.mrb[0].mxu0
    %v2569 = vadd.f32 0.0, %v2568
    %v2570 = vpop.f32.mrb[0].mxu0
    %2571 = vdwg.mxu0
    %v2572 = vadd.f32 %v2150, %v2438
    %v2573 = vadd.f32 %v2153, %v2441
    %v2574 = vadd.f32 %v2158, %v2446
    %v2575 = vadd.f32 %v2161, %v2449
    %v2576 = vadd.f32 %v2166, %v2454
    %v2577 = vadd.f32 %v2169, %v2457
    %v2578 = vadd.f32 %v2174, %v2462
    %v2579 = vadd.f32 %v2177, %v2465
    %v2580 = vadd.f32 %v2182, %v2470
    %v2581 = vadd.f32 %v2185, %v2473
    %v2582 = vadd.f32 %v2190, %v2478
    %v2583 = vadd.f32 %v2193, %v2481
    %v2584 = vadd.f32 %v2198, %v2486
    %v2585 = vadd.f32 %v2201, %v2489
    %v2586 = vadd.f32 %v2206, %v2494
    %v2587 = vadd.f32 %v2209, %v2497
    %v2588 = vadd.f32 %v2214, %v2502
    %v2589 = vadd.f32 %v2217, %v2505
    %v2590 = vadd.f32 %v2222, %v2510
    %v2591 = vadd.f32 %v2225, %v2513
    %v2592 = vadd.f32 %v2230, %v2518
    %v2593 = vadd.f32 %v2233, %v2521
    %v2594 = vadd.f32 %v2238, %v2526
    %v2595 = vadd.f32 %v2241, %v2529
    %v2596 = vadd.f32 %v2246, %v2534
    %v2597 = vadd.f32 %v2249, %v2537
    %v2598 = vadd.f32 %v2254, %v2542
    %v2599 = vadd.f32 %v2257, %v2545
    %v2600 = vadd.f32 %v2262, %v2550
    %v2601 = vadd.f32 %v2265, %v2553
    %v2602 = vadd.f32 %v2270, %v2558
    %v2603 = vadd.f32 %v2273, %v2561
    %v2604 = vadd.f32 %v2278, %v2566
    %v2605 = vadd.f32 %v2281, %v2569
    %v2606 = vld [vmem:[#allocation3 + $0x3] sm:$0xff]
    %v2607 = vld [vmem:[#allocation3 + $0xb] sm:$0xff]
    %v2608 = vld [vmem:[#allocation3 + $0x13] sm:$0xff]
    %v2609 = vld [vmem:[#allocation3 + $0x1b] sm:$0xff]
    %v2610 = vld [vmem:[#allocation3 + $0x23] sm:$0xff]
    %v2611 = vld [vmem:[#allocation3 + $0x2b] sm:$0xff]
    %v2612 = vld [vmem:[#allocation3 + $0x33] sm:$0xff]
    %v2613 = vld [vmem:[#allocation3 + $0x3b] sm:$0xff]
    %v2614 = vld [vmem:[#allocation3 + $0x43] sm:$0xff]
    %v2615 = vld [vmem:[#allocation3 + $0x4b] sm:$0xff]
    %v2616 = vld [vmem:[#allocation3 + $0x53] sm:$0xff]
    %v2617 = vld [vmem:[#allocation3 + $0x5b] sm:$0xff]
    %v2618 = vld [vmem:[#allocation3 + $0x63] sm:$0xff]
    %v2619 = vld [vmem:[#allocation3 + $0x6b] sm:$0xff]
    %v2620 = vld [vmem:[#allocation3 + $0x73] sm:$0xff]
    %v2621 = vld [vmem:[#allocation3 + $0x7b] sm:$0xff]
    %v2622 = vld [vmem:[#allocation3 + $0x83] sm:$0xff]
    %v2623 = vld [vmem:[#allocation3 + $0x8b] sm:$0xff]
    %v2624 = vld [vmem:[#allocation3 + $0x93] sm:$0xff]
    %v2625 = vld [vmem:[#allocation3 + $0x9b] sm:$0xff]
    %v2626 = vld [vmem:[#allocation3 + $0xa3] sm:$0xff]
    %v2627 = vld [vmem:[#allocation3 + $0xab] sm:$0xff]
    %v2628 = vld [vmem:[#allocation3 + $0xb3] sm:$0xff]
    %v2629 = vld [vmem:[#allocation3 + $0xbb] sm:$0xff]
    %v2630 = vld [vmem:[#allocation3 + $0xc3] sm:$0xff]
    %v2631 = vld [vmem:[#allocation3 + $0xcb] sm:$0xff]
    %v2632 = vld [vmem:[#allocation3 + $0xd3] sm:$0xff]
    %v2633 = vld [vmem:[#allocation3 + $0xdb] sm:$0xff]
    %v2634 = vld [vmem:[#allocation3 + $0xe3] sm:$0xff]
    %v2635 = vld [vmem:[#allocation3 + $0xeb] sm:$0xff]
    %v2636 = vld [vmem:[#allocation3 + $0xf3] sm:$0xff]
    %v2637 = vld [vmem:[#allocation3 + $0xfb] sm:$0xff]
    %v2638 = vld [vmem:[#allocation3 + $0x103] sm:$0xff]
    %v2639 = vld [vmem:[#allocation3 + $0x10b] sm:$0xff]
    %v2640 = vpack.c.bf16 %v2607, %v2606
    %v2641 = vpack.c.bf16 %v2609, %v2608
    %v2642 = vpack.c.bf16 %v2611, %v2610
    %v2643 = vpack.c.bf16 %v2613, %v2612
    %v2644 = vpack.c.bf16 %v2615, %v2614
    %v2645 = vpack.c.bf16 %v2617, %v2616
    %v2646 = vpack.c.bf16 %v2619, %v2618
    %v2647 = vpack.c.bf16 %v2621, %v2620
    %v2648 = vpack.c.bf16 %v2623, %v2622
    %v2649 = vpack.c.bf16 %v2625, %v2624
    %v2650 = vpack.c.bf16 %v2627, %v2626
    %v2651 = vpack.c.bf16 %v2629, %v2628
    %v2652 = vpack.c.bf16 %v2631, %v2630
    %v2653 = vpack.c.bf16 %v2633, %v2632
    %v2654 = vpack.c.bf16 %v2635, %v2634
    %v2655 = vpack.c.bf16 %v2637, %v2636
    %v2656 = vpack.c.bf16 %v2639, %v2638
    %s2657 = scalar_lea.vmem %s3, 48
    %v2658 = vld [vmem:[%s2657] sm:$0xf]
    %v2659 = vld [vmem:[%s2657 + $0x4] sm:$0xf]
    %v2660 = vld [vmem:[%s2657 + $0x8] sm:$0xf]
    %v2661 = vld [vmem:[%s2657 + $0xc] sm:$0xf]
    %v2666 = vunpack.c.l.b16 %v2658
    %v2667 = vunpack.c.l.b16 %v2659
    %v2668 = vunpack.c.l.b16 %v2660
    %v2669 = vunpack.c.l.b16 %v2661
    %v2670 = vpack.c.b16 %v2667, %v2666
    %v2671 = vpack.c.b16 %v2669, %v2668
    %v2675 = vsel %vm1670, %v2640, 0
    %v2678 = vsel %vm1670, %v2641, 0
    %v2681 = vsel %vm1670, %v2642, 0
    %v2684 = vsel %vm1670, %v2643, 0
    %v2687 = vsel %vm1670, %v2644, 0
    %v2690 = vsel %vm1670, %v2645, 0
    %v2693 = vsel %vm1670, %v2646, 0
    %v2696 = vsel %vm1670, %v2647, 0
    %v2699 = vsel %vm1670, %v2648, 0
    %v2702 = vsel %vm1670, %v2649, 0
    %v2705 = vsel %vm1670, %v2650, 0
    %v2708 = vsel %vm1670, %v2651, 0
    %v2711 = vsel %vm1670, %v2652, 0
    %v2714 = vsel %vm1670, %v2653, 0
    %v2717 = vsel %vm1670, %v2654, 0
    %v2720 = vsel %vm1670, %v2655, 0
    %v2723 = vsel %vm1670, %v2656, 0
    %2725 = vmatprep.subr.bf16.mxu0 0
    %2726 = vmatpush1.bf16.msra.mxu0 %v2670
    %2727 = vmatprep.subr.bf16.mxu0 0
    %2728 = vmatpush1.bf16.msra.mxu0 %v2671
    %2729 = vmatprep.subr.bf16.mxu0 0
    %2730 = vmatpush1.bf16.msra.mxu0 0
    %2731 = vmatprep.subr.bf16.mxu0 0
    %2732 = vmatpush1.bf16.msra.mxu0 0
    %2733 = vmatprep.subr.bf16.mxu0 0
    %2734 = vmatpush1.bf16.msra.mxu0 0
    %2735 = vmatprep.subr.bf16.mxu0 0
    %2736 = vmatpush1.bf16.msra.mxu0 0
    %2737 = vmatprep.subr.bf16.mxu0 0
    %2738 = vmatpush1.bf16.msra.mxu0 0
    %2739 = vmatprep.subr.bf16.mxu0 0
    %2740 = vmatpush1.bf16.msra.mxu0 0
    %2741 = vmatprep.subr.bf16.mxu0 0
    %2742 = vmatpush1.bf16.msra.mxu0 0
    %2743 = vmatprep.subr.bf16.mxu0 0
    %2744 = vmatpush1.bf16.msra.mxu0 0
    %2745 = vmatprep.subr.bf16.mxu0 0
    %2746 = vmatpush1.bf16.msra.mxu0 0
    %2747 = vmatprep.subr.bf16.mxu0 0
    %2748 = vmatpush1.bf16.msra.mxu0 0
    %2749 = vmatprep.subr.bf16.mxu0 0
    %2750 = vmatpush1.bf16.msra.mxu0 0
    %2751 = vmatprep.subr.bf16.mxu0 0
    %2752 = vmatpush1.bf16.msra.mxu0 0
    %2753 = vmatprep.subr.bf16.mxu0 0
    %2754 = vmatpush1.bf16.msra.mxu0 0
    %2755 = vmatprep.subr.bf16.mxu0 0
    %2756 = vmatpush1.bf16.msra.mxu0 0
    %2757 = vmatprep.mubr.bf16.mxu0 0
    %2758 = vmatmul.mubr.bf16.gmra.mrb[0].mxu0 %v2675
    %v2759 = vpop.f32.mrb[0].mxu0
    %v2760 = vadd.f32 0.0, %v2759
    %v2761 = vpop.f32.mrb[0].mxu0
    %v2762 = vpop.f32.mrb[0].mxu0
    %v2763 = vadd.f32 0.0, %v2762
    %v2764 = vpop.f32.mrb[0].mxu0
    %2765 = vmatprep.mubr.bf16.mxu0 0
    %2766 = vmatmul.mubr.bf16.gmra.mrb[0].mxu0 %v2678
    %v2767 = vpop.f32.mrb[0].mxu0
    %v2768 = vadd.f32 0.0, %v2767
    %v2769 = vpop.f32.mrb[0].mxu0
    %v2770 = vpop.f32.mrb[0].mxu0
    %v2771 = vadd.f32 0.0, %v2770
    %v2772 = vpop.f32.mrb[0].mxu0
    %2773 = vmatprep.mubr.bf16.mxu0 0
    %2774 = vmatmul.mubr.bf16.gmra.mrb[0].mxu0 %v2681
    %v2775 = vpop.f32.mrb[0].mxu0
    %v2776 = vadd.f32 0.0, %v2775
    %v2777 = vpop.f32.mrb[0].mxu0
    %v2778 = vpop.f32.mrb[0].mxu0
    %v2779 = vadd.f32 0.0, %v2778
    %v2780 = vpop.f32.mrb[0].mxu0
    %2781 = vmatprep.mubr.bf16.mxu0 0
    %2782 = vmatmul.mubr.bf16.gmra.mrb[0].mxu0 %v2684
    %v2783 = vpop.f32.mrb[0].mxu0
    %v2784 = vadd.f32 0.0, %v2783
    %v2785 = vpop.f32.mrb[0].mxu0
    %v2786 = vpop.f32.mrb[0].mxu0
    %v2787 = vadd.f32 0.0, %v2786
    %v2788 = vpop.f32.mrb[0].mxu0
    %2789 = vmatprep.mubr.bf16.mxu0 0
    %2790 = vmatmul.mubr.bf16.gmra.mrb[0].mxu0 %v2687
    %v2791 = vpop.f32.mrb[0].mxu0
    %v2792 = vadd.f32 0.0, %v2791
    %v2793 = vpop.f32.mrb[0].mxu0
    %v2794 = vpop.f32.mrb[0].mxu0
    %v2795 = vadd.f32 0.0, %v2794
    %v2796 = vpop.f32.mrb[0].mxu0
    %2797 = vmatprep.mubr.bf16.mxu0 0
    %2798 = vmatmul.mubr.bf16.gmra.mrb[0].mxu0 %v2690
    %v2799 = vpop.f32.mrb[0].mxu0
    %v2800 = vadd.f32 0.0, %v2799
    %v2801 = vpop.f32.mrb[0].mxu0
    %v2802 = vpop.f32.mrb[0].mxu0
    %v2803 = vadd.f32 0.0, %v2802
    %v2804 = vpop.f32.mrb[0].mxu0
    %2805 = vmatprep.mubr.bf16.mxu0 0
    %2806 = vmatmul.mubr.bf16.gmra.mrb[0].mxu0 %v2693
    %v2807 = vpop.f32.mrb[0].mxu0
    %v2808 = vadd.f32 0.0, %v2807
    %v2809 = vpop.f32.mrb[0].mxu0
    %v2810 = vpop.f32.mrb[0].mxu0
    %v2811 = vadd.f32 0.0, %v2810
    %v2812 = vpop.f32.mrb[0].mxu0
    %2813 = vmatprep.mubr.bf16.mxu0 0
    %2814 = vmatmul.mubr.bf16.gmra.mrb[0].mxu0 %v2696
    %v2815 = vpop.f32.mrb[0].mxu0
    %v2816 = vadd.f32 0.0, %v2815
    %v2817 = vpop.f32.mrb[0].mxu0
    %v2818 = vpop.f32.mrb[0].mxu0
    %v2819 = vadd.f32 0.0, %v2818
    %v2820 = vpop.f32.mrb[0].mxu0
    %2821 = vmatprep.mubr.bf16.mxu0 0
    %2822 = vmatmul.mubr.bf16.gmra.mrb[0].mxu0 %v2699
    %v2823 = vpop.f32.mrb[0].mxu0
    %v2824 = vadd.f32 0.0, %v2823
    %v2825 = vpop.f32.mrb[0].mxu0
    %v2826 = vpop.f32.mrb[0].mxu0
    %v2827 = vadd.f32 0.0, %v2826
    %v2828 = vpop.f32.mrb[0].mxu0
    %2829 = vmatprep.mubr.bf16.mxu0 0
    %2830 = vmatmul.mubr.bf16.gmra.mrb[0].mxu0 %v2702
    %v2831 = vpop.f32.mrb[0].mxu0
    %v2832 = vadd.f32 0.0, %v2831
    %v2833 = vpop.f32.mrb[0].mxu0
    %v2834 = vpop.f32.mrb[0].mxu0
    %v2835 = vadd.f32 0.0, %v2834
    %v2836 = vpop.f32.mrb[0].mxu0
    %2837 = vmatprep.mubr.bf16.mxu0 0
    %2838 = vmatmul.mubr.bf16.gmra.mrb[0].mxu0 %v2705
    %v2839 = vpop.f32.mrb[0].mxu0
    %v2840 = vadd.f32 0.0, %v2839
    %v2841 = vpop.f32.mrb[0].mxu0
    %v2842 = vpop.f32.mrb[0].mxu0
    %v2843 = vadd.f32 0.0, %v2842
    %v2844 = vpop.f32.mrb[0].mxu0
    %2845 = vmatprep.mubr.bf16.mxu0 0
    %2846 = vmatmul.mubr.bf16.gmra.mrb[0].mxu0 %v2708
    %v2847 = vpop.f32.mrb[0].mxu0
    %v2848 = vadd.f32 0.0, %v2847
    %v2849 = vpop.f32.mrb[0].mxu0
    %v2850 = vpop.f32.mrb[0].mxu0
    %v2851 = vadd.f32 0.0, %v2850
    %v2852 = vpop.f32.mrb[0].mxu0
    %2853 = vmatprep.mubr.bf16.mxu0 0
    %2854 = vmatmul.mubr.bf16.gmra.mrb[0].mxu0 %v2711
    %v2855 = vpop.f32.mrb[0].mxu0
    %v2856 = vadd.f32 0.0, %v2855
    %v2857 = vpop.f32.mrb[0].mxu0
    %v2858 = vpop.f32.mrb[0].mxu0
    %v2859 = vadd.f32 0.0, %v2858
    %v2860 = vpop.f32.mrb[0].mxu0
    %2861 = vmatprep.mubr.bf16.mxu0 0
    %2862 = vmatmul.mubr.bf16.gmra.mrb[0].mxu0 %v2714
    %v2863 = vpop.f32.mrb[0].mxu0
    %v2864 = vadd.f32 0.0, %v2863
    %v2865 = vpop.f32.mrb[0].mxu0
    %v2866 = vpop.f32.mrb[0].mxu0
    %v2867 = vadd.f32 0.0, %v2866
    %v2868 = vpop.f32.mrb[0].mxu0
    %2869 = vmatprep.mubr.bf16.mxu0 0
    %2870 = vmatmul.mubr.bf16.gmra.mrb[0].mxu0 %v2717
    %v2871 = vpop.f32.mrb[0].mxu0
    %v2872 = vadd.f32 0.0, %v2871
    %v2873 = vpop.f32.mrb[0].mxu0
    %v2874 = vpop.f32.mrb[0].mxu0
    %v2875 = vadd.f32 0.0, %v2874
    %v2876 = vpop.f32.mrb[0].mxu0
    %2877 = vmatprep.mubr.bf16.mxu0 0
    %2878 = vmatmul.mubr.bf16.gmra.mrb[0].mxu0 %v2720
    %v2879 = vpop.f32.mrb[0].mxu0
    %v2880 = vadd.f32 0.0, %v2879
    %v2881 = vpop.f32.mrb[0].mxu0
    %v2882 = vpop.f32.mrb[0].mxu0
    %v2883 = vadd.f32 0.0, %v2882
    %v2884 = vpop.f32.mrb[0].mxu0
    %2885 = vmatprep.mubr.bf16.mxu0 0
    %2886 = vmatmul.mubr.bf16.gmra.mrb[0].mxu0 %v2723
    %v2887 = vpop.f32.mrb[0].mxu0
    %v2888 = vadd.f32 0.0, %v2887
    %v2889 = vpop.f32.mrb[0].mxu0
    %v2890 = vpop.f32.mrb[0].mxu0
    %v2891 = vadd.f32 0.0, %v2890
    %v2892 = vpop.f32.mrb[0].mxu0
    %2893 = vdwg.mxu0
    %v2894 = vadd.f32 %v2572, %v2760
    %v2895 = vadd.f32 %v2573, %v2763
    %v2896 = vadd.f32 %v2574, %v2768
    %v2897 = vadd.f32 %v2575, %v2771
    %v2898 = vadd.f32 %v2576, %v2776
    %v2899 = vadd.f32 %v2577, %v2779
    %v2900 = vadd.f32 %v2578, %v2784
    %v2901 = vadd.f32 %v2579, %v2787
    %v2902 = vadd.f32 %v2580, %v2792
    %v2903 = vadd.f32 %v2581, %v2795
    %v2904 = vadd.f32 %v2582, %v2800
    %v2905 = vadd.f32 %v2583, %v2803
    %v2906 = vadd.f32 %v2584, %v2808
    %v2907 = vadd.f32 %v2585, %v2811
    %v2908 = vadd.f32 %v2586, %v2816
    %v2909 = vadd.f32 %v2587, %v2819
    %v2910 = vadd.f32 %v2588, %v2824
    %v2911 = vadd.f32 %v2589, %v2827
    %v2912 = vadd.f32 %v2590, %v2832
    %v2913 = vadd.f32 %v2591, %v2835
    %v2914 = vadd.f32 %v2592, %v2840
    %v2915 = vadd.f32 %v2593, %v2843
    %v2916 = vadd.f32 %v2594, %v2848
    %v2917 = vadd.f32 %v2595, %v2851
    %v2918 = vadd.f32 %v2596, %v2856
    %v2919 = vadd.f32 %v2597, %v2859
    %v2920 = vadd.f32 %v2598, %v2864
    %v2921 = vadd.f32 %v2599, %v2867
    %v2922 = vadd.f32 %v2600, %v2872
    %v2923 = vadd.f32 %v2601, %v2875
    %v2924 = vadd.f32 %v2602, %v2880
    %v2925 = vadd.f32 %v2603, %v2883
    %v2926 = vadd.f32 %v2604, %v2888
    %v2927 = vadd.f32 %v2605, %v2891
    %v2928 = vld [vmem:[#allocation3 + $0xb] sm:$0xff]
    %v2929 = vld [vmem:[#allocation3 + $0x13] sm:$0xff]
    %v2930 = vld [vmem:[#allocation3 + $0x1b] sm:$0xff]
    %v2931 = vld [vmem:[#allocation3 + $0x23] sm:$0xff]
    %v2932 = vld [vmem:[#allocation3 + $0x2b] sm:$0xff]
    %v2933 = vld [vmem:[#allocation3 + $0x33] sm:$0xff]
    %v2934 = vld [vmem:[#allocation3 + $0x3b] sm:$0xff]
    %v2935 = vld [vmem:[#allocation3 + $0x43] sm:$0xff]
    %v2936 = vld [vmem:[#allocation3 + $0x4b] sm:$0xff]
    %v2937 = vld [vmem:[#allocation3 + $0x53] sm:$0xff]
    %v2938 = vld [vmem:[#allocation3 + $0x5b] sm:$0xff]
    %v2939 = vld [vmem:[#allocation3 + $0x63] sm:$0xff]
    %v2940 = vld [vmem:[#allocation3 + $0x6b] sm:$0xff]
    %v2941 = vld [vmem:[#allocation3 + $0x73] sm:$0xff]
    %v2942 = vld [vmem:[#allocation3 + $0x7b] sm:$0xff]
    %v2943 = vld [vmem:[#allocation3 + $0x83] sm:$0xff]
    %v2944 = vld [vmem:[#allocation3 + $0x8b] sm:$0xff]
    %v2945 = vld [vmem:[#allocation3 + $0x93] sm:$0xff]
    %v2946 = vld [vmem:[#allocation3 + $0x9b] sm:$0xff]
    %v2947 = vld [vmem:[#allocation3 + $0xa3] sm:$0xff]
    %v2948 = vld [vmem:[#allocation3 + $0xab] sm:$0xff]
    %v2949 = vld [vmem:[#allocation3 + $0xb3] sm:$0xff]
    %v2950 = vld [vmem:[#allocation3 + $0xbb] sm:$0xff]
    %v2951 = vld [vmem:[#allocation3 + $0xc3] sm:$0xff]
    %v2952 = vld [vmem:[#allocation3 + $0xcb] sm:$0xff]
    %v2953 = vld [vmem:[#allocation3 + $0xd3] sm:$0xff]
    %v2954 = vld [vmem:[#allocation3 + $0xdb] sm:$0xff]
    %v2955 = vld [vmem:[#allocation3 + $0xe3] sm:$0xff]
    %v2956 = vld [vmem:[#allocation3 + $0xeb] sm:$0xff]
    %v2957 = vld [vmem:[#allocation3 + $0xf3] sm:$0xff]
    %v2958 = vld [vmem:[#allocation3 + $0xfb] sm:$0xff]
    %v2959 = vld [vmem:[#allocation3 + $0x103] sm:$0xff]
    %v2960 = vld [vmem:[#allocation3 + $0x10b] sm:$0xff]
    %v2961 = vld [vmem:[#allocation3 + $0x113] sm:$0xff]
    %v2962 = vpack.c.bf16 %v2929, %v2928
    %v2963 = vpack.c.bf16 %v2931, %v2930
    %v2964 = vpack.c.bf16 %v2933, %v2932
    %v2965 = vpack.c.bf16 %v2935, %v2934
    %v2966 = vpack.c.bf16 %v2937, %v2936
    %v2967 = vpack.c.bf16 %v2939, %v2938
    %v2968 = vpack.c.bf16 %v2941, %v2940
    %v2969 = vpack.c.bf16 %v2943, %v2942
    %v2970 = vpack.c.bf16 %v2945, %v2944
    %v2971 = vpack.c.bf16 %v2947, %v2946
    %v2972 = vpack.c.bf16 %v2949, %v2948
    %v2973 = vpack.c.bf16 %v2951, %v2950
    %v2974 = vpack.c.bf16 %v2953, %v2952
    %v2975 = vpack.c.bf16 %v2955, %v2954
    %v2976 = vpack.c.bf16 %v2957, %v2956
    %v2977 = vpack.c.bf16 %v2959, %v2958
    %v2978 = vpack.c.bf16 %v2961, %v2960
    %s2979 = scalar_lea.vmem %s3, 64
    %v2980 = vld [vmem:[%s2979] sm:$0xf]
    %v2981 = vld [vmem:[%s2979 + $0x4] sm:$0xf]
    %v2982 = vld [vmem:[%s2979 + $0x8] sm:$0xf]
    %v2983 = vld [vmem:[%s2979 + $0xc] sm:$0xf]
    %v2988 = vunpack.c.l.b16 %v2980
    %v2989 = vunpack.c.l.b16 %v2981
    %v2990 = vunpack.c.l.b16 %v2982
    %v2991 = vunpack.c.l.b16 %v2983
    %v2992 = vpack.c.b16 %v2989, %v2988
    %v2993 = vpack.c.b16 %v2991, %v2990
    %v2997 = vsel %vm1670, %v2962, 0
    %v3000 = vsel %vm1670, %v2963, 0
    %v3003 = vsel %vm1670, %v2964, 0
    %v3006 = vsel %vm1670, %v2965, 0
    %v3009 = vsel %vm1670, %v2966, 0
    %v3012 = vsel %vm1670, %v2967, 0
    %v3015 = vsel %vm1670, %v2968, 0
    %v3018 = vsel %vm1670, %v2969, 0
    %v3021 = vsel %vm1670, %v2970, 0
    %v3024 = vsel %vm1670, %v2971, 0
    %v3027 = vsel %vm1670, %v2972, 0
    %v3030 = vsel %vm1670, %v2973, 0
    %v3033 = vsel %vm1670, %v2974, 0
    %v3036 = vsel %vm1670, %v2975, 0
    %v3039 = vsel %vm1670, %v2976, 0
    %v3042 = vsel %vm1670, %v2977, 0
    %v3045 = vsel %vm1670, %v2978, 0
    %3047 = vmatprep.subr.bf16.mxu0 0
    %3048 = vmatpush1.bf16.msra.mxu0 %v2992
    %3049 = vmatprep.subr.bf16.mxu0 0
    %3050 = vmatpush1.bf16.msra.mxu0 %v2993
    %3051 = vmatprep.subr.bf16.mxu0 0
    %3052 = vmatpush1.bf16.msra.mxu0 0
    %3053 = vmatprep.subr.bf16.mxu0 0
    %3054 = vmatpush1.bf16.msra.mxu0 0
    %3055 = vmatprep.subr.bf16.mxu0 0
    %3056 = vmatpush1.bf16.msra.mxu0 0
    %3057 = vmatprep.subr.bf16.mxu0 0
    %3058 = vmatpush1.bf16.msra.mxu0 0
    %3059 = vmatprep.subr.bf16.mxu0 0
    %3060 = vmatpush1.bf16.msra.mxu0 0
    %3061 = vmatprep.subr.bf16.mxu0 0
    %3062 = vmatpush1.bf16.msra.mxu0 0
    %3063 = vmatprep.subr.bf16.mxu0 0
    %3064 = vmatpush1.bf16.msra.mxu0 0
    %3065 = vmatprep.subr.bf16.mxu0 0
    %3066 = vmatpush1.bf16.msra.mxu0 0
    %3067 = vmatprep.subr.bf16.mxu0 0
    %3068 = vmatpush1.bf16.msra.mxu0 0
    %3069 = vmatprep.subr.bf16.mxu0 0
    %3070 = vmatpush1.bf16.msra.mxu0 0
    %3071 = vmatprep.subr.bf16.mxu0 0
    %3072 = vmatpush1.bf16.msra.mxu0 0
    %3073 = vmatprep.subr.bf16.mxu0 0
    %3074 = vmatpush1.bf16.msra.mxu0 0
    %3075 = vmatprep.subr.bf16.mxu0 0
    %3076 = vmatpush1.bf16.msra.mxu0 0
    %3077 = vmatprep.subr.bf16.mxu0 0
    %3078 = vmatpush1.bf16.msra.mxu0 0
    %3079 = vmatprep.mubr.bf16.mxu0 0
    %3080 = vmatmul.mubr.bf16.gmra.mrb[0].mxu0 %v2997
    %v3081 = vpop.f32.mrb[0].mxu0
    %v3082 = vadd.f32 0.0, %v3081
    %v3083 = vpop.f32.mrb[0].mxu0
    %v3084 = vpop.f32.mrb[0].mxu0
    %v3085 = vadd.f32 0.0, %v3084
    %v3086 = vpop.f32.mrb[0].mxu0
    %3087 = vmatprep.mubr.bf16.mxu0 0
    %3088 = vmatmul.mubr.bf16.gmra.mrb[0].mxu0 %v3000
    %v3089 = vpop.f32.mrb[0].mxu0
    %v3090 = vadd.f32 0.0, %v3089
    %v3091 = vpop.f32.mrb[0].mxu0
    %v3092 = vpop.f32.mrb[0].mxu0
    %v3093 = vadd.f32 0.0, %v3092
    %v3094 = vpop.f32.mrb[0].mxu0
    %3095 = vmatprep.mubr.bf16.mxu0 0
    %3096 = vmatmul.mubr.bf16.gmra.mrb[0].mxu0 %v3003
    %v3097 = vpop.f32.mrb[0].mxu0
    %v3098 = vadd.f32 0.0, %v3097
    %v3099 = vpop.f32.mrb[0].mxu0
    %v3100 = vpop.f32.mrb[0].mxu0
    %v3101 = vadd.f32 0.0, %v3100
    %v3102 = vpop.f32.mrb[0].mxu0
    %3103 = vmatprep.mubr.bf16.mxu0 0
    %3104 = vmatmul.mubr.bf16.gmra.mrb[0].mxu0 %v3006
    %v3105 = vpop.f32.mrb[0].mxu0
    %v3106 = vadd.f32 0.0, %v3105
    %v3107 = vpop.f32.mrb[0].mxu0
    %v3108 = vpop.f32.mrb[0].mxu0
    %v3109 = vadd.f32 0.0, %v3108
    %v3110 = vpop.f32.mrb[0].mxu0
    %3111 = vmatprep.mubr.bf16.mxu0 0
    %3112 = vmatmul.mubr.bf16.gmra.mrb[0].mxu0 %v3009
    %v3113 = vpop.f32.mrb[0].mxu0
    %v3114 = vadd.f32 0.0, %v3113
    %v3115 = vpop.f32.mrb[0].mxu0
    %v3116 = vpop.f32.mrb[0].mxu0
    %v3117 = vadd.f32 0.0, %v3116
    %v3118 = vpop.f32.mrb[0].mxu0
    %3119 = vmatprep.mubr.bf16.mxu0 0
    %3120 = vmatmul.mubr.bf16.gmra.mrb[0].mxu0 %v3012
    %v3121 = vpop.f32.mrb[0].mxu0
    %v3122 = vadd.f32 0.0, %v3121
    %v3123 = vpop.f32.mrb[0].mxu0
    %v3124 = vpop.f32.mrb[0].mxu0
    %v3125 = vadd.f32 0.0, %v3124
    %v3126 = vpop.f32.mrb[0].mxu0
    %3127 = vmatprep.mubr.bf16.mxu0 0
    %3128 = vmatmul.mubr.bf16.gmra.mrb[0].mxu0 %v3015
    %v3129 = vpop.f32.mrb[0].mxu0
    %v3130 = vadd.f32 0.0, %v3129
    %v3131 = vpop.f32.mrb[0].mxu0
    %v3132 = vpop.f32.mrb[0].mxu0
    %v3133 = vadd.f32 0.0, %v3132
    %v3134 = vpop.f32.mrb[0].mxu0
    %3135 = vmatprep.mubr.bf16.mxu0 0
    %3136 = vmatmul.mubr.bf16.gmra.mrb[0].mxu0 %v3018
    %v3137 = vpop.f32.mrb[0].mxu0
    %v3138 = vadd.f32 0.0, %v3137
    %v3139 = vpop.f32.mrb[0].mxu0
    %v3140 = vpop.f32.mrb[0].mxu0
    %v3141 = vadd.f32 0.0, %v3140
    %v3142 = vpop.f32.mrb[0].mxu0
    %3143 = vmatprep.mubr.bf16.mxu0 0
    %3144 = vmatmul.mubr.bf16.gmra.mrb[0].mxu0 %v3021
    %v3145 = vpop.f32.mrb[0].mxu0
    %v3146 = vadd.f32 0.0, %v3145
    %v3147 = vpop.f32.mrb[0].mxu0
    %v3148 = vpop.f32.mrb[0].mxu0
    %v3149 = vadd.f32 0.0, %v3148
    %v3150 = vpop.f32.mrb[0].mxu0
    %3151 = vmatprep.mubr.bf16.mxu0 0
    %3152 = vmatmul.mubr.bf16.gmra.mrb[0].mxu0 %v3024
    %v3153 = vpop.f32.mrb[0].mxu0
    %v3154 = vadd.f32 0.0, %v3153
    %v3155 = vpop.f32.mrb[0].mxu0
    %v3156 = vpop.f32.mrb[0].mxu0
    %v3157 = vadd.f32 0.0, %v3156
    %v3158 = vpop.f32.mrb[0].mxu0
    %3159 = vmatprep.mubr.bf16.mxu0 0
    %3160 = vmatmul.mubr.bf16.gmra.mrb[0].mxu0 %v3027
    %v3161 = vpop.f32.mrb[0].mxu0
    %v3162 = vadd.f32 0.0, %v3161
    %v3163 = vpop.f32.mrb[0].mxu0
    %v3164 = vpop.f32.mrb[0].mxu0
    %v3165 = vadd.f32 0.0, %v3164
    %v3166 = vpop.f32.mrb[0].mxu0
    %3167 = vmatprep.mubr.bf16.mxu0 0
    %3168 = vmatmul.mubr.bf16.gmra.mrb[0].mxu0 %v3030
    %v3169 = vpop.f32.mrb[0].mxu0
    %v3170 = vadd.f32 0.0, %v3169
    %v3171 = vpop.f32.mrb[0].mxu0
    %v3172 = vpop.f32.mrb[0].mxu0
    %v3173 = vadd.f32 0.0, %v3172
    %v3174 = vpop.f32.mrb[0].mxu0
    %3175 = vmatprep.mubr.bf16.mxu0 0
    %3176 = vmatmul.mubr.bf16.gmra.mrb[0].mxu0 %v3033
    %v3177 = vpop.f32.mrb[0].mxu0
    %v3178 = vadd.f32 0.0, %v3177
    %v3179 = vpop.f32.mrb[0].mxu0
    %v3180 = vpop.f32.mrb[0].mxu0
    %v3181 = vadd.f32 0.0, %v3180
    %v3182 = vpop.f32.mrb[0].mxu0
    %3183 = vmatprep.mubr.bf16.mxu0 0
    %3184 = vmatmul.mubr.bf16.gmra.mrb[0].mxu0 %v3036
    %v3185 = vpop.f32.mrb[0].mxu0
    %v3186 = vadd.f32 0.0, %v3185
    %v3187 = vpop.f32.mrb[0].mxu0
    %v3188 = vpop.f32.mrb[0].mxu0
    %v3189 = vadd.f32 0.0, %v3188
    %v3190 = vpop.f32.mrb[0].mxu0
    %3191 = vmatprep.mubr.bf16.mxu0 0
    %3192 = vmatmul.mubr.bf16.gmra.mrb[0].mxu0 %v3039
    %v3193 = vpop.f32.mrb[0].mxu0
    %v3194 = vadd.f32 0.0, %v3193
    %v3195 = vpop.f32.mrb[0].mxu0
    %v3196 = vpop.f32.mrb[0].mxu0
    %v3197 = vadd.f32 0.0, %v3196
    %v3198 = vpop.f32.mrb[0].mxu0
    %3199 = vmatprep.mubr.bf16.mxu0 0
    %3200 = vmatmul.mubr.bf16.gmra.mrb[0].mxu0 %v3042
    %v3201 = vpop.f32.mrb[0].mxu0
    %v3202 = vadd.f32 0.0, %v3201
    %v3203 = vpop.f32.mrb[0].mxu0
    %v3204 = vpop.f32.mrb[0].mxu0
    %v3205 = vadd.f32 0.0, %v3204
    %v3206 = vpop.f32.mrb[0].mxu0
    %3207 = vmatprep.mubr.bf16.mxu0 0
    %3208 = vmatmul.mubr.bf16.gmra.mrb[0].mxu0 %v3045
    %v3209 = vpop.f32.mrb[0].mxu0
    %v3210 = vadd.f32 0.0, %v3209
    %v3211 = vpop.f32.mrb[0].mxu0
    %v3212 = vpop.f32.mrb[0].mxu0
    %v3213 = vadd.f32 0.0, %v3212
    %v3214 = vpop.f32.mrb[0].mxu0
    %3215 = vdwg.mxu0
    %v3216 = vadd.f32 %v2894, %v3082
    %v3217 = vadd.f32 %v2895, %v3085
    %v3218 = vadd.f32 %v2896, %v3090
    %v3219 = vadd.f32 %v2897, %v3093
    %v3220 = vadd.f32 %v2898, %v3098
    %v3221 = vadd.f32 %v2899, %v3101
    %v3222 = vadd.f32 %v2900, %v3106
    %v3223 = vadd.f32 %v2901, %v3109
    %v3224 = vadd.f32 %v2902, %v3114
    %v3225 = vadd.f32 %v2903, %v3117
    %v3226 = vadd.f32 %v2904, %v3122
    %v3227 = vadd.f32 %v2905, %v3125
    %v3228 = vadd.f32 %v2906, %v3130
    %v3229 = vadd.f32 %v2907, %v3133
    %v3230 = vadd.f32 %v2908, %v3138
    %v3231 = vadd.f32 %v2909, %v3141
    %v3232 = vadd.f32 %v2910, %v3146
    %v3233 = vadd.f32 %v2911, %v3149
    %v3234 = vadd.f32 %v2912, %v3154
    %v3235 = vadd.f32 %v2913, %v3157
    %v3236 = vadd.f32 %v2914, %v3162
    %v3237 = vadd.f32 %v2915, %v3165
    %v3238 = vadd.f32 %v2916, %v3170
    %v3239 = vadd.f32 %v2917, %v3173
    %v3240 = vadd.f32 %v2918, %v3178
    %v3241 = vadd.f32 %v2919, %v3181
    %v3242 = vadd.f32 %v2920, %v3186
    %v3243 = vadd.f32 %v2921, %v3189
    %v3244 = vadd.f32 %v2922, %v3194
    %v3245 = vadd.f32 %v2923, %v3197
    %v3246 = vadd.f32 %v2924, %v3202
    %v3247 = vadd.f32 %v2925, %v3205
    %v3248 = vadd.f32 %v2926, %v3210
    %v3249 = vadd.f32 %v2927, %v3213
    %v3250 = vld [vmem:[#allocation3 + $0xc] sm:$0xff]
    %v3251 = vld [vmem:[#allocation3 + $0x14] sm:$0xff]
    %v3252 = vld [vmem:[#allocation3 + $0x1c] sm:$0xff]
    %v3253 = vld [vmem:[#allocation3 + $0x24] sm:$0xff]
    %v3254 = vld [vmem:[#allocation3 + $0x2c] sm:$0xff]
    %v3255 = vld [vmem:[#allocation3 + $0x34] sm:$0xff]
    %v3256 = vld [vmem:[#allocation3 + $0x3c] sm:$0xff]
    %v3257 = vld [vmem:[#allocation3 + $0x44] sm:$0xff]
    %v3258 = vld [vmem:[#allocation3 + $0x4c] sm:$0xff]
    %v3259 = vld [vmem:[#allocation3 + $0x54] sm:$0xff]
    %v3260 = vld [vmem:[#allocation3 + $0x5c] sm:$0xff]
    %v3261 = vld [vmem:[#allocation3 + $0x64] sm:$0xff]
    %v3262 = vld [vmem:[#allocation3 + $0x6c] sm:$0xff]
    %v3263 = vld [vmem:[#allocation3 + $0x74] sm:$0xff]
    %v3264 = vld [vmem:[#allocation3 + $0x7c] sm:$0xff]
    %v3265 = vld [vmem:[#allocation3 + $0x84] sm:$0xff]
    %v3266 = vld [vmem:[#allocation3 + $0x8c] sm:$0xff]
    %v3267 = vld [vmem:[#allocation3 + $0x94] sm:$0xff]
    %v3268 = vld [vmem:[#allocation3 + $0x9c] sm:$0xff]
    %v3269 = vld [vmem:[#allocation3 + $0xa4] sm:$0xff]
    %v3270 = vld [vmem:[#allocation3 + $0xac] sm:$0xff]
    %v3271 = vld [vmem:[#allocation3 + $0xb4] sm:$0xff]
    %v3272 = vld [vmem:[#allocation3 + $0xbc] sm:$0xff]
    %v3273 = vld [vmem:[#allocation3 + $0xc4] sm:$0xff]
    %v3274 = vld [vmem:[#allocation3 + $0xcc] sm:$0xff]
    %v3275 = vld [vmem:[#allocation3 + $0xd4] sm:$0xff]
    %v3276 = vld [vmem:[#allocation3 + $0xdc] sm:$0xff]
    %v3277 = vld [vmem:[#allocation3 + $0xe4] sm:$0xff]
    %v3278 = vld [vmem:[#allocation3 + $0xec] sm:$0xff]
    %v3279 = vld [vmem:[#allocation3 + $0xf4] sm:$0xff]
    %v3280 = vld [vmem:[#allocation3 + $0xfc] sm:$0xff]
    %v3281 = vld [vmem:[#allocation3 + $0x104] sm:$0xff]
    %v3282 = vld [vmem:[#allocation3 + $0x10c] sm:$0xff]
    %v3283 = vld [vmem:[#allocation3 + $0x114] sm:$0xff]
    %v3284 = vpack.c.bf16 %v3251, %v3250
    %v3285 = vpack.c.bf16 %v3253, %v3252
    %v3286 = vpack.c.bf16 %v3255, %v3254
    %v3287 = vpack.c.bf16 %v3257, %v3256
    %v3288 = vpack.c.bf16 %v3259, %v3258
    %v3289 = vpack.c.bf16 %v3261, %v3260
    %v3290 = vpack.c.bf16 %v3263, %v3262
    %v3291 = vpack.c.bf16 %v3265, %v3264
    %v3292 = vpack.c.bf16 %v3267, %v3266
    %v3293 = vpack.c.bf16 %v3269, %v3268
    %v3294 = vpack.c.bf16 %v3271, %v3270
    %v3295 = vpack.c.bf16 %v3273, %v3272
    %v3296 = vpack.c.bf16 %v3275, %v3274
    %v3297 = vpack.c.bf16 %v3277, %v3276
    %v3298 = vpack.c.bf16 %v3279, %v3278
    %v3299 = vpack.c.bf16 %v3281, %v3280
    %v3300 = vpack.c.bf16 %v3283, %v3282
    %s3301 = scalar_lea.vmem %s3, 80
    %v3302 = vld [vmem:[%s3301] sm:$0xf]
    %v3303 = vld [vmem:[%s3301 + $0x4] sm:$0xf]
    %v3304 = vld [vmem:[%s3301 + $0x8] sm:$0xf]
    %v3305 = vld [vmem:[%s3301 + $0xc] sm:$0xf]
    %v3310 = vunpack.c.l.b16 %v3302
    %v3311 = vunpack.c.l.b16 %v3303
    %v3312 = vunpack.c.l.b16 %v3304
    %v3313 = vunpack.c.l.b16 %v3305
    %v3314 = vpack.c.b16 %v3311, %v3310
    %v3315 = vpack.c.b16 %v3313, %v3312
    %v3319 = vsel %vm1670, %v3284, 0
    %v3322 = vsel %vm1670, %v3285, 0
    %v3325 = vsel %vm1670, %v3286, 0
    %v3328 = vsel %vm1670, %v3287, 0
    %v3331 = vsel %vm1670, %v3288, 0
    %v3334 = vsel %vm1670, %v3289, 0
    %v3337 = vsel %vm1670, %v3290, 0
    %v3340 = vsel %vm1670, %v3291, 0
    %v3343 = vsel %vm1670, %v3292, 0
    %v3346 = vsel %vm1670, %v3293, 0
    %v3349 = vsel %vm1670, %v3294, 0
    %v3352 = vsel %vm1670, %v3295, 0
    %v3355 = vsel %vm1670, %v3296, 0
    %v3358 = vsel %vm1670, %v3297, 0
    %v3361 = vsel %vm1670, %v3298, 0
    %v3364 = vsel %vm1670, %v3299, 0
    %v3367 = vsel %vm1670, %v3300, 0
    %3369 = vmatprep.subr.bf16.mxu0 0
    %3370 = vmatpush1.bf16.msra.mxu0 %v3314
    %3371 = vmatprep.subr.bf16.mxu0 0
    %3372 = vmatpush1.bf16.msra.mxu0 %v3315
    %3373 = vmatprep.subr.bf16.mxu0 0
    %3374 = vmatpush1.bf16.msra.mxu0 0
    %3375 = vmatprep.subr.bf16.mxu0 0
    %3376 = vmatpush1.bf16.msra.mxu0 0
    %3377 = vmatprep.subr.bf16.mxu0 0
    %3378 = vmatpush1.bf16.msra.mxu0 0
    %3379 = vmatprep.subr.bf16.mxu0 0
    %3380 = vmatpush1.bf16.msra.mxu0 0
    %3381 = vmatprep.subr.bf16.mxu0 0
    %3382 = vmatpush1.bf16.msra.mxu0 0
    %3383 = vmatprep.subr.bf16.mxu0 0
    %3384 = vmatpush1.bf16.msra.mxu0 0
    %3385 = vmatprep.subr.bf16.mxu0 0
    %3386 = vmatpush1.bf16.msra.mxu0 0
    %3387 = vmatprep.subr.bf16.mxu0 0
    %3388 = vmatpush1.bf16.msra.mxu0 0
    %3389 = vmatprep.subr.bf16.mxu0 0
    %3390 = vmatpush1.bf16.msra.mxu0 0
    %3391 = vmatprep.subr.bf16.mxu0 0
    %3392 = vmatpush1.bf16.msra.mxu0 0
    %3393 = vmatprep.subr.bf16.mxu0 0
    %3394 = vmatpush1.bf16.msra.mxu0 0
    %3395 = vmatprep.subr.bf16.mxu0 0
    %3396 = vmatpush1.bf16.msra.mxu0 0
    %3397 = vmatprep.subr.bf16.mxu0 0
    %3398 = vmatpush1.bf16.msra.mxu0 0
    %3399 = vmatprep.subr.bf16.mxu0 0
    %3400 = vmatpush1.bf16.msra.mxu0 0
    %3401 = vmatprep.mubr.bf16.mxu0 0
    %3402 = vmatmul.mubr.bf16.gmra.mrb[0].mxu0 %v3319
    %v3403 = vpop.f32.mrb[0].mxu0
    %v3404 = vadd.f32 0.0, %v3403
    %v3405 = vpop.f32.mrb[0].mxu0
    %v3406 = vpop.f32.mrb[0].mxu0
    %v3407 = vadd.f32 0.0, %v3406
    %v3408 = vpop.f32.mrb[0].mxu0
    %3409 = vmatprep.mubr.bf16.mxu0 0
    %3410 = vmatmul.mubr.bf16.gmra.mrb[0].mxu0 %v3322
    %v3411 = vpop.f32.mrb[0].mxu0
    %v3412 = vadd.f32 0.0, %v3411
    %v3413 = vpop.f32.mrb[0].mxu0
    %v3414 = vpop.f32.mrb[0].mxu0
    %v3415 = vadd.f32 0.0, %v3414
    %v3416 = vpop.f32.mrb[0].mxu0
    %3417 = vmatprep.mubr.bf16.mxu0 0
    %3418 = vmatmul.mubr.bf16.gmra.mrb[0].mxu0 %v3325
    %v3419 = vpop.f32.mrb[0].mxu0
    %v3420 = vadd.f32 0.0, %v3419
    %v3421 = vpop.f32.mrb[0].mxu0
    %v3422 = vpop.f32.mrb[0].mxu0
    %v3423 = vadd.f32 0.0, %v3422
    %v3424 = vpop.f32.mrb[0].mxu0
    %3425 = vmatprep.mubr.bf16.mxu0 0
    %3426 = vmatmul.mubr.bf16.gmra.mrb[0].mxu0 %v3328
    %v3427 = vpop.f32.mrb[0].mxu0
    %v3428 = vadd.f32 0.0, %v3427
    %v3429 = vpop.f32.mrb[0].mxu0
    %v3430 = vpop.f32.mrb[0].mxu0
    %v3431 = vadd.f32 0.0, %v3430
    %v3432 = vpop.f32.mrb[0].mxu0
    %3433 = vmatprep.mubr.bf16.mxu0 0
    %3434 = vmatmul.mubr.bf16.gmra.mrb[0].mxu0 %v3331
    %v3435 = vpop.f32.mrb[0].mxu0
    %v3436 = vadd.f32 0.0, %v3435
    %v3437 = vpop.f32.mrb[0].mxu0
    %v3438 = vpop.f32.mrb[0].mxu0
    %v3439 = vadd.f32 0.0, %v3438
    %v3440 = vpop.f32.mrb[0].mxu0
    %3441 = vmatprep.mubr.bf16.mxu0 0
    %3442 = vmatmul.mubr.bf16.gmra.mrb[0].mxu0 %v3334
    %v3443 = vpop.f32.mrb[0].mxu0
    %v3444 = vadd.f32 0.0, %v3443
    %v3445 = vpop.f32.mrb[0].mxu0
    %v3446 = vpop.f32.mrb[0].mxu0
    %v3447 = vadd.f32 0.0, %v3446
    %v3448 = vpop.f32.mrb[0].mxu0
    %3449 = vmatprep.mubr.bf16.mxu0 0
    %3450 = vmatmul.mubr.bf16.gmra.mrb[0].mxu0 %v3337
    %v3451 = vpop.f32.mrb[0].mxu0
    %v3452 = vadd.f32 0.0, %v3451
    %v3453 = vpop.f32.mrb[0].mxu0
    %v3454 = vpop.f32.mrb[0].mxu0
    %v3455 = vadd.f32 0.0, %v3454
    %v3456 = vpop.f32.mrb[0].mxu0
    %3457 = vmatprep.mubr.bf16.mxu0 0
    %3458 = vmatmul.mubr.bf16.gmra.mrb[0].mxu0 %v3340
    %v3459 = vpop.f32.mrb[0].mxu0
    %v3460 = vadd.f32 0.0, %v3459
    %v3461 = vpop.f32.mrb[0].mxu0
    %v3462 = vpop.f32.mrb[0].mxu0
    %v3463 = vadd.f32 0.0, %v3462
    %v3464 = vpop.f32.mrb[0].mxu0
    %3465 = vmatprep.mubr.bf16.mxu0 0
    %3466 = vmatmul.mubr.bf16.gmra.mrb[0].mxu0 %v3343
    %v3467 = vpop.f32.mrb[0].mxu0
    %v3468 = vadd.f32 0.0, %v3467
    %v3469 = vpop.f32.mrb[0].mxu0
    %v3470 = vpop.f32.mrb[0].mxu0
    %v3471 = vadd.f32 0.0, %v3470
    %v3472 = vpop.f32.mrb[0].mxu0
    %3473 = vmatprep.mubr.bf16.mxu0 0
    %3474 = vmatmul.mubr.bf16.gmra.mrb[0].mxu0 %v3346
    %v3475 = vpop.f32.mrb[0].mxu0
    %v3476 = vadd.f32 0.0, %v3475
    %v3477 = vpop.f32.mrb[0].mxu0
    %v3478 = vpop.f32.mrb[0].mxu0
    %v3479 = vadd.f32 0.0, %v3478
    %v3480 = vpop.f32.mrb[0].mxu0
    %3481 = vmatprep.mubr.bf16.mxu0 0
    %3482 = vmatmul.mubr.bf16.gmra.mrb[0].mxu0 %v3349
    %v3483 = vpop.f32.mrb[0].mxu0
    %v3484 = vadd.f32 0.0, %v3483
    %v3485 = vpop.f32.mrb[0].mxu0
    %v3486 = vpop.f32.mrb[0].mxu0
    %v3487 = vadd.f32 0.0, %v3486
    %v3488 = vpop.f32.mrb[0].mxu0
    %3489 = vmatprep.mubr.bf16.mxu0 0
    %3490 = vmatmul.mubr.bf16.gmra.mrb[0].mxu0 %v3352
    %v3491 = vpop.f32.mrb[0].mxu0
    %v3492 = vadd.f32 0.0, %v3491
    %v3493 = vpop.f32.mrb[0].mxu0
    %v3494 = vpop.f32.mrb[0].mxu0
    %v3495 = vadd.f32 0.0, %v3494
    %v3496 = vpop.f32.mrb[0].mxu0
    %3497 = vmatprep.mubr.bf16.mxu0 0
    %3498 = vmatmul.mubr.bf16.gmra.mrb[0].mxu0 %v3355
    %v3499 = vpop.f32.mrb[0].mxu0
    %v3500 = vadd.f32 0.0, %v3499
    %v3501 = vpop.f32.mrb[0].mxu0
    %v3502 = vpop.f32.mrb[0].mxu0
    %v3503 = vadd.f32 0.0, %v3502
    %v3504 = vpop.f32.mrb[0].mxu0
    %3505 = vmatprep.mubr.bf16.mxu0 0
    %3506 = vmatmul.mubr.bf16.gmra.mrb[0].mxu0 %v3358
    %v3507 = vpop.f32.mrb[0].mxu0
    %v3508 = vadd.f32 0.0, %v3507
    %v3509 = vpop.f32.mrb[0].mxu0
    %v3510 = vpop.f32.mrb[0].mxu0
    %v3511 = vadd.f32 0.0, %v3510
    %v3512 = vpop.f32.mrb[0].mxu0
    %3513 = vmatprep.mubr.bf16.mxu0 0
    %3514 = vmatmul.mubr.bf16.gmra.mrb[0].mxu0 %v3361
    %v3515 = vpop.f32.mrb[0].mxu0
    %v3516 = vadd.f32 0.0, %v3515
    %v3517 = vpop.f32.mrb[0].mxu0
    %v3518 = vpop.f32.mrb[0].mxu0
    %v3519 = vadd.f32 0.0, %v3518
    %v3520 = vpop.f32.mrb[0].mxu0
    %3521 = vmatprep.mubr.bf16.mxu0 0
    %3522 = vmatmul.mubr.bf16.gmra.mrb[0].mxu0 %v3364
    %v3523 = vpop.f32.mrb[0].mxu0
    %v3524 = vadd.f32 0.0, %v3523
    %v3525 = vpop.f32.mrb[0].mxu0
    %v3526 = vpop.f32.mrb[0].mxu0
    %v3527 = vadd.f32 0.0, %v3526
    %v3528 = vpop.f32.mrb[0].mxu0
    %3529 = vmatprep.mubr.bf16.mxu0 0
    %3530 = vmatmul.mubr.bf16.gmra.mrb[0].mxu0 %v3367
    %v3531 = vpop.f32.mrb[0].mxu0
    %v3532 = vadd.f32 0.0, %v3531
    %v3533 = vpop.f32.mrb[0].mxu0
    %v3534 = vpop.f32.mrb[0].mxu0
    %v3535 = vadd.f32 0.0, %v3534
    %v3536 = vpop.f32.mrb[0].mxu0
    %3537 = vdwg.mxu0
    %v3538 = vadd.f32 %v3216, %v3404
    %v3539 = vadd.f32 %v3217, %v3407
    %v3540 = vadd.f32 %v3218, %v3412
    %v3541 = vadd.f32 %v3219, %v3415
    %v3542 = vadd.f32 %v3220, %v3420
    %v3543 = vadd.f32 %v3221, %v3423
    %v3544 = vadd.f32 %v3222, %v3428
    %v3545 = vadd.f32 %v3223, %v3431
    %v3546 = vadd.f32 %v3224, %v3436
    %v3547 = vadd.f32 %v3225, %v3439
    %v3548 = vadd.f32 %v3226, %v3444
    %v3549 = vadd.f32 %v3227, %v3447
    %v3550 = vadd.f32 %v3228, %v3452
    %v3551 = vadd.f32 %v3229, %v3455
    %v3552 = vadd.f32 %v3230, %v3460
    %v3553 = vadd.f32 %v3231, %v3463
    %v3554 = vadd.f32 %v3232, %v3468
    %v3555 = vadd.f32 %v3233, %v3471
    %v3556 = vadd.f32 %v3234, %v3476
    %v3557 = vadd.f32 %v3235, %v3479
    %v3558 = vadd.f32 %v3236, %v3484
    %v3559 = vadd.f32 %v3237, %v3487
    %v3560 = vadd.f32 %v3238, %v3492
    %v3561 = vadd.f32 %v3239, %v3495
    %v3562 = vadd.f32 %v3240, %v3500
    %v3563 = vadd.f32 %v3241, %v3503
    %v3564 = vadd.f32 %v3242, %v3508
    %v3565 = vadd.f32 %v3243, %v3511
    %v3566 = vadd.f32 %v3244, %v3516
    %v3567 = vadd.f32 %v3245, %v3519
    %v3568 = vadd.f32 %v3246, %v3524
    %v3569 = vadd.f32 %v3247, %v3527
    %v3570 = vadd.f32 %v3248, %v3532
    %v3571 = vadd.f32 %v3249, %v3535
    %v3572 = vld [vmem:[#allocation3 + $0xd] sm:$0xff]
    %v3573 = vld [vmem:[#allocation3 + $0x15] sm:$0xff]
    %v3574 = vld [vmem:[#allocation3 + $0x1d] sm:$0xff]
    %v3575 = vld [vmem:[#allocation3 + $0x25] sm:$0xff]
    %v3576 = vld [vmem:[#allocation3 + $0x2d] sm:$0xff]
    %v3577 = vld [vmem:[#allocation3 + $0x35] sm:$0xff]
    %v3578 = vld [vmem:[#allocation3 + $0x3d] sm:$0xff]
    %v3579 = vld [vmem:[#allocation3 + $0x45] sm:$0xff]
    %v3580 = vld [vmem:[#allocation3 + $0x4d] sm:$0xff]
    %v3581 = vld [vmem:[#allocation3 + $0x55] sm:$0xff]
    %v3582 = vld [vmem:[#allocation3 + $0x5d] sm:$0xff]
    %v3583 = vld [vmem:[#allocation3 + $0x65] sm:$0xff]
    %v3584 = vld [vmem:[#allocation3 + $0x6d] sm:$0xff]
    %v3585 = vld [vmem:[#allocation3 + $0x75] sm:$0xff]
    %v3586 = vld [vmem:[#allocation3 + $0x7d] sm:$0xff]
    %v3587 = vld [vmem:[#allocation3 + $0x85] sm:$0xff]
    %v3588 = vld [vmem:[#allocation3 + $0x8d] sm:$0xff]
    %v3589 = vld [vmem:[#allocation3 + $0x95] sm:$0xff]
    %v3590 = vld [vmem:[#allocation3 + $0x9d] sm:$0xff]
    %v3591 = vld [vmem:[#allocation3 + $0xa5] sm:$0xff]
    %v3592 = vld [vmem:[#allocation3 + $0xad] sm:$0xff]
    %v3593 = vld [vmem:[#allocation3 + $0xb5] sm:$0xff]
    %v3594 = vld [vmem:[#allocation3 + $0xbd] sm:$0xff]
    %v3595 = vld [vmem:[#allocation3 + $0xc5] sm:$0xff]
    %v3596 = vld [vmem:[#allocation3 + $0xcd] sm:$0xff]
    %v3597 = vld [vmem:[#allocation3 + $0xd5] sm:$0xff]
    %v3598 = vld [vmem:[#allocation3 + $0xdd] sm:$0xff]
    %v3599 = vld [vmem:[#allocation3 + $0xe5] sm:$0xff]
    %v3600 = vld [vmem:[#allocation3 + $0xed] sm:$0xff]
    %v3601 = vld [vmem:[#allocation3 + $0xf5] sm:$0xff]
    %v3602 = vld [vmem:[#allocation3 + $0xfd] sm:$0xff]
    %v3603 = vld [vmem:[#allocation3 + $0x105] sm:$0xff]
    %v3604 = vld [vmem:[#allocation3 + $0x10d] sm:$0xff]
    %v3605 = vld [vmem:[#allocation3 + $0x115] sm:$0xff]
    %v3606 = vpack.c.bf16 %v3573, %v3572
    %v3607 = vpack.c.bf16 %v3575, %v3574
    %v3608 = vpack.c.bf16 %v3577, %v3576
    %v3609 = vpack.c.bf16 %v3579, %v3578
    %v3610 = vpack.c.bf16 %v3581, %v3580
    %v3611 = vpack.c.bf16 %v3583, %v3582
    %v3612 = vpack.c.bf16 %v3585, %v3584
    %v3613 = vpack.c.bf16 %v3587, %v3586
    %v3614 = vpack.c.bf16 %v3589, %v3588
    %v3615 = vpack.c.bf16 %v3591, %v3590
    %v3616 = vpack.c.bf16 %v3593, %v3592
    %v3617 = vpack.c.bf16 %v3595, %v3594
    %v3618 = vpack.c.bf16 %v3597, %v3596
    %v3619 = vpack.c.bf16 %v3599, %v3598
    %v3620 = vpack.c.bf16 %v3601, %v3600
    %v3621 = vpack.c.bf16 %v3603, %v3602
    %v3622 = vpack.c.bf16 %v3605, %v3604
    %s3623 = scalar_lea.vmem %s3, 96
    %v3624 = vld [vmem:[%s3623] sm:$0xf]
    %v3625 = vld [vmem:[%s3623 + $0x4] sm:$0xf]
    %v3626 = vld [vmem:[%s3623 + $0x8] sm:$0xf]
    %v3627 = vld [vmem:[%s3623 + $0xc] sm:$0xf]
    %v3632 = vunpack.c.l.b16 %v3624
    %v3633 = vunpack.c.l.b16 %v3625
    %v3634 = vunpack.c.l.b16 %v3626
    %v3635 = vunpack.c.l.b16 %v3627
    %v3636 = vpack.c.b16 %v3633, %v3632
    %v3637 = vpack.c.b16 %v3635, %v3634
    %v3641 = vsel %vm1670, %v3606, 0
    %v3644 = vsel %vm1670, %v3607, 0
    %v3647 = vsel %vm1670, %v3608, 0
    %v3650 = vsel %vm1670, %v3609, 0
    %v3653 = vsel %vm1670, %v3610, 0
    %v3656 = vsel %vm1670, %v3611, 0
    %v3659 = vsel %vm1670, %v3612, 0
    %v3662 = vsel %vm1670, %v3613, 0
    %v3665 = vsel %vm1670, %v3614, 0
    %v3668 = vsel %vm1670, %v3615, 0
    %v3671 = vsel %vm1670, %v3616, 0
    %v3674 = vsel %vm1670, %v3617, 0
    %v3677 = vsel %vm1670, %v3618, 0
    %v3680 = vsel %vm1670, %v3619, 0
    %v3683 = vsel %vm1670, %v3620, 0
    %v3686 = vsel %vm1670, %v3621, 0
    %v3689 = vsel %vm1670, %v3622, 0
    %3691 = vmatprep.subr.bf16.mxu0 0
    %3692 = vmatpush1.bf16.msra.mxu0 %v3636
    %3693 = vmatprep.subr.bf16.mxu0 0
    %3694 = vmatpush1.bf16.msra.mxu0 %v3637
    %3695 = vmatprep.subr.bf16.mxu0 0
    %3696 = vmatpush1.bf16.msra.mxu0 0
    %3697 = vmatprep.subr.bf16.mxu0 0
    %3698 = vmatpush1.bf16.msra.mxu0 0
    %3699 = vmatprep.subr.bf16.mxu0 0
    %3700 = vmatpush1.bf16.msra.mxu0 0
    %3701 = vmatprep.subr.bf16.mxu0 0
    %3702 = vmatpush1.bf16.msra.mxu0 0
    %3703 = vmatprep.subr.bf16.mxu0 0
    %3704 = vmatpush1.bf16.msra.mxu0 0
    %3705 = vmatprep.subr.bf16.mxu0 0
    %3706 = vmatpush1.bf16.msra.mxu0 0
    %3707 = vmatprep.subr.bf16.mxu0 0
    %3708 = vmatpush1.bf16.msra.mxu0 0
    %3709 = vmatprep.subr.bf16.mxu0 0
    %3710 = vmatpush1.bf16.msra.mxu0 0
    %3711 = vmatprep.subr.bf16.mxu0 0
    %3712 = vmatpush1.bf16.msra.mxu0 0
    %3713 = vmatprep.subr.bf16.mxu0 0
    %3714 = vmatpush1.bf16.msra.mxu0 0
    %3715 = vmatprep.subr.bf16.mxu0 0
    %3716 = vmatpush1.bf16.msra.mxu0 0
    %3717 = vmatprep.subr.bf16.mxu0 0
    %3718 = vmatpush1.bf16.msra.mxu0 0
    %3719 = vmatprep.subr.bf16.mxu0 0
    %3720 = vmatpush1.bf16.msra.mxu0 0
    %3721 = vmatprep.subr.bf16.mxu0 0
    %3722 = vmatpush1.bf16.msra.mxu0 0
    %3723 = vmatprep.mubr.bf16.mxu0 0
    %3724 = vmatmul.mubr.bf16.gmra.mrb[0].mxu0 %v3641
    %v3725 = vpop.f32.mrb[0].mxu0
    %v3726 = vadd.f32 0.0, %v3725
    %v3727 = vpop.f32.mrb[0].mxu0
    %v3728 = vpop.f32.mrb[0].mxu0
    %v3729 = vadd.f32 0.0, %v3728
    %v3730 = vpop.f32.mrb[0].mxu0
    %3731 = vmatprep.mubr.bf16.mxu0 0
    %3732 = vmatmul.mubr.bf16.gmra.mrb[0].mxu0 %v3644
    %v3733 = vpop.f32.mrb[0].mxu0
    %v3734 = vadd.f32 0.0, %v3733
    %v3735 = vpop.f32.mrb[0].mxu0
    %v3736 = vpop.f32.mrb[0].mxu0
    %v3737 = vadd.f32 0.0, %v3736
    %v3738 = vpop.f32.mrb[0].mxu0
    %3739 = vmatprep.mubr.bf16.mxu0 0
    %3740 = vmatmul.mubr.bf16.gmra.mrb[0].mxu0 %v3647
    %v3741 = vpop.f32.mrb[0].mxu0
    %v3742 = vadd.f32 0.0, %v3741
    %v3743 = vpop.f32.mrb[0].mxu0
    %v3744 = vpop.f32.mrb[0].mxu0
    %v3745 = vadd.f32 0.0, %v3744
    %v3746 = vpop.f32.mrb[0].mxu0
    %3747 = vmatprep.mubr.bf16.mxu0 0
    %3748 = vmatmul.mubr.bf16.gmra.mrb[0].mxu0 %v3650
    %v3749 = vpop.f32.mrb[0].mxu0
    %v3750 = vadd.f32 0.0, %v3749
    %v3751 = vpop.f32.mrb[0].mxu0
    %v3752 = vpop.f32.mrb[0].mxu0
    %v3753 = vadd.f32 0.0, %v3752
    %v3754 = vpop.f32.mrb[0].mxu0
    %3755 = vmatprep.mubr.bf16.mxu0 0
    %3756 = vmatmul.mubr.bf16.gmra.mrb[0].mxu0 %v3653
    %v3757 = vpop.f32.mrb[0].mxu0
    %v3758 = vadd.f32 0.0, %v3757
    %v3759 = vpop.f32.mrb[0].mxu0
    %v3760 = vpop.f32.mrb[0].mxu0
    %v3761 = vadd.f32 0.0, %v3760
    %v3762 = vpop.f32.mrb[0].mxu0
    %3763 = vmatprep.mubr.bf16.mxu0 0
    %3764 = vmatmul.mubr.bf16.gmra.mrb[0].mxu0 %v3656
    %v3765 = vpop.f32.mrb[0].mxu0
    %v3766 = vadd.f32 0.0, %v3765
    %v3767 = vpop.f32.mrb[0].mxu0
    %v3768 = vpop.f32.mrb[0].mxu0
    %v3769 = vadd.f32 0.0, %v3768
    %v3770 = vpop.f32.mrb[0].mxu0
    %3771 = vmatprep.mubr.bf16.mxu0 0
    %3772 = vmatmul.mubr.bf16.gmra.mrb[0].mxu0 %v3659
    %v3773 = vpop.f32.mrb[0].mxu0
    %v3774 = vadd.f32 0.0, %v3773
    %v3775 = vpop.f32.mrb[0].mxu0
    %v3776 = vpop.f32.mrb[0].mxu0
    %v3777 = vadd.f32 0.0, %v3776
    %v3778 = vpop.f32.mrb[0].mxu0
    %3779 = vmatprep.mubr.bf16.mxu0 0
    %3780 = vmatmul.mubr.bf16.gmra.mrb[0].mxu0 %v3662
    %v3781 = vpop.f32.mrb[0].mxu0
    %v3782 = vadd.f32 0.0, %v3781
    %v3783 = vpop.f32.mrb[0].mxu0
    %v3784 = vpop.f32.mrb[0].mxu0
    %v3785 = vadd.f32 0.0, %v3784
    %v3786 = vpop.f32.mrb[0].mxu0
    %3787 = vmatprep.mubr.bf16.mxu0 0
    %3788 = vmatmul.mubr.bf16.gmra.mrb[0].mxu0 %v3665
    %v3789 = vpop.f32.mrb[0].mxu0
    %v3790 = vadd.f32 0.0, %v3789
    %v3791 = vpop.f32.mrb[0].mxu0
    %v3792 = vpop.f32.mrb[0].mxu0
    %v3793 = vadd.f32 0.0, %v3792
    %v3794 = vpop.f32.mrb[0].mxu0
    %3795 = vmatprep.mubr.bf16.mxu0 0
    %3796 = vmatmul.mubr.bf16.gmra.mrb[0].mxu0 %v3668
    %v3797 = vpop.f32.mrb[0].mxu0
    %v3798 = vadd.f32 0.0, %v3797
    %v3799 = vpop.f32.mrb[0].mxu0
    %v3800 = vpop.f32.mrb[0].mxu0
    %v3801 = vadd.f32 0.0, %v3800
    %v3802 = vpop.f32.mrb[0].mxu0
    %3803 = vmatprep.mubr.bf16.mxu0 0
    %3804 = vmatmul.mubr.bf16.gmra.mrb[0].mxu0 %v3671
    %v3805 = vpop.f32.mrb[0].mxu0
    %v3806 = vadd.f32 0.0, %v3805
    %v3807 = vpop.f32.mrb[0].mxu0
    %v3808 = vpop.f32.mrb[0].mxu0
    %v3809 = vadd.f32 0.0, %v3808
    %v3810 = vpop.f32.mrb[0].mxu0
    %3811 = vmatprep.mubr.bf16.mxu0 0
    %3812 = vmatmul.mubr.bf16.gmra.mrb[0].mxu0 %v3674
    %v3813 = vpop.f32.mrb[0].mxu0
    %v3814 = vadd.f32 0.0, %v3813
    %v3815 = vpop.f32.mrb[0].mxu0
    %v3816 = vpop.f32.mrb[0].mxu0
    %v3817 = vadd.f32 0.0, %v3816
    %v3818 = vpop.f32.mrb[0].mxu0
    %3819 = vmatprep.mubr.bf16.mxu0 0
    %3820 = vmatmul.mubr.bf16.gmra.mrb[0].mxu0 %v3677
    %v3821 = vpop.f32.mrb[0].mxu0
    %v3822 = vadd.f32 0.0, %v3821
    %v3823 = vpop.f32.mrb[0].mxu0
    %v3824 = vpop.f32.mrb[0].mxu0
    %v3825 = vadd.f32 0.0, %v3824
    %v3826 = vpop.f32.mrb[0].mxu0
    %3827 = vmatprep.mubr.bf16.mxu0 0
    %3828 = vmatmul.mubr.bf16.gmra.mrb[0].mxu0 %v3680
    %v3829 = vpop.f32.mrb[0].mxu0
    %v3830 = vadd.f32 0.0, %v3829
    %v3831 = vpop.f32.mrb[0].mxu0
    %v3832 = vpop.f32.mrb[0].mxu0
    %v3833 = vadd.f32 0.0, %v3832
    %v3834 = vpop.f32.mrb[0].mxu0
    %3835 = vmatprep.mubr.bf16.mxu0 0
    %3836 = vmatmul.mubr.bf16.gmra.mrb[0].mxu0 %v3683
    %v3837 = vpop.f32.mrb[0].mxu0
    %v3838 = vadd.f32 0.0, %v3837
    %v3839 = vpop.f32.mrb[0].mxu0
    %v3840 = vpop.f32.mrb[0].mxu0
    %v3841 = vadd.f32 0.0, %v3840
    %v3842 = vpop.f32.mrb[0].mxu0
    %3843 = vmatprep.mubr.bf16.mxu0 0
    %3844 = vmatmul.mubr.bf16.gmra.mrb[0].mxu0 %v3686
    %v3845 = vpop.f32.mrb[0].mxu0
    %v3846 = vadd.f32 0.0, %v3845
    %v3847 = vpop.f32.mrb[0].mxu0
    %v3848 = vpop.f32.mrb[0].mxu0
    %v3849 = vadd.f32 0.0, %v3848
    %v3850 = vpop.f32.mrb[0].mxu0
    %3851 = vmatprep.mubr.bf16.mxu0 0
    %3852 = vmatmul.mubr.bf16.gmra.mrb[0].mxu0 %v3689
    %v3853 = vpop.f32.mrb[0].mxu0
    %v3854 = vadd.f32 0.0, %v3853
    %v3855 = vpop.f32.mrb[0].mxu0
    %v3856 = vpop.f32.mrb[0].mxu0
    %v3857 = vadd.f32 0.0, %v3856
    %v3858 = vpop.f32.mrb[0].mxu0
    %3859 = vdwg.mxu0
    %v3860 = vadd.f32 %v3538, %v3726
    %v3861 = vadd.f32 %v3539, %v3729
    %v3862 = vadd.f32 %v3540, %v3734
    %v3863 = vadd.f32 %v3541, %v3737
    %v3864 = vadd.f32 %v3542, %v3742
    %v3865 = vadd.f32 %v3543, %v3745
    %v3866 = vadd.f32 %v3544, %v3750
    %v3867 = vadd.f32 %v3545, %v3753
    %v3868 = vadd.f32 %v3546, %v3758
    %v3869 = vadd.f32 %v3547, %v3761
    %v3870 = vadd.f32 %v3548, %v3766
    %v3871 = vadd.f32 %v3549, %v3769
    %v3872 = vadd.f32 %v3550, %v3774
    %v3873 = vadd.f32 %v3551, %v3777
    %v3874 = vadd.f32 %v3552, %v3782
    %v3875 = vadd.f32 %v3553, %v3785
    %v3876 = vadd.f32 %v3554, %v3790
    %v3877 = vadd.f32 %v3555, %v3793
    %v3878 = vadd.f32 %v3556, %v3798
    %v3879 = vadd.f32 %v3557, %v3801
    %v3880 = vadd.f32 %v3558, %v3806
    %v3881 = vadd.f32 %v3559, %v3809
    %v3882 = vadd.f32 %v3560, %v3814
    %v3883 = vadd.f32 %v3561, %v3817
    %v3884 = vadd.f32 %v3562, %v3822
    %v3885 = vadd.f32 %v3563, %v3825
    %v3886 = vadd.f32 %v3564, %v3830
    %v3887 = vadd.f32 %v3565, %v3833
    %v3888 = vadd.f32 %v3566, %v3838
    %v3889 = vadd.f32 %v3567, %v3841
    %v3890 = vadd.f32 %v3568, %v3846
    %v3891 = vadd.f32 %v3569, %v3849
    %v3892 = vadd.f32 %v3570, %v3854
    %v3893 = vadd.f32 %v3571, %v3857
    %v3894 = vld [vmem:[#allocation3 + $0xe] sm:$0xff]
    %v3895 = vld [vmem:[#allocation3 + $0x16] sm:$0xff]
    %v3896 = vld [vmem:[#allocation3 + $0x1e] sm:$0xff]
    %v3897 = vld [vmem:[#allocation3 + $0x26] sm:$0xff]
    %v3898 = vld [vmem:[#allocation3 + $0x2e] sm:$0xff]
    %v3899 = vld [vmem:[#allocation3 + $0x36] sm:$0xff]
    %v3900 = vld [vmem:[#allocation3 + $0x3e] sm:$0xff]
    %v3901 = vld [vmem:[#allocation3 + $0x46] sm:$0xff]
    %v3902 = vld [vmem:[#allocation3 + $0x4e] sm:$0xff]
    %v3903 = vld [vmem:[#allocation3 + $0x56] sm:$0xff]
    %v3904 = vld [vmem:[#allocation3 + $0x5e] sm:$0xff]
    %v3905 = vld [vmem:[#allocation3 + $0x66] sm:$0xff]
    %v3906 = vld [vmem:[#allocation3 + $0x6e] sm:$0xff]
    %v3907 = vld [vmem:[#allocation3 + $0x76] sm:$0xff]
    %v3908 = vld [vmem:[#allocation3 + $0x7e] sm:$0xff]
    %v3909 = vld [vmem:[#allocation3 + $0x86] sm:$0xff]
    %v3910 = vld [vmem:[#allocation3 + $0x8e] sm:$0xff]
    %v3911 = vld [vmem:[#allocation3 + $0x96] sm:$0xff]
    %v3912 = vld [vmem:[#allocation3 + $0x9e] sm:$0xff]
    %v3913 = vld [vmem:[#allocation3 + $0xa6] sm:$0xff]
    %v3914 = vld [vmem:[#allocation3 + $0xae] sm:$0xff]
    %v3915 = vld [vmem:[#allocation3 + $0xb6] sm:$0xff]
    %v3916 = vld [vmem:[#allocation3 + $0xbe] sm:$0xff]
    %v3917 = vld [vmem:[#allocation3 + $0xc6] sm:$0xff]
    %v3918 = vld [vmem:[#allocation3 + $0xce] sm:$0xff]
    %v3919 = vld [vmem:[#allocation3 + $0xd6] sm:$0xff]
    %v3920 = vld [vmem:[#allocation3 + $0xde] sm:$0xff]
    %v3921 = vld [vmem:[#allocation3 + $0xe6] sm:$0xff]
    %v3922 = vld [vmem:[#allocation3 + $0xee] sm:$0xff]
    %v3923 = vld [vmem:[#allocation3 + $0xf6] sm:$0xff]
    %v3924 = vld [vmem:[#allocation3 + $0xfe] sm:$0xff]
    %v3925 = vld [vmem:[#allocation3 + $0x106] sm:$0xff]
    %v3926 = vld [vmem:[#allocation3 + $0x10e] sm:$0xff]
    %v3927 = vld [vmem:[#allocation3 + $0x116] sm:$0xff]
    %v3928 = vpack.c.bf16 %v3895, %v3894
    %v3929 = vpack.c.bf16 %v3897, %v3896
    %v3930 = vpack.c.bf16 %v3899, %v3898
    %v3931 = vpack.c.bf16 %v3901, %v3900
    %v3932 = vpack.c.bf16 %v3903, %v3902
    %v3933 = vpack.c.bf16 %v3905, %v3904
    %v3934 = vpack.c.bf16 %v3907, %v3906
    %v3935 = vpack.c.bf16 %v3909, %v3908
    %v3936 = vpack.c.bf16 %v3911, %v3910
    %v3937 = vpack.c.bf16 %v3913, %v3912
    %v3938 = vpack.c.bf16 %v3915, %v3914
    %v3939 = vpack.c.bf16 %v3917, %v3916
    %v3940 = vpack.c.bf16 %v3919, %v3918
    %v3941 = vpack.c.bf16 %v3921, %v3920
    %v3942 = vpack.c.bf16 %v3923, %v3922
    %v3943 = vpack.c.bf16 %v3925, %v3924
    %v3944 = vpack.c.bf16 %v3927, %v3926
    %s3945 = scalar_lea.vmem %s3, 112
    %v3946 = vld [vmem:[%s3945] sm:$0xf]
    %v3947 = vld [vmem:[%s3945 + $0x4] sm:$0xf]
    %v3948 = vld [vmem:[%s3945 + $0x8] sm:$0xf]
    %v3949 = vld [vmem:[%s3945 + $0xc] sm:$0xf]
    %v3954 = vunpack.c.l.b16 %v3946
    %v3955 = vunpack.c.l.b16 %v3947
    %v3956 = vunpack.c.l.b16 %v3948
    %v3957 = vunpack.c.l.b16 %v3949
    %v3958 = vpack.c.b16 %v3955, %v3954
    %v3959 = vpack.c.b16 %v3957, %v3956
    %v3963 = vsel %vm1670, %v3928, 0
    %v3966 = vsel %vm1670, %v3929, 0
    %v3969 = vsel %vm1670, %v3930, 0
    %v3972 = vsel %vm1670, %v3931, 0
    %v3975 = vsel %vm1670, %v3932, 0
    %v3978 = vsel %vm1670, %v3933, 0
    %v3981 = vsel %vm1670, %v3934, 0
    %v3984 = vsel %vm1670, %v3935, 0
    %v3987 = vsel %vm1670, %v3936, 0
    %v3990 = vsel %vm1670, %v3937, 0
    %v3993 = vsel %vm1670, %v3938, 0
    %v3996 = vsel %vm1670, %v3939, 0
    %v3999 = vsel %vm1670, %v3940, 0
    %v4002 = vsel %vm1670, %v3941, 0
    %v4005 = vsel %vm1670, %v3942, 0
    %v4008 = vsel %vm1670, %v3943, 0
    %v4011 = vsel %vm1670, %v3944, 0
    %4013 = vmatprep.subr.bf16.mxu0 0
    %4014 = vmatpush1.bf16.msra.mxu0 %v3958
    %4015 = vmatprep.subr.bf16.mxu0 0
    %4016 = vmatpush1.bf16.msra.mxu0 %v3959
    %4017 = vmatprep.subr.bf16.mxu0 0
    %4018 = vmatpush1.bf16.msra.mxu0 0
    %4019 = vmatprep.subr.bf16.mxu0 0
    %4020 = vmatpush1.bf16.msra.mxu0 0
    %4021 = vmatprep.subr.bf16.mxu0 0
    %4022 = vmatpush1.bf16.msra.mxu0 0
    %4023 = vmatprep.subr.bf16.mxu0 0
    %4024 = vmatpush1.bf16.msra.mxu0 0
    %4025 = vmatprep.subr.bf16.mxu0 0
    %4026 = vmatpush1.bf16.msra.mxu0 0
    %4027 = vmatprep.subr.bf16.mxu0 0
    %4028 = vmatpush1.bf16.msra.mxu0 0
    %4029 = vmatprep.subr.bf16.mxu0 0
    %4030 = vmatpush1.bf16.msra.mxu0 0
    %4031 = vmatprep.subr.bf16.mxu0 0
    %4032 = vmatpush1.bf16.msra.mxu0 0
    %4033 = vmatprep.subr.bf16.mxu0 0
    %4034 = vmatpush1.bf16.msra.mxu0 0
    %4035 = vmatprep.subr.bf16.mxu0 0
    %4036 = vmatpush1.bf16.msra.mxu0 0
    %4037 = vmatprep.subr.bf16.mxu0 0
    %4038 = vmatpush1.bf16.msra.mxu0 0
    %4039 = vmatprep.subr.bf16.mxu0 0
    %4040 = vmatpush1.bf16.msra.mxu0 0
    %4041 = vmatprep.subr.bf16.mxu0 0
    %4042 = vmatpush1.bf16.msra.mxu0 0
    %4043 = vmatprep.subr.bf16.mxu0 0
    %4044 = vmatpush1.bf16.msra.mxu0 0
    %4045 = vmatprep.mubr.bf16.mxu0 0
    %4046 = vmatmul.mubr.bf16.gmra.mrb[0].mxu0 %v3963
    %v4047 = vpop.f32.mrb[0].mxu0
    %v4048 = vadd.f32 0.0, %v4047
    %v4049 = vpop.f32.mrb[0].mxu0
    %v4050 = vpop.f32.mrb[0].mxu0
    %v4051 = vadd.f32 0.0, %v4050
    %v4052 = vpop.f32.mrb[0].mxu0
    %4053 = vmatprep.mubr.bf16.mxu0 0
    %4054 = vmatmul.mubr.bf16.gmra.mrb[0].mxu0 %v3966
    %v4055 = vpop.f32.mrb[0].mxu0
    %v4056 = vadd.f32 0.0, %v4055
    %v4057 = vpop.f32.mrb[0].mxu0
    %v4058 = vpop.f32.mrb[0].mxu0
    %v4059 = vadd.f32 0.0, %v4058
    %v4060 = vpop.f32.mrb[0].mxu0
    %4061 = vmatprep.mubr.bf16.mxu0 0
    %4062 = vmatmul.mubr.bf16.gmra.mrb[0].mxu0 %v3969
    %v4063 = vpop.f32.mrb[0].mxu0
    %v4064 = vadd.f32 0.0, %v4063
    %v4065 = vpop.f32.mrb[0].mxu0
    %v4066 = vpop.f32.mrb[0].mxu0
    %v4067 = vadd.f32 0.0, %v4066
    %v4068 = vpop.f32.mrb[0].mxu0
    %4069 = vmatprep.mubr.bf16.mxu0 0
    %4070 = vmatmul.mubr.bf16.gmra.mrb[0].mxu0 %v3972
    %v4071 = vpop.f32.mrb[0].mxu0
    %v4072 = vadd.f32 0.0, %v4071
    %v4073 = vpop.f32.mrb[0].mxu0
    %v4074 = vpop.f32.mrb[0].mxu0
    %v4075 = vadd.f32 0.0, %v4074
    %v4076 = vpop.f32.mrb[0].mxu0
    %4077 = vmatprep.mubr.bf16.mxu0 0
    %4078 = vmatmul.mubr.bf16.gmra.mrb[0].mxu0 %v3975
    %v4079 = vpop.f32.mrb[0].mxu0
    %v4080 = vadd.f32 0.0, %v4079
    %v4081 = vpop.f32.mrb[0].mxu0
    %v4082 = vpop.f32.mrb[0].mxu0
    %v4083 = vadd.f32 0.0, %v4082
    %v4084 = vpop.f32.mrb[0].mxu0
    %4085 = vmatprep.mubr.bf16.mxu0 0
    %4086 = vmatmul.mubr.bf16.gmra.mrb[0].mxu0 %v3978
    %v4087 = vpop.f32.mrb[0].mxu0
    %v4088 = vadd.f32 0.0, %v4087
    %v4089 = vpop.f32.mrb[0].mxu0
    %v4090 = vpop.f32.mrb[0].mxu0
    %v4091 = vadd.f32 0.0, %v4090
    %v4092 = vpop.f32.mrb[0].mxu0
    %4093 = vmatprep.mubr.bf16.mxu0 0
    %4094 = vmatmul.mubr.bf16.gmra.mrb[0].mxu0 %v3981
    %v4095 = vpop.f32.mrb[0].mxu0
    %v4096 = vadd.f32 0.0, %v4095
    %v4097 = vpop.f32.mrb[0].mxu0
    %v4098 = vpop.f32.mrb[0].mxu0
    %v4099 = vadd.f32 0.0, %v4098
    %v4100 = vpop.f32.mrb[0].mxu0
    %4101 = vmatprep.mubr.bf16.mxu0 0
    %4102 = vmatmul.mubr.bf16.gmra.mrb[0].mxu0 %v3984
    %v4103 = vpop.f32.mrb[0].mxu0
    %v4104 = vadd.f32 0.0, %v4103
    %v4105 = vpop.f32.mrb[0].mxu0
    %v4106 = vpop.f32.mrb[0].mxu0
    %v4107 = vadd.f32 0.0, %v4106
    %v4108 = vpop.f32.mrb[0].mxu0
    %4109 = vmatprep.mubr.bf16.mxu0 0
    %4110 = vmatmul.mubr.bf16.gmra.mrb[0].mxu0 %v3987
    %v4111 = vpop.f32.mrb[0].mxu0
    %v4112 = vadd.f32 0.0, %v4111
    %v4113 = vpop.f32.mrb[0].mxu0
    %v4114 = vpop.f32.mrb[0].mxu0
    %v4115 = vadd.f32 0.0, %v4114
    %v4116 = vpop.f32.mrb[0].mxu0
    %4117 = vmatprep.mubr.bf16.mxu0 0
    %4118 = vmatmul.mubr.bf16.gmra.mrb[0].mxu0 %v3990
    %v4119 = vpop.f32.mrb[0].mxu0
    %v4120 = vadd.f32 0.0, %v4119
    %v4121 = vpop.f32.mrb[0].mxu0
    %v4122 = vpop.f32.mrb[0].mxu0
    %v4123 = vadd.f32 0.0, %v4122
    %v4124 = vpop.f32.mrb[0].mxu0
    %4125 = vmatprep.mubr.bf16.mxu0 0
    %4126 = vmatmul.mubr.bf16.gmra.mrb[0].mxu0 %v3993
    %v4127 = vpop.f32.mrb[0].mxu0
    %v4128 = vadd.f32 0.0, %v4127
    %v4129 = vpop.f32.mrb[0].mxu0
    %v4130 = vpop.f32.mrb[0].mxu0
    %v4131 = vadd.f32 0.0, %v4130
    %v4132 = vpop.f32.mrb[0].mxu0
    %4133 = vmatprep.mubr.bf16.mxu0 0
    %4134 = vmatmul.mubr.bf16.gmra.mrb[0].mxu0 %v3996
    %v4135 = vpop.f32.mrb[0].mxu0
    %v4136 = vadd.f32 0.0, %v4135
    %v4137 = vpop.f32.mrb[0].mxu0
    %v4138 = vpop.f32.mrb[0].mxu0
    %v4139 = vadd.f32 0.0, %v4138
    %v4140 = vpop.f32.mrb[0].mxu0
    %4141 = vmatprep.mubr.bf16.mxu0 0
    %4142 = vmatmul.mubr.bf16.gmra.mrb[0].mxu0 %v3999
    %v4143 = vpop.f32.mrb[0].mxu0
    %v4144 = vadd.f32 0.0, %v4143
    %v4145 = vpop.f32.mrb[0].mxu0
    %v4146 = vpop.f32.mrb[0].mxu0
    %v4147 = vadd.f32 0.0, %v4146
    %v4148 = vpop.f32.mrb[0].mxu0
    %4149 = vmatprep.mubr.bf16.mxu0 0
    %4150 = vmatmul.mubr.bf16.gmra.mrb[0].mxu0 %v4002
    %v4151 = vpop.f32.mrb[0].mxu0
    %v4152 = vadd.f32 0.0, %v4151
    %v4153 = vpop.f32.mrb[0].mxu0
    %v4154 = vpop.f32.mrb[0].mxu0
    %v4155 = vadd.f32 0.0, %v4154
    %v4156 = vpop.f32.mrb[0].mxu0
    %4157 = vmatprep.mubr.bf16.mxu0 0
    %4158 = vmatmul.mubr.bf16.gmra.mrb[0].mxu0 %v4005
    %v4159 = vpop.f32.mrb[0].mxu0
    %v4160 = vadd.f32 0.0, %v4159
    %v4161 = vpop.f32.mrb[0].mxu0
    %v4162 = vpop.f32.mrb[0].mxu0
    %v4163 = vadd.f32 0.0, %v4162
    %v4164 = vpop.f32.mrb[0].mxu0
    %4165 = vmatprep.mubr.bf16.mxu0 0
    %4166 = vmatmul.mubr.bf16.gmra.mrb[0].mxu0 %v4008
    %v4167 = vpop.f32.mrb[0].mxu0
    %v4168 = vadd.f32 0.0, %v4167
    %v4169 = vpop.f32.mrb[0].mxu0
    %v4170 = vpop.f32.mrb[0].mxu0
    %v4171 = vadd.f32 0.0, %v4170
    %v4172 = vpop.f32.mrb[0].mxu0
    %4173 = vmatprep.mubr.bf16.mxu0 0
    %4174 = vmatmul.mubr.bf16.gmra.mrb[0].mxu0 %v4011
    %v4175 = vpop.f32.mrb[0].mxu0
    %v4176 = vadd.f32 0.0, %v4175
    %v4177 = vpop.f32.mrb[0].mxu0
    %v4178 = vpop.f32.mrb[0].mxu0
    %v4179 = vadd.f32 0.0, %v4178
    %v4180 = vpop.f32.mrb[0].mxu0
    %4181 = vdwg.mxu0
    %v4182 = vadd.f32 %v3860, %v4048
    %v4183 = vadd.f32 %v3861, %v4051
    %v4184 = vadd.f32 %v3862, %v4056
    %v4185 = vadd.f32 %v3863, %v4059
    %v4186 = vadd.f32 %v3864, %v4064
    %v4187 = vadd.f32 %v3865, %v4067
    %v4188 = vadd.f32 %v3866, %v4072
    %v4189 = vadd.f32 %v3867, %v4075
    %v4190 = vadd.f32 %v3868, %v4080
    %v4191 = vadd.f32 %v3869, %v4083
    %v4192 = vadd.f32 %v3870, %v4088
    %v4193 = vadd.f32 %v3871, %v4091
    %v4194 = vadd.f32 %v3872, %v4096
    %v4195 = vadd.f32 %v3873, %v4099
    %v4196 = vadd.f32 %v3874, %v4104
    %v4197 = vadd.f32 %v3875, %v4107
    %v4198 = vadd.f32 %v3876, %v4112
    %v4199 = vadd.f32 %v3877, %v4115
    %v4200 = vadd.f32 %v3878, %v4120
    %v4201 = vadd.f32 %v3879, %v4123
    %v4202 = vadd.f32 %v3880, %v4128
    %v4203 = vadd.f32 %v3881, %v4131
    %v4204 = vadd.f32 %v3882, %v4136
    %v4205 = vadd.f32 %v3883, %v4139
    %v4206 = vadd.f32 %v3884, %v4144
    %v4207 = vadd.f32 %v3885, %v4147
    %v4208 = vadd.f32 %v3886, %v4152
    %v4209 = vadd.f32 %v3887, %v4155
    %v4210 = vadd.f32 %v3888, %v4160
    %v4211 = vadd.f32 %v3889, %v4163
    %v4212 = vadd.f32 %v3890, %v4168
    %v4213 = vadd.f32 %v3891, %v4171
    %v4214 = vadd.f32 %v3892, %v4176
    %v4215 = vadd.f32 %v3893, %v4179
    %v4216 = vld [vmem:[#allocation3 + $0x16] sm:$0xff]
    %v4217 = vld [vmem:[#allocation3 + $0x1e] sm:$0xff]
    %v4218 = vld [vmem:[#allocation3 + $0x26] sm:$0xff]
    %v4219 = vld [vmem:[#allocation3 + $0x2e] sm:$0xff]
    %v4220 = vld [vmem:[#allocation3 + $0x36] sm:$0xff]
    %v4221 = vld [vmem:[#allocation3 + $0x3e] sm:$0xff]
    %v4222 = vld [vmem:[#allocation3 + $0x46] sm:$0xff]
    %v4223 = vld [vmem:[#allocation3 + $0x4e] sm:$0xff]
    %v4224 = vld [vmem:[#allocation3 + $0x56] sm:$0xff]
    %v4225 = vld [vmem:[#allocation3 + $0x5e] sm:$0xff]
    %v4226 = vld [vmem:[#allocation3 + $0x66] sm:$0xff]
    %v4227 = vld [vmem:[#allocation3 + $0x6e] sm:$0xff]
    %v4228 = vld [vmem:[#allocation3 + $0x76] sm:$0xff]
    %v4229 = vld [vmem:[#allocation3 + $0x7e] sm:$0xff]
    %v4230 = vld [vmem:[#allocation3 + $0x86] sm:$0xff]
    %v4231 = vld [vmem:[#allocation3 + $0x8e] sm:$0xff]
    %v4232 = vld [vmem:[#allocation3 + $0x96] sm:$0xff]
    %v4233 = vld [vmem:[#allocation3 + $0x9e] sm:$0xff]
    %v4234 = vld [vmem:[#allocation3 + $0xa6] sm:$0xff]
    %v4235 = vld [vmem:[#allocation3 + $0xae] sm:$0xff]
    %v4236 = vld [vmem:[#allocation3 + $0xb6] sm:$0xff]
    %v4237 = vld [vmem:[#allocation3 + $0xbe] sm:$0xff]
    %v4238 = vld [vmem:[#allocation3 + $0xc6] sm:$0xff]
    %v4239 = vld [vmem:[#allocation3 + $0xce] sm:$0xff]
    %v4240 = vld [vmem:[#allocation3 + $0xd6] sm:$0xff]
    %v4241 = vld [vmem:[#allocation3 + $0xde] sm:$0xff]
    %v4242 = vld [vmem:[#allocation3 + $0xe6] sm:$0xff]
    %v4243 = vld [vmem:[#allocation3 + $0xee] sm:$0xff]
    %v4244 = vld [vmem:[#allocation3 + $0xf6] sm:$0xff]
    %v4245 = vld [vmem:[#allocation3 + $0xfe] sm:$0xff]
    %v4246 = vld [vmem:[#allocation3 + $0x106] sm:$0xff]
    %v4247 = vld [vmem:[#allocation3 + $0x10e] sm:$0xff]
    %v4248 = vld [vmem:[#allocation3 + $0x116] sm:$0xff]
    %v4249 = vld [vmem:[#allocation3 + $0x11e] sm:$0xff]
    %v4250 = vpack.c.bf16 %v4217, %v4216
    %v4251 = vpack.c.bf16 %v4219, %v4218
    %v4252 = vpack.c.bf16 %v4221, %v4220
    %v4253 = vpack.c.bf16 %v4223, %v4222
    %v4254 = vpack.c.bf16 %v4225, %v4224
    %v4255 = vpack.c.bf16 %v4227, %v4226
    %v4256 = vpack.c.bf16 %v4229, %v4228
    %v4257 = vpack.c.bf16 %v4231, %v4230
    %v4258 = vpack.c.bf16 %v4233, %v4232
    %v4259 = vpack.c.bf16 %v4235, %v4234
    %v4260 = vpack.c.bf16 %v4237, %v4236
    %v4261 = vpack.c.bf16 %v4239, %v4238
    %v4262 = vpack.c.bf16 %v4241, %v4240
    %v4263 = vpack.c.bf16 %v4243, %v4242
    %v4264 = vpack.c.bf16 %v4245, %v4244
    %v4265 = vpack.c.bf16 %v4247, %v4246
    %v4266 = vpack.c.bf16 %v4249, %v4248
    %s4267 = scalar_lea.vmem %s3, 128
    %v4268 = vld [vmem:[%s4267] sm:$0xf]
    %v4269 = vld [vmem:[%s4267 + $0x4] sm:$0xf]
    %v4270 = vld [vmem:[%s4267 + $0x8] sm:$0xf]
    %v4271 = vld [vmem:[%s4267 + $0xc] sm:$0xf]
    %v4276 = vunpack.c.l.b16 %v4268
    %v4277 = vunpack.c.l.b16 %v4269
    %v4278 = vunpack.c.l.b16 %v4270
    %v4279 = vunpack.c.l.b16 %v4271
    %v4280 = vpack.c.b16 %v4277, %v4276
    %v4281 = vpack.c.b16 %v4279, %v4278
    %v4285 = vsel %vm1670, %v4250, 0
    %v4288 = vsel %vm1670, %v4251, 0
    %v4291 = vsel %vm1670, %v4252, 0
    %v4294 = vsel %vm1670, %v4253, 0
    %v4297 = vsel %vm1670, %v4254, 0
    %v4300 = vsel %vm1670, %v4255, 0
    %v4303 = vsel %vm1670, %v4256, 0
    %v4306 = vsel %vm1670, %v4257, 0
    %v4309 = vsel %vm1670, %v4258, 0
    %v4312 = vsel %vm1670, %v4259, 0
    %v4315 = vsel %vm1670, %v4260, 0
    %v4318 = vsel %vm1670, %v4261, 0
    %v4321 = vsel %vm1670, %v4262, 0
    %v4324 = vsel %vm1670, %v4263, 0
    %v4327 = vsel %vm1670, %v4264, 0
    %v4330 = vsel %vm1670, %v4265, 0
    %v4333 = vsel %vm1670, %v4266, 0
    %4335 = vmatprep.subr.bf16.mxu0 0
    %4336 = vmatpush1.bf16.msra.mxu0 %v4280
    %4337 = vmatprep.subr.bf16.mxu0 0
    %4338 = vmatpush1.bf16.msra.mxu0 %v4281
    %4339 = vmatprep.subr.bf16.mxu0 0
    %4340 = vmatpush1.bf16.msra.mxu0 0
    %4341 = vmatprep.subr.bf16.mxu0 0
    %4342 = vmatpush1.bf16.msra.mxu0 0
    %4343 = vmatprep.subr.bf16.mxu0 0
    %4344 = vmatpush1.bf16.msra.mxu0 0
    %4345 = vmatprep.subr.bf16.mxu0 0
    %4346 = vmatpush1.bf16.msra.mxu0 0
    %4347 = vmatprep.subr.bf16.mxu0 0
    %4348 = vmatpush1.bf16.msra.mxu0 0
    %4349 = vmatprep.subr.bf16.mxu0 0
    %4350 = vmatpush1.bf16.msra.mxu0 0
    %4351 = vmatprep.subr.bf16.mxu0 0
    %4352 = vmatpush1.bf16.msra.mxu0 0
    %4353 = vmatprep.subr.bf16.mxu0 0
    %4354 = vmatpush1.bf16.msra.mxu0 0
    %4355 = vmatprep.subr.bf16.mxu0 0
    %4356 = vmatpush1.bf16.msra.mxu0 0
    %4357 = vmatprep.subr.bf16.mxu0 0
    %4358 = vmatpush1.bf16.msra.mxu0 0
    %4359 = vmatprep.subr.bf16.mxu0 0
    %4360 = vmatpush1.bf16.msra.mxu0 0
    %4361 = vmatprep.subr.bf16.mxu0 0
    %4362 = vmatpush1.bf16.msra.mxu0 0
    %4363 = vmatprep.subr.bf16.mxu0 0
    %4364 = vmatpush1.bf16.msra.mxu0 0
    %4365 = vmatprep.subr.bf16.mxu0 0
    %4366 = vmatpush1.bf16.msra.mxu0 0
    %4367 = vmatprep.mubr.bf16.mxu0 0
    %4368 = vmatmul.mubr.bf16.gmra.mrb[0].mxu0 %v4285
    %v4369 = vpop.f32.mrb[0].mxu0
    %v4370 = vadd.f32 0.0, %v4369
    %v4371 = vpop.f32.mrb[0].mxu0
    %v4372 = vpop.f32.mrb[0].mxu0
    %v4373 = vadd.f32 0.0, %v4372
    %v4374 = vpop.f32.mrb[0].mxu0
    %4375 = vmatprep.mubr.bf16.mxu0 0
    %4376 = vmatmul.mubr.bf16.gmra.mrb[0].mxu0 %v4288
    %v4377 = vpop.f32.mrb[0].mxu0
    %v4378 = vadd.f32 0.0, %v4377
    %v4379 = vpop.f32.mrb[0].mxu0
    %v4380 = vpop.f32.mrb[0].mxu0
    %v4381 = vadd.f32 0.0, %v4380
    %v4382 = vpop.f32.mrb[0].mxu0
    %4383 = vmatprep.mubr.bf16.mxu0 0
    %4384 = vmatmul.mubr.bf16.gmra.mrb[0].mxu0 %v4291
    %v4385 = vpop.f32.mrb[0].mxu0
    %v4386 = vadd.f32 0.0, %v4385
    %v4387 = vpop.f32.mrb[0].mxu0
    %v4388 = vpop.f32.mrb[0].mxu0
    %v4389 = vadd.f32 0.0, %v4388
    %v4390 = vpop.f32.mrb[0].mxu0
    %4391 = vmatprep.mubr.bf16.mxu0 0
    %4392 = vmatmul.mubr.bf16.gmra.mrb[0].mxu0 %v4294
    %v4393 = vpop.f32.mrb[0].mxu0
    %v4394 = vadd.f32 0.0, %v4393
    %v4395 = vpop.f32.mrb[0].mxu0
    %v4396 = vpop.f32.mrb[0].mxu0
    %v4397 = vadd.f32 0.0, %v4396
    %v4398 = vpop.f32.mrb[0].mxu0
    %4399 = vmatprep.mubr.bf16.mxu0 0
    %4400 = vmatmul.mubr.bf16.gmra.mrb[0].mxu0 %v4297
    %v4401 = vpop.f32.mrb[0].mxu0
    %v4402 = vadd.f32 0.0, %v4401
    %v4403 = vpop.f32.mrb[0].mxu0
    %v4404 = vpop.f32.mrb[0].mxu0
    %v4405 = vadd.f32 0.0, %v4404
    %v4406 = vpop.f32.mrb[0].mxu0
    %4407 = vmatprep.mubr.bf16.mxu0 0
    %4408 = vmatmul.mubr.bf16.gmra.mrb[0].mxu0 %v4300
    %v4409 = vpop.f32.mrb[0].mxu0
    %v4410 = vadd.f32 0.0, %v4409
    %v4411 = vpop.f32.mrb[0].mxu0
    %v4412 = vpop.f32.mrb[0].mxu0
    %v4413 = vadd.f32 0.0, %v4412
    %v4414 = vpop.f32.mrb[0].mxu0
    %4415 = vmatprep.mubr.bf16.mxu0 0
    %4416 = vmatmul.mubr.bf16.gmra.mrb[0].mxu0 %v4303
    %v4417 = vpop.f32.mrb[0].mxu0
    %v4418 = vadd.f32 0.0, %v4417
    %v4419 = vpop.f32.mrb[0].mxu0
    %v4420 = vpop.f32.mrb[0].mxu0
    %v4421 = vadd.f32 0.0, %v4420
    %v4422 = vpop.f32.mrb[0].mxu0
    %4423 = vmatprep.mubr.bf16.mxu0 0
    %4424 = vmatmul.mubr.bf16.gmra.mrb[0].mxu0 %v4306
    %v4425 = vpop.f32.mrb[0].mxu0
    %v4426 = vadd.f32 0.0, %v4425
    %v4427 = vpop.f32.mrb[0].mxu0
    %v4428 = vpop.f32.mrb[0].mxu0
    %v4429 = vadd.f32 0.0, %v4428
    %v4430 = vpop.f32.mrb[0].mxu0
    %4431 = vmatprep.mubr.bf16.mxu0 0
    %4432 = vmatmul.mubr.bf16.gmra.mrb[0].mxu0 %v4309
    %v4433 = vpop.f32.mrb[0].mxu0
    %v4434 = vadd.f32 0.0, %v4433
    %v4435 = vpop.f32.mrb[0].mxu0
    %v4436 = vpop.f32.mrb[0].mxu0
    %v4437 = vadd.f32 0.0, %v4436
    %v4438 = vpop.f32.mrb[0].mxu0
    %4439 = vmatprep.mubr.bf16.mxu0 0
    %4440 = vmatmul.mubr.bf16.gmra.mrb[0].mxu0 %v4312
    %v4441 = vpop.f32.mrb[0].mxu0
    %v4442 = vadd.f32 0.0, %v4441
    %v4443 = vpop.f32.mrb[0].mxu0
    %v4444 = vpop.f32.mrb[0].mxu0
    %v4445 = vadd.f32 0.0, %v4444
    %v4446 = vpop.f32.mrb[0].mxu0
    %4447 = vmatprep.mubr.bf16.mxu0 0
    %4448 = vmatmul.mubr.bf16.gmra.mrb[0].mxu0 %v4315
    %v4449 = vpop.f32.mrb[0].mxu0
    %v4450 = vadd.f32 0.0, %v4449
    %v4451 = vpop.f32.mrb[0].mxu0
    %v4452 = vpop.f32.mrb[0].mxu0
    %v4453 = vadd.f32 0.0, %v4452
    %v4454 = vpop.f32.mrb[0].mxu0
    %4455 = vmatprep.mubr.bf16.mxu0 0
    %4456 = vmatmul.mubr.bf16.gmra.mrb[0].mxu0 %v4318
    %v4457 = vpop.f32.mrb[0].mxu0
    %v4458 = vadd.f32 0.0, %v4457
    %v4459 = vpop.f32.mrb[0].mxu0
    %v4460 = vpop.f32.mrb[0].mxu0
    %v4461 = vadd.f32 0.0, %v4460
    %v4462 = vpop.f32.mrb[0].mxu0
    %4463 = vmatprep.mubr.bf16.mxu0 0
    %4464 = vmatmul.mubr.bf16.gmra.mrb[0].mxu0 %v4321
    %v4465 = vpop.f32.mrb[0].mxu0
    %v4466 = vadd.f32 0.0, %v4465
    %v4467 = vpop.f32.mrb[0].mxu0
    %v4468 = vpop.f32.mrb[0].mxu0
    %v4469 = vadd.f32 0.0, %v4468
    %v4470 = vpop.f32.mrb[0].mxu0
    %4471 = vmatprep.mubr.bf16.mxu0 0
    %4472 = vmatmul.mubr.bf16.gmra.mrb[0].mxu0 %v4324
    %v4473 = vpop.f32.mrb[0].mxu0
    %v4474 = vadd.f32 0.0, %v4473
    %v4475 = vpop.f32.mrb[0].mxu0
    %v4476 = vpop.f32.mrb[0].mxu0
    %v4477 = vadd.f32 0.0, %v4476
    %v4478 = vpop.f32.mrb[0].mxu0
    %4479 = vmatprep.mubr.bf16.mxu0 0
    %4480 = vmatmul.mubr.bf16.gmra.mrb[0].mxu0 %v4327
    %v4481 = vpop.f32.mrb[0].mxu0
    %v4482 = vadd.f32 0.0, %v4481
    %v4483 = vpop.f32.mrb[0].mxu0
    %v4484 = vpop.f32.mrb[0].mxu0
    %v4485 = vadd.f32 0.0, %v4484
    %v4486 = vpop.f32.mrb[0].mxu0
    %4487 = vmatprep.mubr.bf16.mxu0 0
    %4488 = vmatmul.mubr.bf16.gmra.mrb[0].mxu0 %v4330
    %v4489 = vpop.f32.mrb[0].mxu0
    %v4490 = vadd.f32 0.0, %v4489
    %v4491 = vpop.f32.mrb[0].mxu0
    %v4492 = vpop.f32.mrb[0].mxu0
    %v4493 = vadd.f32 0.0, %v4492
    %v4494 = vpop.f32.mrb[0].mxu0
    %4495 = vmatprep.mubr.bf16.mxu0 0
    %4496 = vmatmul.mubr.bf16.gmra.mrb[0].mxu0 %v4333
    %v4497 = vpop.f32.mrb[0].mxu0
    %v4498 = vadd.f32 0.0, %v4497
    %v4499 = vpop.f32.mrb[0].mxu0
    %v4500 = vpop.f32.mrb[0].mxu0
    %v4501 = vadd.f32 0.0, %v4500
    %v4502 = vpop.f32.mrb[0].mxu0
    %4503 = vdwg.mxu0
    %v4504 = vadd.f32 %v4182, %v4370
    %v4505 = vadd.f32 %v4183, %v4373
    %v4506 = vadd.f32 %v4184, %v4378
    %v4507 = vadd.f32 %v4185, %v4381
    %v4508 = vadd.f32 %v4186, %v4386
    %v4509 = vadd.f32 %v4187, %v4389
    %v4510 = vadd.f32 %v4188, %v4394
    %v4511 = vadd.f32 %v4189, %v4397
    %v4512 = vadd.f32 %v4190, %v4402
    %v4513 = vadd.f32 %v4191, %v4405
    %v4514 = vadd.f32 %v4192, %v4410
    %v4515 = vadd.f32 %v4193, %v4413
    %v4516 = vadd.f32 %v4194, %v4418
    %v4517 = vadd.f32 %v4195, %v4421
    %v4518 = vadd.f32 %v4196, %v4426
    %v4519 = vadd.f32 %v4197, %v4429
    %v4520 = vadd.f32 %v4198, %v4434
    %v4521 = vadd.f32 %v4199, %v4437
    %v4522 = vadd.f32 %v4200, %v4442
    %v4523 = vadd.f32 %v4201, %v4445
    %v4524 = vadd.f32 %v4202, %v4450
    %v4525 = vadd.f32 %v4203, %v4453
    %v4526 = vadd.f32 %v4204, %v4458
    %v4527 = vadd.f32 %v4205, %v4461
    %v4528 = vadd.f32 %v4206, %v4466
    %v4529 = vadd.f32 %v4207, %v4469
    %v4530 = vadd.f32 %v4208, %v4474
    %v4531 = vadd.f32 %v4209, %v4477
    %v4532 = vadd.f32 %v4210, %v4482
    %v4533 = vadd.f32 %v4211, %v4485
    %v4534 = vadd.f32 %v4212, %v4490
    %v4535 = vadd.f32 %v4213, %v4493
    %v4536 = vadd.f32 %v4214, %v4498
    %v4537 = vadd.f32 %v4215, %v4501
    %v4538 = vld [vmem:[#allocation3 + $0x17] sm:$0xff]
    %v4539 = vld [vmem:[#allocation3 + $0x1f] sm:$0xff]
    %v4540 = vld [vmem:[#allocation3 + $0x27] sm:$0xff]
    %v4541 = vld [vmem:[#allocation3 + $0x2f] sm:$0xff]
    %v4542 = vld [vmem:[#allocation3 + $0x37] sm:$0xff]
    %v4543 = vld [vmem:[#allocation3 + $0x3f] sm:$0xff]
    %v4544 = vld [vmem:[#allocation3 + $0x47] sm:$0xff]
    %v4545 = vld [vmem:[#allocation3 + $0x4f] sm:$0xff]
    %v4546 = vld [vmem:[#allocation3 + $0x57] sm:$0xff]
    %v4547 = vld [vmem:[#allocation3 + $0x5f] sm:$0xff]
    %v4548 = vld [vmem:[#allocation3 + $0x67] sm:$0xff]
    %v4549 = vld [vmem:[#allocation3 + $0x6f] sm:$0xff]
    %v4550 = vld [vmem:[#allocation3 + $0x77] sm:$0xff]
    %v4551 = vld [vmem:[#allocation3 + $0x7f] sm:$0xff]
    %v4552 = vld [vmem:[#allocation3 + $0x87] sm:$0xff]
    %v4553 = vld [vmem:[#allocation3 + $0x8f] sm:$0xff]
    %v4554 = vld [vmem:[#allocation3 + $0x97] sm:$0xff]
    %v4555 = vld [vmem:[#allocation3 + $0x9f] sm:$0xff]
    %v4556 = vld [vmem:[#allocation3 + $0xa7] sm:$0xff]
    %v4557 = vld [vmem:[#allocation3 + $0xaf] sm:$0xff]
    %v4558 = vld [vmem:[#allocation3 + $0xb7] sm:$0xff]
    %v4559 = vld [vmem:[#allocation3 + $0xbf] sm:$0xff]
    %v4560 = vld [vmem:[#allocation3 + $0xc7] sm:$0xff]
    %v4561 = vld [vmem:[#allocation3 + $0xcf] sm:$0xff]
    %v4562 = vld [vmem:[#allocation3 + $0xd7] sm:$0xff]
    %v4563 = vld [vmem:[#allocation3 + $0xdf] sm:$0xff]
    %v4564 = vld [vmem:[#allocation3 + $0xe7] sm:$0xff]
    %v4565 = vld [vmem:[#allocation3 + $0xef] sm:$0xff]
    %v4566 = vld [vmem:[#allocation3 + $0xf7] sm:$0xff]
    %v4567 = vld [vmem:[#allocation3 + $0xff] sm:$0xff]
    %v4568 = vld [vmem:[#allocation3 + $0x107] sm:$0xff]
    %v4569 = vld [vmem:[#allocation3 + $0x10f] sm:$0xff]
    %v4570 = vld [vmem:[#allocation3 + $0x117] sm:$0xff]
    %v4571 = vld [vmem:[#allocation3 + $0x11f] sm:$0xff]
    %v4572 = vpack.c.bf16 %v4539, %v4538
    %v4573 = vpack.c.bf16 %v4541, %v4540
    %v4574 = vpack.c.bf16 %v4543, %v4542
    %v4575 = vpack.c.bf16 %v4545, %v4544
    %v4576 = vpack.c.bf16 %v4547, %v4546
    %v4577 = vpack.c.bf16 %v4549, %v4548
    %v4578 = vpack.c.bf16 %v4551, %v4550
    %v4579 = vpack.c.bf16 %v4553, %v4552
    %v4580 = vpack.c.bf16 %v4555, %v4554
    %v4581 = vpack.c.bf16 %v4557, %v4556
    %v4582 = vpack.c.bf16 %v4559, %v4558
    %v4583 = vpack.c.bf16 %v4561, %v4560
    %v4584 = vpack.c.bf16 %v4563, %v4562
    %v4585 = vpack.c.bf16 %v4565, %v4564
    %v4586 = vpack.c.bf16 %v4567, %v4566
    %v4587 = vpack.c.bf16 %v4569, %v4568
    %v4588 = vpack.c.bf16 %v4571, %v4570
    %s4589 = scalar_lea.vmem %s3, 144
    %v4590 = vld [vmem:[%s4589] sm:$0xf]
    %v4591 = vld [vmem:[%s4589 + $0x4] sm:$0xf]
    %v4592 = vld [vmem:[%s4589 + $0x8] sm:$0xf]
    %v4593 = vld [vmem:[%s4589 + $0xc] sm:$0xf]
    %v4598 = vunpack.c.l.b16 %v4590
    %v4599 = vunpack.c.l.b16 %v4591
    %v4600 = vunpack.c.l.b16 %v4592
    %v4601 = vunpack.c.l.b16 %v4593
    %v4602 = vpack.c.b16 %v4599, %v4598
    %v4603 = vpack.c.b16 %v4601, %v4600
    %v4607 = vsel %vm1670, %v4572, 0
    %v4610 = vsel %vm1670, %v4573, 0
    %v4613 = vsel %vm1670, %v4574, 0
    %v4616 = vsel %vm1670, %v4575, 0
    %v4619 = vsel %vm1670, %v4576, 0
    %v4622 = vsel %vm1670, %v4577, 0
    %v4625 = vsel %vm1670, %v4578, 0
    %v4628 = vsel %vm1670, %v4579, 0
    %v4631 = vsel %vm1670, %v4580, 0
    %v4634 = vsel %vm1670, %v4581, 0
    %v4637 = vsel %vm1670, %v4582, 0
    %v4640 = vsel %vm1670, %v4583, 0
    %v4643 = vsel %vm1670, %v4584, 0
    %v4646 = vsel %vm1670, %v4585, 0
    %v4649 = vsel %vm1670, %v4586, 0
    %v4652 = vsel %vm1670, %v4587, 0
    %v4655 = vsel %vm1670, %v4588, 0
    %4657 = vmatprep.subr.bf16.mxu0 0
    %4658 = vmatpush1.bf16.msra.mxu0 %v4602
    %4659 = vmatprep.subr.bf16.mxu0 0
    %4660 = vmatpush1.bf16.msra.mxu0 %v4603
    %4661 = vmatprep.subr.bf16.mxu0 0
    %4662 = vmatpush1.bf16.msra.mxu0 0
    %4663 = vmatprep.subr.bf16.mxu0 0
    %4664 = vmatpush1.bf16.msra.mxu0 0
    %4665 = vmatprep.subr.bf16.mxu0 0
    %4666 = vmatpush1.bf16.msra.mxu0 0
    %4667 = vmatprep.subr.bf16.mxu0 0
    %4668 = vmatpush1.bf16.msra.mxu0 0
    %4669 = vmatprep.subr.bf16.mxu0 0
    %4670 = vmatpush1.bf16.msra.mxu0 0
    %4671 = vmatprep.subr.bf16.mxu0 0
    %4672 = vmatpush1.bf16.msra.mxu0 0
    %4673 = vmatprep.subr.bf16.mxu0 0
    %4674 = vmatpush1.bf16.msra.mxu0 0
    %4675 = vmatprep.subr.bf16.mxu0 0
    %4676 = vmatpush1.bf16.msra.mxu0 0
    %4677 = vmatprep.subr.bf16.mxu0 0
    %4678 = vmatpush1.bf16.msra.mxu0 0
    %4679 = vmatprep.subr.bf16.mxu0 0
    %4680 = vmatpush1.bf16.msra.mxu0 0
    %4681 = vmatprep.subr.bf16.mxu0 0
    %4682 = vmatpush1.bf16.msra.mxu0 0
    %4683 = vmatprep.subr.bf16.mxu0 0
    %4684 = vmatpush1.bf16.msra.mxu0 0
    %4685 = vmatprep.subr.bf16.mxu0 0
    %4686 = vmatpush1.bf16.msra.mxu0 0
    %4687 = vmatprep.subr.bf16.mxu0 0
    %4688 = vmatpush1.bf16.msra.mxu0 0
    %4689 = vmatprep.mubr.bf16.mxu0 0
    %4690 = vmatmul.mubr.bf16.gmra.mrb[0].mxu0 %v4607
    %v4691 = vpop.f32.mrb[0].mxu0
    %v4692 = vadd.f32 0.0, %v4691
    %v4693 = vpop.f32.mrb[0].mxu0
    %v4694 = vpop.f32.mrb[0].mxu0
    %v4695 = vadd.f32 0.0, %v4694
    %v4696 = vpop.f32.mrb[0].mxu0
    %4697 = vmatprep.mubr.bf16.mxu0 0
    %4698 = vmatmul.mubr.bf16.gmra.mrb[0].mxu0 %v4610
    %v4699 = vpop.f32.mrb[0].mxu0
    %v4700 = vadd.f32 0.0, %v4699
    %v4701 = vpop.f32.mrb[0].mxu0
    %v4702 = vpop.f32.mrb[0].mxu0
    %v4703 = vadd.f32 0.0, %v4702
    %v4704 = vpop.f32.mrb[0].mxu0
    %4705 = vmatprep.mubr.bf16.mxu0 0
    %4706 = vmatmul.mubr.bf16.gmra.mrb[0].mxu0 %v4613
    %v4707 = vpop.f32.mrb[0].mxu0
    %v4708 = vadd.f32 0.0, %v4707
    %v4709 = vpop.f32.mrb[0].mxu0
    %v4710 = vpop.f32.mrb[0].mxu0
    %v4711 = vadd.f32 0.0, %v4710
    %v4712 = vpop.f32.mrb[0].mxu0
    %4713 = vmatprep.mubr.bf16.mxu0 0
    %4714 = vmatmul.mubr.bf16.gmra.mrb[0].mxu0 %v4616
    %v4715 = vpop.f32.mrb[0].mxu0
    %v4716 = vadd.f32 0.0, %v4715
    %v4717 = vpop.f32.mrb[0].mxu0
    %v4718 = vpop.f32.mrb[0].mxu0
    %v4719 = vadd.f32 0.0, %v4718
    %v4720 = vpop.f32.mrb[0].mxu0
    %4721 = vmatprep.mubr.bf16.mxu0 0
    %4722 = vmatmul.mubr.bf16.gmra.mrb[0].mxu0 %v4619
    %v4723 = vpop.f32.mrb[0].mxu0
    %v4724 = vadd.f32 0.0, %v4723
    %v4725 = vpop.f32.mrb[0].mxu0
    %v4726 = vpop.f32.mrb[0].mxu0
    %v4727 = vadd.f32 0.0, %v4726
    %v4728 = vpop.f32.mrb[0].mxu0
    %4729 = vmatprep.mubr.bf16.mxu0 0
    %4730 = vmatmul.mubr.bf16.gmra.mrb[0].mxu0 %v4622
    %v4731 = vpop.f32.mrb[0].mxu0
    %v4732 = vadd.f32 0.0, %v4731
    %v4733 = vpop.f32.mrb[0].mxu0
    %v4734 = vpop.f32.mrb[0].mxu0
    %v4735 = vadd.f32 0.0, %v4734
    %v4736 = vpop.f32.mrb[0].mxu0
    %4737 = vmatprep.mubr.bf16.mxu0 0
    %4738 = vmatmul.mubr.bf16.gmra.mrb[0].mxu0 %v4625
    %v4739 = vpop.f32.mrb[0].mxu0
    %v4740 = vadd.f32 0.0, %v4739
    %v4741 = vpop.f32.mrb[0].mxu0
    %v4742 = vpop.f32.mrb[0].mxu0
    %v4743 = vadd.f32 0.0, %v4742
    %v4744 = vpop.f32.mrb[0].mxu0
    %4745 = vmatprep.mubr.bf16.mxu0 0
    %4746 = vmatmul.mubr.bf16.gmra.mrb[0].mxu0 %v4628
    %v4747 = vpop.f32.mrb[0].mxu0
    %v4748 = vadd.f32 0.0, %v4747
    %v4749 = vpop.f32.mrb[0].mxu0
    %v4750 = vpop.f32.mrb[0].mxu0
    %v4751 = vadd.f32 0.0, %v4750
    %v4752 = vpop.f32.mrb[0].mxu0
    %4753 = vmatprep.mubr.bf16.mxu0 0
    %4754 = vmatmul.mubr.bf16.gmra.mrb[0].mxu0 %v4631
    %v4755 = vpop.f32.mrb[0].mxu0
    %v4756 = vadd.f32 0.0, %v4755
    %v4757 = vpop.f32.mrb[0].mxu0
    %v4758 = vpop.f32.mrb[0].mxu0
    %v4759 = vadd.f32 0.0, %v4758
    %v4760 = vpop.f32.mrb[0].mxu0
    %4761 = vmatprep.mubr.bf16.mxu0 0
    %4762 = vmatmul.mubr.bf16.gmra.mrb[0].mxu0 %v4634
    %v4763 = vpop.f32.mrb[0].mxu0
    %v4764 = vadd.f32 0.0, %v4763
    %v4765 = vpop.f32.mrb[0].mxu0
    %v4766 = vpop.f32.mrb[0].mxu0
    %v4767 = vadd.f32 0.0, %v4766
    %v4768 = vpop.f32.mrb[0].mxu0
    %4769 = vmatprep.mubr.bf16.mxu0 0
    %4770 = vmatmul.mubr.bf16.gmra.mrb[0].mxu0 %v4637
    %v4771 = vpop.f32.mrb[0].mxu0
    %v4772 = vadd.f32 0.0, %v4771
    %v4773 = vpop.f32.mrb[0].mxu0
    %v4774 = vpop.f32.mrb[0].mxu0
    %v4775 = vadd.f32 0.0, %v4774
    %v4776 = vpop.f32.mrb[0].mxu0
    %4777 = vmatprep.mubr.bf16.mxu0 0
    %4778 = vmatmul.mubr.bf16.gmra.mrb[0].mxu0 %v4640
    %v4779 = vpop.f32.mrb[0].mxu0
    %v4780 = vadd.f32 0.0, %v4779
    %v4781 = vpop.f32.mrb[0].mxu0
    %v4782 = vpop.f32.mrb[0].mxu0
    %v4783 = vadd.f32 0.0, %v4782
    %v4784 = vpop.f32.mrb[0].mxu0
    %4785 = vmatprep.mubr.bf16.mxu0 0
    %4786 = vmatmul.mubr.bf16.gmra.mrb[0].mxu0 %v4643
    %v4787 = vpop.f32.mrb[0].mxu0
    %v4788 = vadd.f32 0.0, %v4787
    %v4789 = vpop.f32.mrb[0].mxu0
    %v4790 = vpop.f32.mrb[0].mxu0
    %v4791 = vadd.f32 0.0, %v4790
    %v4792 = vpop.f32.mrb[0].mxu0
    %4793 = vmatprep.mubr.bf16.mxu0 0
    %4794 = vmatmul.mubr.bf16.gmra.mrb[0].mxu0 %v4646
    %v4795 = vpop.f32.mrb[0].mxu0
    %v4796 = vadd.f32 0.0, %v4795
    %v4797 = vpop.f32.mrb[0].mxu0
    %v4798 = vpop.f32.mrb[0].mxu0
    %v4799 = vadd.f32 0.0, %v4798
    %v4800 = vpop.f32.mrb[0].mxu0
    %4801 = vmatprep.mubr.bf16.mxu0 0
    %4802 = vmatmul.mubr.bf16.gmra.mrb[0].mxu0 %v4649
    %v4803 = vpop.f32.mrb[0].mxu0
    %v4804 = vadd.f32 0.0, %v4803
    %v4805 = vpop.f32.mrb[0].mxu0
    %v4806 = vpop.f32.mrb[0].mxu0
    %v4807 = vadd.f32 0.0, %v4806
    %v4808 = vpop.f32.mrb[0].mxu0
    %4809 = vmatprep.mubr.bf16.mxu0 0
    %4810 = vmatmul.mubr.bf16.gmra.mrb[0].mxu0 %v4652
    %v4811 = vpop.f32.mrb[0].mxu0
    %v4812 = vadd.f32 0.0, %v4811
    %v4813 = vpop.f32.mrb[0].mxu0
    %v4814 = vpop.f32.mrb[0].mxu0
    %v4815 = vadd.f32 0.0, %v4814
    %v4816 = vpop.f32.mrb[0].mxu0
    %4817 = vmatprep.mubr.bf16.mxu0 0
    %4818 = vmatmul.mubr.bf16.gmra.mrb[0].mxu0 %v4655
    %v4819 = vpop.f32.mrb[0].mxu0
    %v4820 = vadd.f32 0.0, %v4819
    %v4821 = vpop.f32.mrb[0].mxu0
    %v4822 = vpop.f32.mrb[0].mxu0
    %v4823 = vadd.f32 0.0, %v4822
    %v4824 = vpop.f32.mrb[0].mxu0
    %4825 = vdwg.mxu0
    %v4826 = vadd.f32 %v4504, %v4692
    %v4827 = vadd.f32 %v4505, %v4695
    %v4828 = vadd.f32 %v4506, %v4700
    %v4829 = vadd.f32 %v4507, %v4703
    %v4830 = vadd.f32 %v4508, %v4708
    %v4831 = vadd.f32 %v4509, %v4711
    %v4832 = vadd.f32 %v4510, %v4716
    %v4833 = vadd.f32 %v4511, %v4719
    %v4834 = vadd.f32 %v4512, %v4724
    %v4835 = vadd.f32 %v4513, %v4727
    %v4836 = vadd.f32 %v4514, %v4732
    %v4837 = vadd.f32 %v4515, %v4735
    %v4838 = vadd.f32 %v4516, %v4740
    %v4839 = vadd.f32 %v4517, %v4743
    %v4840 = vadd.f32 %v4518, %v4748
    %v4841 = vadd.f32 %v4519, %v4751
    %v4842 = vadd.f32 %v4520, %v4756
    %v4843 = vadd.f32 %v4521, %v4759
    %v4844 = vadd.f32 %v4522, %v4764
    %v4845 = vadd.f32 %v4523, %v4767
    %v4846 = vadd.f32 %v4524, %v4772
    %v4847 = vadd.f32 %v4525, %v4775
    %v4848 = vadd.f32 %v4526, %v4780
    %v4849 = vadd.f32 %v4527, %v4783
    %v4850 = vadd.f32 %v4528, %v4788
    %v4851 = vadd.f32 %v4529, %v4791
    %v4852 = vadd.f32 %v4530, %v4796
    %v4853 = vadd.f32 %v4531, %v4799
    %v4854 = vadd.f32 %v4532, %v4804
    %v4855 = vadd.f32 %v4533, %v4807
    %v4856 = vadd.f32 %v4534, %v4812
    %v4857 = vadd.f32 %v4535, %v4815
    %v4858 = vadd.f32 %v4536, %v4820
    %v4859 = vadd.f32 %v4537, %v4823
    %v4860 = vld [vmem:[#allocation3 + $0x18] sm:$0xff]
    %v4861 = vld [vmem:[#allocation3 + $0x20] sm:$0xff]
    %v4862 = vld [vmem:[#allocation3 + $0x28] sm:$0xff]
    %v4863 = vld [vmem:[#allocation3 + $0x30] sm:$0xff]
    %v4864 = vld [vmem:[#allocation3 + $0x38] sm:$0xff]
    %v4865 = vld [vmem:[#allocation3 + $0x40] sm:$0xff]
    %v4866 = vld [vmem:[#allocation3 + $0x48] sm:$0xff]
    %v4867 = vld [vmem:[#allocation3 + $0x50] sm:$0xff]
    %v4868 = vld [vmem:[#allocation3 + $0x58] sm:$0xff]
    %v4869 = vld [vmem:[#allocation3 + $0x60] sm:$0xff]
    %v4870 = vld [vmem:[#allocation3 + $0x68] sm:$0xff]
    %v4871 = vld [vmem:[#allocation3 + $0x70] sm:$0xff]
    %v4872 = vld [vmem:[#allocation3 + $0x78] sm:$0xff]
    %v4873 = vld [vmem:[#allocation3 + $0x80] sm:$0xff]
    %v4874 = vld [vmem:[#allocation3 + $0x88] sm:$0xff]
    %v4875 = vld [vmem:[#allocation3 + $0x90] sm:$0xff]
    %v4876 = vld [vmem:[#allocation3 + $0x98] sm:$0xff]
    %v4877 = vld [vmem:[#allocation3 + $0xa0] sm:$0xff]
    %v4878 = vld [vmem:[#allocation3 + $0xa8] sm:$0xff]
    %v4879 = vld [vmem:[#allocation3 + $0xb0] sm:$0xff]
    %v4880 = vld [vmem:[#allocation3 + $0xb8] sm:$0xff]
    %v4881 = vld [vmem:[#allocation3 + $0xc0] sm:$0xff]
    %v4882 = vld [vmem:[#allocation3 + $0xc8] sm:$0xff]
    %v4883 = vld [vmem:[#allocation3 + $0xd0] sm:$0xff]
    %v4884 = vld [vmem:[#allocation3 + $0xd8] sm:$0xff]
    %v4885 = vld [vmem:[#allocation3 + $0xe0] sm:$0xff]
    %v4886 = vld [vmem:[#allocation3 + $0xe8] sm:$0xff]
    %v4887 = vld [vmem:[#allocation3 + $0xf0] sm:$0xff]
    %v4888 = vld [vmem:[#allocation3 + $0xf8] sm:$0xff]
    %v4889 = vld [vmem:[#allocation3 + $0x100] sm:$0xff]
    %v4890 = vld [vmem:[#allocation3 + $0x108] sm:$0xff]
    %v4891 = vld [vmem:[#allocation3 + $0x110] sm:$0xff]
    %v4892 = vld [vmem:[#allocation3 + $0x118] sm:$0xff]
    %v4893 = vld [vmem:[#allocation3 + $0x120] sm:$0xff]
    %v4894 = vpack.c.bf16 %v4861, %v4860
    %v4895 = vpack.c.bf16 %v4863, %v4862
    %v4896 = vpack.c.bf16 %v4865, %v4864
    %v4897 = vpack.c.bf16 %v4867, %v4866
    %v4898 = vpack.c.bf16 %v4869, %v4868
    %v4899 = vpack.c.bf16 %v4871, %v4870
    %v4900 = vpack.c.bf16 %v4873, %v4872
    %v4901 = vpack.c.bf16 %v4875, %v4874
    %v4902 = vpack.c.bf16 %v4877, %v4876
    %v4903 = vpack.c.bf16 %v4879, %v4878
    %v4904 = vpack.c.bf16 %v4881, %v4880
    %v4905 = vpack.c.bf16 %v4883, %v4882
    %v4906 = vpack.c.bf16 %v4885, %v4884
    %v4907 = vpack.c.bf16 %v4887, %v4886
    %v4908 = vpack.c.bf16 %v4889, %v4888
    %v4909 = vpack.c.bf16 %v4891, %v4890
    %v4910 = vpack.c.bf16 %v4893, %v4892
    %s4911 = scalar_lea.vmem %s3, 160
    %v4912 = vld [vmem:[%s4911] sm:$0xf]
    %v4913 = vld [vmem:[%s4911 + $0x4] sm:$0xf]
    %v4914 = vld [vmem:[%s4911 + $0x8] sm:$0xf]
    %v4915 = vld [vmem:[%s4911 + $0xc] sm:$0xf]
    %v4920 = vunpack.c.l.b16 %v4912
    %v4921 = vunpack.c.l.b16 %v4913
    %v4922 = vunpack.c.l.b16 %v4914
    %v4923 = vunpack.c.l.b16 %v4915
    %v4924 = vpack.c.b16 %v4921, %v4920
    %v4925 = vpack.c.b16 %v4923, %v4922
    %v4929 = vsel %vm1670, %v4894, 0
    %v4932 = vsel %vm1670, %v4895, 0
    %v4935 = vsel %vm1670, %v4896, 0
    %v4938 = vsel %vm1670, %v4897, 0
    %v4941 = vsel %vm1670, %v4898, 0
    %v4944 = vsel %vm1670, %v4899, 0
    %v4947 = vsel %vm1670, %v4900, 0
    %v4950 = vsel %vm1670, %v4901, 0
    %v4953 = vsel %vm1670, %v4902, 0
    %v4956 = vsel %vm1670, %v4903, 0
    %v4959 = vsel %vm1670, %v4904, 0
    %v4962 = vsel %vm1670, %v4905, 0
    %v4965 = vsel %vm1670, %v4906, 0
    %v4968 = vsel %vm1670, %v4907, 0
    %v4971 = vsel %vm1670, %v4908, 0
    %v4974 = vsel %vm1670, %v4909, 0
    %v4977 = vsel %vm1670, %v4910, 0
    %4979 = vmatprep.subr.bf16.mxu0 0
    %4980 = vmatpush1.bf16.msra.mxu0 %v4924
    %4981 = vmatprep.subr.bf16.mxu0 0
    %4982 = vmatpush1.bf16.msra.mxu0 %v4925
    %4983 = vmatprep.subr.bf16.mxu0 0
    %4984 = vmatpush1.bf16.msra.mxu0 0
    %4985 = vmatprep.subr.bf16.mxu0 0
    %4986 = vmatpush1.bf16.msra.mxu0 0
    %4987 = vmatprep.subr.bf16.mxu0 0
    %4988 = vmatpush1.bf16.msra.mxu0 0
    %4989 = vmatprep.subr.bf16.mxu0 0
    %4990 = vmatpush1.bf16.msra.mxu0 0
    %4991 = vmatprep.subr.bf16.mxu0 0
    %4992 = vmatpush1.bf16.msra.mxu0 0
    %4993 = vmatprep.subr.bf16.mxu0 0
    %4994 = vmatpush1.bf16.msra.mxu0 0
    %4995 = vmatprep.subr.bf16.mxu0 0
    %4996 = vmatpush1.bf16.msra.mxu0 0
    %4997 = vmatprep.subr.bf16.mxu0 0
    %4998 = vmatpush1.bf16.msra.mxu0 0
    %4999 = vmatprep.subr.bf16.mxu0 0
    %5000 = vmatpush1.bf16.msra.mxu0 0
    %5001 = vmatprep.subr.bf16.mxu0 0
    %5002 = vmatpush1.bf16.msra.mxu0 0
    %5003 = vmatprep.subr.bf16.mxu0 0
    %5004 = vmatpush1.bf16.msra.mxu0 0
    %5005 = vmatprep.subr.bf16.mxu0 0
    %5006 = vmatpush1.bf16.msra.mxu0 0
    %5007 = vmatprep.subr.bf16.mxu0 0
    %5008 = vmatpush1.bf16.msra.mxu0 0
    %5009 = vmatprep.subr.bf16.mxu0 0
    %5010 = vmatpush1.bf16.msra.mxu0 0
    %5011 = vmatprep.mubr.bf16.mxu0 0
    %5012 = vmatmul.mubr.bf16.gmra.mrb[0].mxu0 %v4929
    %v5013 = vpop.f32.mrb[0].mxu0
    %v5014 = vadd.f32 0.0, %v5013
    %v5015 = vpop.f32.mrb[0].mxu0
    %v5016 = vpop.f32.mrb[0].mxu0
    %v5017 = vadd.f32 0.0, %v5016
    %v5018 = vpop.f32.mrb[0].mxu0
    %5019 = vmatprep.mubr.bf16.mxu0 0
    %5020 = vmatmul.mubr.bf16.gmra.mrb[0].mxu0 %v4932
    %v5021 = vpop.f32.mrb[0].mxu0
    %v5022 = vadd.f32 0.0, %v5021
    %v5023 = vpop.f32.mrb[0].mxu0
    %v5024 = vpop.f32.mrb[0].mxu0
    %v5025 = vadd.f32 0.0, %v5024
    %v5026 = vpop.f32.mrb[0].mxu0
    %5027 = vmatprep.mubr.bf16.mxu0 0
    %5028 = vmatmul.mubr.bf16.gmra.mrb[0].mxu0 %v4935
    %v5029 = vpop.f32.mrb[0].mxu0
    %v5030 = vadd.f32 0.0, %v5029
    %v5031 = vpop.f32.mrb[0].mxu0
    %v5032 = vpop.f32.mrb[0].mxu0
    %v5033 = vadd.f32 0.0, %v5032
    %v5034 = vpop.f32.mrb[0].mxu0
    %5035 = vmatprep.mubr.bf16.mxu0 0
    %5036 = vmatmul.mubr.bf16.gmra.mrb[0].mxu0 %v4938
    %v5037 = vpop.f32.mrb[0].mxu0
    %v5038 = vadd.f32 0.0, %v5037
    %v5039 = vpop.f32.mrb[0].mxu0
    %v5040 = vpop.f32.mrb[0].mxu0
    %v5041 = vadd.f32 0.0, %v5040
    %v5042 = vpop.f32.mrb[0].mxu0
    %5043 = vmatprep.mubr.bf16.mxu0 0
    %5044 = vmatmul.mubr.bf16.gmra.mrb[0].mxu0 %v4941
    %v5045 = vpop.f32.mrb[0].mxu0
    %v5046 = vadd.f32 0.0, %v5045
    %v5047 = vpop.f32.mrb[0].mxu0
    %v5048 = vpop.f32.mrb[0].mxu0
    %v5049 = vadd.f32 0.0, %v5048
    %v5050 = vpop.f32.mrb[0].mxu0
    %5051 = vmatprep.mubr.bf16.mxu0 0
    %5052 = vmatmul.mubr.bf16.gmra.mrb[0].mxu0 %v4944
    %v5053 = vpop.f32.mrb[0].mxu0
    %v5054 = vadd.f32 0.0, %v5053
    %v5055 = vpop.f32.mrb[0].mxu0
    %v5056 = vpop.f32.mrb[0].mxu0
    %v5057 = vadd.f32 0.0, %v5056
    %v5058 = vpop.f32.mrb[0].mxu0
    %5059 = vmatprep.mubr.bf16.mxu0 0
    %5060 = vmatmul.mubr.bf16.gmra.mrb[0].mxu0 %v4947
    %v5061 = vpop.f32.mrb[0].mxu0
    %v5062 = vadd.f32 0.0, %v5061
    %v5063 = vpop.f32.mrb[0].mxu0
    %v5064 = vpop.f32.mrb[0].mxu0
    %v5065 = vadd.f32 0.0, %v5064
    %v5066 = vpop.f32.mrb[0].mxu0
    %5067 = vmatprep.mubr.bf16.mxu0 0
    %5068 = vmatmul.mubr.bf16.gmra.mrb[0].mxu0 %v4950
    %v5069 = vpop.f32.mrb[0].mxu0
    %v5070 = vadd.f32 0.0, %v5069
    %v5071 = vpop.f32.mrb[0].mxu0
    %v5072 = vpop.f32.mrb[0].mxu0
    %v5073 = vadd.f32 0.0, %v5072
    %v5074 = vpop.f32.mrb[0].mxu0
    %5075 = vmatprep.mubr.bf16.mxu0 0
    %5076 = vmatmul.mubr.bf16.gmra.mrb[0].mxu0 %v4953
    %v5077 = vpop.f32.mrb[0].mxu0
    %v5078 = vadd.f32 0.0, %v5077
    %v5079 = vpop.f32.mrb[0].mxu0
    %v5080 = vpop.f32.mrb[0].mxu0
    %v5081 = vadd.f32 0.0, %v5080
    %v5082 = vpop.f32.mrb[0].mxu0
    %5083 = vmatprep.mubr.bf16.mxu0 0
    %5084 = vmatmul.mubr.bf16.gmra.mrb[0].mxu0 %v4956
    %v5085 = vpop.f32.mrb[0].mxu0
    %v5086 = vadd.f32 0.0, %v5085
    %v5087 = vpop.f32.mrb[0].mxu0
    %v5088 = vpop.f32.mrb[0].mxu0
    %v5089 = vadd.f32 0.0, %v5088
    %v5090 = vpop.f32.mrb[0].mxu0
    %5091 = vmatprep.mubr.bf16.mxu0 0
    %5092 = vmatmul.mubr.bf16.gmra.mrb[0].mxu0 %v4959
    %v5093 = vpop.f32.mrb[0].mxu0
    %v5094 = vadd.f32 0.0, %v5093
    %v5095 = vpop.f32.mrb[0].mxu0
    %v5096 = vpop.f32.mrb[0].mxu0
    %v5097 = vadd.f32 0.0, %v5096
    %v5098 = vpop.f32.mrb[0].mxu0
    %5099 = vmatprep.mubr.bf16.mxu0 0
    %5100 = vmatmul.mubr.bf16.gmra.mrb[0].mxu0 %v4962
    %v5101 = vpop.f32.mrb[0].mxu0
    %v5102 = vadd.f32 0.0, %v5101
    %v5103 = vpop.f32.mrb[0].mxu0
    %v5104 = vpop.f32.mrb[0].mxu0
    %v5105 = vadd.f32 0.0, %v5104
    %v5106 = vpop.f32.mrb[0].mxu0
    %5107 = vmatprep.mubr.bf16.mxu0 0
    %5108 = vmatmul.mubr.bf16.gmra.mrb[0].mxu0 %v4965
    %v5109 = vpop.f32.mrb[0].mxu0
    %v5110 = vadd.f32 0.0, %v5109
    %v5111 = vpop.f32.mrb[0].mxu0
    %v5112 = vpop.f32.mrb[0].mxu0
    %v5113 = vadd.f32 0.0, %v5112
    %v5114 = vpop.f32.mrb[0].mxu0
    %5115 = vmatprep.mubr.bf16.mxu0 0
    %5116 = vmatmul.mubr.bf16.gmra.mrb[0].mxu0 %v4968
    %v5117 = vpop.f32.mrb[0].mxu0
    %v5118 = vadd.f32 0.0, %v5117
    %v5119 = vpop.f32.mrb[0].mxu0
    %v5120 = vpop.f32.mrb[0].mxu0
    %v5121 = vadd.f32 0.0, %v5120
    %v5122 = vpop.f32.mrb[0].mxu0
    %5123 = vmatprep.mubr.bf16.mxu0 0
    %5124 = vmatmul.mubr.bf16.gmra.mrb[0].mxu0 %v4971
    %v5125 = vpop.f32.mrb[0].mxu0
    %v5126 = vadd.f32 0.0, %v5125
    %v5127 = vpop.f32.mrb[0].mxu0
    %v5128 = vpop.f32.mrb[0].mxu0
    %v5129 = vadd.f32 0.0, %v5128
    %v5130 = vpop.f32.mrb[0].mxu0
    %5131 = vmatprep.mubr.bf16.mxu0 0
    %5132 = vmatmul.mubr.bf16.gmra.mrb[0].mxu0 %v4974
    %v5133 = vpop.f32.mrb[0].mxu0
    %v5134 = vadd.f32 0.0, %v5133
    %v5135 = vpop.f32.mrb[0].mxu0
    %v5136 = vpop.f32.mrb[0].mxu0
    %v5137 = vadd.f32 0.0, %v5136
    %v5138 = vpop.f32.mrb[0].mxu0
    %5139 = vmatprep.mubr.bf16.mxu0 0
    %5140 = vmatmul.mubr.bf16.gmra.mrb[0].mxu0 %v4977
    %v5141 = vpop.f32.mrb[0].mxu0
    %v5142 = vadd.f32 0.0, %v5141
    %v5143 = vpop.f32.mrb[0].mxu0
    %v5144 = vpop.f32.mrb[0].mxu0
    %v5145 = vadd.f32 0.0, %v5144
    %v5146 = vpop.f32.mrb[0].mxu0
    %5147 = vdwg.mxu0
    %v5148 = vadd.f32 %v4826, %v5014
    %v5149 = vadd.f32 %v4827, %v5017
    %v5150 = vadd.f32 %v4828, %v5022
    %v5151 = vadd.f32 %v4829, %v5025
    %v5152 = vadd.f32 %v4830, %v5030
    %v5153 = vadd.f32 %v4831, %v5033
    %v5154 = vadd.f32 %v4832, %v5038
    %v5155 = vadd.f32 %v4833, %v5041
    %v5156 = vadd.f32 %v4834, %v5046
    %v5157 = vadd.f32 %v4835, %v5049
    %v5158 = vadd.f32 %v4836, %v5054
    %v5159 = vadd.f32 %v4837, %v5057
    %v5160 = vadd.f32 %v4838, %v5062
    %v5161 = vadd.f32 %v4839, %v5065
    %v5162 = vadd.f32 %v4840, %v5070
    %v5163 = vadd.f32 %v4841, %v5073
    %v5164 = vadd.f32 %v4842, %v5078
    %v5165 = vadd.f32 %v4843, %v5081
    %v5166 = vadd.f32 %v4844, %v5086
    %v5167 = vadd.f32 %v4845, %v5089
    %v5168 = vadd.f32 %v4846, %v5094
    %v5169 = vadd.f32 %v4847, %v5097
    %v5170 = vadd.f32 %v4848, %v5102
    %v5171 = vadd.f32 %v4849, %v5105
    %v5172 = vadd.f32 %v4850, %v5110
    %v5173 = vadd.f32 %v4851, %v5113
    %v5174 = vadd.f32 %v4852, %v5118
    %v5175 = vadd.f32 %v4853, %v5121
    %v5176 = vadd.f32 %v4854, %v5126
    %v5177 = vadd.f32 %v4855, %v5129
    %v5178 = vadd.f32 %v4856, %v5134
    %v5179 = vadd.f32 %v4857, %v5137
    %v5180 = vadd.f32 %v4858, %v5142
    %v5181 = vadd.f32 %v4859, %v5145
    %v5182 = vld [vmem:[#allocation3 + $0x19] sm:$0xff]
    %v5183 = vld [vmem:[#allocation3 + $0x21] sm:$0xff]
    %v5184 = vld [vmem:[#allocation3 + $0x29] sm:$0xff]
    %v5185 = vld [vmem:[#allocation3 + $0x31] sm:$0xff]
    %v5186 = vld [vmem:[#allocation3 + $0x39] sm:$0xff]
    %v5187 = vld [vmem:[#allocation3 + $0x41] sm:$0xff]
    %v5188 = vld [vmem:[#allocation3 + $0x49] sm:$0xff]
    %v5189 = vld [vmem:[#allocation3 + $0x51] sm:$0xff]
    %v5190 = vld [vmem:[#allocation3 + $0x59] sm:$0xff]
    %v5191 = vld [vmem:[#allocation3 + $0x61] sm:$0xff]
    %v5192 = vld [vmem:[#allocation3 + $0x69] sm:$0xff]
    %v5193 = vld [vmem:[#allocation3 + $0x71] sm:$0xff]
    %v5194 = vld [vmem:[#allocation3 + $0x79] sm:$0xff]
    %v5195 = vld [vmem:[#allocation3 + $0x81] sm:$0xff]
    %v5196 = vld [vmem:[#allocation3 + $0x89] sm:$0xff]
    %v5197 = vld [vmem:[#allocation3 + $0x91] sm:$0xff]
    %v5198 = vld [vmem:[#allocation3 + $0x99] sm:$0xff]
    %v5199 = vld [vmem:[#allocation3 + $0xa1] sm:$0xff]
    %v5200 = vld [vmem:[#allocation3 + $0xa9] sm:$0xff]
    %v5201 = vld [vmem:[#allocation3 + $0xb1] sm:$0xff]
    %v5202 = vld [vmem:[#allocation3 + $0xb9] sm:$0xff]
    %v5203 = vld [vmem:[#allocation3 + $0xc1] sm:$0xff]
    %v5204 = vld [vmem:[#allocation3 + $0xc9] sm:$0xff]
    %v5205 = vld [vmem:[#allocation3 + $0xd1] sm:$0xff]
    %v5206 = vld [vmem:[#allocation3 + $0xd9] sm:$0xff]
    %v5207 = vld [vmem:[#allocation3 + $0xe1] sm:$0xff]
    %v5208 = vld [vmem:[#allocation3 + $0xe9] sm:$0xff]
    %v5209 = vld [vmem:[#allocation3 + $0xf1] sm:$0xff]
    %v5210 = vld [vmem:[#allocation3 + $0xf9] sm:$0xff]
    %v5211 = vld [vmem:[#allocation3 + $0x101] sm:$0xff]
    %v5212 = vld [vmem:[#allocation3 + $0x109] sm:$0xff]
    %v5213 = vld [vmem:[#allocation3 + $0x111] sm:$0xff]
    %v5214 = vld [vmem:[#allocation3 + $0x119] sm:$0xff]
    %v5215 = vld [vmem:[#allocation3 + $0x121] sm:$0xff]
    %v5216 = vpack.c.bf16 %v5183, %v5182
    %v5217 = vpack.c.bf16 %v5185, %v5184
    %v5218 = vpack.c.bf16 %v5187, %v5186
    %v5219 = vpack.c.bf16 %v5189, %v5188
    %v5220 = vpack.c.bf16 %v5191, %v5190
    %v5221 = vpack.c.bf16 %v5193, %v5192
    %v5222 = vpack.c.bf16 %v5195, %v5194
    %v5223 = vpack.c.bf16 %v5197, %v5196
    %v5224 = vpack.c.bf16 %v5199, %v5198
    %v5225 = vpack.c.bf16 %v5201, %v5200
    %v5226 = vpack.c.bf16 %v5203, %v5202
    %v5227 = vpack.c.bf16 %v5205, %v5204
    %v5228 = vpack.c.bf16 %v5207, %v5206
    %v5229 = vpack.c.bf16 %v5209, %v5208
    %v5230 = vpack.c.bf16 %v5211, %v5210
    %v5231 = vpack.c.bf16 %v5213, %v5212
    %v5232 = vpack.c.bf16 %v5215, %v5214
    %s5233 = scalar_lea.vmem %s3, 176
    %v5234 = vld [vmem:[%s5233] sm:$0xf]
    %v5235 = vld [vmem:[%s5233 + $0x4] sm:$0xf]
    %v5236 = vld [vmem:[%s5233 + $0x8] sm:$0xf]
    %v5237 = vld [vmem:[%s5233 + $0xc] sm:$0xf]
    %v5242 = vunpack.c.l.b16 %v5234
    %v5243 = vunpack.c.l.b16 %v5235
    %v5244 = vunpack.c.l.b16 %v5236
    %v5245 = vunpack.c.l.b16 %v5237
    %v5246 = vpack.c.b16 %v5243, %v5242
    %v5247 = vpack.c.b16 %v5245, %v5244
    %v5251 = vsel %vm1670, %v5216, 0
    %v5254 = vsel %vm1670, %v5217, 0
    %v5257 = vsel %vm1670, %v5218, 0
    %v5260 = vsel %vm1670, %v5219, 0
    %v5263 = vsel %vm1670, %v5220, 0
    %v5266 = vsel %vm1670, %v5221, 0
    %v5269 = vsel %vm1670, %v5222, 0
    %v5272 = vsel %vm1670, %v5223, 0
    %v5275 = vsel %vm1670, %v5224, 0
    %v5278 = vsel %vm1670, %v5225, 0
    %v5281 = vsel %vm1670, %v5226, 0
    %v5284 = vsel %vm1670, %v5227, 0
    %v5287 = vsel %vm1670, %v5228, 0
    %v5290 = vsel %vm1670, %v5229, 0
    %v5293 = vsel %vm1670, %v5230, 0
    %v5296 = vsel %vm1670, %v5231, 0
    %v5299 = vsel %vm1670, %v5232, 0
    %5301 = vmatprep.subr.bf16.mxu0 0
    %5302 = vmatpush1.bf16.msra.mxu0 %v5246
    %5303 = vmatprep.subr.bf16.mxu0 0
    %5304 = vmatpush1.bf16.msra.mxu0 %v5247
    %5305 = vmatprep.subr.bf16.mxu0 0
    %5306 = vmatpush1.bf16.msra.mxu0 0
    %5307 = vmatprep.subr.bf16.mxu0 0
    %5308 = vmatpush1.bf16.msra.mxu0 0
    %5309 = vmatprep.subr.bf16.mxu0 0
    %5310 = vmatpush1.bf16.msra.mxu0 0
    %5311 = vmatprep.subr.bf16.mxu0 0
    %5312 = vmatpush1.bf16.msra.mxu0 0
    %5313 = vmatprep.subr.bf16.mxu0 0
    %5314 = vmatpush1.bf16.msra.mxu0 0
    %5315 = vmatprep.subr.bf16.mxu0 0
    %5316 = vmatpush1.bf16.msra.mxu0 0
    %5317 = vmatprep.subr.bf16.mxu0 0
    %5318 = vmatpush1.bf16.msra.mxu0 0
    %5319 = vmatprep.subr.bf16.mxu0 0
    %5320 = vmatpush1.bf16.msra.mxu0 0
    %5321 = vmatprep.subr.bf16.mxu0 0
    %5322 = vmatpush1.bf16.msra.mxu0 0
    %5323 = vmatprep.subr.bf16.mxu0 0
    %5324 = vmatpush1.bf16.msra.mxu0 0
    %5325 = vmatprep.subr.bf16.mxu0 0
    %5326 = vmatpush1.bf16.msra.mxu0 0
    %5327 = vmatprep.subr.bf16.mxu0 0
    %5328 = vmatpush1.bf16.msra.mxu0 0
    %5329 = vmatprep.subr.bf16.mxu0 0
    %5330 = vmatpush1.bf16.msra.mxu0 0
    %5331 = vmatprep.subr.bf16.mxu0 0
    %5332 = vmatpush1.bf16.msra.mxu0 0
    %5333 = vmatprep.mubr.bf16.mxu0 0
    %5334 = vmatmul.mubr.bf16.gmra.mrb[0].mxu0 %v5251
    %v5335 = vpop.f32.mrb[0].mxu0
    %v5336 = vadd.f32 0.0, %v5335
    %v5337 = vpop.f32.mrb[0].mxu0
    %v5338 = vpop.f32.mrb[0].mxu0
    %v5339 = vadd.f32 0.0, %v5338
    %v5340 = vpop.f32.mrb[0].mxu0
    %5341 = vmatprep.mubr.bf16.mxu0 0
    %5342 = vmatmul.mubr.bf16.gmra.mrb[0].mxu0 %v5254
    %v5343 = vpop.f32.mrb[0].mxu0
    %v5344 = vadd.f32 0.0, %v5343
    %v5345 = vpop.f32.mrb[0].mxu0
    %v5346 = vpop.f32.mrb[0].mxu0
    %v5347 = vadd.f32 0.0, %v5346
    %v5348 = vpop.f32.mrb[0].mxu0
    %5349 = vmatprep.mubr.bf16.mxu0 0
    %5350 = vmatmul.mubr.bf16.gmra.mrb[0].mxu0 %v5257
    %v5351 = vpop.f32.mrb[0].mxu0
    %v5352 = vadd.f32 0.0, %v5351
    %v5353 = vpop.f32.mrb[0].mxu0
    %v5354 = vpop.f32.mrb[0].mxu0
    %v5355 = vadd.f32 0.0, %v5354
    %v5356 = vpop.f32.mrb[0].mxu0
    %5357 = vmatprep.mubr.bf16.mxu0 0
    %5358 = vmatmul.mubr.bf16.gmra.mrb[0].mxu0 %v5260
    %v5359 = vpop.f32.mrb[0].mxu0
    %v5360 = vadd.f32 0.0, %v5359
    %v5361 = vpop.f32.mrb[0].mxu0
    %v5362 = vpop.f32.mrb[0].mxu0
    %v5363 = vadd.f32 0.0, %v5362
    %v5364 = vpop.f32.mrb[0].mxu0
    %5365 = vmatprep.mubr.bf16.mxu0 0
    %5366 = vmatmul.mubr.bf16.gmra.mrb[0].mxu0 %v5263
    %v5367 = vpop.f32.mrb[0].mxu0
    %v5368 = vadd.f32 0.0, %v5367
    %v5369 = vpop.f32.mrb[0].mxu0
    %v5370 = vpop.f32.mrb[0].mxu0
    %v5371 = vadd.f32 0.0, %v5370
    %v5372 = vpop.f32.mrb[0].mxu0
    %5373 = vmatprep.mubr.bf16.mxu0 0
    %5374 = vmatmul.mubr.bf16.gmra.mrb[0].mxu0 %v5266
    %v5375 = vpop.f32.mrb[0].mxu0
    %v5376 = vadd.f32 0.0, %v5375
    %v5377 = vpop.f32.mrb[0].mxu0
    %v5378 = vpop.f32.mrb[0].mxu0
    %v5379 = vadd.f32 0.0, %v5378
    %v5380 = vpop.f32.mrb[0].mxu0
    %5381 = vmatprep.mubr.bf16.mxu0 0
    %5382 = vmatmul.mubr.bf16.gmra.mrb[0].mxu0 %v5269
    %v5383 = vpop.f32.mrb[0].mxu0
    %v5384 = vadd.f32 0.0, %v5383
    %v5385 = vpop.f32.mrb[0].mxu0
    %v5386 = vpop.f32.mrb[0].mxu0
    %v5387 = vadd.f32 0.0, %v5386
    %v5388 = vpop.f32.mrb[0].mxu0
    %5389 = vmatprep.mubr.bf16.mxu0 0
    %5390 = vmatmul.mubr.bf16.gmra.mrb[0].mxu0 %v5272
    %v5391 = vpop.f32.mrb[0].mxu0
    %v5392 = vadd.f32 0.0, %v5391
    %v5393 = vpop.f32.mrb[0].mxu0
    %v5394 = vpop.f32.mrb[0].mxu0
    %v5395 = vadd.f32 0.0, %v5394
    %v5396 = vpop.f32.mrb[0].mxu0
    %5397 = vmatprep.mubr.bf16.mxu0 0
    %5398 = vmatmul.mubr.bf16.gmra.mrb[0].mxu0 %v5275
    %v5399 = vpop.f32.mrb[0].mxu0
    %v5400 = vadd.f32 0.0, %v5399
    %v5401 = vpop.f32.mrb[0].mxu0
    %v5402 = vpop.f32.mrb[0].mxu0
    %v5403 = vadd.f32 0.0, %v5402
    %v5404 = vpop.f32.mrb[0].mxu0
    %5405 = vmatprep.mubr.bf16.mxu0 0
    %5406 = vmatmul.mubr.bf16.gmra.mrb[0].mxu0 %v5278
    %v5407 = vpop.f32.mrb[0].mxu0
    %v5408 = vadd.f32 0.0, %v5407
    %v5409 = vpop.f32.mrb[0].mxu0
    %v5410 = vpop.f32.mrb[0].mxu0
    %v5411 = vadd.f32 0.0, %v5410
    %v5412 = vpop.f32.mrb[0].mxu0
    %5413 = vmatprep.mubr.bf16.mxu0 0
    %5414 = vmatmul.mubr.bf16.gmra.mrb[0].mxu0 %v5281
    %v5415 = vpop.f32.mrb[0].mxu0
    %v5416 = vadd.f32 0.0, %v5415
    %v5417 = vpop.f32.mrb[0].mxu0
    %v5418 = vpop.f32.mrb[0].mxu0
    %v5419 = vadd.f32 0.0, %v5418
    %v5420 = vpop.f32.mrb[0].mxu0
    %5421 = vmatprep.mubr.bf16.mxu0 0
    %5422 = vmatmul.mubr.bf16.gmra.mrb[0].mxu0 %v5284
    %v5423 = vpop.f32.mrb[0].mxu0
    %v5424 = vadd.f32 0.0, %v5423
    %v5425 = vpop.f32.mrb[0].mxu0
    %v5426 = vpop.f32.mrb[0].mxu0
    %v5427 = vadd.f32 0.0, %v5426
    %v5428 = vpop.f32.mrb[0].mxu0
    %5429 = vmatprep.mubr.bf16.mxu0 0
    %5430 = vmatmul.mubr.bf16.gmra.mrb[0].mxu0 %v5287
    %v5431 = vpop.f32.mrb[0].mxu0
    %v5432 = vadd.f32 0.0, %v5431
    %v5433 = vpop.f32.mrb[0].mxu0
    %v5434 = vpop.f32.mrb[0].mxu0
    %v5435 = vadd.f32 0.0, %v5434
    %v5436 = vpop.f32.mrb[0].mxu0
    %5437 = vmatprep.mubr.bf16.mxu0 0
    %5438 = vmatmul.mubr.bf16.gmra.mrb[0].mxu0 %v5290
    %v5439 = vpop.f32.mrb[0].mxu0
    %v5440 = vadd.f32 0.0, %v5439
    %v5441 = vpop.f32.mrb[0].mxu0
    %v5442 = vpop.f32.mrb[0].mxu0
    %v5443 = vadd.f32 0.0, %v5442
    %v5444 = vpop.f32.mrb[0].mxu0
    %5445 = vmatprep.mubr.bf16.mxu0 0
    %5446 = vmatmul.mubr.bf16.gmra.mrb[0].mxu0 %v5293
    %v5447 = vpop.f32.mrb[0].mxu0
    %v5448 = vadd.f32 0.0, %v5447
    %v5449 = vpop.f32.mrb[0].mxu0
    %v5450 = vpop.f32.mrb[0].mxu0
    %v5451 = vadd.f32 0.0, %v5450
    %v5452 = vpop.f32.mrb[0].mxu0
    %5453 = vmatprep.mubr.bf16.mxu0 0
    %5454 = vmatmul.mubr.bf16.gmra.mrb[0].mxu0 %v5296
    %v5455 = vpop.f32.mrb[0].mxu0
    %v5456 = vadd.f32 0.0, %v5455
    %v5457 = vpop.f32.mrb[0].mxu0
    %v5458 = vpop.f32.mrb[0].mxu0
    %v5459 = vadd.f32 0.0, %v5458
    %v5460 = vpop.f32.mrb[0].mxu0
    %5461 = vmatprep.mubr.bf16.mxu0 0
    %5462 = vmatmul.mubr.bf16.gmra.mrb[0].mxu0 %v5299
    %v5463 = vpop.f32.mrb[0].mxu0
    %v5464 = vadd.f32 0.0, %v5463
    %v5465 = vpop.f32.mrb[0].mxu0
    %v5466 = vpop.f32.mrb[0].mxu0
    %v5467 = vadd.f32 0.0, %v5466
    %v5468 = vpop.f32.mrb[0].mxu0
    %5469 = vdwg.mxu0
    %v5470 = vadd.f32 %v5148, %v5336
    %v5471 = vadd.f32 %v5149, %v5339
    %v5472 = vadd.f32 %v5150, %v5344
    %v5473 = vadd.f32 %v5151, %v5347
    %v5474 = vadd.f32 %v5152, %v5352
    %v5475 = vadd.f32 %v5153, %v5355
    %v5476 = vadd.f32 %v5154, %v5360
    %v5477 = vadd.f32 %v5155, %v5363
    %v5478 = vadd.f32 %v5156, %v5368
    %v5479 = vadd.f32 %v5157, %v5371
    %v5480 = vadd.f32 %v5158, %v5376
    %v5481 = vadd.f32 %v5159, %v5379
    %v5482 = vadd.f32 %v5160, %v5384
    %v5483 = vadd.f32 %v5161, %v5387
    %v5484 = vadd.f32 %v5162, %v5392
    %v5485 = vadd.f32 %v5163, %v5395
    %v5486 = vadd.f32 %v5164, %v5400
    %v5487 = vadd.f32 %v5165, %v5403
    %v5488 = vadd.f32 %v5166, %v5408
    %v5489 = vadd.f32 %v5167, %v5411
    %v5490 = vadd.f32 %v5168, %v5416
    %v5491 = vadd.f32 %v5169, %v5419
    %v5492 = vadd.f32 %v5170, %v5424
    %v5493 = vadd.f32 %v5171, %v5427
    %v5494 = vadd.f32 %v5172, %v5432
    %v5495 = vadd.f32 %v5173, %v5435
    %v5496 = vadd.f32 %v5174, %v5440
    %v5497 = vadd.f32 %v5175, %v5443
    %v5498 = vadd.f32 %v5176, %v5448
    %v5499 = vadd.f32 %v5177, %v5451
    %v5500 = vadd.f32 %v5178, %v5456
    %v5501 = vadd.f32 %v5179, %v5459
    %v5502 = vadd.f32 %v5180, %v5464
    %v5503 = vadd.f32 %v5181, %v5467
    %v5504 = vld [vmem:[#allocation3 + $0x21] sm:$0xff]
    %v5505 = vld [vmem:[#allocation3 + $0x29] sm:$0xff]
    %v5506 = vld [vmem:[#allocation3 + $0x31] sm:$0xff]
    %v5507 = vld [vmem:[#allocation3 + $0x39] sm:$0xff]
    %v5508 = vld [vmem:[#allocation3 + $0x41] sm:$0xff]
    %v5509 = vld [vmem:[#allocation3 + $0x49] sm:$0xff]
    %v5510 = vld [vmem:[#allocation3 + $0x51] sm:$0xff]
    %v5511 = vld [vmem:[#allocation3 + $0x59] sm:$0xff]
    %v5512 = vld [vmem:[#allocation3 + $0x61] sm:$0xff]
    %v5513 = vld [vmem:[#allocation3 + $0x69] sm:$0xff]
    %v5514 = vld [vmem:[#allocation3 + $0x71] sm:$0xff]
    %v5515 = vld [vmem:[#allocation3 + $0x79] sm:$0xff]
    %v5516 = vld [vmem:[#allocation3 + $0x81] sm:$0xff]
    %v5517 = vld [vmem:[#allocation3 + $0x89] sm:$0xff]
    %v5518 = vld [vmem:[#allocation3 + $0x91] sm:$0xff]
    %v5519 = vld [vmem:[#allocation3 + $0x99] sm:$0xff]
    %v5520 = vld [vmem:[#allocation3 + $0xa1] sm:$0xff]
    %v5521 = vld [vmem:[#allocation3 + $0xa9] sm:$0xff]
    %v5522 = vld [vmem:[#allocation3 + $0xb1] sm:$0xff]
    %v5523 = vld [vmem:[#allocation3 + $0xb9] sm:$0xff]
    %v5524 = vld [vmem:[#allocation3 + $0xc1] sm:$0xff]
    %v5525 = vld [vmem:[#allocation3 + $0xc9] sm:$0xff]
    %v5526 = vld [vmem:[#allocation3 + $0xd1] sm:$0xff]
    %v5527 = vld [vmem:[#allocation3 + $0xd9] sm:$0xff]
    %v5528 = vld [vmem:[#allocation3 + $0xe1] sm:$0xff]
    %v5529 = vld [vmem:[#allocation3 + $0xe9] sm:$0xff]
    %v5530 = vld [vmem:[#allocation3 + $0xf1] sm:$0xff]
    %v5531 = vld [vmem:[#allocation3 + $0xf9] sm:$0xff]
    %v5532 = vld [vmem:[#allocation3 + $0x101] sm:$0xff]
    %v5533 = vld [vmem:[#allocation3 + $0x109] sm:$0xff]
    %v5534 = vld [vmem:[#allocation3 + $0x111] sm:$0xff]
    %v5535 = vld [vmem:[#allocation3 + $0x119] sm:$0xff]
    %v5536 = vld [vmem:[#allocation3 + $0x121] sm:$0xff]
    %v5537 = vld [vmem:[#allocation3 + $0x129] sm:$0xff]
    %v5538 = vpack.c.bf16 %v5505, %v5504
    %v5539 = vpack.c.bf16 %v5507, %v5506
    %v5540 = vpack.c.bf16 %v5509, %v5508
    %v5541 = vpack.c.bf16 %v5511, %v5510
    %v5542 = vpack.c.bf16 %v5513, %v5512
    %v5543 = vpack.c.bf16 %v5515, %v5514
    %v5544 = vpack.c.bf16 %v5517, %v5516
    %v5545 = vpack.c.bf16 %v5519, %v5518
    %v5546 = vpack.c.bf16 %v5521, %v5520
    %v5547 = vpack.c.bf16 %v5523, %v5522
    %v5548 = vpack.c.bf16 %v5525, %v5524
    %v5549 = vpack.c.bf16 %v5527, %v5526
    %v5550 = vpack.c.bf16 %v5529, %v5528
    %v5551 = vpack.c.bf16 %v5531, %v5530
    %v5552 = vpack.c.bf16 %v5533, %v5532
    %v5553 = vpack.c.bf16 %v5535, %v5534
    %v5554 = vpack.c.bf16 %v5537, %v5536
    %s5555 = scalar_lea.vmem %s3, 192
    %v5556 = vld [vmem:[%s5555] sm:$0xf]
    %v5557 = vld [vmem:[%s5555 + $0x4] sm:$0xf]
    %v5558 = vld [vmem:[%s5555 + $0x8] sm:$0xf]
    %v5559 = vld [vmem:[%s5555 + $0xc] sm:$0xf]
    %v5564 = vunpack.c.l.b16 %v5556
    %v5565 = vunpack.c.l.b16 %v5557
    %v5566 = vunpack.c.l.b16 %v5558
    %v5567 = vunpack.c.l.b16 %v5559
    %v5568 = vpack.c.b16 %v5565, %v5564
    %v5569 = vpack.c.b16 %v5567, %v5566
    %v5573 = vsel %vm1670, %v5538, 0
    %v5576 = vsel %vm1670, %v5539, 0
    %v5579 = vsel %vm1670, %v5540, 0
    %v5582 = vsel %vm1670, %v5541, 0
    %v5585 = vsel %vm1670, %v5542, 0
    %v5588 = vsel %vm1670, %v5543, 0
    %v5591 = vsel %vm1670, %v5544, 0
    %v5594 = vsel %vm1670, %v5545, 0
    %v5597 = vsel %vm1670, %v5546, 0
    %v5600 = vsel %vm1670, %v5547, 0
    %v5603 = vsel %vm1670, %v5548, 0
    %v5606 = vsel %vm1670, %v5549, 0
    %v5609 = vsel %vm1670, %v5550, 0
    %v5612 = vsel %vm1670, %v5551, 0
    %v5615 = vsel %vm1670, %v5552, 0
    %v5618 = vsel %vm1670, %v5553, 0
    %v5621 = vsel %vm1670, %v5554, 0
    %5623 = vmatprep.subr.bf16.mxu0 0
    %5624 = vmatpush1.bf16.msra.mxu0 %v5568
    %5625 = vmatprep.subr.bf16.mxu0 0
    %5626 = vmatpush1.bf16.msra.mxu0 %v5569
    %5627 = vmatprep.subr.bf16.mxu0 0
    %5628 = vmatpush1.bf16.msra.mxu0 0
    %5629 = vmatprep.subr.bf16.mxu0 0
    %5630 = vmatpush1.bf16.msra.mxu0 0
    %5631 = vmatprep.subr.bf16.mxu0 0
    %5632 = vmatpush1.bf16.msra.mxu0 0
    %5633 = vmatprep.subr.bf16.mxu0 0
    %5634 = vmatpush1.bf16.msra.mxu0 0
    %5635 = vmatprep.subr.bf16.mxu0 0
    %5636 = vmatpush1.bf16.msra.mxu0 0
    %5637 = vmatprep.subr.bf16.mxu0 0
    %5638 = vmatpush1.bf16.msra.mxu0 0
    %5639 = vmatprep.subr.bf16.mxu0 0
    %5640 = vmatpush1.bf16.msra.mxu0 0
    %5641 = vmatprep.subr.bf16.mxu0 0
    %5642 = vmatpush1.bf16.msra.mxu0 0
    %5643 = vmatprep.subr.bf16.mxu0 0
    %5644 = vmatpush1.bf16.msra.mxu0 0
    %5645 = vmatprep.subr.bf16.mxu0 0
    %5646 = vmatpush1.bf16.msra.mxu0 0
    %5647 = vmatprep.subr.bf16.mxu0 0
    %5648 = vmatpush1.bf16.msra.mxu0 0
    %5649 = vmatprep.subr.bf16.mxu0 0
    %5650 = vmatpush1.bf16.msra.mxu0 0
    %5651 = vmatprep.subr.bf16.mxu0 0
    %5652 = vmatpush1.bf16.msra.mxu0 0
    %5653 = vmatprep.subr.bf16.mxu0 0
    %5654 = vmatpush1.bf16.msra.mxu0 0
    %5655 = vmatprep.mubr.bf16.mxu0 0
    %5656 = vmatmul.mubr.bf16.gmra.mrb[0].mxu0 %v5573
    %v5657 = vpop.f32.mrb[0].mxu0
    %v5658 = vadd.f32 0.0, %v5657
    %v5659 = vpop.f32.mrb[0].mxu0
    %v5660 = vpop.f32.mrb[0].mxu0
    %v5661 = vadd.f32 0.0, %v5660
    %v5662 = vpop.f32.mrb[0].mxu0
    %5663 = vmatprep.mubr.bf16.mxu0 0
    %5664 = vmatmul.mubr.bf16.gmra.mrb[0].mxu0 %v5576
    %v5665 = vpop.f32.mrb[0].mxu0
    %v5666 = vadd.f32 0.0, %v5665
    %v5667 = vpop.f32.mrb[0].mxu0
    %v5668 = vpop.f32.mrb[0].mxu0
    %v5669 = vadd.f32 0.0, %v5668
    %v5670 = vpop.f32.mrb[0].mxu0
    %5671 = vmatprep.mubr.bf16.mxu0 0
    %5672 = vmatmul.mubr.bf16.gmra.mrb[0].mxu0 %v5579
    %v5673 = vpop.f32.mrb[0].mxu0
    %v5674 = vadd.f32 0.0, %v5673
    %v5675 = vpop.f32.mrb[0].mxu0
    %v5676 = vpop.f32.mrb[0].mxu0
    %v5677 = vadd.f32 0.0, %v5676
    %v5678 = vpop.f32.mrb[0].mxu0
    %5679 = vmatprep.mubr.bf16.mxu0 0
    %5680 = vmatmul.mubr.bf16.gmra.mrb[0].mxu0 %v5582
    %v5681 = vpop.f32.mrb[0].mxu0
    %v5682 = vadd.f32 0.0, %v5681
    %v5683 = vpop.f32.mrb[0].mxu0
    %v5684 = vpop.f32.mrb[0].mxu0
    %v5685 = vadd.f32 0.0, %v5684
    %v5686 = vpop.f32.mrb[0].mxu0
    %5687 = vmatprep.mubr.bf16.mxu0 0
    %5688 = vmatmul.mubr.bf16.gmra.mrb[0].mxu0 %v5585
    %v5689 = vpop.f32.mrb[0].mxu0
    %v5690 = vadd.f32 0.0, %v5689
    %v5691 = vpop.f32.mrb[0].mxu0
    %v5692 = vpop.f32.mrb[0].mxu0
    %v5693 = vadd.f32 0.0, %v5692
    %v5694 = vpop.f32.mrb[0].mxu0
    %5695 = vmatprep.mubr.bf16.mxu0 0
    %5696 = vmatmul.mubr.bf16.gmra.mrb[0].mxu0 %v5588
    %v5697 = vpop.f32.mrb[0].mxu0
    %v5698 = vadd.f32 0.0, %v5697
    %v5699 = vpop.f32.mrb[0].mxu0
    %v5700 = vpop.f32.mrb[0].mxu0
    %v5701 = vadd.f32 0.0, %v5700
    %v5702 = vpop.f32.mrb[0].mxu0
    %5703 = vmatprep.mubr.bf16.mxu0 0
    %5704 = vmatmul.mubr.bf16.gmra.mrb[0].mxu0 %v5591
    %v5705 = vpop.f32.mrb[0].mxu0
    %v5706 = vadd.f32 0.0, %v5705
    %v5707 = vpop.f32.mrb[0].mxu0
    %v5708 = vpop.f32.mrb[0].mxu0
    %v5709 = vadd.f32 0.0, %v5708
    %v5710 = vpop.f32.mrb[0].mxu0
    %5711 = vmatprep.mubr.bf16.mxu0 0
    %5712 = vmatmul.mubr.bf16.gmra.mrb[0].mxu0 %v5594
    %v5713 = vpop.f32.mrb[0].mxu0
    %v5714 = vadd.f32 0.0, %v5713
    %v5715 = vpop.f32.mrb[0].mxu0
    %v5716 = vpop.f32.mrb[0].mxu0
    %v5717 = vadd.f32 0.0, %v5716
    %v5718 = vpop.f32.mrb[0].mxu0
    %5719 = vmatprep.mubr.bf16.mxu0 0
    %5720 = vmatmul.mubr.bf16.gmra.mrb[0].mxu0 %v5597
    %v5721 = vpop.f32.mrb[0].mxu0
    %v5722 = vadd.f32 0.0, %v5721
    %v5723 = vpop.f32.mrb[0].mxu0
    %v5724 = vpop.f32.mrb[0].mxu0
    %v5725 = vadd.f32 0.0, %v5724
    %v5726 = vpop.f32.mrb[0].mxu0
    %5727 = vmatprep.mubr.bf16.mxu0 0
    %5728 = vmatmul.mubr.bf16.gmra.mrb[0].mxu0 %v5600
    %v5729 = vpop.f32.mrb[0].mxu0
    %v5730 = vadd.f32 0.0, %v5729
    %v5731 = vpop.f32.mrb[0].mxu0
    %v5732 = vpop.f32.mrb[0].mxu0
    %v5733 = vadd.f32 0.0, %v5732
    %v5734 = vpop.f32.mrb[0].mxu0
    %5735 = vmatprep.mubr.bf16.mxu0 0
    %5736 = vmatmul.mubr.bf16.gmra.mrb[0].mxu0 %v5603
    %v5737 = vpop.f32.mrb[0].mxu0
    %v5738 = vadd.f32 0.0, %v5737
    %v5739 = vpop.f32.mrb[0].mxu0
    %v5740 = vpop.f32.mrb[0].mxu0
    %v5741 = vadd.f32 0.0, %v5740
    %v5742 = vpop.f32.mrb[0].mxu0
    %5743 = vmatprep.mubr.bf16.mxu0 0
    %5744 = vmatmul.mubr.bf16.gmra.mrb[0].mxu0 %v5606
    %v5745 = vpop.f32.mrb[0].mxu0
    %v5746 = vadd.f32 0.0, %v5745
    %v5747 = vpop.f32.mrb[0].mxu0
    %v5748 = vpop.f32.mrb[0].mxu0
    %v5749 = vadd.f32 0.0, %v5748
    %v5750 = vpop.f32.mrb[0].mxu0
    %5751 = vmatprep.mubr.bf16.mxu0 0
    %5752 = vmatmul.mubr.bf16.gmra.mrb[0].mxu0 %v5609
    %v5753 = vpop.f32.mrb[0].mxu0
    %v5754 = vadd.f32 0.0, %v5753
    %v5755 = vpop.f32.mrb[0].mxu0
    %v5756 = vpop.f32.mrb[0].mxu0
    %v5757 = vadd.f32 0.0, %v5756
    %v5758 = vpop.f32.mrb[0].mxu0
    %5759 = vmatprep.mubr.bf16.mxu0 0
    %5760 = vmatmul.mubr.bf16.gmra.mrb[0].mxu0 %v5612
    %v5761 = vpop.f32.mrb[0].mxu0
    %v5762 = vadd.f32 0.0, %v5761
    %v5763 = vpop.f32.mrb[0].mxu0
    %v5764 = vpop.f32.mrb[0].mxu0
    %v5765 = vadd.f32 0.0, %v5764
    %v5766 = vpop.f32.mrb[0].mxu0
    %5767 = vmatprep.mubr.bf16.mxu0 0
    %5768 = vmatmul.mubr.bf16.gmra.mrb[0].mxu0 %v5615
    %v5769 = vpop.f32.mrb[0].mxu0
    %v5770 = vadd.f32 0.0, %v5769
    %v5771 = vpop.f32.mrb[0].mxu0
    %v5772 = vpop.f32.mrb[0].mxu0
    %v5773 = vadd.f32 0.0, %v5772
    %v5774 = vpop.f32.mrb[0].mxu0
    %5775 = vmatprep.mubr.bf16.mxu0 0
    %5776 = vmatmul.mubr.bf16.gmra.mrb[0].mxu0 %v5618
    %v5777 = vpop.f32.mrb[0].mxu0
    %v5778 = vadd.f32 0.0, %v5777
    %v5779 = vpop.f32.mrb[0].mxu0
    %v5780 = vpop.f32.mrb[0].mxu0
    %v5781 = vadd.f32 0.0, %v5780
    %v5782 = vpop.f32.mrb[0].mxu0
    %5783 = vmatprep.mubr.bf16.mxu0 0
    %5784 = vmatmul.mubr.bf16.gmra.mrb[0].mxu0 %v5621
    %v5785 = vpop.f32.mrb[0].mxu0
    %v5786 = vadd.f32 0.0, %v5785
    %v5787 = vpop.f32.mrb[0].mxu0
    %v5788 = vpop.f32.mrb[0].mxu0
    %v5789 = vadd.f32 0.0, %v5788
    %v5790 = vpop.f32.mrb[0].mxu0
    %5791 = vdwg.mxu0
    %v5792 = vadd.f32 %v5470, %v5658
    %v5793 = vadd.f32 %v5471, %v5661
    %v5794 = vadd.f32 %v5472, %v5666
    %v5795 = vadd.f32 %v5473, %v5669
    %v5796 = vadd.f32 %v5474, %v5674
    %v5797 = vadd.f32 %v5475, %v5677
    %v5798 = vadd.f32 %v5476, %v5682
    %v5799 = vadd.f32 %v5477, %v5685
    %v5800 = vadd.f32 %v5478, %v5690
    %v5801 = vadd.f32 %v5479, %v5693
    %v5802 = vadd.f32 %v5480, %v5698
    %v5803 = vadd.f32 %v5481, %v5701
    %v5804 = vadd.f32 %v5482, %v5706
    %v5805 = vadd.f32 %v5483, %v5709
    %v5806 = vadd.f32 %v5484, %v5714
    %v5807 = vadd.f32 %v5485, %v5717
    %v5808 = vadd.f32 %v5486, %v5722
    %v5809 = vadd.f32 %v5487, %v5725
    %v5810 = vadd.f32 %v5488, %v5730
    %v5811 = vadd.f32 %v5489, %v5733
    %v5812 = vadd.f32 %v5490, %v5738
    %v5813 = vadd.f32 %v5491, %v5741
    %v5814 = vadd.f32 %v5492, %v5746
    %v5815 = vadd.f32 %v5493, %v5749
    %v5816 = vadd.f32 %v5494, %v5754
    %v5817 = vadd.f32 %v5495, %v5757
    %v5818 = vadd.f32 %v5496, %v5762
    %v5819 = vadd.f32 %v5497, %v5765
    %v5820 = vadd.f32 %v5498, %v5770
    %v5821 = vadd.f32 %v5499, %v5773
    %v5822 = vadd.f32 %v5500, %v5778
    %v5823 = vadd.f32 %v5501, %v5781
    %v5824 = vadd.f32 %v5502, %v5786
    %v5825 = vadd.f32 %v5503, %v5789
    %v5826 = vld [vmem:[#allocation3 + $0x22] sm:$0xff]
    %v5827 = vld [vmem:[#allocation3 + $0x2a] sm:$0xff]
    %v5828 = vld [vmem:[#allocation3 + $0x32] sm:$0xff]
    %v5829 = vld [vmem:[#allocation3 + $0x3a] sm:$0xff]
    %v5830 = vld [vmem:[#allocation3 + $0x42] sm:$0xff]
    %v5831 = vld [vmem:[#allocation3 + $0x4a] sm:$0xff]
    %v5832 = vld [vmem:[#allocation3 + $0x52] sm:$0xff]
    %v5833 = vld [vmem:[#allocation3 + $0x5a] sm:$0xff]
    %v5834 = vld [vmem:[#allocation3 + $0x62] sm:$0xff]
    %v5835 = vld [vmem:[#allocation3 + $0x6a] sm:$0xff]
    %v5836 = vld [vmem:[#allocation3 + $0x72] sm:$0xff]
    %v5837 = vld [vmem:[#allocation3 + $0x7a] sm:$0xff]
    %v5838 = vld [vmem:[#allocation3 + $0x82] sm:$0xff]
    %v5839 = vld [vmem:[#allocation3 + $0x8a] sm:$0xff]
    %v5840 = vld [vmem:[#allocation3 + $0x92] sm:$0xff]
    %v5841 = vld [vmem:[#allocation3 + $0x9a] sm:$0xff]
    %v5842 = vld [vmem:[#allocation3 + $0xa2] sm:$0xff]
    %v5843 = vld [vmem:[#allocation3 + $0xaa] sm:$0xff]
    %v5844 = vld [vmem:[#allocation3 + $0xb2] sm:$0xff]
    %v5845 = vld [vmem:[#allocation3 + $0xba] sm:$0xff]
    %v5846 = vld [vmem:[#allocation3 + $0xc2] sm:$0xff]
    %v5847 = vld [vmem:[#allocation3 + $0xca] sm:$0xff]
    %v5848 = vld [vmem:[#allocation3 + $0xd2] sm:$0xff]
    %v5849 = vld [vmem:[#allocation3 + $0xda] sm:$0xff]
    %v5850 = vld [vmem:[#allocation3 + $0xe2] sm:$0xff]
    %v5851 = vld [vmem:[#allocation3 + $0xea] sm:$0xff]
    %v5852 = vld [vmem:[#allocation3 + $0xf2] sm:$0xff]
    %v5853 = vld [vmem:[#allocation3 + $0xfa] sm:$0xff]
    %v5854 = vld [vmem:[#allocation3 + $0x102] sm:$0xff]
    %v5855 = vld [vmem:[#allocation3 + $0x10a] sm:$0xff]
    %v5856 = vld [vmem:[#allocation3 + $0x112] sm:$0xff]
    %v5857 = vld [vmem:[#allocation3 + $0x11a] sm:$0xff]
    %v5858 = vld [vmem:[#allocation3 + $0x122] sm:$0xff]
    %v5859 = vld [vmem:[#allocation3 + $0x12a] sm:$0xff]
    %v5860 = vpack.c.bf16 %v5827, %v5826
    %v5861 = vpack.c.bf16 %v5829, %v5828
    %v5862 = vpack.c.bf16 %v5831, %v5830
    %v5863 = vpack.c.bf16 %v5833, %v5832
    %v5864 = vpack.c.bf16 %v5835, %v5834
    %v5865 = vpack.c.bf16 %v5837, %v5836
    %v5866 = vpack.c.bf16 %v5839, %v5838
    %v5867 = vpack.c.bf16 %v5841, %v5840
    %v5868 = vpack.c.bf16 %v5843, %v5842
    %v5869 = vpack.c.bf16 %v5845, %v5844
    %v5870 = vpack.c.bf16 %v5847, %v5846
    %v5871 = vpack.c.bf16 %v5849, %v5848
    %v5872 = vpack.c.bf16 %v5851, %v5850
    %v5873 = vpack.c.bf16 %v5853, %v5852
    %v5874 = vpack.c.bf16 %v5855, %v5854
    %v5875 = vpack.c.bf16 %v5857, %v5856
    %v5876 = vpack.c.bf16 %v5859, %v5858
    %s5877 = scalar_lea.vmem %s3, 208
    %v5878 = vld [vmem:[%s5877] sm:$0xf]
    %v5879 = vld [vmem:[%s5877 + $0x4] sm:$0xf]
    %v5880 = vld [vmem:[%s5877 + $0x8] sm:$0xf]
    %v5881 = vld [vmem:[%s5877 + $0xc] sm:$0xf]
    %v5886 = vunpack.c.l.b16 %v5878
    %v5887 = vunpack.c.l.b16 %v5879
    %v5888 = vunpack.c.l.b16 %v5880
    %v5889 = vunpack.c.l.b16 %v5881
    %v5890 = vpack.c.b16 %v5887, %v5886
    %v5891 = vpack.c.b16 %v5889, %v5888
    %v5895 = vsel %vm1670, %v5860, 0
    %v5898 = vsel %vm1670, %v5861, 0
    %v5901 = vsel %vm1670, %v5862, 0
    %v5904 = vsel %vm1670, %v5863, 0
    %v5907 = vsel %vm1670, %v5864, 0
    %v5910 = vsel %vm1670, %v5865, 0
    %v5913 = vsel %vm1670, %v5866, 0
    %v5916 = vsel %vm1670, %v5867, 0
    %v5919 = vsel %vm1670, %v5868, 0
    %v5922 = vsel %vm1670, %v5869, 0
    %v5925 = vsel %vm1670, %v5870, 0
    %v5928 = vsel %vm1670, %v5871, 0
    %v5931 = vsel %vm1670, %v5872, 0
    %v5934 = vsel %vm1670, %v5873, 0
    %v5937 = vsel %vm1670, %v5874, 0
    %v5940 = vsel %vm1670, %v5875, 0
    %v5943 = vsel %vm1670, %v5876, 0
    %5945 = vmatprep.subr.bf16.mxu0 0
    %5946 = vmatpush1.bf16.msra.mxu0 %v5890
    %5947 = vmatprep.subr.bf16.mxu0 0
    %5948 = vmatpush1.bf16.msra.mxu0 %v5891
    %5949 = vmatprep.subr.bf16.mxu0 0
    %5950 = vmatpush1.bf16.msra.mxu0 0
    %5951 = vmatprep.subr.bf16.mxu0 0
    %5952 = vmatpush1.bf16.msra.mxu0 0
    %5953 = vmatprep.subr.bf16.mxu0 0
    %5954 = vmatpush1.bf16.msra.mxu0 0
    %5955 = vmatprep.subr.bf16.mxu0 0
    %5956 = vmatpush1.bf16.msra.mxu0 0
    %5957 = vmatprep.subr.bf16.mxu0 0
    %5958 = vmatpush1.bf16.msra.mxu0 0
    %5959 = vmatprep.subr.bf16.mxu0 0
    %5960 = vmatpush1.bf16.msra.mxu0 0
    %5961 = vmatprep.subr.bf16.mxu0 0
    %5962 = vmatpush1.bf16.msra.mxu0 0
    %5963 = vmatprep.subr.bf16.mxu0 0
    %5964 = vmatpush1.bf16.msra.mxu0 0
    %5965 = vmatprep.subr.bf16.mxu0 0
    %5966 = vmatpush1.bf16.msra.mxu0 0
    %5967 = vmatprep.subr.bf16.mxu0 0
    %5968 = vmatpush1.bf16.msra.mxu0 0
    %5969 = vmatprep.subr.bf16.mxu0 0
    %5970 = vmatpush1.bf16.msra.mxu0 0
    %5971 = vmatprep.subr.bf16.mxu0 0
    %5972 = vmatpush1.bf16.msra.mxu0 0
    %5973 = vmatprep.subr.bf16.mxu0 0
    %5974 = vmatpush1.bf16.msra.mxu0 0
    %5975 = vmatprep.subr.bf16.mxu0 0
    %5976 = vmatpush1.bf16.msra.mxu0 0
    %5977 = vmatprep.mubr.bf16.mxu0 0
    %5978 = vmatmul.mubr.bf16.gmra.mrb[0].mxu0 %v5895
    %v5979 = vpop.f32.mrb[0].mxu0
    %v5980 = vadd.f32 0.0, %v5979
    %v5981 = vpop.f32.mrb[0].mxu0
    %v5982 = vpop.f32.mrb[0].mxu0
    %v5983 = vadd.f32 0.0, %v5982
    %v5984 = vpop.f32.mrb[0].mxu0
    %5985 = vmatprep.mubr.bf16.mxu0 0
    %5986 = vmatmul.mubr.bf16.gmra.mrb[0].mxu0 %v5898
    %v5987 = vpop.f32.mrb[0].mxu0
    %v5988 = vadd.f32 0.0, %v5987
    %v5989 = vpop.f32.mrb[0].mxu0
    %v5990 = vpop.f32.mrb[0].mxu0
    %v5991 = vadd.f32 0.0, %v5990
    %v5992 = vpop.f32.mrb[0].mxu0
    %5993 = vmatprep.mubr.bf16.mxu0 0
    %5994 = vmatmul.mubr.bf16.gmra.mrb[0].mxu0 %v5901
    %v5995 = vpop.f32.mrb[0].mxu0
    %v5996 = vadd.f32 0.0, %v5995
    %v5997 = vpop.f32.mrb[0].mxu0
    %v5998 = vpop.f32.mrb[0].mxu0
    %v5999 = vadd.f32 0.0, %v5998
    %v6000 = vpop.f32.mrb[0].mxu0
    %6001 = vmatprep.mubr.bf16.mxu0 0
    %6002 = vmatmul.mubr.bf16.gmra.mrb[0].mxu0 %v5904
    %v6003 = vpop.f32.mrb[0].mxu0
    %v6004 = vadd.f32 0.0, %v6003
    %v6005 = vpop.f32.mrb[0].mxu0
    %v6006 = vpop.f32.mrb[0].mxu0
    %v6007 = vadd.f32 0.0, %v6006
    %v6008 = vpop.f32.mrb[0].mxu0
    %6009 = vmatprep.mubr.bf16.mxu0 0
    %6010 = vmatmul.mubr.bf16.gmra.mrb[0].mxu0 %v5907
    %v6011 = vpop.f32.mrb[0].mxu0
    %v6012 = vadd.f32 0.0, %v6011
    %v6013 = vpop.f32.mrb[0].mxu0
    %v6014 = vpop.f32.mrb[0].mxu0
    %v6015 = vadd.f32 0.0, %v6014
    %v6016 = vpop.f32.mrb[0].mxu0
    %6017 = vmatprep.mubr.bf16.mxu0 0
    %6018 = vmatmul.mubr.bf16.gmra.mrb[0].mxu0 %v5910
    %v6019 = vpop.f32.mrb[0].mxu0
    %v6020 = vadd.f32 0.0, %v6019
    %v6021 = vpop.f32.mrb[0].mxu0
    %v6022 = vpop.f32.mrb[0].mxu0
    %v6023 = vadd.f32 0.0, %v6022
    %v6024 = vpop.f32.mrb[0].mxu0
    %6025 = vmatprep.mubr.bf16.mxu0 0
    %6026 = vmatmul.mubr.bf16.gmra.mrb[0].mxu0 %v5913
    %v6027 = vpop.f32.mrb[0].mxu0
    %v6028 = vadd.f32 0.0, %v6027
    %v6029 = vpop.f32.mrb[0].mxu0
    %v6030 = vpop.f32.mrb[0].mxu0
    %v6031 = vadd.f32 0.0, %v6030
    %v6032 = vpop.f32.mrb[0].mxu0
    %6033 = vmatprep.mubr.bf16.mxu0 0
    %6034 = vmatmul.mubr.bf16.gmra.mrb[0].mxu0 %v5916
    %v6035 = vpop.f32.mrb[0].mxu0
    %v6036 = vadd.f32 0.0, %v6035
    %v6037 = vpop.f32.mrb[0].mxu0
    %v6038 = vpop.f32.mrb[0].mxu0
    %v6039 = vadd.f32 0.0, %v6038
    %v6040 = vpop.f32.mrb[0].mxu0
    %6041 = vmatprep.mubr.bf16.mxu0 0
    %6042 = vmatmul.mubr.bf16.gmra.mrb[0].mxu0 %v5919
    %v6043 = vpop.f32.mrb[0].mxu0
    %v6044 = vadd.f32 0.0, %v6043
    %v6045 = vpop.f32.mrb[0].mxu0
    %v6046 = vpop.f32.mrb[0].mxu0
    %v6047 = vadd.f32 0.0, %v6046
    %v6048 = vpop.f32.mrb[0].mxu0
    %6049 = vmatprep.mubr.bf16.mxu0 0
    %6050 = vmatmul.mubr.bf16.gmra.mrb[0].mxu0 %v5922
    %v6051 = vpop.f32.mrb[0].mxu0
    %v6052 = vadd.f32 0.0, %v6051
    %v6053 = vpop.f32.mrb[0].mxu0
    %v6054 = vpop.f32.mrb[0].mxu0
    %v6055 = vadd.f32 0.0, %v6054
    %v6056 = vpop.f32.mrb[0].mxu0
    %6057 = vmatprep.mubr.bf16.mxu0 0
    %6058 = vmatmul.mubr.bf16.gmra.mrb[0].mxu0 %v5925
    %v6059 = vpop.f32.mrb[0].mxu0
    %v6060 = vadd.f32 0.0, %v6059
    %v6061 = vpop.f32.mrb[0].mxu0
    %v6062 = vpop.f32.mrb[0].mxu0
    %v6063 = vadd.f32 0.0, %v6062
    %v6064 = vpop.f32.mrb[0].mxu0
    %6065 = vmatprep.mubr.bf16.mxu0 0
    %6066 = vmatmul.mubr.bf16.gmra.mrb[0].mxu0 %v5928
    %v6067 = vpop.f32.mrb[0].mxu0
    %v6068 = vadd.f32 0.0, %v6067
    %v6069 = vpop.f32.mrb[0].mxu0
    %v6070 = vpop.f32.mrb[0].mxu0
    %v6071 = vadd.f32 0.0, %v6070
    %v6072 = vpop.f32.mrb[0].mxu0
    %6073 = vmatprep.mubr.bf16.mxu0 0
    %6074 = vmatmul.mubr.bf16.gmra.mrb[0].mxu0 %v5931
    %v6075 = vpop.f32.mrb[0].mxu0
    %v6076 = vadd.f32 0.0, %v6075
    %v6077 = vpop.f32.mrb[0].mxu0
    %v6078 = vpop.f32.mrb[0].mxu0
    %v6079 = vadd.f32 0.0, %v6078
    %v6080 = vpop.f32.mrb[0].mxu0
    %6081 = vmatprep.mubr.bf16.mxu0 0
    %6082 = vmatmul.mubr.bf16.gmra.mrb[0].mxu0 %v5934
    %v6083 = vpop.f32.mrb[0].mxu0
    %v6084 = vadd.f32 0.0, %v6083
    %v6085 = vpop.f32.mrb[0].mxu0
    %v6086 = vpop.f32.mrb[0].mxu0
    %v6087 = vadd.f32 0.0, %v6086
    %v6088 = vpop.f32.mrb[0].mxu0
    %6089 = vmatprep.mubr.bf16.mxu0 0
    %6090 = vmatmul.mubr.bf16.gmra.mrb[0].mxu0 %v5937
    %v6091 = vpop.f32.mrb[0].mxu0
    %v6092 = vadd.f32 0.0, %v6091
    %v6093 = vpop.f32.mrb[0].mxu0
    %v6094 = vpop.f32.mrb[0].mxu0
    %v6095 = vadd.f32 0.0, %v6094
    %v6096 = vpop.f32.mrb[0].mxu0
    %6097 = vmatprep.mubr.bf16.mxu0 0
    %6098 = vmatmul.mubr.bf16.gmra.mrb[0].mxu0 %v5940
    %v6099 = vpop.f32.mrb[0].mxu0
    %v6100 = vadd.f32 0.0, %v6099
    %v6101 = vpop.f32.mrb[0].mxu0
    %v6102 = vpop.f32.mrb[0].mxu0
    %v6103 = vadd.f32 0.0, %v6102
    %v6104 = vpop.f32.mrb[0].mxu0
    %6105 = vmatprep.mubr.bf16.mxu0 0
    %6106 = vmatmul.mubr.bf16.gmra.mrb[0].mxu0 %v5943
    %v6107 = vpop.f32.mrb[0].mxu0
    %v6108 = vadd.f32 0.0, %v6107
    %v6109 = vpop.f32.mrb[0].mxu0
    %v6110 = vpop.f32.mrb[0].mxu0
    %v6111 = vadd.f32 0.0, %v6110
    %v6112 = vpop.f32.mrb[0].mxu0
    %6113 = vdwg.mxu0
    %v6114 = vadd.f32 %v5792, %v5980
    %v6115 = vadd.f32 %v5793, %v5983
    %v6116 = vadd.f32 %v5794, %v5988
    %v6117 = vadd.f32 %v5795, %v5991
    %v6118 = vadd.f32 %v5796, %v5996
    %v6119 = vadd.f32 %v5797, %v5999
    %v6120 = vadd.f32 %v5798, %v6004
    %v6121 = vadd.f32 %v5799, %v6007
    %v6122 = vadd.f32 %v5800, %v6012
    %v6123 = vadd.f32 %v5801, %v6015
    %v6124 = vadd.f32 %v5802, %v6020
    %v6125 = vadd.f32 %v5803, %v6023
    %v6126 = vadd.f32 %v5804, %v6028
    %v6127 = vadd.f32 %v5805, %v6031
    %v6128 = vadd.f32 %v5806, %v6036
    %v6129 = vadd.f32 %v5807, %v6039
    %v6130 = vadd.f32 %v5808, %v6044
    %v6131 = vadd.f32 %v5809, %v6047
    %v6132 = vadd.f32 %v5810, %v6052
    %v6133 = vadd.f32 %v5811, %v6055
    %v6134 = vadd.f32 %v5812, %v6060
    %v6135 = vadd.f32 %v5813, %v6063
    %v6136 = vadd.f32 %v5814, %v6068
    %v6137 = vadd.f32 %v5815, %v6071
    %v6138 = vadd.f32 %v5816, %v6076
    %v6139 = vadd.f32 %v5817, %v6079
    %v6140 = vadd.f32 %v5818, %v6084
    %v6141 = vadd.f32 %v5819, %v6087
    %v6142 = vadd.f32 %v5820, %v6092
    %v6143 = vadd.f32 %v5821, %v6095
    %v6144 = vadd.f32 %v5822, %v6100
    %v6145 = vadd.f32 %v5823, %v6103
    %v6146 = vadd.f32 %v5824, %v6108
    %v6147 = vadd.f32 %v5825, %v6111
    %v6148 = vld [vmem:[#allocation3 + $0x23] sm:$0xff]
    %v6149 = vld [vmem:[#allocation3 + $0x2b] sm:$0xff]
    %v6150 = vld [vmem:[#allocation3 + $0x33] sm:$0xff]
    %v6151 = vld [vmem:[#allocation3 + $0x3b] sm:$0xff]
    %v6152 = vld [vmem:[#allocation3 + $0x43] sm:$0xff]
    %v6153 = vld [vmem:[#allocation3 + $0x4b] sm:$0xff]
    %v6154 = vld [vmem:[#allocation3 + $0x53] sm:$0xff]
    %v6155 = vld [vmem:[#allocation3 + $0x5b] sm:$0xff]
    %v6156 = vld [vmem:[#allocation3 + $0x63] sm:$0xff]
    %v6157 = vld [vmem:[#allocation3 + $0x6b] sm:$0xff]
    %v6158 = vld [vmem:[#allocation3 + $0x73] sm:$0xff]
    %v6159 = vld [vmem:[#allocation3 + $0x7b] sm:$0xff]
    %v6160 = vld [vmem:[#allocation3 + $0x83] sm:$0xff]
    %v6161 = vld [vmem:[#allocation3 + $0x8b] sm:$0xff]
    %v6162 = vld [vmem:[#allocation3 + $0x93] sm:$0xff]
    %v6163 = vld [vmem:[#allocation3 + $0x9b] sm:$0xff]
    %v6164 = vld [vmem:[#allocation3 + $0xa3] sm:$0xff]
    %v6165 = vld [vmem:[#allocation3 + $0xab] sm:$0xff]
    %v6166 = vld [vmem:[#allocation3 + $0xb3] sm:$0xff]
    %v6167 = vld [vmem:[#allocation3 + $0xbb] sm:$0xff]
    %v6168 = vld [vmem:[#allocation3 + $0xc3] sm:$0xff]
    %v6169 = vld [vmem:[#allocation3 + $0xcb] sm:$0xff]
    %v6170 = vld [vmem:[#allocation3 + $0xd3] sm:$0xff]
    %v6171 = vld [vmem:[#allocation3 + $0xdb] sm:$0xff]
    %v6172 = vld [vmem:[#allocation3 + $0xe3] sm:$0xff]
    %v6173 = vld [vmem:[#allocation3 + $0xeb] sm:$0xff]
    %v6174 = vld [vmem:[#allocation3 + $0xf3] sm:$0xff]
    %v6175 = vld [vmem:[#allocation3 + $0xfb] sm:$0xff]
    %v6176 = vld [vmem:[#allocation3 + $0x103] sm:$0xff]
    %v6177 = vld [vmem:[#allocation3 + $0x10b] sm:$0xff]
    %v6178 = vld [vmem:[#allocation3 + $0x113] sm:$0xff]
    %v6179 = vld [vmem:[#allocation3 + $0x11b] sm:$0xff]
    %v6180 = vld [vmem:[#allocation3 + $0x123] sm:$0xff]
    %v6181 = vld [vmem:[#allocation3 + $0x12b] sm:$0xff]
    %v6182 = vpack.c.bf16 %v6149, %v6148
    %v6183 = vpack.c.bf16 %v6151, %v6150
    %v6184 = vpack.c.bf16 %v6153, %v6152
    %v6185 = vpack.c.bf16 %v6155, %v6154
    %v6186 = vpack.c.bf16 %v6157, %v6156
    %v6187 = vpack.c.bf16 %v6159, %v6158
    %v6188 = vpack.c.bf16 %v6161, %v6160
    %v6189 = vpack.c.bf16 %v6163, %v6162
    %v6190 = vpack.c.bf16 %v6165, %v6164
    %v6191 = vpack.c.bf16 %v6167, %v6166
    %v6192 = vpack.c.bf16 %v6169, %v6168
    %v6193 = vpack.c.bf16 %v6171, %v6170
    %v6194 = vpack.c.bf16 %v6173, %v6172
    %v6195 = vpack.c.bf16 %v6175, %v6174
    %v6196 = vpack.c.bf16 %v6177, %v6176
    %v6197 = vpack.c.bf16 %v6179, %v6178
    %v6198 = vpack.c.bf16 %v6181, %v6180
    %s6199 = scalar_lea.vmem %s3, 224
    %v6200 = vld [vmem:[%s6199] sm:$0xf]
    %v6201 = vld [vmem:[%s6199 + $0x4] sm:$0xf]
    %v6202 = vld [vmem:[%s6199 + $0x8] sm:$0xf]
    %v6203 = vld [vmem:[%s6199 + $0xc] sm:$0xf]
    %v6208 = vunpack.c.l.b16 %v6200
    %v6209 = vunpack.c.l.b16 %v6201
    %v6210 = vunpack.c.l.b16 %v6202
    %v6211 = vunpack.c.l.b16 %v6203
    %v6212 = vpack.c.b16 %v6209, %v6208
    %v6213 = vpack.c.b16 %v6211, %v6210
    %v6217 = vsel %vm1670, %v6182, 0
    %v6220 = vsel %vm1670, %v6183, 0
    %v6223 = vsel %vm1670, %v6184, 0
    %v6226 = vsel %vm1670, %v6185, 0
    %v6229 = vsel %vm1670, %v6186, 0
    %v6232 = vsel %vm1670, %v6187, 0
    %v6235 = vsel %vm1670, %v6188, 0
    %v6238 = vsel %vm1670, %v6189, 0
    %v6241 = vsel %vm1670, %v6190, 0
    %v6244 = vsel %vm1670, %v6191, 0
    %v6247 = vsel %vm1670, %v6192, 0
    %v6250 = vsel %vm1670, %v6193, 0
    %v6253 = vsel %vm1670, %v6194, 0
    %v6256 = vsel %vm1670, %v6195, 0
    %v6259 = vsel %vm1670, %v6196, 0
    %v6262 = vsel %vm1670, %v6197, 0
    %v6265 = vsel %vm1670, %v6198, 0
    %6267 = vmatprep.subr.bf16.mxu0 0
    %6268 = vmatpush1.bf16.msra.mxu0 %v6212
    %6269 = vmatprep.subr.bf16.mxu0 0
    %6270 = vmatpush1.bf16.msra.mxu0 %v6213
    %6271 = vmatprep.subr.bf16.mxu0 0
    %6272 = vmatpush1.bf16.msra.mxu0 0
    %6273 = vmatprep.subr.bf16.mxu0 0
    %6274 = vmatpush1.bf16.msra.mxu0 0
    %6275 = vmatprep.subr.bf16.mxu0 0
    %6276 = vmatpush1.bf16.msra.mxu0 0
    %6277 = vmatprep.subr.bf16.mxu0 0
    %6278 = vmatpush1.bf16.msra.mxu0 0
    %6279 = vmatprep.subr.bf16.mxu0 0
    %6280 = vmatpush1.bf16.msra.mxu0 0
    %6281 = vmatprep.subr.bf16.mxu0 0
    %6282 = vmatpush1.bf16.msra.mxu0 0
    %6283 = vmatprep.subr.bf16.mxu0 0
    %6284 = vmatpush1.bf16.msra.mxu0 0
    %6285 = vmatprep.subr.bf16.mxu0 0
    %6286 = vmatpush1.bf16.msra.mxu0 0
    %6287 = vmatprep.subr.bf16.mxu0 0
    %6288 = vmatpush1.bf16.msra.mxu0 0
    %6289 = vmatprep.subr.bf16.mxu0 0
    %6290 = vmatpush1.bf16.msra.mxu0 0
    %6291 = vmatprep.subr.bf16.mxu0 0
    %6292 = vmatpush1.bf16.msra.mxu0 0
    %6293 = vmatprep.subr.bf16.mxu0 0
    %6294 = vmatpush1.bf16.msra.mxu0 0
    %6295 = vmatprep.subr.bf16.mxu0 0
    %6296 = vmatpush1.bf16.msra.mxu0 0
    %6297 = vmatprep.subr.bf16.mxu0 0
    %6298 = vmatpush1.bf16.msra.mxu0 0
    %6299 = vmatprep.mubr.bf16.mxu0 0
    %6300 = vmatmul.mubr.bf16.gmra.mrb[0].mxu0 %v6217
    %v6301 = vpop.f32.mrb[0].mxu0
    %v6302 = vadd.f32 0.0, %v6301
    %v6303 = vpop.f32.mrb[0].mxu0
    %v6304 = vpop.f32.mrb[0].mxu0
    %v6305 = vadd.f32 0.0, %v6304
    %v6306 = vpop.f32.mrb[0].mxu0
    %6307 = vmatprep.mubr.bf16.mxu0 0
    %6308 = vmatmul.mubr.bf16.gmra.mrb[0].mxu0 %v6220
    %v6309 = vpop.f32.mrb[0].mxu0
    %v6310 = vadd.f32 0.0, %v6309
    %v6311 = vpop.f32.mrb[0].mxu0
    %v6312 = vpop.f32.mrb[0].mxu0
    %v6313 = vadd.f32 0.0, %v6312
    %v6314 = vpop.f32.mrb[0].mxu0
    %6315 = vmatprep.mubr.bf16.mxu0 0
    %6316 = vmatmul.mubr.bf16.gmra.mrb[0].mxu0 %v6223
    %v6317 = vpop.f32.mrb[0].mxu0
    %v6318 = vadd.f32 0.0, %v6317
    %v6319 = vpop.f32.mrb[0].mxu0
    %v6320 = vpop.f32.mrb[0].mxu0
    %v6321 = vadd.f32 0.0, %v6320
    %v6322 = vpop.f32.mrb[0].mxu0
    %6323 = vmatprep.mubr.bf16.mxu0 0
    %6324 = vmatmul.mubr.bf16.gmra.mrb[0].mxu0 %v6226
    %v6325 = vpop.f32.mrb[0].mxu0
    %v6326 = vadd.f32 0.0, %v6325
    %v6327 = vpop.f32.mrb[0].mxu0
    %v6328 = vpop.f32.mrb[0].mxu0
    %v6329 = vadd.f32 0.0, %v6328
    %v6330 = vpop.f32.mrb[0].mxu0
    %6331 = vmatprep.mubr.bf16.mxu0 0
    %6332 = vmatmul.mubr.bf16.gmra.mrb[0].mxu0 %v6229
    %v6333 = vpop.f32.mrb[0].mxu0
    %v6334 = vadd.f32 0.0, %v6333
    %v6335 = vpop.f32.mrb[0].mxu0
    %v6336 = vpop.f32.mrb[0].mxu0
    %v6337 = vadd.f32 0.0, %v6336
    %v6338 = vpop.f32.mrb[0].mxu0
    %6339 = vmatprep.mubr.bf16.mxu0 0
    %6340 = vmatmul.mubr.bf16.gmra.mrb[0].mxu0 %v6232
    %v6341 = vpop.f32.mrb[0].mxu0
    %v6342 = vadd.f32 0.0, %v6341
    %v6343 = vpop.f32.mrb[0].mxu0
    %v6344 = vpop.f32.mrb[0].mxu0
    %v6345 = vadd.f32 0.0, %v6344
    %v6346 = vpop.f32.mrb[0].mxu0
    %6347 = vmatprep.mubr.bf16.mxu0 0
    %6348 = vmatmul.mubr.bf16.gmra.mrb[0].mxu0 %v6235
    %v6349 = vpop.f32.mrb[0].mxu0
    %v6350 = vadd.f32 0.0, %v6349
    %v6351 = vpop.f32.mrb[0].mxu0
    %v6352 = vpop.f32.mrb[0].mxu0
    %v6353 = vadd.f32 0.0, %v6352
    %v6354 = vpop.f32.mrb[0].mxu0
    %6355 = vmatprep.mubr.bf16.mxu0 0
    %6356 = vmatmul.mubr.bf16.gmra.mrb[0].mxu0 %v6238
    %v6357 = vpop.f32.mrb[0].mxu0
    %v6358 = vadd.f32 0.0, %v6357
    %v6359 = vpop.f32.mrb[0].mxu0
    %v6360 = vpop.f32.mrb[0].mxu0
    %v6361 = vadd.f32 0.0, %v6360
    %v6362 = vpop.f32.mrb[0].mxu0
    %6363 = vmatprep.mubr.bf16.mxu0 0
    %6364 = vmatmul.mubr.bf16.gmra.mrb[0].mxu0 %v6241
    %v6365 = vpop.f32.mrb[0].mxu0
    %v6366 = vadd.f32 0.0, %v6365
    %v6367 = vpop.f32.mrb[0].mxu0
    %v6368 = vpop.f32.mrb[0].mxu0
    %v6369 = vadd.f32 0.0, %v6368
    %v6370 = vpop.f32.mrb[0].mxu0
    %6371 = vmatprep.mubr.bf16.mxu0 0
    %6372 = vmatmul.mubr.bf16.gmra.mrb[0].mxu0 %v6244
    %v6373 = vpop.f32.mrb[0].mxu0
    %v6374 = vadd.f32 0.0, %v6373
    %v6375 = vpop.f32.mrb[0].mxu0
    %v6376 = vpop.f32.mrb[0].mxu0
    %v6377 = vadd.f32 0.0, %v6376
    %v6378 = vpop.f32.mrb[0].mxu0
    %6379 = vmatprep.mubr.bf16.mxu0 0
    %6380 = vmatmul.mubr.bf16.gmra.mrb[0].mxu0 %v6247
    %v6381 = vpop.f32.mrb[0].mxu0
    %v6382 = vadd.f32 0.0, %v6381
    %v6383 = vpop.f32.mrb[0].mxu0
    %v6384 = vpop.f32.mrb[0].mxu0
    %v6385 = vadd.f32 0.0, %v6384
    %v6386 = vpop.f32.mrb[0].mxu0
    %6387 = vmatprep.mubr.bf16.mxu0 0
    %6388 = vmatmul.mubr.bf16.gmra.mrb[0].mxu0 %v6250
    %v6389 = vpop.f32.mrb[0].mxu0
    %v6390 = vadd.f32 0.0, %v6389
    %v6391 = vpop.f32.mrb[0].mxu0
    %v6392 = vpop.f32.mrb[0].mxu0
    %v6393 = vadd.f32 0.0, %v6392
    %v6394 = vpop.f32.mrb[0].mxu0
    %6395 = vmatprep.mubr.bf16.mxu0 0
    %6396 = vmatmul.mubr.bf16.gmra.mrb[0].mxu0 %v6253
    %v6397 = vpop.f32.mrb[0].mxu0
    %v6398 = vadd.f32 0.0, %v6397
    %v6399 = vpop.f32.mrb[0].mxu0
    %v6400 = vpop.f32.mrb[0].mxu0
    %v6401 = vadd.f32 0.0, %v6400
    %v6402 = vpop.f32.mrb[0].mxu0
    %6403 = vmatprep.mubr.bf16.mxu0 0
    %6404 = vmatmul.mubr.bf16.gmra.mrb[0].mxu0 %v6256
    %v6405 = vpop.f32.mrb[0].mxu0
    %v6406 = vadd.f32 0.0, %v6405
    %v6407 = vpop.f32.mrb[0].mxu0
    %v6408 = vpop.f32.mrb[0].mxu0
    %v6409 = vadd.f32 0.0, %v6408
    %v6410 = vpop.f32.mrb[0].mxu0
    %6411 = vmatprep.mubr.bf16.mxu0 0
    %6412 = vmatmul.mubr.bf16.gmra.mrb[0].mxu0 %v6259
    %v6413 = vpop.f32.mrb[0].mxu0
    %v6414 = vadd.f32 0.0, %v6413
    %v6415 = vpop.f32.mrb[0].mxu0
    %v6416 = vpop.f32.mrb[0].mxu0
    %v6417 = vadd.f32 0.0, %v6416
    %v6418 = vpop.f32.mrb[0].mxu0
    %6419 = vmatprep.mubr.bf16.mxu0 0
    %6420 = vmatmul.mubr.bf16.gmra.mrb[0].mxu0 %v6262
    %v6421 = vpop.f32.mrb[0].mxu0
    %v6422 = vadd.f32 0.0, %v6421
    %v6423 = vpop.f32.mrb[0].mxu0
    %v6424 = vpop.f32.mrb[0].mxu0
    %v6425 = vadd.f32 0.0, %v6424
    %v6426 = vpop.f32.mrb[0].mxu0
    %6427 = vmatprep.mubr.bf16.mxu0 0
    %6428 = vmatmul.mubr.bf16.gmra.mrb[0].mxu0 %v6265
    %v6429 = vpop.f32.mrb[0].mxu0
    %v6430 = vadd.f32 0.0, %v6429
    %v6431 = vpop.f32.mrb[0].mxu0
    %v6432 = vpop.f32.mrb[0].mxu0
    %v6433 = vadd.f32 0.0, %v6432
    %v6434 = vpop.f32.mrb[0].mxu0
    %6435 = vdwg.mxu0
    %v6436 = vadd.f32 %v6114, %v6302
    %v6437 = vadd.f32 %v6115, %v6305
    %v6438 = vadd.f32 %v6116, %v6310
    %v6439 = vadd.f32 %v6117, %v6313
    %v6440 = vadd.f32 %v6118, %v6318
    %v6441 = vadd.f32 %v6119, %v6321
    %v6442 = vadd.f32 %v6120, %v6326
    %v6443 = vadd.f32 %v6121, %v6329
    %v6444 = vadd.f32 %v6122, %v6334
    %v6445 = vadd.f32 %v6123, %v6337
    %v6446 = vadd.f32 %v6124, %v6342
    %v6447 = vadd.f32 %v6125, %v6345
    %v6448 = vadd.f32 %v6126, %v6350
    %v6449 = vadd.f32 %v6127, %v6353
    %v6450 = vadd.f32 %v6128, %v6358
    %v6451 = vadd.f32 %v6129, %v6361
    %v6452 = vadd.f32 %v6130, %v6366
    %v6453 = vadd.f32 %v6131, %v6369
    %v6454 = vadd.f32 %v6132, %v6374
    %v6455 = vadd.f32 %v6133, %v6377
    %v6456 = vadd.f32 %v6134, %v6382
    %v6457 = vadd.f32 %v6135, %v6385
    %v6458 = vadd.f32 %v6136, %v6390
    %v6459 = vadd.f32 %v6137, %v6393
    %v6460 = vadd.f32 %v6138, %v6398
    %v6461 = vadd.f32 %v6139, %v6401
    %v6462 = vadd.f32 %v6140, %v6406
    %v6463 = vadd.f32 %v6141, %v6409
    %v6464 = vadd.f32 %v6142, %v6414
    %v6465 = vadd.f32 %v6143, %v6417
    %v6466 = vadd.f32 %v6144, %v6422
    %v6467 = vadd.f32 %v6145, %v6425
    %v6468 = vadd.f32 %v6146, %v6430
    %v6469 = vadd.f32 %v6147, %v6433
    %v6470 = vld [vmem:[#allocation3 + $0x24] sm:$0xff]
    %v6471 = vld [vmem:[#allocation3 + $0x2c] sm:$0xff]
    %v6472 = vld [vmem:[#allocation3 + $0x34] sm:$0xff]
    %v6473 = vld [vmem:[#allocation3 + $0x3c] sm:$0xff]
    %v6474 = vld [vmem:[#allocation3 + $0x44] sm:$0xff]
    %v6475 = vld [vmem:[#allocation3 + $0x4c] sm:$0xff]
    %v6476 = vld [vmem:[#allocation3 + $0x54] sm:$0xff]
    %v6477 = vld [vmem:[#allocation3 + $0x5c] sm:$0xff]
    %v6478 = vld [vmem:[#allocation3 + $0x64] sm:$0xff]
    %v6479 = vld [vmem:[#allocation3 + $0x6c] sm:$0xff]
    %v6480 = vld [vmem:[#allocation3 + $0x74] sm:$0xff]
    %v6481 = vld [vmem:[#allocation3 + $0x7c] sm:$0xff]
    %v6482 = vld [vmem:[#allocation3 + $0x84] sm:$0xff]
    %v6483 = vld [vmem:[#allocation3 + $0x8c] sm:$0xff]
    %v6484 = vld [vmem:[#allocation3 + $0x94] sm:$0xff]
    %v6485 = vld [vmem:[#allocation3 + $0x9c] sm:$0xff]
    %v6486 = vld [vmem:[#allocation3 + $0xa4] sm:$0xff]
    %v6487 = vld [vmem:[#allocation3 + $0xac] sm:$0xff]
    %v6488 = vld [vmem:[#allocation3 + $0xb4] sm:$0xff]
    %v6489 = vld [vmem:[#allocation3 + $0xbc] sm:$0xff]
    %v6490 = vld [vmem:[#allocation3 + $0xc4] sm:$0xff]
    %v6491 = vld [vmem:[#allocation3 + $0xcc] sm:$0xff]
    %v6492 = vld [vmem:[#allocation3 + $0xd4] sm:$0xff]
    %v6493 = vld [vmem:[#allocation3 + $0xdc] sm:$0xff]
    %v6494 = vld [vmem:[#allocation3 + $0xe4] sm:$0xff]
    %v6495 = vld [vmem:[#allocation3 + $0xec] sm:$0xff]
    %v6496 = vld [vmem:[#allocation3 + $0xf4] sm:$0xff]
    %v6497 = vld [vmem:[#allocation3 + $0xfc] sm:$0xff]
    %v6498 = vld [vmem:[#allocation3 + $0x104] sm:$0xff]
    %v6499 = vld [vmem:[#allocation3 + $0x10c] sm:$0xff]
    %v6500 = vld [vmem:[#allocation3 + $0x114] sm:$0xff]
    %v6501 = vld [vmem:[#allocation3 + $0x11c] sm:$0xff]
    %v6502 = vld [vmem:[#allocation3 + $0x124] sm:$0xff]
    %v6503 = vld [vmem:[#allocation3 + $0x12c] sm:$0xff]
    %v6504 = vpack.c.bf16 %v6471, %v6470
    %v6505 = vpack.c.bf16 %v6473, %v6472
    %v6506 = vpack.c.bf16 %v6475, %v6474
    %v6507 = vpack.c.bf16 %v6477, %v6476
    %v6508 = vpack.c.bf16 %v6479, %v6478
    %v6509 = vpack.c.bf16 %v6481, %v6480
    %v6510 = vpack.c.bf16 %v6483, %v6482
    %v6511 = vpack.c.bf16 %v6485, %v6484
    %v6512 = vpack.c.bf16 %v6487, %v6486
    %v6513 = vpack.c.bf16 %v6489, %v6488
    %v6514 = vpack.c.bf16 %v6491, %v6490
    %v6515 = vpack.c.bf16 %v6493, %v6492
    %v6516 = vpack.c.bf16 %v6495, %v6494
    %v6517 = vpack.c.bf16 %v6497, %v6496
    %v6518 = vpack.c.bf16 %v6499, %v6498
    %v6519 = vpack.c.bf16 %v6501, %v6500
    %v6520 = vpack.c.bf16 %v6503, %v6502
    %s6521 = scalar_lea.vmem %s3, 240
    %v6522 = vld [vmem:[%s6521] sm:$0xf]
    %v6523 = vld [vmem:[%s6521 + $0x4] sm:$0xf]
    %v6524 = vld [vmem:[%s6521 + $0x8] sm:$0xf]
    %v6525 = vld [vmem:[%s6521 + $0xc] sm:$0xf]
    %v6530 = vunpack.c.l.b16 %v6522
    %v6531 = vunpack.c.l.b16 %v6523
    %v6532 = vunpack.c.l.b16 %v6524
    %v6533 = vunpack.c.l.b16 %v6525
    %v6534 = vpack.c.b16 %v6531, %v6530
    %v6535 = vpack.c.b16 %v6533, %v6532
    %v6539 = vsel %vm1670, %v6504, 0
    %v6542 = vsel %vm1670, %v6505, 0
    %v6545 = vsel %vm1670, %v6506, 0
    %v6548 = vsel %vm1670, %v6507, 0
    %v6551 = vsel %vm1670, %v6508, 0
    %v6554 = vsel %vm1670, %v6509, 0
    %v6557 = vsel %vm1670, %v6510, 0
    %v6560 = vsel %vm1670, %v6511, 0
    %v6563 = vsel %vm1670, %v6512, 0
    %v6566 = vsel %vm1670, %v6513, 0
    %v6569 = vsel %vm1670, %v6514, 0
    %v6572 = vsel %vm1670, %v6515, 0
    %v6575 = vsel %vm1670, %v6516, 0
    %v6578 = vsel %vm1670, %v6517, 0
    %v6581 = vsel %vm1670, %v6518, 0
    %v6584 = vsel %vm1670, %v6519, 0
    %v6587 = vsel %vm1670, %v6520, 0
    %6589 = vmatprep.subr.bf16.mxu0 0
    %6590 = vmatpush1.bf16.msra.mxu0 %v6534
    %6591 = vmatprep.subr.bf16.mxu0 0
    %6592 = vmatpush1.bf16.msra.mxu0 %v6535
    %6593 = vmatprep.subr.bf16.mxu0 0
    %6594 = vmatpush1.bf16.msra.mxu0 0
    %6595 = vmatprep.subr.bf16.mxu0 0
    %6596 = vmatpush1.bf16.msra.mxu0 0
    %6597 = vmatprep.subr.bf16.mxu0 0
    %6598 = vmatpush1.bf16.msra.mxu0 0
    %6599 = vmatprep.subr.bf16.mxu0 0
    %6600 = vmatpush1.bf16.msra.mxu0 0
    %6601 = vmatprep.subr.bf16.mxu0 0
    %6602 = vmatpush1.bf16.msra.mxu0 0
    %6603 = vmatprep.subr.bf16.mxu0 0
    %6604 = vmatpush1.bf16.msra.mxu0 0
    %6605 = vmatprep.subr.bf16.mxu0 0
    %6606 = vmatpush1.bf16.msra.mxu0 0
    %6607 = vmatprep.subr.bf16.mxu0 0
    %6608 = vmatpush1.bf16.msra.mxu0 0
    %6609 = vmatprep.subr.bf16.mxu0 0
    %6610 = vmatpush1.bf16.msra.mxu0 0
    %6611 = vmatprep.subr.bf16.mxu0 0
    %6612 = vmatpush1.bf16.msra.mxu0 0
    %6613 = vmatprep.subr.bf16.mxu0 0
    %6614 = vmatpush1.bf16.msra.mxu0 0
    %6615 = vmatprep.subr.bf16.mxu0 0
    %6616 = vmatpush1.bf16.msra.mxu0 0
    %6617 = vmatprep.subr.bf16.mxu0 0
    %6618 = vmatpush1.bf16.msra.mxu0 0
    %6619 = vmatprep.subr.bf16.mxu0 0
    %6620 = vmatpush1.bf16.msra.mxu0 0
    %6621 = vmatprep.mubr.bf16.mxu0 0
    %6622 = vmatmul.mubr.bf16.gmra.mrb[0].mxu0 %v6539
    %v6623 = vpop.f32.mrb[0].mxu0
    %v6624 = vadd.f32 0.0, %v6623
    %v6625 = vpop.f32.mrb[0].mxu0
    %v6626 = vpop.f32.mrb[0].mxu0
    %v6627 = vadd.f32 0.0, %v6626
    %v6628 = vpop.f32.mrb[0].mxu0
    %6629 = vmatprep.mubr.bf16.mxu0 0
    %6630 = vmatmul.mubr.bf16.gmra.mrb[0].mxu0 %v6542
    %v6631 = vpop.f32.mrb[0].mxu0
    %v6632 = vadd.f32 0.0, %v6631
    %v6633 = vpop.f32.mrb[0].mxu0
    %v6634 = vpop.f32.mrb[0].mxu0
    %v6635 = vadd.f32 0.0, %v6634
    %v6636 = vpop.f32.mrb[0].mxu0
    %6637 = vmatprep.mubr.bf16.mxu0 0
    %6638 = vmatmul.mubr.bf16.gmra.mrb[0].mxu0 %v6545
    %v6639 = vpop.f32.mrb[0].mxu0
    %v6640 = vadd.f32 0.0, %v6639
    %v6641 = vpop.f32.mrb[0].mxu0
    %v6642 = vpop.f32.mrb[0].mxu0
    %v6643 = vadd.f32 0.0, %v6642
    %v6644 = vpop.f32.mrb[0].mxu0
    %6645 = vmatprep.mubr.bf16.mxu0 0
    %6646 = vmatmul.mubr.bf16.gmra.mrb[0].mxu0 %v6548
    %v6647 = vpop.f32.mrb[0].mxu0
    %v6648 = vadd.f32 0.0, %v6647
    %v6649 = vpop.f32.mrb[0].mxu0
    %v6650 = vpop.f32.mrb[0].mxu0
    %v6651 = vadd.f32 0.0, %v6650
    %v6652 = vpop.f32.mrb[0].mxu0
    %6653 = vmatprep.mubr.bf16.mxu0 0
    %6654 = vmatmul.mubr.bf16.gmra.mrb[0].mxu0 %v6551
    %v6655 = vpop.f32.mrb[0].mxu0
    %v6656 = vadd.f32 0.0, %v6655
    %v6657 = vpop.f32.mrb[0].mxu0
    %v6658 = vpop.f32.mrb[0].mxu0
    %v6659 = vadd.f32 0.0, %v6658
    %v6660 = vpop.f32.mrb[0].mxu0
    %6661 = vmatprep.mubr.bf16.mxu0 0
    %6662 = vmatmul.mubr.bf16.gmra.mrb[0].mxu0 %v6554
    %v6663 = vpop.f32.mrb[0].mxu0
    %v6664 = vadd.f32 0.0, %v6663
    %v6665 = vpop.f32.mrb[0].mxu0
    %v6666 = vpop.f32.mrb[0].mxu0
    %v6667 = vadd.f32 0.0, %v6666
    %v6668 = vpop.f32.mrb[0].mxu0
    %6669 = vmatprep.mubr.bf16.mxu0 0
    %6670 = vmatmul.mubr.bf16.gmra.mrb[0].mxu0 %v6557
    %v6671 = vpop.f32.mrb[0].mxu0
    %v6672 = vadd.f32 0.0, %v6671
    %v6673 = vpop.f32.mrb[0].mxu0
    %v6674 = vpop.f32.mrb[0].mxu0
    %v6675 = vadd.f32 0.0, %v6674
    %v6676 = vpop.f32.mrb[0].mxu0
    %6677 = vmatprep.mubr.bf16.mxu0 0
    %6678 = vmatmul.mubr.bf16.gmra.mrb[0].mxu0 %v6560
    %v6679 = vpop.f32.mrb[0].mxu0
    %v6680 = vadd.f32 0.0, %v6679
    %v6681 = vpop.f32.mrb[0].mxu0
    %v6682 = vpop.f32.mrb[0].mxu0
    %v6683 = vadd.f32 0.0, %v6682
    %v6684 = vpop.f32.mrb[0].mxu0
    %6685 = vmatprep.mubr.bf16.mxu0 0
    %6686 = vmatmul.mubr.bf16.gmra.mrb[0].mxu0 %v6563
    %v6687 = vpop.f32.mrb[0].mxu0
    %v6688 = vadd.f32 0.0, %v6687
    %v6689 = vpop.f32.mrb[0].mxu0
    %v6690 = vpop.f32.mrb[0].mxu0
    %v6691 = vadd.f32 0.0, %v6690
    %v6692 = vpop.f32.mrb[0].mxu0
    %6693 = vmatprep.mubr.bf16.mxu0 0
    %6694 = vmatmul.mubr.bf16.gmra.mrb[0].mxu0 %v6566
    %v6695 = vpop.f32.mrb[0].mxu0
    %v6696 = vadd.f32 0.0, %v6695
    %v6697 = vpop.f32.mrb[0].mxu0
    %v6698 = vpop.f32.mrb[0].mxu0
    %v6699 = vadd.f32 0.0, %v6698
    %v6700 = vpop.f32.mrb[0].mxu0
    %6701 = vmatprep.mubr.bf16.mxu0 0
    %6702 = vmatmul.mubr.bf16.gmra.mrb[0].mxu0 %v6569
    %v6703 = vpop.f32.mrb[0].mxu0
    %v6704 = vadd.f32 0.0, %v6703
    %v6705 = vpop.f32.mrb[0].mxu0
    %v6706 = vpop.f32.mrb[0].mxu0
    %v6707 = vadd.f32 0.0, %v6706
    %v6708 = vpop.f32.mrb[0].mxu0
    %6709 = vmatprep.mubr.bf16.mxu0 0
    %6710 = vmatmul.mubr.bf16.gmra.mrb[0].mxu0 %v6572
    %v6711 = vpop.f32.mrb[0].mxu0
    %v6712 = vadd.f32 0.0, %v6711
    %v6713 = vpop.f32.mrb[0].mxu0
    %v6714 = vpop.f32.mrb[0].mxu0
    %v6715 = vadd.f32 0.0, %v6714
    %v6716 = vpop.f32.mrb[0].mxu0
    %6717 = vmatprep.mubr.bf16.mxu0 0
    %6718 = vmatmul.mubr.bf16.gmra.mrb[0].mxu0 %v6575
    %v6719 = vpop.f32.mrb[0].mxu0
    %v6720 = vadd.f32 0.0, %v6719
    %v6721 = vpop.f32.mrb[0].mxu0
    %v6722 = vpop.f32.mrb[0].mxu0
    %v6723 = vadd.f32 0.0, %v6722
    %v6724 = vpop.f32.mrb[0].mxu0
    %6725 = vmatprep.mubr.bf16.mxu0 0
    %6726 = vmatmul.mubr.bf16.gmra.mrb[0].mxu0 %v6578
    %v6727 = vpop.f32.mrb[0].mxu0
    %v6728 = vadd.f32 0.0, %v6727
    %v6729 = vpop.f32.mrb[0].mxu0
    %v6730 = vpop.f32.mrb[0].mxu0
    %v6731 = vadd.f32 0.0, %v6730
    %v6732 = vpop.f32.mrb[0].mxu0
    %6733 = vmatprep.mubr.bf16.mxu0 0
    %6734 = vmatmul.mubr.bf16.gmra.mrb[0].mxu0 %v6581
    %v6735 = vpop.f32.mrb[0].mxu0
    %v6736 = vadd.f32 0.0, %v6735
    %v6737 = vpop.f32.mrb[0].mxu0
    %v6738 = vpop.f32.mrb[0].mxu0
    %v6739 = vadd.f32 0.0, %v6738
    %v6740 = vpop.f32.mrb[0].mxu0
    %6741 = vmatprep.mubr.bf16.mxu0 0
    %6742 = vmatmul.mubr.bf16.gmra.mrb[0].mxu0 %v6584
    %v6743 = vpop.f32.mrb[0].mxu0
    %v6744 = vadd.f32 0.0, %v6743
    %v6745 = vpop.f32.mrb[0].mxu0
    %v6746 = vpop.f32.mrb[0].mxu0
    %v6747 = vadd.f32 0.0, %v6746
    %v6748 = vpop.f32.mrb[0].mxu0
    %6749 = vmatprep.mubr.bf16.mxu0 0
    %6750 = vmatmul.mubr.bf16.gmra.mrb[0].mxu0 %v6587
    %v6751 = vpop.f32.mrb[0].mxu0
    %v6752 = vadd.f32 0.0, %v6751
    %v6753 = vpop.f32.mrb[0].mxu0
    %v6754 = vpop.f32.mrb[0].mxu0
    %v6755 = vadd.f32 0.0, %v6754
    %v6756 = vpop.f32.mrb[0].mxu0
    %6757 = vdwg.mxu0
    %v6758 = vadd.f32 %v6436, %v6624
    %v6759 = vadd.f32 %v6437, %v6627
    %v6760 = vadd.f32 %v6438, %v6632
    %v6761 = vadd.f32 %v6439, %v6635
    %v6762 = vadd.f32 %v6440, %v6640
    %v6763 = vadd.f32 %v6441, %v6643
    %v6764 = vadd.f32 %v6442, %v6648
    %v6765 = vadd.f32 %v6443, %v6651
    %v6766 = vadd.f32 %v6444, %v6656
    %v6767 = vadd.f32 %v6445, %v6659
    %v6768 = vadd.f32 %v6446, %v6664
    %v6769 = vadd.f32 %v6447, %v6667
    %v6770 = vadd.f32 %v6448, %v6672
    %v6771 = vadd.f32 %v6449, %v6675
    %v6772 = vadd.f32 %v6450, %v6680
    %v6773 = vadd.f32 %v6451, %v6683
    %v6774 = vadd.f32 %v6452, %v6688
    %v6775 = vadd.f32 %v6453, %v6691
    %v6776 = vadd.f32 %v6454, %v6696
    %v6777 = vadd.f32 %v6455, %v6699
    %v6778 = vadd.f32 %v6456, %v6704
    %v6779 = vadd.f32 %v6457, %v6707
    %v6780 = vadd.f32 %v6458, %v6712
    %v6781 = vadd.f32 %v6459, %v6715
    %v6782 = vadd.f32 %v6460, %v6720
    %v6783 = vadd.f32 %v6461, %v6723
    %v6784 = vadd.f32 %v6462, %v6728
    %v6785 = vadd.f32 %v6463, %v6731
    %v6786 = vadd.f32 %v6464, %v6736
    %v6787 = vadd.f32 %v6465, %v6739
    %v6788 = vadd.f32 %v6466, %v6744
    %v6789 = vadd.f32 %v6467, %v6747
    %v6790 = vadd.f32 %v6468, %v6752
    %v6791 = vadd.f32 %v6469, %v6755
    %v6792 = vld [vmem:[%s4] sm:$0x1]
    %v6794 = vlaneseq
    %v6795 = vshrl.u32 %v6794, 7
    %v6796 = vsub.s32 0, %v6795
    %v6797 = vrot.slane %v6792, %v6796
    %v6799 = vadd.f32 %v6758, %v6797
    %v6800 = vadd.f32 %v6759, %v6797
    %v6801 = vadd.f32 %v6760, %v6797
    %v6802 = vadd.f32 %v6761, %v6797
    %v6803 = vadd.f32 %v6762, %v6797
    %v6804 = vadd.f32 %v6763, %v6797
    %v6805 = vadd.f32 %v6764, %v6797
    %v6806 = vadd.f32 %v6765, %v6797
    %v6807 = vadd.f32 %v6766, %v6797
    %v6808 = vadd.f32 %v6767, %v6797
    %v6809 = vadd.f32 %v6768, %v6797
    %v6810 = vadd.f32 %v6769, %v6797
    %v6811 = vadd.f32 %v6770, %v6797
    %v6812 = vadd.f32 %v6771, %v6797
    %v6813 = vadd.f32 %v6772, %v6797
    %v6814 = vadd.f32 %v6773, %v6797
    %v6815 = vadd.f32 %v6774, %v6797
    %v6816 = vadd.f32 %v6775, %v6797
    %v6817 = vadd.f32 %v6776, %v6797
    %v6818 = vadd.f32 %v6777, %v6797
    %v6819 = vadd.f32 %v6778, %v6797
    %v6820 = vadd.f32 %v6779, %v6797
    %v6821 = vadd.f32 %v6780, %v6797
    %v6822 = vadd.f32 %v6781, %v6797
    %v6823 = vadd.f32 %v6782, %v6797
    %v6824 = vadd.f32 %v6783, %v6797
    %v6825 = vadd.f32 %v6784, %v6797
    %v6826 = vadd.f32 %v6785, %v6797
    %v6827 = vadd.f32 %v6786, %v6797
    %v6828 = vadd.f32 %v6787, %v6797
    %v6829 = vadd.f32 %v6788, %v6797
    %v6830 = vadd.f32 %v6789, %v6797
    %v6831 = vadd.f32 %v6790, %v6797
    %v6832 = vadd.f32 %v6791, %v6797
    %v6833 = vmax.f32 %v6799, 0.0
    %v6834 = vmax.f32 %v6800, 0.0
    %v6835 = vmax.f32 %v6801, 0.0
    %v6836 = vmax.f32 %v6802, 0.0
    %v6837 = vmax.f32 %v6803, 0.0
    %v6838 = vmax.f32 %v6804, 0.0
    %v6839 = vmax.f32 %v6805, 0.0
    %v6840 = vmax.f32 %v6806, 0.0
    %v6841 = vmax.f32 %v6807, 0.0
    %v6842 = vmax.f32 %v6808, 0.0
    %v6843 = vmax.f32 %v6809, 0.0
    %v6844 = vmax.f32 %v6810, 0.0
    %v6845 = vmax.f32 %v6811, 0.0
    %v6846 = vmax.f32 %v6812, 0.0
    %v6847 = vmax.f32 %v6813, 0.0
    %v6848 = vmax.f32 %v6814, 0.0
    %v6849 = vmax.f32 %v6815, 0.0
    %v6850 = vmax.f32 %v6816, 0.0
    %v6851 = vmax.f32 %v6817, 0.0
    %v6852 = vmax.f32 %v6818, 0.0
    %v6853 = vmax.f32 %v6819, 0.0
    %v6854 = vmax.f32 %v6820, 0.0
    %v6855 = vmax.f32 %v6821, 0.0
    %v6856 = vmax.f32 %v6822, 0.0
    %v6857 = vmax.f32 %v6823, 0.0
    %v6858 = vmax.f32 %v6824, 0.0
    %v6859 = vmax.f32 %v6825, 0.0
    %v6860 = vmax.f32 %v6826, 0.0
    %v6861 = vmax.f32 %v6827, 0.0
    %v6862 = vmax.f32 %v6828, 0.0
    %v6863 = vmax.f32 %v6829, 0.0
    %v6864 = vmax.f32 %v6830, 0.0
    %v6865 = vmax.f32 %v6831, 0.0
    %v6866 = vmax.f32 %v6832, 0.0
    %6867 = vst.msk [vmem:[#allocation4] sm:$0xff] %vm76, %v6833
    %6868 = vst.msk [vmem:[#allocation4 + $0x8] sm:$0xff] %vm76, %v6834
    %6869 = vst.msk [vmem:[#allocation4 + $0x10] sm:$0xff] %vm76, %v6835
    %6870 = vst.msk [vmem:[#allocation4 + $0x18] sm:$0xff] %vm76, %v6836
    %6871 = vst.msk [vmem:[#allocation4 + $0x20] sm:$0xff] %vm76, %v6837
    %6872 = vst.msk [vmem:[#allocation4 + $0x28] sm:$0xff] %vm76, %v6838
    %6873 = vst.msk [vmem:[#allocation4 + $0x30] sm:$0xff] %vm76, %v6839
    %6874 = vst.msk [vmem:[#allocation4 + $0x38] sm:$0xff] %vm76, %v6840
    %6875 = vst.msk [vmem:[#allocation4 + $0x40] sm:$0xff] %vm76, %v6841
    %6876 = vst.msk [vmem:[#allocation4 + $0x48] sm:$0xff] %vm76, %v6842
    %6877 = vst.msk [vmem:[#allocation4 + $0x50] sm:$0xff] %vm76, %v6843
    %6878 = vst.msk [vmem:[#allocation4 + $0x58] sm:$0xff] %vm76, %v6844
    %6879 = vst.msk [vmem:[#allocation4 + $0x60] sm:$0xff] %vm76, %v6845
    %6880 = vst.msk [vmem:[#allocation4 + $0x68] sm:$0xff] %vm76, %v6846
    %6881 = vst.msk [vmem:[#allocation4 + $0x70] sm:$0xff] %vm76, %v6847
    %6882 = vst.msk [vmem:[#allocation4 + $0x78] sm:$0xff] %vm76, %v6848
    %6883 = vst.msk [vmem:[#allocation4 + $0x80] sm:$0xff] %vm76, %v6849
    %6884 = vst.msk [vmem:[#allocation4 + $0x88] sm:$0xff] %vm76, %v6850
    %6885 = vst.msk [vmem:[#allocation4 + $0x90] sm:$0xff] %vm76, %v6851
    %6886 = vst.msk [vmem:[#allocation4 + $0x98] sm:$0xff] %vm76, %v6852
    %6887 = vst.msk [vmem:[#allocation4 + $0xa0] sm:$0xff] %vm76, %v6853
    %6888 = vst.msk [vmem:[#allocation4 + $0xa8] sm:$0xff] %vm76, %v6854
    %6889 = vst.msk [vmem:[#allocation4 + $0xb0] sm:$0xff] %vm76, %v6855
    %6890 = vst.msk [vmem:[#allocation4 + $0xb8] sm:$0xff] %vm76, %v6856
    %6891 = vst.msk [vmem:[#allocation4 + $0xc0] sm:$0xff] %vm76, %v6857
    %6892 = vst.msk [vmem:[#allocation4 + $0xc8] sm:$0xff] %vm76, %v6858
    %6893 = vst.msk [vmem:[#allocation4 + $0xd0] sm:$0xff] %vm76, %v6859
    %6894 = vst.msk [vmem:[#allocation4 + $0xd8] sm:$0xff] %vm76, %v6860
    %6895 = vst.msk [vmem:[#allocation4 + $0xe0] sm:$0xff] %vm76, %v6861
    %6896 = vst.msk [vmem:[#allocation4 + $0xe8] sm:$0xff] %vm76, %v6862
    %6897 = vst.msk [vmem:[#allocation4 + $0xf0] sm:$0xff] %vm76, %v6863
    %6898 = vst.msk [vmem:[#allocation4 + $0xf8] sm:$0xff] %vm76, %v6864
    %6899 = vst.msk [vmem:[#allocation4 + $0x100] sm:$0xff] %vm76, %v6865
    %6900 = vst.msk [vmem:[#allocation4 + $0x108] sm:$0xff] %vm76, %v6866
    %v6901 = vld [vmem:[#allocation4] sm:$0xff]
    %v6902 = vld [vmem:[#allocation4 + $0x8] sm:$0xff]
    %v6903 = vld [vmem:[#allocation4 + $0x10] sm:$0xff]
    %v6904 = vld [vmem:[#allocation4 + $0x18] sm:$0xff]
    %v6905 = vld [vmem:[#allocation4 + $0x20] sm:$0xff]
    %v6906 = vld [vmem:[#allocation4 + $0x28] sm:$0xff]
    %v6907 = vld [vmem:[#allocation4 + $0x30] sm:$0xff]
    %v6908 = vld [vmem:[#allocation4 + $0x38] sm:$0xff]
    %v6909 = vld [vmem:[#allocation4 + $0x40] sm:$0xff]
    %v6910 = vld [vmem:[#allocation4 + $0x48] sm:$0xff]
    %v6911 = vld [vmem:[#allocation4 + $0x50] sm:$0xff]
    %v6912 = vld [vmem:[#allocation4 + $0x58] sm:$0xff]
    %v6913 = vld [vmem:[#allocation4 + $0x60] sm:$0xff]
    %v6914 = vld [vmem:[#allocation4 + $0x68] sm:$0xff]
    %v6915 = vld [vmem:[#allocation4 + $0x70] sm:$0xff]
    %v6916 = vld [vmem:[#allocation4 + $0x78] sm:$0xff]
    %v6917 = vld [vmem:[#allocation4 + $0x80] sm:$0xff]
    %v6918 = vld [vmem:[#allocation4 + $0x88] sm:$0xff]
    %v6919 = vld [vmem:[#allocation4 + $0x90] sm:$0xff]
    %v6920 = vld [vmem:[#allocation4 + $0x98] sm:$0xff]
    %v6921 = vld [vmem:[#allocation4 + $0xa0] sm:$0xff]
    %v6922 = vld [vmem:[#allocation4 + $0xa8] sm:$0xff]
    %v6923 = vld [vmem:[#allocation4 + $0xb0] sm:$0xff]
    %v6924 = vld [vmem:[#allocation4 + $0xb8] sm:$0xff]
    %v6925 = vld [vmem:[#allocation4 + $0xc0] sm:$0xff]
    %v6926 = vld [vmem:[#allocation4 + $0xc8] sm:$0xff]
    %v6927 = vld [vmem:[#allocation4 + $0xd0] sm:$0xff]
    %v6928 = vld [vmem:[#allocation4 + $0xd8] sm:$0xff]
    %v6929 = vpack.c.bf16 %v6902, %v6901
    %v6930 = vpack.c.bf16 %v6904, %v6903
    %v6931 = vpack.c.bf16 %v6906, %v6905
    %v6932 = vpack.c.bf16 %v6908, %v6907
    %v6933 = vpack.c.bf16 %v6910, %v6909
    %v6934 = vpack.c.bf16 %v6912, %v6911
    %v6935 = vpack.c.bf16 %v6914, %v6913
    %v6936 = vpack.c.bf16 %v6916, %v6915
    %v6937 = vpack.c.bf16 %v6918, %v6917
    %v6938 = vpack.c.bf16 %v6920, %v6919
    %v6939 = vpack.c.bf16 %v6922, %v6921
    %v6940 = vpack.c.bf16 %v6924, %v6923
    %v6941 = vpack.c.bf16 %v6926, %v6925
    %v6942 = vpack.c.bf16 %v6928, %v6927
    %v6943 = vld [vmem:[%s5] sm:$0xf]
    %v6944 = vld [vmem:[%s5 + $0x4] sm:$0xf]
    %v6945 = vld [vmem:[%s5 + $0x8] sm:$0xf]
    %v6946 = vld [vmem:[%s5 + $0xc] sm:$0xf]
    %v6947 = vld [vmem:[%s5 + $0x10] sm:$0xf]
    %v6948 = vld [vmem:[%s5 + $0x14] sm:$0xf]
    %v6949 = vld [vmem:[%s5 + $0x18] sm:$0xf]
    %v6950 = vld [vmem:[%s5 + $0x1c] sm:$0xf]
    %v6951 = vld [vmem:[#allocation4 + $0x2] sm:$0xff]
    %v6952 = vld [vmem:[#allocation4 + $0xa] sm:$0xff]
    %v6953 = vld [vmem:[#allocation4 + $0x12] sm:$0xff]
    %v6954 = vld [vmem:[#allocation4 + $0x1a] sm:$0xff]
    %v6955 = vld [vmem:[#allocation4 + $0x22] sm:$0xff]
    %v6956 = vld [vmem:[#allocation4 + $0x2a] sm:$0xff]
    %v6957 = vld [vmem:[#allocation4 + $0x32] sm:$0xff]
    %v6958 = vld [vmem:[#allocation4 + $0x3a] sm:$0xff]
    %v6959 = vld [vmem:[#allocation4 + $0x42] sm:$0xff]
    %v6960 = vld [vmem:[#allocation4 + $0x4a] sm:$0xff]
    %v6961 = vld [vmem:[#allocation4 + $0x52] sm:$0xff]
    %v6962 = vld [vmem:[#allocation4 + $0x5a] sm:$0xff]
    %v6963 = vld [vmem:[#allocation4 + $0x62] sm:$0xff]
    %v6964 = vld [vmem:[#allocation4 + $0x6a] sm:$0xff]
    %v6965 = vld [vmem:[#allocation4 + $0x72] sm:$0xff]
    %v6966 = vld [vmem:[#allocation4 + $0x7a] sm:$0xff]
    %v6967 = vld [vmem:[#allocation4 + $0x82] sm:$0xff]
    %v6968 = vld [vmem:[#allocation4 + $0x8a] sm:$0xff]
    %v6969 = vld [vmem:[#allocation4 + $0x92] sm:$0xff]
    %v6970 = vld [vmem:[#allocation4 + $0x9a] sm:$0xff]
    %v6971 = vld [vmem:[#allocation4 + $0xa2] sm:$0xff]
    %v6972 = vld [vmem:[#allocation4 + $0xaa] sm:$0xff]
    %v6973 = vld [vmem:[#allocation4 + $0xb2] sm:$0xff]
    %v6974 = vld [vmem:[#allocation4 + $0xba] sm:$0xff]
    %v6975 = vld [vmem:[#allocation4 + $0xc2] sm:$0xff]
    %v6976 = vld [vmem:[#allocation4 + $0xca] sm:$0xff]
    %v6977 = vld [vmem:[#allocation4 + $0xd2] sm:$0xff]
    %v6978 = vld [vmem:[#allocation4 + $0xda] sm:$0xff]
    %v6979 = vpack.c.bf16 %v6952, %v6951
    %v6980 = vpack.c.bf16 %v6954, %v6953
    %v6981 = vpack.c.bf16 %v6956, %v6955
    %v6982 = vpack.c.bf16 %v6958, %v6957
    %v6983 = vpack.c.bf16 %v6960, %v6959
    %v6984 = vpack.c.bf16 %v6962, %v6961
    %v6985 = vpack.c.bf16 %v6964, %v6963
    %v6986 = vpack.c.bf16 %v6966, %v6965
    %v6987 = vpack.c.bf16 %v6968, %v6967
    %v6988 = vpack.c.bf16 %v6970, %v6969
    %v6989 = vpack.c.bf16 %v6972, %v6971
    %v6990 = vpack.c.bf16 %v6974, %v6973
    %v6991 = vpack.c.bf16 %v6976, %v6975
    %v6992 = vpack.c.bf16 %v6978, %v6977
    %s6993 = scalar_lea.vmem %s5, 32
    %v6994 = vld [vmem:[%s6993] sm:$0xf]
    %v6995 = vld [vmem:[%s6993 + $0x4] sm:$0xf]
    %v6996 = vld [vmem:[%s6993 + $0x8] sm:$0xf]
    %v6997 = vld [vmem:[%s6993 + $0xc] sm:$0xf]
    %v6998 = vld [vmem:[%s6993 + $0x10] sm:$0xf]
    %v6999 = vld [vmem:[%s6993 + $0x14] sm:$0xf]
    %v7000 = vld [vmem:[%s6993 + $0x18] sm:$0xf]
    %v7001 = vld [vmem:[%s6993 + $0x1c] sm:$0xf]
    %v7010 = vunpack.c.l.b16 %v6994
    %v7011 = vunpack.c.l.b16 %v6995
    %v7012 = vunpack.c.l.b16 %v6996
    %v7013 = vunpack.c.l.b16 %v6997
    %v7014 = vunpack.c.l.b16 %v6998
    %v7015 = vunpack.c.l.b16 %v6999
    %v7016 = vunpack.c.l.b16 %v7000
    %v7017 = vunpack.c.l.b16 %v7001
    %v7018 = vpack.c.b16 %v7011, %v7010
    %v7019 = vpack.c.b16 %v7013, %v7012
    %v7020 = vpack.c.b16 %v7015, %v7014
    %v7021 = vpack.c.b16 %v7017, %v7016
    %v7027 = vsel %vm76, %v6979, 0
    %v7030 = vsel %vm76, %v6980, 0
    %v7033 = vsel %vm76, %v6981, 0
    %v7036 = vsel %vm76, %v6982, 0
    %v7039 = vsel %vm76, %v6983, 0
    %v7042 = vsel %vm76, %v6984, 0
    %v7045 = vsel %vm76, %v6985, 0
    %v7048 = vsel %vm76, %v6986, 0
    %v7051 = vsel %vm76, %v6987, 0
    %v7054 = vsel %vm76, %v6988, 0
    %v7057 = vsel %vm76, %v6989, 0
    %v7060 = vsel %vm76, %v6990, 0
    %v7063 = vsel %vm76, %v6991, 0
    %v7066 = vsel %vm76, %v6992, 0
    %7068 = vmatprep.subr.bf16.mxu0 0
    %7069 = vmatpush1.bf16.msra.mxu0 %v7018
    %7070 = vmatprep.subr.bf16.mxu0 0
    %7071 = vmatpush1.bf16.msra.mxu0 %v7019
    %7072 = vmatprep.subr.bf16.mxu0 0
    %7073 = vmatpush1.bf16.msra.mxu0 %v7020
    %7074 = vmatprep.subr.bf16.mxu0 0
    %7075 = vmatpush1.bf16.msra.mxu0 %v7021
    %7076 = vmatprep.subr.bf16.mxu0 0
    %7077 = vmatpush1.bf16.msra.mxu0 0
    %7078 = vmatprep.subr.bf16.mxu0 0
    %7079 = vmatpush1.bf16.msra.mxu0 0
    %7080 = vmatprep.subr.bf16.mxu0 0
    %7081 = vmatpush1.bf16.msra.mxu0 0
    %7082 = vmatprep.subr.bf16.mxu0 0
    %7083 = vmatpush1.bf16.msra.mxu0 0
    %7084 = vmatprep.subr.bf16.mxu0 0
    %7085 = vmatpush1.bf16.msra.mxu0 0
    %7086 = vmatprep.subr.bf16.mxu0 0
    %7087 = vmatpush1.bf16.msra.mxu0 0
    %7088 = vmatprep.subr.bf16.mxu0 0
    %7089 = vmatpush1.bf16.msra.mxu0 0
    %7090 = vmatprep.subr.bf16.mxu0 0
    %7091 = vmatpush1.bf16.msra.mxu0 0
    %7092 = vmatprep.subr.bf16.mxu0 0
    %7093 = vmatpush1.bf16.msra.mxu0 0
    %7094 = vmatprep.subr.bf16.mxu0 0
    %7095 = vmatpush1.bf16.msra.mxu0 0
    %7096 = vmatprep.subr.bf16.mxu0 0
    %7097 = vmatpush1.bf16.msra.mxu0 0
    %7098 = vmatprep.subr.bf16.mxu0 0
    %7099 = vmatpush1.bf16.msra.mxu0 0
    %7100 = vmatprep.mubr.bf16.mxu0 0
    %7101 = vmatmul.mubr.bf16.gmra.mrb[0].mxu0 %v7027
    %v7102 = vpop.f32.mrb[0].mxu0
    %v7103 = vadd.f32 0.0, %v7102
    %v7104 = vpop.f32.mrb[0].mxu0
    %v7105 = vpop.f32.mrb[0].mxu0
    %v7106 = vadd.f32 0.0, %v7105
    %v7107 = vpop.f32.mrb[0].mxu0
    %7108 = vmatprep.mubr.bf16.mxu0 0
    %7109 = vmatmul.mubr.bf16.gmra.mrb[0].mxu0 %v7030
    %v7110 = vpop.f32.mrb[0].mxu0
    %v7111 = vadd.f32 0.0, %v7110
    %v7112 = vpop.f32.mrb[0].mxu0
    %v7113 = vpop.f32.mrb[0].mxu0
    %v7114 = vadd.f32 0.0, %v7113
    %v7115 = vpop.f32.mrb[0].mxu0
    %7116 = vmatprep.mubr.bf16.mxu0 0
    %7117 = vmatmul.mubr.bf16.gmra.mrb[0].mxu0 %v7033
    %v7118 = vpop.f32.mrb[0].mxu0
    %v7119 = vadd.f32 0.0, %v7118
    %v7120 = vpop.f32.mrb[0].mxu0
    %v7121 = vpop.f32.mrb[0].mxu0
    %v7122 = vadd.f32 0.0, %v7121
    %v7123 = vpop.f32.mrb[0].mxu0
    %7124 = vmatprep.mubr.bf16.mxu0 0
    %7125 = vmatmul.mubr.bf16.gmra.mrb[0].mxu0 %v7036
    %v7126 = vpop.f32.mrb[0].mxu0
    %v7127 = vadd.f32 0.0, %v7126
    %v7128 = vpop.f32.mrb[0].mxu0
    %v7129 = vpop.f32.mrb[0].mxu0
    %v7130 = vadd.f32 0.0, %v7129
    %v7131 = vpop.f32.mrb[0].mxu0
    %7132 = vmatprep.mubr.bf16.mxu0 0
    %7133 = vmatmul.mubr.bf16.gmra.mrb[0].mxu0 %v7039
    %v7134 = vpop.f32.mrb[0].mxu0
    %v7135 = vadd.f32 0.0, %v7134
    %v7136 = vpop.f32.mrb[0].mxu0
    %v7137 = vpop.f32.mrb[0].mxu0
    %v7138 = vadd.f32 0.0, %v7137
    %v7139 = vpop.f32.mrb[0].mxu0
    %7140 = vmatprep.mubr.bf16.mxu0 0
    %7141 = vmatmul.mubr.bf16.gmra.mrb[0].mxu0 %v7042
    %v7142 = vpop.f32.mrb[0].mxu0
    %v7143 = vadd.f32 0.0, %v7142
    %v7144 = vpop.f32.mrb[0].mxu0
    %v7145 = vpop.f32.mrb[0].mxu0
    %v7146 = vadd.f32 0.0, %v7145
    %v7147 = vpop.f32.mrb[0].mxu0
    %7148 = vmatprep.mubr.bf16.mxu0 0
    %7149 = vmatmul.mubr.bf16.gmra.mrb[0].mxu0 %v7045
    %v7150 = vpop.f32.mrb[0].mxu0
    %v7151 = vadd.f32 0.0, %v7150
    %v7152 = vpop.f32.mrb[0].mxu0
    %v7153 = vpop.f32.mrb[0].mxu0
    %v7154 = vadd.f32 0.0, %v7153
    %v7155 = vpop.f32.mrb[0].mxu0
    %7156 = vmatprep.mubr.bf16.mxu0 0
    %7157 = vmatmul.mubr.bf16.gmra.mrb[0].mxu0 %v7048
    %v7158 = vpop.f32.mrb[0].mxu0
    %v7159 = vadd.f32 0.0, %v7158
    %v7160 = vpop.f32.mrb[0].mxu0
    %v7161 = vpop.f32.mrb[0].mxu0
    %v7162 = vadd.f32 0.0, %v7161
    %v7163 = vpop.f32.mrb[0].mxu0
    %7164 = vmatprep.mubr.bf16.mxu0 0
    %7165 = vmatmul.mubr.bf16.gmra.mrb[0].mxu0 %v7051
    %v7166 = vpop.f32.mrb[0].mxu0
    %v7167 = vadd.f32 0.0, %v7166
    %v7168 = vpop.f32.mrb[0].mxu0
    %v7169 = vpop.f32.mrb[0].mxu0
    %v7170 = vadd.f32 0.0, %v7169
    %v7171 = vpop.f32.mrb[0].mxu0
    %7172 = vmatprep.mubr.bf16.mxu0 0
    %7173 = vmatmul.mubr.bf16.gmra.mrb[0].mxu0 %v7054
    %v7174 = vpop.f32.mrb[0].mxu0
    %v7175 = vadd.f32 0.0, %v7174
    %v7176 = vpop.f32.mrb[0].mxu0
    %v7177 = vpop.f32.mrb[0].mxu0
    %v7178 = vadd.f32 0.0, %v7177
    %v7179 = vpop.f32.mrb[0].mxu0
    %7180 = vmatprep.mubr.bf16.mxu0 0
    %7181 = vmatmul.mubr.bf16.gmra.mrb[0].mxu0 %v7057
    %v7182 = vpop.f32.mrb[0].mxu0
    %v7183 = vadd.f32 0.0, %v7182
    %v7184 = vpop.f32.mrb[0].mxu0
    %v7185 = vpop.f32.mrb[0].mxu0
    %v7186 = vadd.f32 0.0, %v7185
    %v7187 = vpop.f32.mrb[0].mxu0
    %7188 = vmatprep.mubr.bf16.mxu0 0
    %7189 = vmatmul.mubr.bf16.gmra.mrb[0].mxu0 %v7060
    %v7190 = vpop.f32.mrb[0].mxu0
    %v7191 = vadd.f32 0.0, %v7190
    %v7192 = vpop.f32.mrb[0].mxu0
    %v7193 = vpop.f32.mrb[0].mxu0
    %v7194 = vadd.f32 0.0, %v7193
    %v7195 = vpop.f32.mrb[0].mxu0
    %7196 = vmatprep.mubr.bf16.mxu0 0
    %7197 = vmatmul.mubr.bf16.gmra.mrb[0].mxu0 %v7063
    %v7198 = vpop.f32.mrb[0].mxu0
    %v7199 = vadd.f32 0.0, %v7198
    %v7200 = vpop.f32.mrb[0].mxu0
    %v7201 = vpop.f32.mrb[0].mxu0
    %v7202 = vadd.f32 0.0, %v7201
    %v7203 = vpop.f32.mrb[0].mxu0
    %7204 = vmatprep.mubr.bf16.mxu0 0
    %7205 = vmatmul.mubr.bf16.gmra.mrb[0].mxu0 %v7066
    %v7206 = vpop.f32.mrb[0].mxu0
    %v7207 = vadd.f32 0.0, %v7206
    %v7208 = vpop.f32.mrb[0].mxu0
    %v7209 = vpop.f32.mrb[0].mxu0
    %v7210 = vadd.f32 0.0, %v7209
    %v7211 = vpop.f32.mrb[0].mxu0
    %7212 = vdwg.mxu0
    %v7221 = vunpack.c.l.b16 %v6943
    %v7222 = vunpack.c.l.b16 %v6944
    %v7223 = vunpack.c.l.b16 %v6945
    %v7224 = vunpack.c.l.b16 %v6946
    %v7225 = vunpack.c.l.b16 %v6947
    %v7226 = vunpack.c.l.b16 %v6948
    %v7227 = vunpack.c.l.b16 %v6949
    %v7228 = vunpack.c.l.b16 %v6950
    %v7229 = vpack.c.b16 %v7222, %v7221
    %v7230 = vpack.c.b16 %v7224, %v7223
    %v7231 = vpack.c.b16 %v7226, %v7225
    %v7232 = vpack.c.b16 %v7228, %v7227
    %v7238 = vsel %vm76, %v6929, 0
    %v7241 = vsel %vm76, %v6930, 0
    %v7244 = vsel %vm76, %v6931, 0
    %v7247 = vsel %vm76, %v6932, 0
    %v7250 = vsel %vm76, %v6933, 0
    %v7253 = vsel %vm76, %v6934, 0
    %v7256 = vsel %vm76, %v6935, 0
    %v7259 = vsel %vm76, %v6936, 0
    %v7262 = vsel %vm76, %v6937, 0
    %v7265 = vsel %vm76, %v6938, 0
    %v7268 = vsel %vm76, %v6939, 0
    %v7271 = vsel %vm76, %v6940, 0
    %v7274 = vsel %vm76, %v6941, 0
    %v7277 = vsel %vm76, %v6942, 0
    %7279 = vmatprep.subr.bf16.mxu0 0
    %7280 = vmatpush1.bf16.msra.mxu0 %v7229
    %7281 = vmatprep.subr.bf16.mxu0 0
    %7282 = vmatpush1.bf16.msra.mxu0 %v7230
    %7283 = vmatprep.subr.bf16.mxu0 0
    %7284 = vmatpush1.bf16.msra.mxu0 %v7231
    %7285 = vmatprep.subr.bf16.mxu0 0
    %7286 = vmatpush1.bf16.msra.mxu0 %v7232
    %7287 = vmatprep.subr.bf16.mxu0 0
    %7288 = vmatpush1.bf16.msra.mxu0 0
    %7289 = vmatprep.subr.bf16.mxu0 0
    %7290 = vmatpush1.bf16.msra.mxu0 0
    %7291 = vmatprep.subr.bf16.mxu0 0
    %7292 = vmatpush1.bf16.msra.mxu0 0
    %7293 = vmatprep.subr.bf16.mxu0 0
    %7294 = vmatpush1.bf16.msra.mxu0 0
    %7295 = vmatprep.subr.bf16.mxu0 0
    %7296 = vmatpush1.bf16.msra.mxu0 0
    %7297 = vmatprep.subr.bf16.mxu0 0
    %7298 = vmatpush1.bf16.msra.mxu0 0
    %7299 = vmatprep.subr.bf16.mxu0 0
    %7300 = vmatpush1.bf16.msra.mxu0 0
    %7301 = vmatprep.subr.bf16.mxu0 0
    %7302 = vmatpush1.bf16.msra.mxu0 0
    %7303 = vmatprep.subr.bf16.mxu0 0
    %7304 = vmatpush1.bf16.msra.mxu0 0
    %7305 = vmatprep.subr.bf16.mxu0 0
    %7306 = vmatpush1.bf16.msra.mxu0 0
    %7307 = vmatprep.subr.bf16.mxu0 0
    %7308 = vmatpush1.bf16.msra.mxu0 0
    %7309 = vmatprep.subr.bf16.mxu0 0
    %7310 = vmatpush1.bf16.msra.mxu0 0
    %7311 = vmatprep.mubr.bf16.mxu0 0
    %7312 = vmatmul.mubr.bf16.gmra.mrb[0].mxu0 %v7238
    %v7313 = vpop.f32.mrb[0].mxu0
    %v7314 = vadd.f32 %v7103, %v7313
    %v7315 = vpop.f32.mrb[0].mxu0
    %v7316 = vpop.f32.mrb[0].mxu0
    %v7317 = vadd.f32 %v7106, %v7316
    %v7318 = vpop.f32.mrb[0].mxu0
    %7319 = vmatprep.mubr.bf16.mxu0 0
    %7320 = vmatmul.mubr.bf16.gmra.mrb[0].mxu0 %v7241
    %v7321 = vpop.f32.mrb[0].mxu0
    %v7322 = vadd.f32 %v7111, %v7321
    %v7323 = vpop.f32.mrb[0].mxu0
    %v7324 = vpop.f32.mrb[0].mxu0
    %v7325 = vadd.f32 %v7114, %v7324
    %v7326 = vpop.f32.mrb[0].mxu0
    %7327 = vmatprep.mubr.bf16.mxu0 0
    %7328 = vmatmul.mubr.bf16.gmra.mrb[0].mxu0 %v7244
    %v7329 = vpop.f32.mrb[0].mxu0
    %v7330 = vadd.f32 %v7119, %v7329
    %v7331 = vpop.f32.mrb[0].mxu0
    %v7332 = vpop.f32.mrb[0].mxu0
    %v7333 = vadd.f32 %v7122, %v7332
    %v7334 = vpop.f32.mrb[0].mxu0
    %7335 = vmatprep.mubr.bf16.mxu0 0
    %7336 = vmatmul.mubr.bf16.gmra.mrb[0].mxu0 %v7247
    %v7337 = vpop.f32.mrb[0].mxu0
    %v7338 = vadd.f32 %v7127, %v7337
    %v7339 = vpop.f32.mrb[0].mxu0
    %v7340 = vpop.f32.mrb[0].mxu0
    %v7341 = vadd.f32 %v7130, %v7340
    %v7342 = vpop.f32.mrb[0].mxu0
    %7343 = vmatprep.mubr.bf16.mxu0 0
    %7344 = vmatmul.mubr.bf16.gmra.mrb[0].mxu0 %v7250
    %v7345 = vpop.f32.mrb[0].mxu0
    %v7346 = vadd.f32 %v7135, %v7345
    %v7347 = vpop.f32.mrb[0].mxu0
    %v7348 = vpop.f32.mrb[0].mxu0
    %v7349 = vadd.f32 %v7138, %v7348
    %v7350 = vpop.f32.mrb[0].mxu0
    %7351 = vmatprep.mubr.bf16.mxu0 0
    %7352 = vmatmul.mubr.bf16.gmra.mrb[0].mxu0 %v7253
    %v7353 = vpop.f32.mrb[0].mxu0
    %v7354 = vadd.f32 %v7143, %v7353
    %v7355 = vpop.f32.mrb[0].mxu0
    %v7356 = vpop.f32.mrb[0].mxu0
    %v7357 = vadd.f32 %v7146, %v7356
    %v7358 = vpop.f32.mrb[0].mxu0
    %7359 = vmatprep.mubr.bf16.mxu0 0
    %7360 = vmatmul.mubr.bf16.gmra.mrb[0].mxu0 %v7256
    %v7361 = vpop.f32.mrb[0].mxu0
    %v7362 = vadd.f32 %v7151, %v7361
    %v7363 = vpop.f32.mrb[0].mxu0
    %v7364 = vpop.f32.mrb[0].mxu0
    %v7365 = vadd.f32 %v7154, %v7364
    %v7366 = vpop.f32.mrb[0].mxu0
    %7367 = vmatprep.mubr.bf16.mxu0 0
    %7368 = vmatmul.mubr.bf16.gmra.mrb[0].mxu0 %v7259
    %v7369 = vpop.f32.mrb[0].mxu0
    %v7370 = vadd.f32 %v7159, %v7369
    %v7371 = vpop.f32.mrb[0].mxu0
    %v7372 = vpop.f32.mrb[0].mxu0
    %v7373 = vadd.f32 %v7162, %v7372
    %v7374 = vpop.f32.mrb[0].mxu0
    %7375 = vmatprep.mubr.bf16.mxu0 0
    %7376 = vmatmul.mubr.bf16.gmra.mrb[0].mxu0 %v7262
    %v7377 = vpop.f32.mrb[0].mxu0
    %v7378 = vadd.f32 %v7167, %v7377
    %v7379 = vpop.f32.mrb[0].mxu0
    %v7380 = vpop.f32.mrb[0].mxu0
    %v7381 = vadd.f32 %v7170, %v7380
    %v7382 = vpop.f32.mrb[0].mxu0
    %7383 = vmatprep.mubr.bf16.mxu0 0
    %7384 = vmatmul.mubr.bf16.gmra.mrb[0].mxu0 %v7265
    %v7385 = vpop.f32.mrb[0].mxu0
    %v7386 = vadd.f32 %v7175, %v7385
    %v7387 = vpop.f32.mrb[0].mxu0
    %v7388 = vpop.f32.mrb[0].mxu0
    %v7389 = vadd.f32 %v7178, %v7388
    %v7390 = vpop.f32.mrb[0].mxu0
    %7391 = vmatprep.mubr.bf16.mxu0 0
    %7392 = vmatmul.mubr.bf16.gmra.mrb[0].mxu0 %v7268
    %v7393 = vpop.f32.mrb[0].mxu0
    %v7394 = vadd.f32 %v7183, %v7393
    %v7395 = vpop.f32.mrb[0].mxu0
    %v7396 = vpop.f32.mrb[0].mxu0
    %v7397 = vadd.f32 %v7186, %v7396
    %v7398 = vpop.f32.mrb[0].mxu0
    %7399 = vmatprep.mubr.bf16.mxu0 0
    %7400 = vmatmul.mubr.bf16.gmra.mrb[0].mxu0 %v7271
    %v7401 = vpop.f32.mrb[0].mxu0
    %v7402 = vadd.f32 %v7191, %v7401
    %v7403 = vpop.f32.mrb[0].mxu0
    %v7404 = vpop.f32.mrb[0].mxu0
    %v7405 = vadd.f32 %v7194, %v7404
    %v7406 = vpop.f32.mrb[0].mxu0
    %7407 = vmatprep.mubr.bf16.mxu0 0
    %7408 = vmatmul.mubr.bf16.gmra.mrb[0].mxu0 %v7274
    %v7409 = vpop.f32.mrb[0].mxu0
    %v7410 = vadd.f32 %v7199, %v7409
    %v7411 = vpop.f32.mrb[0].mxu0
    %v7412 = vpop.f32.mrb[0].mxu0
    %v7413 = vadd.f32 %v7202, %v7412
    %v7414 = vpop.f32.mrb[0].mxu0
    %7415 = vmatprep.mubr.bf16.mxu0 0
    %7416 = vmatmul.mubr.bf16.gmra.mrb[0].mxu0 %v7277
    %v7417 = vpop.f32.mrb[0].mxu0
    %v7418 = vadd.f32 %v7207, %v7417
    %v7419 = vpop.f32.mrb[0].mxu0
    %v7420 = vpop.f32.mrb[0].mxu0
    %v7421 = vadd.f32 %v7210, %v7420
    %v7422 = vpop.f32.mrb[0].mxu0
    %7423 = vdwg.mxu0
    %v7424 = vld [vmem:[#allocation4 + $0x4] sm:$0xff]
    %v7425 = vld [vmem:[#allocation4 + $0xc] sm:$0xff]
    %v7426 = vld [vmem:[#allocation4 + $0x14] sm:$0xff]
    %v7427 = vld [vmem:[#allocation4 + $0x1c] sm:$0xff]
    %v7428 = vld [vmem:[#allocation4 + $0x24] sm:$0xff]
    %v7429 = vld [vmem:[#allocation4 + $0x2c] sm:$0xff]
    %v7430 = vld [vmem:[#allocation4 + $0x34] sm:$0xff]
    %v7431 = vld [vmem:[#allocation4 + $0x3c] sm:$0xff]
    %v7432 = vld [vmem:[#allocation4 + $0x44] sm:$0xff]
    %v7433 = vld [vmem:[#allocation4 + $0x4c] sm:$0xff]
    %v7434 = vld [vmem:[#allocation4 + $0x54] sm:$0xff]
    %v7435 = vld [vmem:[#allocation4 + $0x5c] sm:$0xff]
    %v7436 = vld [vmem:[#allocation4 + $0x64] sm:$0xff]
    %v7437 = vld [vmem:[#allocation4 + $0x6c] sm:$0xff]
    %v7438 = vld [vmem:[#allocation4 + $0x74] sm:$0xff]
    %v7439 = vld [vmem:[#allocation4 + $0x7c] sm:$0xff]
    %v7440 = vld [vmem:[#allocation4 + $0x84] sm:$0xff]
    %v7441 = vld [vmem:[#allocation4 + $0x8c] sm:$0xff]
    %v7442 = vld [vmem:[#allocation4 + $0x94] sm:$0xff]
    %v7443 = vld [vmem:[#allocation4 + $0x9c] sm:$0xff]
    %v7444 = vld [vmem:[#allocation4 + $0xa4] sm:$0xff]
    %v7445 = vld [vmem:[#allocation4 + $0xac] sm:$0xff]
    %v7446 = vld [vmem:[#allocation4 + $0xb4] sm:$0xff]
    %v7447 = vld [vmem:[#allocation4 + $0xbc] sm:$0xff]
    %v7448 = vld [vmem:[#allocation4 + $0xc4] sm:$0xff]
    %v7449 = vld [vmem:[#allocation4 + $0xcc] sm:$0xff]
    %v7450 = vld [vmem:[#allocation4 + $0xd4] sm:$0xff]
    %v7451 = vld [vmem:[#allocation4 + $0xdc] sm:$0xff]
    %v7452 = vpack.c.bf16 %v7425, %v7424
    %v7453 = vpack.c.bf16 %v7427, %v7426
    %v7454 = vpack.c.bf16 %v7429, %v7428
    %v7455 = vpack.c.bf16 %v7431, %v7430
    %v7456 = vpack.c.bf16 %v7433, %v7432
    %v7457 = vpack.c.bf16 %v7435, %v7434
    %v7458 = vpack.c.bf16 %v7437, %v7436
    %v7459 = vpack.c.bf16 %v7439, %v7438
    %v7460 = vpack.c.bf16 %v7441, %v7440
    %v7461 = vpack.c.bf16 %v7443, %v7442
    %v7462 = vpack.c.bf16 %v7445, %v7444
    %v7463 = vpack.c.bf16 %v7447, %v7446
    %v7464 = vpack.c.bf16 %v7449, %v7448
    %v7465 = vpack.c.bf16 %v7451, %v7450
    %s7466 = scalar_lea.vmem %s5, 64
    %v7467 = vld [vmem:[%s7466] sm:$0xf]
    %v7468 = vld [vmem:[%s7466 + $0x4] sm:$0xf]
    %v7469 = vld [vmem:[%s7466 + $0x8] sm:$0xf]
    %v7470 = vld [vmem:[%s7466 + $0xc] sm:$0xf]
    %v7471 = vld [vmem:[%s7466 + $0x10] sm:$0xf]
    %v7472 = vld [vmem:[%s7466 + $0x14] sm:$0xf]
    %v7473 = vld [vmem:[%s7466 + $0x18] sm:$0xf]
    %v7474 = vld [vmem:[%s7466 + $0x1c] sm:$0xf]
    %v7483 = vunpack.c.l.b16 %v7467
    %v7484 = vunpack.c.l.b16 %v7468
    %v7485 = vunpack.c.l.b16 %v7469
    %v7486 = vunpack.c.l.b16 %v7470
    %v7487 = vunpack.c.l.b16 %v7471
    %v7488 = vunpack.c.l.b16 %v7472
    %v7489 = vunpack.c.l.b16 %v7473
    %v7490 = vunpack.c.l.b16 %v7474
    %v7491 = vpack.c.b16 %v7484, %v7483
    %v7492 = vpack.c.b16 %v7486, %v7485
    %v7493 = vpack.c.b16 %v7488, %v7487
    %v7494 = vpack.c.b16 %v7490, %v7489
    %v7500 = vsel %vm76, %v7452, 0
    %v7503 = vsel %vm76, %v7453, 0
    %v7506 = vsel %vm76, %v7454, 0
    %v7509 = vsel %vm76, %v7455, 0
    %v7512 = vsel %vm76, %v7456, 0
    %v7515 = vsel %vm76, %v7457, 0
    %v7518 = vsel %vm76, %v7458, 0
    %v7521 = vsel %vm76, %v7459, 0
    %v7524 = vsel %vm76, %v7460, 0
    %v7527 = vsel %vm76, %v7461, 0
    %v7530 = vsel %vm76, %v7462, 0
    %v7533 = vsel %vm76, %v7463, 0
    %v7536 = vsel %vm76, %v7464, 0
    %v7539 = vsel %vm76, %v7465, 0
    %7541 = vmatprep.subr.bf16.mxu0 0
    %7542 = vmatpush1.bf16.msra.mxu0 %v7491
    %7543 = vmatprep.subr.bf16.mxu0 0
    %7544 = vmatpush1.bf16.msra.mxu0 %v7492
    %7545 = vmatprep.subr.bf16.mxu0 0
    %7546 = vmatpush1.bf16.msra.mxu0 %v7493
    %7547 = vmatprep.subr.bf16.mxu0 0
    %7548 = vmatpush1.bf16.msra.mxu0 %v7494
    %7549 = vmatprep.subr.bf16.mxu0 0
    %7550 = vmatpush1.bf16.msra.mxu0 0
    %7551 = vmatprep.subr.bf16.mxu0 0
    %7552 = vmatpush1.bf16.msra.mxu0 0
    %7553 = vmatprep.subr.bf16.mxu0 0
    %7554 = vmatpush1.bf16.msra.mxu0 0
    %7555 = vmatprep.subr.bf16.mxu0 0
    %7556 = vmatpush1.bf16.msra.mxu0 0
    %7557 = vmatprep.subr.bf16.mxu0 0
    %7558 = vmatpush1.bf16.msra.mxu0 0
    %7559 = vmatprep.subr.bf16.mxu0 0
    %7560 = vmatpush1.bf16.msra.mxu0 0
    %7561 = vmatprep.subr.bf16.mxu0 0
    %7562 = vmatpush1.bf16.msra.mxu0 0
    %7563 = vmatprep.subr.bf16.mxu0 0
    %7564 = vmatpush1.bf16.msra.mxu0 0
    %7565 = vmatprep.subr.bf16.mxu0 0
    %7566 = vmatpush1.bf16.msra.mxu0 0
    %7567 = vmatprep.subr.bf16.mxu0 0
    %7568 = vmatpush1.bf16.msra.mxu0 0
    %7569 = vmatprep.subr.bf16.mxu0 0
    %7570 = vmatpush1.bf16.msra.mxu0 0
    %7571 = vmatprep.subr.bf16.mxu0 0
    %7572 = vmatpush1.bf16.msra.mxu0 0
    %7573 = vmatprep.mubr.bf16.mxu0 0
    %7574 = vmatmul.mubr.bf16.gmra.mrb[0].mxu0 %v7500
    %v7575 = vpop.f32.mrb[0].mxu0
    %v7576 = vadd.f32 0.0, %v7575
    %v7577 = vpop.f32.mrb[0].mxu0
    %v7578 = vpop.f32.mrb[0].mxu0
    %v7579 = vadd.f32 0.0, %v7578
    %v7580 = vpop.f32.mrb[0].mxu0
    %7581 = vmatprep.mubr.bf16.mxu0 0
    %7582 = vmatmul.mubr.bf16.gmra.mrb[0].mxu0 %v7503
    %v7583 = vpop.f32.mrb[0].mxu0
    %v7584 = vadd.f32 0.0, %v7583
    %v7585 = vpop.f32.mrb[0].mxu0
    %v7586 = vpop.f32.mrb[0].mxu0
    %v7587 = vadd.f32 0.0, %v7586
    %v7588 = vpop.f32.mrb[0].mxu0
    %7589 = vmatprep.mubr.bf16.mxu0 0
    %7590 = vmatmul.mubr.bf16.gmra.mrb[0].mxu0 %v7506
    %v7591 = vpop.f32.mrb[0].mxu0
    %v7592 = vadd.f32 0.0, %v7591
    %v7593 = vpop.f32.mrb[0].mxu0
    %v7594 = vpop.f32.mrb[0].mxu0
    %v7595 = vadd.f32 0.0, %v7594
    %v7596 = vpop.f32.mrb[0].mxu0
    %7597 = vmatprep.mubr.bf16.mxu0 0
    %7598 = vmatmul.mubr.bf16.gmra.mrb[0].mxu0 %v7509
    %v7599 = vpop.f32.mrb[0].mxu0
    %v7600 = vadd.f32 0.0, %v7599
    %v7601 = vpop.f32.mrb[0].mxu0
    %v7602 = vpop.f32.mrb[0].mxu0
    %v7603 = vadd.f32 0.0, %v7602
    %v7604 = vpop.f32.mrb[0].mxu0
    %7605 = vmatprep.mubr.bf16.mxu0 0
    %7606 = vmatmul.mubr.bf16.gmra.mrb[0].mxu0 %v7512
    %v7607 = vpop.f32.mrb[0].mxu0
    %v7608 = vadd.f32 0.0, %v7607
    %v7609 = vpop.f32.mrb[0].mxu0
    %v7610 = vpop.f32.mrb[0].mxu0
    %v7611 = vadd.f32 0.0, %v7610
    %v7612 = vpop.f32.mrb[0].mxu0
    %7613 = vmatprep.mubr.bf16.mxu0 0
    %7614 = vmatmul.mubr.bf16.gmra.mrb[0].mxu0 %v7515
    %v7615 = vpop.f32.mrb[0].mxu0
    %v7616 = vadd.f32 0.0, %v7615
    %v7617 = vpop.f32.mrb[0].mxu0
    %v7618 = vpop.f32.mrb[0].mxu0
    %v7619 = vadd.f32 0.0, %v7618
    %v7620 = vpop.f32.mrb[0].mxu0
    %7621 = vmatprep.mubr.bf16.mxu0 0
    %7622 = vmatmul.mubr.bf16.gmra.mrb[0].mxu0 %v7518
    %v7623 = vpop.f32.mrb[0].mxu0
    %v7624 = vadd.f32 0.0, %v7623
    %v7625 = vpop.f32.mrb[0].mxu0
    %v7626 = vpop.f32.mrb[0].mxu0
    %v7627 = vadd.f32 0.0, %v7626
    %v7628 = vpop.f32.mrb[0].mxu0
    %7629 = vmatprep.mubr.bf16.mxu0 0
    %7630 = vmatmul.mubr.bf16.gmra.mrb[0].mxu0 %v7521
    %v7631 = vpop.f32.mrb[0].mxu0
    %v7632 = vadd.f32 0.0, %v7631
    %v7633 = vpop.f32.mrb[0].mxu0
    %v7634 = vpop.f32.mrb[0].mxu0
    %v7635 = vadd.f32 0.0, %v7634
    %v7636 = vpop.f32.mrb[0].mxu0
    %7637 = vmatprep.mubr.bf16.mxu0 0
    %7638 = vmatmul.mubr.bf16.gmra.mrb[0].mxu0 %v7524
    %v7639 = vpop.f32.mrb[0].mxu0
    %v7640 = vadd.f32 0.0, %v7639
    %v7641 = vpop.f32.mrb[0].mxu0
    %v7642 = vpop.f32.mrb[0].mxu0
    %v7643 = vadd.f32 0.0, %v7642
    %v7644 = vpop.f32.mrb[0].mxu0
    %7645 = vmatprep.mubr.bf16.mxu0 0
    %7646 = vmatmul.mubr.bf16.gmra.mrb[0].mxu0 %v7527
    %v7647 = vpop.f32.mrb[0].mxu0
    %v7648 = vadd.f32 0.0, %v7647
    %v7649 = vpop.f32.mrb[0].mxu0
    %v7650 = vpop.f32.mrb[0].mxu0
    %v7651 = vadd.f32 0.0, %v7650
    %v7652 = vpop.f32.mrb[0].mxu0
    %7653 = vmatprep.mubr.bf16.mxu0 0
    %7654 = vmatmul.mubr.bf16.gmra.mrb[0].mxu0 %v7530
    %v7655 = vpop.f32.mrb[0].mxu0
    %v7656 = vadd.f32 0.0, %v7655
    %v7657 = vpop.f32.mrb[0].mxu0
    %v7658 = vpop.f32.mrb[0].mxu0
    %v7659 = vadd.f32 0.0, %v7658
    %v7660 = vpop.f32.mrb[0].mxu0
    %7661 = vmatprep.mubr.bf16.mxu0 0
    %7662 = vmatmul.mubr.bf16.gmra.mrb[0].mxu0 %v7533
    %v7663 = vpop.f32.mrb[0].mxu0
    %v7664 = vadd.f32 0.0, %v7663
    %v7665 = vpop.f32.mrb[0].mxu0
    %v7666 = vpop.f32.mrb[0].mxu0
    %v7667 = vadd.f32 0.0, %v7666
    %v7668 = vpop.f32.mrb[0].mxu0
    %7669 = vmatprep.mubr.bf16.mxu0 0
    %7670 = vmatmul.mubr.bf16.gmra.mrb[0].mxu0 %v7536
    %v7671 = vpop.f32.mrb[0].mxu0
    %v7672 = vadd.f32 0.0, %v7671
    %v7673 = vpop.f32.mrb[0].mxu0
    %v7674 = vpop.f32.mrb[0].mxu0
    %v7675 = vadd.f32 0.0, %v7674
    %v7676 = vpop.f32.mrb[0].mxu0
    %7677 = vmatprep.mubr.bf16.mxu0 0
    %7678 = vmatmul.mubr.bf16.gmra.mrb[0].mxu0 %v7539
    %v7679 = vpop.f32.mrb[0].mxu0
    %v7680 = vadd.f32 0.0, %v7679
    %v7681 = vpop.f32.mrb[0].mxu0
    %v7682 = vpop.f32.mrb[0].mxu0
    %v7683 = vadd.f32 0.0, %v7682
    %v7684 = vpop.f32.mrb[0].mxu0
    %7685 = vdwg.mxu0
    %v7686 = vadd.f32 %v7314, %v7576
    %v7687 = vadd.f32 %v7317, %v7579
    %v7688 = vadd.f32 %v7322, %v7584
    %v7689 = vadd.f32 %v7325, %v7587
    %v7690 = vadd.f32 %v7330, %v7592
    %v7691 = vadd.f32 %v7333, %v7595
    %v7692 = vadd.f32 %v7338, %v7600
    %v7693 = vadd.f32 %v7341, %v7603
    %v7694 = vadd.f32 %v7346, %v7608
    %v7695 = vadd.f32 %v7349, %v7611
    %v7696 = vadd.f32 %v7354, %v7616
    %v7697 = vadd.f32 %v7357, %v7619
    %v7698 = vadd.f32 %v7362, %v7624
    %v7699 = vadd.f32 %v7365, %v7627
    %v7700 = vadd.f32 %v7370, %v7632
    %v7701 = vadd.f32 %v7373, %v7635
    %v7702 = vadd.f32 %v7378, %v7640
    %v7703 = vadd.f32 %v7381, %v7643
    %v7704 = vadd.f32 %v7386, %v7648
    %v7705 = vadd.f32 %v7389, %v7651
    %v7706 = vadd.f32 %v7394, %v7656
    %v7707 = vadd.f32 %v7397, %v7659
    %v7708 = vadd.f32 %v7402, %v7664
    %v7709 = vadd.f32 %v7405, %v7667
    %v7710 = vadd.f32 %v7410, %v7672
    %v7711 = vadd.f32 %v7413, %v7675
    %v7712 = vadd.f32 %v7418, %v7680
    %v7713 = vadd.f32 %v7421, %v7683
    %v7714 = vld [vmem:[#allocation4 + $0x16] sm:$0xff]
    %v7715 = vld [vmem:[#allocation4 + $0x1e] sm:$0xff]
    %v7716 = vld [vmem:[#allocation4 + $0x26] sm:$0xff]
    %v7717 = vld [vmem:[#allocation4 + $0x2e] sm:$0xff]
    %v7718 = vld [vmem:[#allocation4 + $0x36] sm:$0xff]
    %v7719 = vld [vmem:[#allocation4 + $0x3e] sm:$0xff]
    %v7720 = vld [vmem:[#allocation4 + $0x46] sm:$0xff]
    %v7721 = vld [vmem:[#allocation4 + $0x4e] sm:$0xff]
    %v7722 = vld [vmem:[#allocation4 + $0x56] sm:$0xff]
    %v7723 = vld [vmem:[#allocation4 + $0x5e] sm:$0xff]
    %v7724 = vld [vmem:[#allocation4 + $0x66] sm:$0xff]
    %v7725 = vld [vmem:[#allocation4 + $0x6e] sm:$0xff]
    %v7726 = vld [vmem:[#allocation4 + $0x76] sm:$0xff]
    %v7727 = vld [vmem:[#allocation4 + $0x7e] sm:$0xff]
    %v7728 = vld [vmem:[#allocation4 + $0x86] sm:$0xff]
    %v7729 = vld [vmem:[#allocation4 + $0x8e] sm:$0xff]
    %v7730 = vld [vmem:[#allocation4 + $0x96] sm:$0xff]
    %v7731 = vld [vmem:[#allocation4 + $0x9e] sm:$0xff]
    %v7732 = vld [vmem:[#allocation4 + $0xa6] sm:$0xff]
    %v7733 = vld [vmem:[#allocation4 + $0xae] sm:$0xff]
    %v7734 = vld [vmem:[#allocation4 + $0xb6] sm:$0xff]
    %v7735 = vld [vmem:[#allocation4 + $0xbe] sm:$0xff]
    %v7736 = vld [vmem:[#allocation4 + $0xc6] sm:$0xff]
    %v7737 = vld [vmem:[#allocation4 + $0xce] sm:$0xff]
    %v7738 = vld [vmem:[#allocation4 + $0xd6] sm:$0xff]
    %v7739 = vld [vmem:[#allocation4 + $0xde] sm:$0xff]
    %v7740 = vld [vmem:[#allocation4 + $0xe6] sm:$0xff]
    %v7741 = vld [vmem:[#allocation4 + $0xee] sm:$0xff]
    %v7742 = vpack.c.bf16 %v7715, %v7714
    %v7743 = vpack.c.bf16 %v7717, %v7716
    %v7744 = vpack.c.bf16 %v7719, %v7718
    %v7745 = vpack.c.bf16 %v7721, %v7720
    %v7746 = vpack.c.bf16 %v7723, %v7722
    %v7747 = vpack.c.bf16 %v7725, %v7724
    %v7748 = vpack.c.bf16 %v7727, %v7726
    %v7749 = vpack.c.bf16 %v7729, %v7728
    %v7750 = vpack.c.bf16 %v7731, %v7730
    %v7751 = vpack.c.bf16 %v7733, %v7732
    %v7752 = vpack.c.bf16 %v7735, %v7734
    %v7753 = vpack.c.bf16 %v7737, %v7736
    %v7754 = vpack.c.bf16 %v7739, %v7738
    %v7755 = vpack.c.bf16 %v7741, %v7740
    %s7756 = scalar_lea.vmem %s5, 96
    %v7757 = vld [vmem:[%s7756] sm:$0xf]
    %v7758 = vld [vmem:[%s7756 + $0x4] sm:$0xf]
    %v7759 = vld [vmem:[%s7756 + $0x8] sm:$0xf]
    %v7760 = vld [vmem:[%s7756 + $0xc] sm:$0xf]
    %v7761 = vld [vmem:[%s7756 + $0x10] sm:$0xf]
    %v7762 = vld [vmem:[%s7756 + $0x14] sm:$0xf]
    %v7763 = vld [vmem:[%s7756 + $0x18] sm:$0xf]
    %v7764 = vld [vmem:[%s7756 + $0x1c] sm:$0xf]
    %v7773 = vunpack.c.l.b16 %v7757
    %v7774 = vunpack.c.l.b16 %v7758
    %v7775 = vunpack.c.l.b16 %v7759
    %v7776 = vunpack.c.l.b16 %v7760
    %v7777 = vunpack.c.l.b16 %v7761
    %v7778 = vunpack.c.l.b16 %v7762
    %v7779 = vunpack.c.l.b16 %v7763
    %v7780 = vunpack.c.l.b16 %v7764
    %v7781 = vpack.c.b16 %v7774, %v7773
    %v7782 = vpack.c.b16 %v7776, %v7775
    %v7783 = vpack.c.b16 %v7778, %v7777
    %v7784 = vpack.c.b16 %v7780, %v7779
    %v7790 = vsel %vm76, %v7742, 0
    %v7793 = vsel %vm76, %v7743, 0
    %v7796 = vsel %vm76, %v7744, 0
    %v7799 = vsel %vm76, %v7745, 0
    %v7802 = vsel %vm76, %v7746, 0
    %v7805 = vsel %vm76, %v7747, 0
    %v7808 = vsel %vm76, %v7748, 0
    %v7811 = vsel %vm76, %v7749, 0
    %v7814 = vsel %vm76, %v7750, 0
    %v7817 = vsel %vm76, %v7751, 0
    %v7820 = vsel %vm76, %v7752, 0
    %v7823 = vsel %vm76, %v7753, 0
    %v7826 = vsel %vm76, %v7754, 0
    %v7829 = vsel %vm76, %v7755, 0
    %7831 = vmatprep.subr.bf16.mxu0 0
    %7832 = vmatpush1.bf16.msra.mxu0 %v7781
    %7833 = vmatprep.subr.bf16.mxu0 0
    %7834 = vmatpush1.bf16.msra.mxu0 %v7782
    %7835 = vmatprep.subr.bf16.mxu0 0
    %7836 = vmatpush1.bf16.msra.mxu0 %v7783
    %7837 = vmatprep.subr.bf16.mxu0 0
    %7838 = vmatpush1.bf16.msra.mxu0 %v7784
    %7839 = vmatprep.subr.bf16.mxu0 0
    %7840 = vmatpush1.bf16.msra.mxu0 0
    %7841 = vmatprep.subr.bf16.mxu0 0
    %7842 = vmatpush1.bf16.msra.mxu0 0
    %7843 = vmatprep.subr.bf16.mxu0 0
    %7844 = vmatpush1.bf16.msra.mxu0 0
    %7845 = vmatprep.subr.bf16.mxu0 0
    %7846 = vmatpush1.bf16.msra.mxu0 0
    %7847 = vmatprep.subr.bf16.mxu0 0
    %7848 = vmatpush1.bf16.msra.mxu0 0
    %7849 = vmatprep.subr.bf16.mxu0 0
    %7850 = vmatpush1.bf16.msra.mxu0 0
    %7851 = vmatprep.subr.bf16.mxu0 0
    %7852 = vmatpush1.bf16.msra.mxu0 0
    %7853 = vmatprep.subr.bf16.mxu0 0
    %7854 = vmatpush1.bf16.msra.mxu0 0
    %7855 = vmatprep.subr.bf16.mxu0 0
    %7856 = vmatpush1.bf16.msra.mxu0 0
    %7857 = vmatprep.subr.bf16.mxu0 0
    %7858 = vmatpush1.bf16.msra.mxu0 0
    %7859 = vmatprep.subr.bf16.mxu0 0
    %7860 = vmatpush1.bf16.msra.mxu0 0
    %7861 = vmatprep.subr.bf16.mxu0 0
    %7862 = vmatpush1.bf16.msra.mxu0 0
    %7863 = vmatprep.mubr.bf16.mxu0 0
    %7864 = vmatmul.mubr.bf16.gmra.mrb[0].mxu0 %v7790
    %v7865 = vpop.f32.mrb[0].mxu0
    %v7866 = vadd.f32 0.0, %v7865
    %v7867 = vpop.f32.mrb[0].mxu0
    %v7868 = vpop.f32.mrb[0].mxu0
    %v7869 = vadd.f32 0.0, %v7868
    %v7870 = vpop.f32.mrb[0].mxu0
    %7871 = vmatprep.mubr.bf16.mxu0 0
    %7872 = vmatmul.mubr.bf16.gmra.mrb[0].mxu0 %v7793
    %v7873 = vpop.f32.mrb[0].mxu0
    %v7874 = vadd.f32 0.0, %v7873
    %v7875 = vpop.f32.mrb[0].mxu0
    %v7876 = vpop.f32.mrb[0].mxu0
    %v7877 = vadd.f32 0.0, %v7876
    %v7878 = vpop.f32.mrb[0].mxu0
    %7879 = vmatprep.mubr.bf16.mxu0 0
    %7880 = vmatmul.mubr.bf16.gmra.mrb[0].mxu0 %v7796
    %v7881 = vpop.f32.mrb[0].mxu0
    %v7882 = vadd.f32 0.0, %v7881
    %v7883 = vpop.f32.mrb[0].mxu0
    %v7884 = vpop.f32.mrb[0].mxu0
    %v7885 = vadd.f32 0.0, %v7884
    %v7886 = vpop.f32.mrb[0].mxu0
    %7887 = vmatprep.mubr.bf16.mxu0 0
    %7888 = vmatmul.mubr.bf16.gmra.mrb[0].mxu0 %v7799
    %v7889 = vpop.f32.mrb[0].mxu0
    %v7890 = vadd.f32 0.0, %v7889
    %v7891 = vpop.f32.mrb[0].mxu0
    %v7892 = vpop.f32.mrb[0].mxu0
    %v7893 = vadd.f32 0.0, %v7892
    %v7894 = vpop.f32.mrb[0].mxu0
    %7895 = vmatprep.mubr.bf16.mxu0 0
    %7896 = vmatmul.mubr.bf16.gmra.mrb[0].mxu0 %v7802
    %v7897 = vpop.f32.mrb[0].mxu0
    %v7898 = vadd.f32 0.0, %v7897
    %v7899 = vpop.f32.mrb[0].mxu0
    %v7900 = vpop.f32.mrb[0].mxu0
    %v7901 = vadd.f32 0.0, %v7900
    %v7902 = vpop.f32.mrb[0].mxu0
    %7903 = vmatprep.mubr.bf16.mxu0 0
    %7904 = vmatmul.mubr.bf16.gmra.mrb[0].mxu0 %v7805
    %v7905 = vpop.f32.mrb[0].mxu0
    %v7906 = vadd.f32 0.0, %v7905
    %v7907 = vpop.f32.mrb[0].mxu0
    %v7908 = vpop.f32.mrb[0].mxu0
    %v7909 = vadd.f32 0.0, %v7908
    %v7910 = vpop.f32.mrb[0].mxu0
    %7911 = vmatprep.mubr.bf16.mxu0 0
    %7912 = vmatmul.mubr.bf16.gmra.mrb[0].mxu0 %v7808
    %v7913 = vpop.f32.mrb[0].mxu0
    %v7914 = vadd.f32 0.0, %v7913
    %v7915 = vpop.f32.mrb[0].mxu0
    %v7916 = vpop.f32.mrb[0].mxu0
    %v7917 = vadd.f32 0.0, %v7916
    %v7918 = vpop.f32.mrb[0].mxu0
    %7919 = vmatprep.mubr.bf16.mxu0 0
    %7920 = vmatmul.mubr.bf16.gmra.mrb[0].mxu0 %v7811
    %v7921 = vpop.f32.mrb[0].mxu0
    %v7922 = vadd.f32 0.0, %v7921
    %v7923 = vpop.f32.mrb[0].mxu0
    %v7924 = vpop.f32.mrb[0].mxu0
    %v7925 = vadd.f32 0.0, %v7924
    %v7926 = vpop.f32.mrb[0].mxu0
    %7927 = vmatprep.mubr.bf16.mxu0 0
    %7928 = vmatmul.mubr.bf16.gmra.mrb[0].mxu0 %v7814
    %v7929 = vpop.f32.mrb[0].mxu0
    %v7930 = vadd.f32 0.0, %v7929
    %v7931 = vpop.f32.mrb[0].mxu0
    %v7932 = vpop.f32.mrb[0].mxu0
    %v7933 = vadd.f32 0.0, %v7932
    %v7934 = vpop.f32.mrb[0].mxu0
    %7935 = vmatprep.mubr.bf16.mxu0 0
    %7936 = vmatmul.mubr.bf16.gmra.mrb[0].mxu0 %v7817
    %v7937 = vpop.f32.mrb[0].mxu0
    %v7938 = vadd.f32 0.0, %v7937
    %v7939 = vpop.f32.mrb[0].mxu0
    %v7940 = vpop.f32.mrb[0].mxu0
    %v7941 = vadd.f32 0.0, %v7940
    %v7942 = vpop.f32.mrb[0].mxu0
    %7943 = vmatprep.mubr.bf16.mxu0 0
    %7944 = vmatmul.mubr.bf16.gmra.mrb[0].mxu0 %v7820
    %v7945 = vpop.f32.mrb[0].mxu0
    %v7946 = vadd.f32 0.0, %v7945
    %v7947 = vpop.f32.mrb[0].mxu0
    %v7948 = vpop.f32.mrb[0].mxu0
    %v7949 = vadd.f32 0.0, %v7948
    %v7950 = vpop.f32.mrb[0].mxu0
    %7951 = vmatprep.mubr.bf16.mxu0 0
    %7952 = vmatmul.mubr.bf16.gmra.mrb[0].mxu0 %v7823
    %v7953 = vpop.f32.mrb[0].mxu0
    %v7954 = vadd.f32 0.0, %v7953
    %v7955 = vpop.f32.mrb[0].mxu0
    %v7956 = vpop.f32.mrb[0].mxu0
    %v7957 = vadd.f32 0.0, %v7956
    %v7958 = vpop.f32.mrb[0].mxu0
    %7959 = vmatprep.mubr.bf16.mxu0 0
    %7960 = vmatmul.mubr.bf16.gmra.mrb[0].mxu0 %v7826
    %v7961 = vpop.f32.mrb[0].mxu0
    %v7962 = vadd.f32 0.0, %v7961
    %v7963 = vpop.f32.mrb[0].mxu0
    %v7964 = vpop.f32.mrb[0].mxu0
    %v7965 = vadd.f32 0.0, %v7964
    %v7966 = vpop.f32.mrb[0].mxu0
    %7967 = vmatprep.mubr.bf16.mxu0 0
    %7968 = vmatmul.mubr.bf16.gmra.mrb[0].mxu0 %v7829
    %v7969 = vpop.f32.mrb[0].mxu0
    %v7970 = vadd.f32 0.0, %v7969
    %v7971 = vpop.f32.mrb[0].mxu0
    %v7972 = vpop.f32.mrb[0].mxu0
    %v7973 = vadd.f32 0.0, %v7972
    %v7974 = vpop.f32.mrb[0].mxu0
    %7975 = vdwg.mxu0
    %v7976 = vadd.f32 %v7686, %v7866
    %v7977 = vadd.f32 %v7687, %v7869
    %v7978 = vadd.f32 %v7688, %v7874
    %v7979 = vadd.f32 %v7689, %v7877
    %v7980 = vadd.f32 %v7690, %v7882
    %v7981 = vadd.f32 %v7691, %v7885
    %v7982 = vadd.f32 %v7692, %v7890
    %v7983 = vadd.f32 %v7693, %v7893
    %v7984 = vadd.f32 %v7694, %v7898
    %v7985 = vadd.f32 %v7695, %v7901
    %v7986 = vadd.f32 %v7696, %v7906
    %v7987 = vadd.f32 %v7697, %v7909
    %v7988 = vadd.f32 %v7698, %v7914
    %v7989 = vadd.f32 %v7699, %v7917
    %v7990 = vadd.f32 %v7700, %v7922
    %v7991 = vadd.f32 %v7701, %v7925
    %v7992 = vadd.f32 %v7702, %v7930
    %v7993 = vadd.f32 %v7703, %v7933
    %v7994 = vadd.f32 %v7704, %v7938
    %v7995 = vadd.f32 %v7705, %v7941
    %v7996 = vadd.f32 %v7706, %v7946
    %v7997 = vadd.f32 %v7707, %v7949
    %v7998 = vadd.f32 %v7708, %v7954
    %v7999 = vadd.f32 %v7709, %v7957
    %v8000 = vadd.f32 %v7710, %v7962
    %v8001 = vadd.f32 %v7711, %v7965
    %v8002 = vadd.f32 %v7712, %v7970
    %v8003 = vadd.f32 %v7713, %v7973
    %v8004 = vld [vmem:[#allocation4 + $0x18] sm:$0xff]
    %v8005 = vld [vmem:[#allocation4 + $0x20] sm:$0xff]
    %v8006 = vld [vmem:[#allocation4 + $0x28] sm:$0xff]
    %v8007 = vld [vmem:[#allocation4 + $0x30] sm:$0xff]
    %v8008 = vld [vmem:[#allocation4 + $0x38] sm:$0xff]
    %v8009 = vld [vmem:[#allocation4 + $0x40] sm:$0xff]
    %v8010 = vld [vmem:[#allocation4 + $0x48] sm:$0xff]
    %v8011 = vld [vmem:[#allocation4 + $0x50] sm:$0xff]
    %v8012 = vld [vmem:[#allocation4 + $0x58] sm:$0xff]
    %v8013 = vld [vmem:[#allocation4 + $0x60] sm:$0xff]
    %v8014 = vld [vmem:[#allocation4 + $0x68] sm:$0xff]
    %v8015 = vld [vmem:[#allocation4 + $0x70] sm:$0xff]
    %v8016 = vld [vmem:[#allocation4 + $0x78] sm:$0xff]
    %v8017 = vld [vmem:[#allocation4 + $0x80] sm:$0xff]
    %v8018 = vld [vmem:[#allocation4 + $0x88] sm:$0xff]
    %v8019 = vld [vmem:[#allocation4 + $0x90] sm:$0xff]
    %v8020 = vld [vmem:[#allocation4 + $0x98] sm:$0xff]
    %v8021 = vld [vmem:[#allocation4 + $0xa0] sm:$0xff]
    %v8022 = vld [vmem:[#allocation4 + $0xa8] sm:$0xff]
    %v8023 = vld [vmem:[#allocation4 + $0xb0] sm:$0xff]
    %v8024 = vld [vmem:[#allocation4 + $0xb8] sm:$0xff]
    %v8025 = vld [vmem:[#allocation4 + $0xc0] sm:$0xff]
    %v8026 = vld [vmem:[#allocation4 + $0xc8] sm:$0xff]
    %v8027 = vld [vmem:[#allocation4 + $0xd0] sm:$0xff]
    %v8028 = vld [vmem:[#allocation4 + $0xd8] sm:$0xff]
    %v8029 = vld [vmem:[#allocation4 + $0xe0] sm:$0xff]
    %v8030 = vld [vmem:[#allocation4 + $0xe8] sm:$0xff]
    %v8031 = vld [vmem:[#allocation4 + $0xf0] sm:$0xff]
    %v8032 = vpack.c.bf16 %v8005, %v8004
    %v8033 = vpack.c.bf16 %v8007, %v8006
    %v8034 = vpack.c.bf16 %v8009, %v8008
    %v8035 = vpack.c.bf16 %v8011, %v8010
    %v8036 = vpack.c.bf16 %v8013, %v8012
    %v8037 = vpack.c.bf16 %v8015, %v8014
    %v8038 = vpack.c.bf16 %v8017, %v8016
    %v8039 = vpack.c.bf16 %v8019, %v8018
    %v8040 = vpack.c.bf16 %v8021, %v8020
    %v8041 = vpack.c.bf16 %v8023, %v8022
    %v8042 = vpack.c.bf16 %v8025, %v8024
    %v8043 = vpack.c.bf16 %v8027, %v8026
    %v8044 = vpack.c.bf16 %v8029, %v8028
    %v8045 = vpack.c.bf16 %v8031, %v8030
    %s8046 = scalar_lea.vmem %s5, 128
    %v8047 = vld [vmem:[%s8046] sm:$0xf]
    %v8048 = vld [vmem:[%s8046 + $0x4] sm:$0xf]
    %v8049 = vld [vmem:[%s8046 + $0x8] sm:$0xf]
    %v8050 = vld [vmem:[%s8046 + $0xc] sm:$0xf]
    %v8051 = vld [vmem:[%s8046 + $0x10] sm:$0xf]
    %v8052 = vld [vmem:[%s8046 + $0x14] sm:$0xf]
    %v8053 = vld [vmem:[%s8046 + $0x18] sm:$0xf]
    %v8054 = vld [vmem:[%s8046 + $0x1c] sm:$0xf]
    %v8063 = vunpack.c.l.b16 %v8047
    %v8064 = vunpack.c.l.b16 %v8048
    %v8065 = vunpack.c.l.b16 %v8049
    %v8066 = vunpack.c.l.b16 %v8050
    %v8067 = vunpack.c.l.b16 %v8051
    %v8068 = vunpack.c.l.b16 %v8052
    %v8069 = vunpack.c.l.b16 %v8053
    %v8070 = vunpack.c.l.b16 %v8054
    %v8071 = vpack.c.b16 %v8064, %v8063
    %v8072 = vpack.c.b16 %v8066, %v8065
    %v8073 = vpack.c.b16 %v8068, %v8067
    %v8074 = vpack.c.b16 %v8070, %v8069
    %v8080 = vsel %vm76, %v8032, 0
    %v8083 = vsel %vm76, %v8033, 0
    %v8086 = vsel %vm76, %v8034, 0
    %v8089 = vsel %vm76, %v8035, 0
    %v8092 = vsel %vm76, %v8036, 0
    %v8095 = vsel %vm76, %v8037, 0
    %v8098 = vsel %vm76, %v8038, 0
    %v8101 = vsel %vm76, %v8039, 0
    %v8104 = vsel %vm76, %v8040, 0
    %v8107 = vsel %vm76, %v8041, 0
    %v8110 = vsel %vm76, %v8042, 0
    %v8113 = vsel %vm76, %v8043, 0
    %v8116 = vsel %vm76, %v8044, 0
    %v8119 = vsel %vm76, %v8045, 0
    %8121 = vmatprep.subr.bf16.mxu0 0
    %8122 = vmatpush1.bf16.msra.mxu0 %v8071
    %8123 = vmatprep.subr.bf16.mxu0 0
    %8124 = vmatpush1.bf16.msra.mxu0 %v8072
    %8125 = vmatprep.subr.bf16.mxu0 0
    %8126 = vmatpush1.bf16.msra.mxu0 %v8073
    %8127 = vmatprep.subr.bf16.mxu0 0
    %8128 = vmatpush1.bf16.msra.mxu0 %v8074
    %8129 = vmatprep.subr.bf16.mxu0 0
    %8130 = vmatpush1.bf16.msra.mxu0 0
    %8131 = vmatprep.subr.bf16.mxu0 0
    %8132 = vmatpush1.bf16.msra.mxu0 0
    %8133 = vmatprep.subr.bf16.mxu0 0
    %8134 = vmatpush1.bf16.msra.mxu0 0
    %8135 = vmatprep.subr.bf16.mxu0 0
    %8136 = vmatpush1.bf16.msra.mxu0 0
    %8137 = vmatprep.subr.bf16.mxu0 0
    %8138 = vmatpush1.bf16.msra.mxu0 0
    %8139 = vmatprep.subr.bf16.mxu0 0
    %8140 = vmatpush1.bf16.msra.mxu0 0
    %8141 = vmatprep.subr.bf16.mxu0 0
    %8142 = vmatpush1.bf16.msra.mxu0 0
    %8143 = vmatprep.subr.bf16.mxu0 0
    %8144 = vmatpush1.bf16.msra.mxu0 0
    %8145 = vmatprep.subr.bf16.mxu0 0
    %8146 = vmatpush1.bf16.msra.mxu0 0
    %8147 = vmatprep.subr.bf16.mxu0 0
    %8148 = vmatpush1.bf16.msra.mxu0 0
    %8149 = vmatprep.subr.bf16.mxu0 0
    %8150 = vmatpush1.bf16.msra.mxu0 0
    %8151 = vmatprep.subr.bf16.mxu0 0
    %8152 = vmatpush1.bf16.msra.mxu0 0
    %8153 = vmatprep.mubr.bf16.mxu0 0
    %8154 = vmatmul.mubr.bf16.gmra.mrb[0].mxu0 %v8080
    %v8155 = vpop.f32.mrb[0].mxu0
    %v8156 = vadd.f32 0.0, %v8155
    %v8157 = vpop.f32.mrb[0].mxu0
    %v8158 = vpop.f32.mrb[0].mxu0
    %v8159 = vadd.f32 0.0, %v8158
    %v8160 = vpop.f32.mrb[0].mxu0
    %8161 = vmatprep.mubr.bf16.mxu0 0
    %8162 = vmatmul.mubr.bf16.gmra.mrb[0].mxu0 %v8083
    %v8163 = vpop.f32.mrb[0].mxu0
    %v8164 = vadd.f32 0.0, %v8163
    %v8165 = vpop.f32.mrb[0].mxu0
    %v8166 = vpop.f32.mrb[0].mxu0
    %v8167 = vadd.f32 0.0, %v8166
    %v8168 = vpop.f32.mrb[0].mxu0
    %8169 = vmatprep.mubr.bf16.mxu0 0
    %8170 = vmatmul.mubr.bf16.gmra.mrb[0].mxu0 %v8086
    %v8171 = vpop.f32.mrb[0].mxu0
    %v8172 = vadd.f32 0.0, %v8171
    %v8173 = vpop.f32.mrb[0].mxu0
    %v8174 = vpop.f32.mrb[0].mxu0
    %v8175 = vadd.f32 0.0, %v8174
    %v8176 = vpop.f32.mrb[0].mxu0
    %8177 = vmatprep.mubr.bf16.mxu0 0
    %8178 = vmatmul.mubr.bf16.gmra.mrb[0].mxu0 %v8089
    %v8179 = vpop.f32.mrb[0].mxu0
    %v8180 = vadd.f32 0.0, %v8179
    %v8181 = vpop.f32.mrb[0].mxu0
    %v8182 = vpop.f32.mrb[0].mxu0
    %v8183 = vadd.f32 0.0, %v8182
    %v8184 = vpop.f32.mrb[0].mxu0
    %8185 = vmatprep.mubr.bf16.mxu0 0
    %8186 = vmatmul.mubr.bf16.gmra.mrb[0].mxu0 %v8092
    %v8187 = vpop.f32.mrb[0].mxu0
    %v8188 = vadd.f32 0.0, %v8187
    %v8189 = vpop.f32.mrb[0].mxu0
    %v8190 = vpop.f32.mrb[0].mxu0
    %v8191 = vadd.f32 0.0, %v8190
    %v8192 = vpop.f32.mrb[0].mxu0
    %8193 = vmatprep.mubr.bf16.mxu0 0
    %8194 = vmatmul.mubr.bf16.gmra.mrb[0].mxu0 %v8095
    %v8195 = vpop.f32.mrb[0].mxu0
    %v8196 = vadd.f32 0.0, %v8195
    %v8197 = vpop.f32.mrb[0].mxu0
    %v8198 = vpop.f32.mrb[0].mxu0
    %v8199 = vadd.f32 0.0, %v8198
    %v8200 = vpop.f32.mrb[0].mxu0
    %8201 = vmatprep.mubr.bf16.mxu0 0
    %8202 = vmatmul.mubr.bf16.gmra.mrb[0].mxu0 %v8098
    %v8203 = vpop.f32.mrb[0].mxu0
    %v8204 = vadd.f32 0.0, %v8203
    %v8205 = vpop.f32.mrb[0].mxu0
    %v8206 = vpop.f32.mrb[0].mxu0
    %v8207 = vadd.f32 0.0, %v8206
    %v8208 = vpop.f32.mrb[0].mxu0
    %8209 = vmatprep.mubr.bf16.mxu0 0
    %8210 = vmatmul.mubr.bf16.gmra.mrb[0].mxu0 %v8101
    %v8211 = vpop.f32.mrb[0].mxu0
    %v8212 = vadd.f32 0.0, %v8211
    %v8213 = vpop.f32.mrb[0].mxu0
    %v8214 = vpop.f32.mrb[0].mxu0
    %v8215 = vadd.f32 0.0, %v8214
    %v8216 = vpop.f32.mrb[0].mxu0
    %8217 = vmatprep.mubr.bf16.mxu0 0
    %8218 = vmatmul.mubr.bf16.gmra.mrb[0].mxu0 %v8104
    %v8219 = vpop.f32.mrb[0].mxu0
    %v8220 = vadd.f32 0.0, %v8219
    %v8221 = vpop.f32.mrb[0].mxu0
    %v8222 = vpop.f32.mrb[0].mxu0
    %v8223 = vadd.f32 0.0, %v8222
    %v8224 = vpop.f32.mrb[0].mxu0
    %8225 = vmatprep.mubr.bf16.mxu0 0
    %8226 = vmatmul.mubr.bf16.gmra.mrb[0].mxu0 %v8107
    %v8227 = vpop.f32.mrb[0].mxu0
    %v8228 = vadd.f32 0.0, %v8227
    %v8229 = vpop.f32.mrb[0].mxu0
    %v8230 = vpop.f32.mrb[0].mxu0
    %v8231 = vadd.f32 0.0, %v8230
    %v8232 = vpop.f32.mrb[0].mxu0
    %8233 = vmatprep.mubr.bf16.mxu0 0
    %8234 = vmatmul.mubr.bf16.gmra.mrb[0].mxu0 %v8110
    %v8235 = vpop.f32.mrb[0].mxu0
    %v8236 = vadd.f32 0.0, %v8235
    %v8237 = vpop.f32.mrb[0].mxu0
    %v8238 = vpop.f32.mrb[0].mxu0
    %v8239 = vadd.f32 0.0, %v8238
    %v8240 = vpop.f32.mrb[0].mxu0
    %8241 = vmatprep.mubr.bf16.mxu0 0
    %8242 = vmatmul.mubr.bf16.gmra.mrb[0].mxu0 %v8113
    %v8243 = vpop.f32.mrb[0].mxu0
    %v8244 = vadd.f32 0.0, %v8243
    %v8245 = vpop.f32.mrb[0].mxu0
    %v8246 = vpop.f32.mrb[0].mxu0
    %v8247 = vadd.f32 0.0, %v8246
    %v8248 = vpop.f32.mrb[0].mxu0
    %8249 = vmatprep.mubr.bf16.mxu0 0
    %8250 = vmatmul.mubr.bf16.gmra.mrb[0].mxu0 %v8116
    %v8251 = vpop.f32.mrb[0].mxu0
    %v8252 = vadd.f32 0.0, %v8251
    %v8253 = vpop.f32.mrb[0].mxu0
    %v8254 = vpop.f32.mrb[0].mxu0
    %v8255 = vadd.f32 0.0, %v8254
    %v8256 = vpop.f32.mrb[0].mxu0
    %8257 = vmatprep.mubr.bf16.mxu0 0
    %8258 = vmatmul.mubr.bf16.gmra.mrb[0].mxu0 %v8119
    %v8259 = vpop.f32.mrb[0].mxu0
    %v8260 = vadd.f32 0.0, %v8259
    %v8261 = vpop.f32.mrb[0].mxu0
    %v8262 = vpop.f32.mrb[0].mxu0
    %v8263 = vadd.f32 0.0, %v8262
    %v8264 = vpop.f32.mrb[0].mxu0
    %8265 = vdwg.mxu0
    %v8266 = vadd.f32 %v7976, %v8156
    %v8267 = vadd.f32 %v7977, %v8159
    %v8268 = vadd.f32 %v7978, %v8164
    %v8269 = vadd.f32 %v7979, %v8167
    %v8270 = vadd.f32 %v7980, %v8172
    %v8271 = vadd.f32 %v7981, %v8175
    %v8272 = vadd.f32 %v7982, %v8180
    %v8273 = vadd.f32 %v7983, %v8183
    %v8274 = vadd.f32 %v7984, %v8188
    %v8275 = vadd.f32 %v7985, %v8191
    %v8276 = vadd.f32 %v7986, %v8196
    %v8277 = vadd.f32 %v7987, %v8199
    %v8278 = vadd.f32 %v7988, %v8204
    %v8279 = vadd.f32 %v7989, %v8207
    %v8280 = vadd.f32 %v7990, %v8212
    %v8281 = vadd.f32 %v7991, %v8215
    %v8282 = vadd.f32 %v7992, %v8220
    %v8283 = vadd.f32 %v7993, %v8223
    %v8284 = vadd.f32 %v7994, %v8228
    %v8285 = vadd.f32 %v7995, %v8231
    %v8286 = vadd.f32 %v7996, %v8236
    %v8287 = vadd.f32 %v7997, %v8239
    %v8288 = vadd.f32 %v7998, %v8244
    %v8289 = vadd.f32 %v7999, %v8247
    %v8290 = vadd.f32 %v8000, %v8252
    %v8291 = vadd.f32 %v8001, %v8255
    %v8292 = vadd.f32 %v8002, %v8260
    %v8293 = vadd.f32 %v8003, %v8263
    %v8294 = vld [vmem:[#allocation4 + $0x1a] sm:$0xff]
    %v8295 = vld [vmem:[#allocation4 + $0x22] sm:$0xff]
    %v8296 = vld [vmem:[#allocation4 + $0x2a] sm:$0xff]
    %v8297 = vld [vmem:[#allocation4 + $0x32] sm:$0xff]
    %v8298 = vld [vmem:[#allocation4 + $0x3a] sm:$0xff]
    %v8299 = vld [vmem:[#allocation4 + $0x42] sm:$0xff]
    %v8300 = vld [vmem:[#allocation4 + $0x4a] sm:$0xff]
    %v8301 = vld [vmem:[#allocation4 + $0x52] sm:$0xff]
    %v8302 = vld [vmem:[#allocation4 + $0x5a] sm:$0xff]
    %v8303 = vld [vmem:[#allocation4 + $0x62] sm:$0xff]
    %v8304 = vld [vmem:[#allocation4 + $0x6a] sm:$0xff]
    %v8305 = vld [vmem:[#allocation4 + $0x72] sm:$0xff]
    %v8306 = vld [vmem:[#allocation4 + $0x7a] sm:$0xff]
    %v8307 = vld [vmem:[#allocation4 + $0x82] sm:$0xff]
    %v8308 = vld [vmem:[#allocation4 + $0x8a] sm:$0xff]
    %v8309 = vld [vmem:[#allocation4 + $0x92] sm:$0xff]
    %v8310 = vld [vmem:[#allocation4 + $0x9a] sm:$0xff]
    %v8311 = vld [vmem:[#allocation4 + $0xa2] sm:$0xff]
    %v8312 = vld [vmem:[#allocation4 + $0xaa] sm:$0xff]
    %v8313 = vld [vmem:[#allocation4 + $0xb2] sm:$0xff]
    %v8314 = vld [vmem:[#allocation4 + $0xba] sm:$0xff]
    %v8315 = vld [vmem:[#allocation4 + $0xc2] sm:$0xff]
    %v8316 = vld [vmem:[#allocation4 + $0xca] sm:$0xff]
    %v8317 = vld [vmem:[#allocation4 + $0xd2] sm:$0xff]
    %v8318 = vld [vmem:[#allocation4 + $0xda] sm:$0xff]
    %v8319 = vld [vmem:[#allocation4 + $0xe2] sm:$0xff]
    %v8320 = vld [vmem:[#allocation4 + $0xea] sm:$0xff]
    %v8321 = vld [vmem:[#allocation4 + $0xf2] sm:$0xff]
    %v8322 = vpack.c.bf16 %v8295, %v8294
    %v8323 = vpack.c.bf16 %v8297, %v8296
    %v8324 = vpack.c.bf16 %v8299, %v8298
    %v8325 = vpack.c.bf16 %v8301, %v8300
    %v8326 = vpack.c.bf16 %v8303, %v8302
    %v8327 = vpack.c.bf16 %v8305, %v8304
    %v8328 = vpack.c.bf16 %v8307, %v8306
    %v8329 = vpack.c.bf16 %v8309, %v8308
    %v8330 = vpack.c.bf16 %v8311, %v8310
    %v8331 = vpack.c.bf16 %v8313, %v8312
    %v8332 = vpack.c.bf16 %v8315, %v8314
    %v8333 = vpack.c.bf16 %v8317, %v8316
    %v8334 = vpack.c.bf16 %v8319, %v8318
    %v8335 = vpack.c.bf16 %v8321, %v8320
    %s8336 = scalar_lea.vmem %s5, 160
    %v8337 = vld [vmem:[%s8336] sm:$0xf]
    %v8338 = vld [vmem:[%s8336 + $0x4] sm:$0xf]
    %v8339 = vld [vmem:[%s8336 + $0x8] sm:$0xf]
    %v8340 = vld [vmem:[%s8336 + $0xc] sm:$0xf]
    %v8341 = vld [vmem:[%s8336 + $0x10] sm:$0xf]
    %v8342 = vld [vmem:[%s8336 + $0x14] sm:$0xf]
    %v8343 = vld [vmem:[%s8336 + $0x18] sm:$0xf]
    %v8344 = vld [vmem:[%s8336 + $0x1c] sm:$0xf]
    %v8353 = vunpack.c.l.b16 %v8337
    %v8354 = vunpack.c.l.b16 %v8338
    %v8355 = vunpack.c.l.b16 %v8339
    %v8356 = vunpack.c.l.b16 %v8340
    %v8357 = vunpack.c.l.b16 %v8341
    %v8358 = vunpack.c.l.b16 %v8342
    %v8359 = vunpack.c.l.b16 %v8343
    %v8360 = vunpack.c.l.b16 %v8344
    %v8361 = vpack.c.b16 %v8354, %v8353
    %v8362 = vpack.c.b16 %v8356, %v8355
    %v8363 = vpack.c.b16 %v8358, %v8357
    %v8364 = vpack.c.b16 %v8360, %v8359
    %v8370 = vsel %vm76, %v8322, 0
    %v8373 = vsel %vm76, %v8323, 0
    %v8376 = vsel %vm76, %v8324, 0
    %v8379 = vsel %vm76, %v8325, 0
    %v8382 = vsel %vm76, %v8326, 0
    %v8385 = vsel %vm76, %v8327, 0
    %v8388 = vsel %vm76, %v8328, 0
    %v8391 = vsel %vm76, %v8329, 0
    %v8394 = vsel %vm76, %v8330, 0
    %v8397 = vsel %vm76, %v8331, 0
    %v8400 = vsel %vm76, %v8332, 0
    %v8403 = vsel %vm76, %v8333, 0
    %v8406 = vsel %vm76, %v8334, 0
    %v8409 = vsel %vm76, %v8335, 0
    %8411 = vmatprep.subr.bf16.mxu0 0
    %8412 = vmatpush1.bf16.msra.mxu0 %v8361
    %8413 = vmatprep.subr.bf16.mxu0 0
    %8414 = vmatpush1.bf16.msra.mxu0 %v8362
    %8415 = vmatprep.subr.bf16.mxu0 0
    %8416 = vmatpush1.bf16.msra.mxu0 %v8363
    %8417 = vmatprep.subr.bf16.mxu0 0
    %8418 = vmatpush1.bf16.msra.mxu0 %v8364
    %8419 = vmatprep.subr.bf16.mxu0 0
    %8420 = vmatpush1.bf16.msra.mxu0 0
    %8421 = vmatprep.subr.bf16.mxu0 0
    %8422 = vmatpush1.bf16.msra.mxu0 0
    %8423 = vmatprep.subr.bf16.mxu0 0
    %8424 = vmatpush1.bf16.msra.mxu0 0
    %8425 = vmatprep.subr.bf16.mxu0 0
    %8426 = vmatpush1.bf16.msra.mxu0 0
    %8427 = vmatprep.subr.bf16.mxu0 0
    %8428 = vmatpush1.bf16.msra.mxu0 0
    %8429 = vmatprep.subr.bf16.mxu0 0
    %8430 = vmatpush1.bf16.msra.mxu0 0
    %8431 = vmatprep.subr.bf16.mxu0 0
    %8432 = vmatpush1.bf16.msra.mxu0 0
    %8433 = vmatprep.subr.bf16.mxu0 0
    %8434 = vmatpush1.bf16.msra.mxu0 0
    %8435 = vmatprep.subr.bf16.mxu0 0
    %8436 = vmatpush1.bf16.msra.mxu0 0
    %8437 = vmatprep.subr.bf16.mxu0 0
    %8438 = vmatpush1.bf16.msra.mxu0 0
    %8439 = vmatprep.subr.bf16.mxu0 0
    %8440 = vmatpush1.bf16.msra.mxu0 0
    %8441 = vmatprep.subr.bf16.mxu0 0
    %8442 = vmatpush1.bf16.msra.mxu0 0
    %8443 = vmatprep.mubr.bf16.mxu0 0
    %8444 = vmatmul.mubr.bf16.gmra.mrb[0].mxu0 %v8370
    %v8445 = vpop.f32.mrb[0].mxu0
    %v8446 = vadd.f32 0.0, %v8445
    %v8447 = vpop.f32.mrb[0].mxu0
    %v8448 = vpop.f32.mrb[0].mxu0
    %v8449 = vadd.f32 0.0, %v8448
    %v8450 = vpop.f32.mrb[0].mxu0
    %8451 = vmatprep.mubr.bf16.mxu0 0
    %8452 = vmatmul.mubr.bf16.gmra.mrb[0].mxu0 %v8373
    %v8453 = vpop.f32.mrb[0].mxu0
    %v8454 = vadd.f32 0.0, %v8453
    %v8455 = vpop.f32.mrb[0].mxu0
    %v8456 = vpop.f32.mrb[0].mxu0
    %v8457 = vadd.f32 0.0, %v8456
    %v8458 = vpop.f32.mrb[0].mxu0
    %8459 = vmatprep.mubr.bf16.mxu0 0
    %8460 = vmatmul.mubr.bf16.gmra.mrb[0].mxu0 %v8376
    %v8461 = vpop.f32.mrb[0].mxu0
    %v8462 = vadd.f32 0.0, %v8461
    %v8463 = vpop.f32.mrb[0].mxu0
    %v8464 = vpop.f32.mrb[0].mxu0
    %v8465 = vadd.f32 0.0, %v8464
    %v8466 = vpop.f32.mrb[0].mxu0
    %8467 = vmatprep.mubr.bf16.mxu0 0
    %8468 = vmatmul.mubr.bf16.gmra.mrb[0].mxu0 %v8379
    %v8469 = vpop.f32.mrb[0].mxu0
    %v8470 = vadd.f32 0.0, %v8469
    %v8471 = vpop.f32.mrb[0].mxu0
    %v8472 = vpop.f32.mrb[0].mxu0
    %v8473 = vadd.f32 0.0, %v8472
    %v8474 = vpop.f32.mrb[0].mxu0
    %8475 = vmatprep.mubr.bf16.mxu0 0
    %8476 = vmatmul.mubr.bf16.gmra.mrb[0].mxu0 %v8382
    %v8477 = vpop.f32.mrb[0].mxu0
    %v8478 = vadd.f32 0.0, %v8477
    %v8479 = vpop.f32.mrb[0].mxu0
    %v8480 = vpop.f32.mrb[0].mxu0
    %v8481 = vadd.f32 0.0, %v8480
    %v8482 = vpop.f32.mrb[0].mxu0
    %8483 = vmatprep.mubr.bf16.mxu0 0
    %8484 = vmatmul.mubr.bf16.gmra.mrb[0].mxu0 %v8385
    %v8485 = vpop.f32.mrb[0].mxu0
    %v8486 = vadd.f32 0.0, %v8485
    %v8487 = vpop.f32.mrb[0].mxu0
    %v8488 = vpop.f32.mrb[0].mxu0
    %v8489 = vadd.f32 0.0, %v8488
    %v8490 = vpop.f32.mrb[0].mxu0
    %8491 = vmatprep.mubr.bf16.mxu0 0
    %8492 = vmatmul.mubr.bf16.gmra.mrb[0].mxu0 %v8388
    %v8493 = vpop.f32.mrb[0].mxu0
    %v8494 = vadd.f32 0.0, %v8493
    %v8495 = vpop.f32.mrb[0].mxu0
    %v8496 = vpop.f32.mrb[0].mxu0
    %v8497 = vadd.f32 0.0, %v8496
    %v8498 = vpop.f32.mrb[0].mxu0
    %8499 = vmatprep.mubr.bf16.mxu0 0
    %8500 = vmatmul.mubr.bf16.gmra.mrb[0].mxu0 %v8391
    %v8501 = vpop.f32.mrb[0].mxu0
    %v8502 = vadd.f32 0.0, %v8501
    %v8503 = vpop.f32.mrb[0].mxu0
    %v8504 = vpop.f32.mrb[0].mxu0
    %v8505 = vadd.f32 0.0, %v8504
    %v8506 = vpop.f32.mrb[0].mxu0
    %8507 = vmatprep.mubr.bf16.mxu0 0
    %8508 = vmatmul.mubr.bf16.gmra.mrb[0].mxu0 %v8394
    %v8509 = vpop.f32.mrb[0].mxu0
    %v8510 = vadd.f32 0.0, %v8509
    %v8511 = vpop.f32.mrb[0].mxu0
    %v8512 = vpop.f32.mrb[0].mxu0
    %v8513 = vadd.f32 0.0, %v8512
    %v8514 = vpop.f32.mrb[0].mxu0
    %8515 = vmatprep.mubr.bf16.mxu0 0
    %8516 = vmatmul.mubr.bf16.gmra.mrb[0].mxu0 %v8397
    %v8517 = vpop.f32.mrb[0].mxu0
    %v8518 = vadd.f32 0.0, %v8517
    %v8519 = vpop.f32.mrb[0].mxu0
    %v8520 = vpop.f32.mrb[0].mxu0
    %v8521 = vadd.f32 0.0, %v8520
    %v8522 = vpop.f32.mrb[0].mxu0
    %8523 = vmatprep.mubr.bf16.mxu0 0
    %8524 = vmatmul.mubr.bf16.gmra.mrb[0].mxu0 %v8400
    %v8525 = vpop.f32.mrb[0].mxu0
    %v8526 = vadd.f32 0.0, %v8525
    %v8527 = vpop.f32.mrb[0].mxu0
    %v8528 = vpop.f32.mrb[0].mxu0
    %v8529 = vadd.f32 0.0, %v8528
    %v8530 = vpop.f32.mrb[0].mxu0
    %8531 = vmatprep.mubr.bf16.mxu0 0
    %8532 = vmatmul.mubr.bf16.gmra.mrb[0].mxu0 %v8403
    %v8533 = vpop.f32.mrb[0].mxu0
    %v8534 = vadd.f32 0.0, %v8533
    %v8535 = vpop.f32.mrb[0].mxu0
    %v8536 = vpop.f32.mrb[0].mxu0
    %v8537 = vadd.f32 0.0, %v8536
    %v8538 = vpop.f32.mrb[0].mxu0
    %8539 = vmatprep.mubr.bf16.mxu0 0
    %8540 = vmatmul.mubr.bf16.gmra.mrb[0].mxu0 %v8406
    %v8541 = vpop.f32.mrb[0].mxu0
    %v8542 = vadd.f32 0.0, %v8541
    %v8543 = vpop.f32.mrb[0].mxu0
    %v8544 = vpop.f32.mrb[0].mxu0
    %v8545 = vadd.f32 0.0, %v8544
    %v8546 = vpop.f32.mrb[0].mxu0
    %8547 = vmatprep.mubr.bf16.mxu0 0
    %8548 = vmatmul.mubr.bf16.gmra.mrb[0].mxu0 %v8409
    %v8549 = vpop.f32.mrb[0].mxu0
    %v8550 = vadd.f32 0.0, %v8549
    %v8551 = vpop.f32.mrb[0].mxu0
    %v8552 = vpop.f32.mrb[0].mxu0
    %v8553 = vadd.f32 0.0, %v8552
    %v8554 = vpop.f32.mrb[0].mxu0
    %8555 = vdwg.mxu0
    %v8556 = vadd.f32 %v8266, %v8446
    %v8557 = vadd.f32 %v8267, %v8449
    %v8558 = vadd.f32 %v8268, %v8454
    %v8559 = vadd.f32 %v8269, %v8457
    %v8560 = vadd.f32 %v8270, %v8462
    %v8561 = vadd.f32 %v8271, %v8465
    %v8562 = vadd.f32 %v8272, %v8470
    %v8563 = vadd.f32 %v8273, %v8473
    %v8564 = vadd.f32 %v8274, %v8478
    %v8565 = vadd.f32 %v8275, %v8481
    %v8566 = vadd.f32 %v8276, %v8486
    %v8567 = vadd.f32 %v8277, %v8489
    %v8568 = vadd.f32 %v8278, %v8494
    %v8569 = vadd.f32 %v8279, %v8497
    %v8570 = vadd.f32 %v8280, %v8502
    %v8571 = vadd.f32 %v8281, %v8505
    %v8572 = vadd.f32 %v8282, %v8510
    %v8573 = vadd.f32 %v8283, %v8513
    %v8574 = vadd.f32 %v8284, %v8518
    %v8575 = vadd.f32 %v8285, %v8521
    %v8576 = vadd.f32 %v8286, %v8526
    %v8577 = vadd.f32 %v8287, %v8529
    %v8578 = vadd.f32 %v8288, %v8534
    %v8579 = vadd.f32 %v8289, %v8537
    %v8580 = vadd.f32 %v8290, %v8542
    %v8581 = vadd.f32 %v8291, %v8545
    %v8582 = vadd.f32 %v8292, %v8550
    %v8583 = vadd.f32 %v8293, %v8553
    %v8584 = vld [vmem:[#allocation4 + $0x2c] sm:$0xff]
    %v8585 = vld [vmem:[#allocation4 + $0x34] sm:$0xff]
    %v8586 = vld [vmem:[#allocation4 + $0x3c] sm:$0xff]
    %v8587 = vld [vmem:[#allocation4 + $0x44] sm:$0xff]
    %v8588 = vld [vmem:[#allocation4 + $0x4c] sm:$0xff]
    %v8589 = vld [vmem:[#allocation4 + $0x54] sm:$0xff]
    %v8590 = vld [vmem:[#allocation4 + $0x5c] sm:$0xff]
    %v8591 = vld [vmem:[#allocation4 + $0x64] sm:$0xff]
    %v8592 = vld [vmem:[#allocation4 + $0x6c] sm:$0xff]
    %v8593 = vld [vmem:[#allocation4 + $0x74] sm:$0xff]
    %v8594 = vld [vmem:[#allocation4 + $0x7c] sm:$0xff]
    %v8595 = vld [vmem:[#allocation4 + $0x84] sm:$0xff]
    %v8596 = vld [vmem:[#allocation4 + $0x8c] sm:$0xff]
    %v8597 = vld [vmem:[#allocation4 + $0x94] sm:$0xff]
    %v8598 = vld [vmem:[#allocation4 + $0x9c] sm:$0xff]
    %v8599 = vld [vmem:[#allocation4 + $0xa4] sm:$0xff]
    %v8600 = vld [vmem:[#allocation4 + $0xac] sm:$0xff]
    %v8601 = vld [vmem:[#allocation4 + $0xb4] sm:$0xff]
    %v8602 = vld [vmem:[#allocation4 + $0xbc] sm:$0xff]
    %v8603 = vld [vmem:[#allocation4 + $0xc4] sm:$0xff]
    %v8604 = vld [vmem:[#allocation4 + $0xcc] sm:$0xff]
    %v8605 = vld [vmem:[#allocation4 + $0xd4] sm:$0xff]
    %v8606 = vld [vmem:[#allocation4 + $0xdc] sm:$0xff]
    %v8607 = vld [vmem:[#allocation4 + $0xe4] sm:$0xff]
    %v8608 = vld [vmem:[#allocation4 + $0xec] sm:$0xff]
    %v8609 = vld [vmem:[#allocation4 + $0xf4] sm:$0xff]
    %v8610 = vld [vmem:[#allocation4 + $0xfc] sm:$0xff]
    %v8611 = vld [vmem:[#allocation4 + $0x104] sm:$0xff]
    %v8612 = vpack.c.bf16 %v8585, %v8584
    %v8613 = vpack.c.bf16 %v8587, %v8586
    %v8614 = vpack.c.bf16 %v8589, %v8588
    %v8615 = vpack.c.bf16 %v8591, %v8590
    %v8616 = vpack.c.bf16 %v8593, %v8592
    %v8617 = vpack.c.bf16 %v8595, %v8594
    %v8618 = vpack.c.bf16 %v8597, %v8596
    %v8619 = vpack.c.bf16 %v8599, %v8598
    %v8620 = vpack.c.bf16 %v8601, %v8600
    %v8621 = vpack.c.bf16 %v8603, %v8602
    %v8622 = vpack.c.bf16 %v8605, %v8604
    %v8623 = vpack.c.bf16 %v8607, %v8606
    %v8624 = vpack.c.bf16 %v8609, %v8608
    %v8625 = vpack.c.bf16 %v8611, %v8610
    %s8626 = scalar_lea.vmem %s5, 192
    %v8627 = vld [vmem:[%s8626] sm:$0xf]
    %v8628 = vld [vmem:[%s8626 + $0x4] sm:$0xf]
    %v8629 = vld [vmem:[%s8626 + $0x8] sm:$0xf]
    %v8630 = vld [vmem:[%s8626 + $0xc] sm:$0xf]
    %v8631 = vld [vmem:[%s8626 + $0x10] sm:$0xf]
    %v8632 = vld [vmem:[%s8626 + $0x14] sm:$0xf]
    %v8633 = vld [vmem:[%s8626 + $0x18] sm:$0xf]
    %v8634 = vld [vmem:[%s8626 + $0x1c] sm:$0xf]
    %v8643 = vunpack.c.l.b16 %v8627
    %v8644 = vunpack.c.l.b16 %v8628
    %v8645 = vunpack.c.l.b16 %v8629
    %v8646 = vunpack.c.l.b16 %v8630
    %v8647 = vunpack.c.l.b16 %v8631
    %v8648 = vunpack.c.l.b16 %v8632
    %v8649 = vunpack.c.l.b16 %v8633
    %v8650 = vunpack.c.l.b16 %v8634
    %v8651 = vpack.c.b16 %v8644, %v8643
    %v8652 = vpack.c.b16 %v8646, %v8645
    %v8653 = vpack.c.b16 %v8648, %v8647
    %v8654 = vpack.c.b16 %v8650, %v8649
    %v8660 = vsel %vm76, %v8612, 0
    %v8663 = vsel %vm76, %v8613, 0
    %v8666 = vsel %vm76, %v8614, 0
    %v8669 = vsel %vm76, %v8615, 0
    %v8672 = vsel %vm76, %v8616, 0
    %v8675 = vsel %vm76, %v8617, 0
    %v8678 = vsel %vm76, %v8618, 0
    %v8681 = vsel %vm76, %v8619, 0
    %v8684 = vsel %vm76, %v8620, 0
    %v8687 = vsel %vm76, %v8621, 0
    %v8690 = vsel %vm76, %v8622, 0
    %v8693 = vsel %vm76, %v8623, 0
    %v8696 = vsel %vm76, %v8624, 0
    %v8699 = vsel %vm76, %v8625, 0
    %8701 = vmatprep.subr.bf16.mxu0 0
    %8702 = vmatpush1.bf16.msra.mxu0 %v8651
    %8703 = vmatprep.subr.bf16.mxu0 0
    %8704 = vmatpush1.bf16.msra.mxu0 %v8652
    %8705 = vmatprep.subr.bf16.mxu0 0
    %8706 = vmatpush1.bf16.msra.mxu0 %v8653
    %8707 = vmatprep.subr.bf16.mxu0 0
    %8708 = vmatpush1.bf16.msra.mxu0 %v8654
    %8709 = vmatprep.subr.bf16.mxu0 0
    %8710 = vmatpush1.bf16.msra.mxu0 0
    %8711 = vmatprep.subr.bf16.mxu0 0
    %8712 = vmatpush1.bf16.msra.mxu0 0
    %8713 = vmatprep.subr.bf16.mxu0 0
    %8714 = vmatpush1.bf16.msra.mxu0 0
    %8715 = vmatprep.subr.bf16.mxu0 0
    %8716 = vmatpush1.bf16.msra.mxu0 0
    %8717 = vmatprep.subr.bf16.mxu0 0
    %8718 = vmatpush1.bf16.msra.mxu0 0
    %8719 = vmatprep.subr.bf16.mxu0 0
    %8720 = vmatpush1.bf16.msra.mxu0 0
    %8721 = vmatprep.subr.bf16.mxu0 0
    %8722 = vmatpush1.bf16.msra.mxu0 0
    %8723 = vmatprep.subr.bf16.mxu0 0
    %8724 = vmatpush1.bf16.msra.mxu0 0
    %8725 = vmatprep.subr.bf16.mxu0 0
    %8726 = vmatpush1.bf16.msra.mxu0 0
    %8727 = vmatprep.subr.bf16.mxu0 0
    %8728 = vmatpush1.bf16.msra.mxu0 0
    %8729 = vmatprep.subr.bf16.mxu0 0
    %8730 = vmatpush1.bf16.msra.mxu0 0
    %8731 = vmatprep.subr.bf16.mxu0 0
    %8732 = vmatpush1.bf16.msra.mxu0 0
    %8733 = vmatprep.mubr.bf16.mxu0 0
    %8734 = vmatmul.mubr.bf16.gmra.mrb[0].mxu0 %v8660
    %v8735 = vpop.f32.mrb[0].mxu0
    %v8736 = vadd.f32 0.0, %v8735
    %v8737 = vpop.f32.mrb[0].mxu0
    %v8738 = vpop.f32.mrb[0].mxu0
    %v8739 = vadd.f32 0.0, %v8738
    %v8740 = vpop.f32.mrb[0].mxu0
    %8741 = vmatprep.mubr.bf16.mxu0 0
    %8742 = vmatmul.mubr.bf16.gmra.mrb[0].mxu0 %v8663
    %v8743 = vpop.f32.mrb[0].mxu0
    %v8744 = vadd.f32 0.0, %v8743
    %v8745 = vpop.f32.mrb[0].mxu0
    %v8746 = vpop.f32.mrb[0].mxu0
    %v8747 = vadd.f32 0.0, %v8746
    %v8748 = vpop.f32.mrb[0].mxu0
    %8749 = vmatprep.mubr.bf16.mxu0 0
    %8750 = vmatmul.mubr.bf16.gmra.mrb[0].mxu0 %v8666
    %v8751 = vpop.f32.mrb[0].mxu0
    %v8752 = vadd.f32 0.0, %v8751
    %v8753 = vpop.f32.mrb[0].mxu0
    %v8754 = vpop.f32.mrb[0].mxu0
    %v8755 = vadd.f32 0.0, %v8754
    %v8756 = vpop.f32.mrb[0].mxu0
    %8757 = vmatprep.mubr.bf16.mxu0 0
    %8758 = vmatmul.mubr.bf16.gmra.mrb[0].mxu0 %v8669
    %v8759 = vpop.f32.mrb[0].mxu0
    %v8760 = vadd.f32 0.0, %v8759
    %v8761 = vpop.f32.mrb[0].mxu0
    %v8762 = vpop.f32.mrb[0].mxu0
    %v8763 = vadd.f32 0.0, %v8762
    %v8764 = vpop.f32.mrb[0].mxu0
    %8765 = vmatprep.mubr.bf16.mxu0 0
    %8766 = vmatmul.mubr.bf16.gmra.mrb[0].mxu0 %v8672
    %v8767 = vpop.f32.mrb[0].mxu0
    %v8768 = vadd.f32 0.0, %v8767
    %v8769 = vpop.f32.mrb[0].mxu0
    %v8770 = vpop.f32.mrb[0].mxu0
    %v8771 = vadd.f32 0.0, %v8770
    %v8772 = vpop.f32.mrb[0].mxu0
    %8773 = vmatprep.mubr.bf16.mxu0 0
    %8774 = vmatmul.mubr.bf16.gmra.mrb[0].mxu0 %v8675
    %v8775 = vpop.f32.mrb[0].mxu0
    %v8776 = vadd.f32 0.0, %v8775
    %v8777 = vpop.f32.mrb[0].mxu0
    %v8778 = vpop.f32.mrb[0].mxu0
    %v8779 = vadd.f32 0.0, %v8778
    %v8780 = vpop.f32.mrb[0].mxu0
    %8781 = vmatprep.mubr.bf16.mxu0 0
    %8782 = vmatmul.mubr.bf16.gmra.mrb[0].mxu0 %v8678
    %v8783 = vpop.f32.mrb[0].mxu0
    %v8784 = vadd.f32 0.0, %v8783
    %v8785 = vpop.f32.mrb[0].mxu0
    %v8786 = vpop.f32.mrb[0].mxu0
    %v8787 = vadd.f32 0.0, %v8786
    %v8788 = vpop.f32.mrb[0].mxu0
    %8789 = vmatprep.mubr.bf16.mxu0 0
    %8790 = vmatmul.mubr.bf16.gmra.mrb[0].mxu0 %v8681
    %v8791 = vpop.f32.mrb[0].mxu0
    %v8792 = vadd.f32 0.0, %v8791
    %v8793 = vpop.f32.mrb[0].mxu0
    %v8794 = vpop.f32.mrb[0].mxu0
    %v8795 = vadd.f32 0.0, %v8794
    %v8796 = vpop.f32.mrb[0].mxu0
    %8797 = vmatprep.mubr.bf16.mxu0 0
    %8798 = vmatmul.mubr.bf16.gmra.mrb[0].mxu0 %v8684
    %v8799 = vpop.f32.mrb[0].mxu0
    %v8800 = vadd.f32 0.0, %v8799
    %v8801 = vpop.f32.mrb[0].mxu0
    %v8802 = vpop.f32.mrb[0].mxu0
    %v8803 = vadd.f32 0.0, %v8802
    %v8804 = vpop.f32.mrb[0].mxu0
    %8805 = vmatprep.mubr.bf16.mxu0 0
    %8806 = vmatmul.mubr.bf16.gmra.mrb[0].mxu0 %v8687
    %v8807 = vpop.f32.mrb[0].mxu0
    %v8808 = vadd.f32 0.0, %v8807
    %v8809 = vpop.f32.mrb[0].mxu0
    %v8810 = vpop.f32.mrb[0].mxu0
    %v8811 = vadd.f32 0.0, %v8810
    %v8812 = vpop.f32.mrb[0].mxu0
    %8813 = vmatprep.mubr.bf16.mxu0 0
    %8814 = vmatmul.mubr.bf16.gmra.mrb[0].mxu0 %v8690
    %v8815 = vpop.f32.mrb[0].mxu0
    %v8816 = vadd.f32 0.0, %v8815
    %v8817 = vpop.f32.mrb[0].mxu0
    %v8818 = vpop.f32.mrb[0].mxu0
    %v8819 = vadd.f32 0.0, %v8818
    %v8820 = vpop.f32.mrb[0].mxu0
    %8821 = vmatprep.mubr.bf16.mxu0 0
    %8822 = vmatmul.mubr.bf16.gmra.mrb[0].mxu0 %v8693
    %v8823 = vpop.f32.mrb[0].mxu0
    %v8824 = vadd.f32 0.0, %v8823
    %v8825 = vpop.f32.mrb[0].mxu0
    %v8826 = vpop.f32.mrb[0].mxu0
    %v8827 = vadd.f32 0.0, %v8826
    %v8828 = vpop.f32.mrb[0].mxu0
    %8829 = vmatprep.mubr.bf16.mxu0 0
    %8830 = vmatmul.mubr.bf16.gmra.mrb[0].mxu0 %v8696
    %v8831 = vpop.f32.mrb[0].mxu0
    %v8832 = vadd.f32 0.0, %v8831
    %v8833 = vpop.f32.mrb[0].mxu0
    %v8834 = vpop.f32.mrb[0].mxu0
    %v8835 = vadd.f32 0.0, %v8834
    %v8836 = vpop.f32.mrb[0].mxu0
    %8837 = vmatprep.mubr.bf16.mxu0 0
    %8838 = vmatmul.mubr.bf16.gmra.mrb[0].mxu0 %v8699
    %v8839 = vpop.f32.mrb[0].mxu0
    %v8840 = vadd.f32 0.0, %v8839
    %v8841 = vpop.f32.mrb[0].mxu0
    %v8842 = vpop.f32.mrb[0].mxu0
    %v8843 = vadd.f32 0.0, %v8842
    %v8844 = vpop.f32.mrb[0].mxu0
    %8845 = vdwg.mxu0
    %v8846 = vadd.f32 %v8556, %v8736
    %v8847 = vadd.f32 %v8557, %v8739
    %v8848 = vadd.f32 %v8558, %v8744
    %v8849 = vadd.f32 %v8559, %v8747
    %v8850 = vadd.f32 %v8560, %v8752
    %v8851 = vadd.f32 %v8561, %v8755
    %v8852 = vadd.f32 %v8562, %v8760
    %v8853 = vadd.f32 %v8563, %v8763
    %v8854 = vadd.f32 %v8564, %v8768
    %v8855 = vadd.f32 %v8565, %v8771
    %v8856 = vadd.f32 %v8566, %v8776
    %v8857 = vadd.f32 %v8567, %v8779
    %v8858 = vadd.f32 %v8568, %v8784
    %v8859 = vadd.f32 %v8569, %v8787
    %v8860 = vadd.f32 %v8570, %v8792
    %v8861 = vadd.f32 %v8571, %v8795
    %v8862 = vadd.f32 %v8572, %v8800
    %v8863 = vadd.f32 %v8573, %v8803
    %v8864 = vadd.f32 %v8574, %v8808
    %v8865 = vadd.f32 %v8575, %v8811
    %v8866 = vadd.f32 %v8576, %v8816
    %v8867 = vadd.f32 %v8577, %v8819
    %v8868 = vadd.f32 %v8578, %v8824
    %v8869 = vadd.f32 %v8579, %v8827
    %v8870 = vadd.f32 %v8580, %v8832
    %v8871 = vadd.f32 %v8581, %v8835
    %v8872 = vadd.f32 %v8582, %v8840
    %v8873 = vadd.f32 %v8583, %v8843
    %v8874 = vld [vmem:[#allocation4 + $0x2e] sm:$0xff]
    %v8875 = vld [vmem:[#allocation4 + $0x36] sm:$0xff]
    %v8876 = vld [vmem:[#allocation4 + $0x3e] sm:$0xff]
    %v8877 = vld [vmem:[#allocation4 + $0x46] sm:$0xff]
    %v8878 = vld [vmem:[#allocation4 + $0x4e] sm:$0xff]
    %v8879 = vld [vmem:[#allocation4 + $0x56] sm:$0xff]
    %v8880 = vld [vmem:[#allocation4 + $0x5e] sm:$0xff]
    %v8881 = vld [vmem:[#allocation4 + $0x66] sm:$0xff]
    %v8882 = vld [vmem:[#allocation4 + $0x6e] sm:$0xff]
    %v8883 = vld [vmem:[#allocation4 + $0x76] sm:$0xff]
    %v8884 = vld [vmem:[#allocation4 + $0x7e] sm:$0xff]
    %v8885 = vld [vmem:[#allocation4 + $0x86] sm:$0xff]
    %v8886 = vld [vmem:[#allocation4 + $0x8e] sm:$0xff]
    %v8887 = vld [vmem:[#allocation4 + $0x96] sm:$0xff]
    %v8888 = vld [vmem:[#allocation4 + $0x9e] sm:$0xff]
    %v8889 = vld [vmem:[#allocation4 + $0xa6] sm:$0xff]
    %v8890 = vld [vmem:[#allocation4 + $0xae] sm:$0xff]
    %v8891 = vld [vmem:[#allocation4 + $0xb6] sm:$0xff]
    %v8892 = vld [vmem:[#allocation4 + $0xbe] sm:$0xff]
    %v8893 = vld [vmem:[#allocation4 + $0xc6] sm:$0xff]
    %v8894 = vld [vmem:[#allocation4 + $0xce] sm:$0xff]
    %v8895 = vld [vmem:[#allocation4 + $0xd6] sm:$0xff]
    %v8896 = vld [vmem:[#allocation4 + $0xde] sm:$0xff]
    %v8897 = vld [vmem:[#allocation4 + $0xe6] sm:$0xff]
    %v8898 = vld [vmem:[#allocation4 + $0xee] sm:$0xff]
    %v8899 = vld [vmem:[#allocation4 + $0xf6] sm:$0xff]
    %v8900 = vld [vmem:[#allocation4 + $0xfe] sm:$0xff]
    %v8901 = vld [vmem:[#allocation4 + $0x106] sm:$0xff]
    %v8902 = vpack.c.bf16 %v8875, %v8874
    %v8903 = vpack.c.bf16 %v8877, %v8876
    %v8904 = vpack.c.bf16 %v8879, %v8878
    %v8905 = vpack.c.bf16 %v8881, %v8880
    %v8906 = vpack.c.bf16 %v8883, %v8882
    %v8907 = vpack.c.bf16 %v8885, %v8884
    %v8908 = vpack.c.bf16 %v8887, %v8886
    %v8909 = vpack.c.bf16 %v8889, %v8888
    %v8910 = vpack.c.bf16 %v8891, %v8890
    %v8911 = vpack.c.bf16 %v8893, %v8892
    %v8912 = vpack.c.bf16 %v8895, %v8894
    %v8913 = vpack.c.bf16 %v8897, %v8896
    %v8914 = vpack.c.bf16 %v8899, %v8898
    %v8915 = vpack.c.bf16 %v8901, %v8900
    %s8916 = scalar_lea.vmem %s5, 224
    %v8917 = vld [vmem:[%s8916] sm:$0xf]
    %v8918 = vld [vmem:[%s8916 + $0x4] sm:$0xf]
    %v8919 = vld [vmem:[%s8916 + $0x8] sm:$0xf]
    %v8920 = vld [vmem:[%s8916 + $0xc] sm:$0xf]
    %v8921 = vld [vmem:[%s8916 + $0x10] sm:$0xf]
    %v8922 = vld [vmem:[%s8916 + $0x14] sm:$0xf]
    %v8923 = vld [vmem:[%s8916 + $0x18] sm:$0xf]
    %v8924 = vld [vmem:[%s8916 + $0x1c] sm:$0xf]
    %v8933 = vunpack.c.l.b16 %v8917
    %v8934 = vunpack.c.l.b16 %v8918
    %v8935 = vunpack.c.l.b16 %v8919
    %v8936 = vunpack.c.l.b16 %v8920
    %v8937 = vunpack.c.l.b16 %v8921
    %v8938 = vunpack.c.l.b16 %v8922
    %v8939 = vunpack.c.l.b16 %v8923
    %v8940 = vunpack.c.l.b16 %v8924
    %v8941 = vpack.c.b16 %v8934, %v8933
    %v8942 = vpack.c.b16 %v8936, %v8935
    %v8943 = vpack.c.b16 %v8938, %v8937
    %v8944 = vpack.c.b16 %v8940, %v8939
    %v8950 = vsel %vm76, %v8902, 0
    %v8953 = vsel %vm76, %v8903, 0
    %v8956 = vsel %vm76, %v8904, 0
    %v8959 = vsel %vm76, %v8905, 0
    %v8962 = vsel %vm76, %v8906, 0
    %v8965 = vsel %vm76, %v8907, 0
    %v8968 = vsel %vm76, %v8908, 0
    %v8971 = vsel %vm76, %v8909, 0
    %v8974 = vsel %vm76, %v8910, 0
    %v8977 = vsel %vm76, %v8911, 0
    %v8980 = vsel %vm76, %v8912, 0
    %v8983 = vsel %vm76, %v8913, 0
    %v8986 = vsel %vm76, %v8914, 0
    %v8989 = vsel %vm76, %v8915, 0
    %8991 = vmatprep.subr.bf16.mxu0 0
    %8992 = vmatpush1.bf16.msra.mxu0 %v8941
    %8993 = vmatprep.subr.bf16.mxu0 0
    %8994 = vmatpush1.bf16.msra.mxu0 %v8942
    %8995 = vmatprep.subr.bf16.mxu0 0
    %8996 = vmatpush1.bf16.msra.mxu0 %v8943
    %8997 = vmatprep.subr.bf16.mxu0 0
    %8998 = vmatpush1.bf16.msra.mxu0 %v8944
    %8999 = vmatprep.subr.bf16.mxu0 0
    %9000 = vmatpush1.bf16.msra.mxu0 0
    %9001 = vmatprep.subr.bf16.mxu0 0
    %9002 = vmatpush1.bf16.msra.mxu0 0
    %9003 = vmatprep.subr.bf16.mxu0 0
    %9004 = vmatpush1.bf16.msra.mxu0 0
    %9005 = vmatprep.subr.bf16.mxu0 0
    %9006 = vmatpush1.bf16.msra.mxu0 0
    %9007 = vmatprep.subr.bf16.mxu0 0
    %9008 = vmatpush1.bf16.msra.mxu0 0
    %9009 = vmatprep.subr.bf16.mxu0 0
    %9010 = vmatpush1.bf16.msra.mxu0 0
    %9011 = vmatprep.subr.bf16.mxu0 0
    %9012 = vmatpush1.bf16.msra.mxu0 0
    %9013 = vmatprep.subr.bf16.mxu0 0
    %9014 = vmatpush1.bf16.msra.mxu0 0
    %9015 = vmatprep.subr.bf16.mxu0 0
    %9016 = vmatpush1.bf16.msra.mxu0 0
    %9017 = vmatprep.subr.bf16.mxu0 0
    %9018 = vmatpush1.bf16.msra.mxu0 0
    %9019 = vmatprep.subr.bf16.mxu0 0
    %9020 = vmatpush1.bf16.msra.mxu0 0
    %9021 = vmatprep.subr.bf16.mxu0 0
    %9022 = vmatpush1.bf16.msra.mxu0 0
    %9023 = vmatprep.mubr.bf16.mxu0 0
    %9024 = vmatmul.mubr.bf16.gmra.mrb[0].mxu0 %v8950
    %v9025 = vpop.f32.mrb[0].mxu0
    %v9026 = vadd.f32 0.0, %v9025
    %v9027 = vpop.f32.mrb[0].mxu0
    %v9028 = vpop.f32.mrb[0].mxu0
    %v9029 = vadd.f32 0.0, %v9028
    %v9030 = vpop.f32.mrb[0].mxu0
    %9031 = vmatprep.mubr.bf16.mxu0 0
    %9032 = vmatmul.mubr.bf16.gmra.mrb[0].mxu0 %v8953
    %v9033 = vpop.f32.mrb[0].mxu0
    %v9034 = vadd.f32 0.0, %v9033
    %v9035 = vpop.f32.mrb[0].mxu0
    %v9036 = vpop.f32.mrb[0].mxu0
    %v9037 = vadd.f32 0.0, %v9036
    %v9038 = vpop.f32.mrb[0].mxu0
    %9039 = vmatprep.mubr.bf16.mxu0 0
    %9040 = vmatmul.mubr.bf16.gmra.mrb[0].mxu0 %v8956
    %v9041 = vpop.f32.mrb[0].mxu0
    %v9042 = vadd.f32 0.0, %v9041
    %v9043 = vpop.f32.mrb[0].mxu0
    %v9044 = vpop.f32.mrb[0].mxu0
    %v9045 = vadd.f32 0.0, %v9044
    %v9046 = vpop.f32.mrb[0].mxu0
    %9047 = vmatprep.mubr.bf16.mxu0 0
    %9048 = vmatmul.mubr.bf16.gmra.mrb[0].mxu0 %v8959
    %v9049 = vpop.f32.mrb[0].mxu0
    %v9050 = vadd.f32 0.0, %v9049
    %v9051 = vpop.f32.mrb[0].mxu0
    %v9052 = vpop.f32.mrb[0].mxu0
    %v9053 = vadd.f32 0.0, %v9052
    %v9054 = vpop.f32.mrb[0].mxu0
    %9055 = vmatprep.mubr.bf16.mxu0 0
    %9056 = vmatmul.mubr.bf16.gmra.mrb[0].mxu0 %v8962
    %v9057 = vpop.f32.mrb[0].mxu0
    %v9058 = vadd.f32 0.0, %v9057
    %v9059 = vpop.f32.mrb[0].mxu0
    %v9060 = vpop.f32.mrb[0].mxu0
    %v9061 = vadd.f32 0.0, %v9060
    %v9062 = vpop.f32.mrb[0].mxu0
    %9063 = vmatprep.mubr.bf16.mxu0 0
    %9064 = vmatmul.mubr.bf16.gmra.mrb[0].mxu0 %v8965
    %v9065 = vpop.f32.mrb[0].mxu0
    %v9066 = vadd.f32 0.0, %v9065
    %v9067 = vpop.f32.mrb[0].mxu0
    %v9068 = vpop.f32.mrb[0].mxu0
    %v9069 = vadd.f32 0.0, %v9068
    %v9070 = vpop.f32.mrb[0].mxu0
    %9071 = vmatprep.mubr.bf16.mxu0 0
    %9072 = vmatmul.mubr.bf16.gmra.mrb[0].mxu0 %v8968
    %v9073 = vpop.f32.mrb[0].mxu0
    %v9074 = vadd.f32 0.0, %v9073
    %v9075 = vpop.f32.mrb[0].mxu0
    %v9076 = vpop.f32.mrb[0].mxu0
    %v9077 = vadd.f32 0.0, %v9076
    %v9078 = vpop.f32.mrb[0].mxu0
    %9079 = vmatprep.mubr.bf16.mxu0 0
    %9080 = vmatmul.mubr.bf16.gmra.mrb[0].mxu0 %v8971
    %v9081 = vpop.f32.mrb[0].mxu0
    %v9082 = vadd.f32 0.0, %v9081
    %v9083 = vpop.f32.mrb[0].mxu0
    %v9084 = vpop.f32.mrb[0].mxu0
    %v9085 = vadd.f32 0.0, %v9084
    %v9086 = vpop.f32.mrb[0].mxu0
    %9087 = vmatprep.mubr.bf16.mxu0 0
    %9088 = vmatmul.mubr.bf16.gmra.mrb[0].mxu0 %v8974
    %v9089 = vpop.f32.mrb[0].mxu0
    %v9090 = vadd.f32 0.0, %v9089
    %v9091 = vpop.f32.mrb[0].mxu0
    %v9092 = vpop.f32.mrb[0].mxu0
    %v9093 = vadd.f32 0.0, %v9092
    %v9094 = vpop.f32.mrb[0].mxu0
    %9095 = vmatprep.mubr.bf16.mxu0 0
    %9096 = vmatmul.mubr.bf16.gmra.mrb[0].mxu0 %v8977
    %v9097 = vpop.f32.mrb[0].mxu0
    %v9098 = vadd.f32 0.0, %v9097
    %v9099 = vpop.f32.mrb[0].mxu0
    %v9100 = vpop.f32.mrb[0].mxu0
    %v9101 = vadd.f32 0.0, %v9100
    %v9102 = vpop.f32.mrb[0].mxu0
    %9103 = vmatprep.mubr.bf16.mxu0 0
    %9104 = vmatmul.mubr.bf16.gmra.mrb[0].mxu0 %v8980
    %v9105 = vpop.f32.mrb[0].mxu0
    %v9106 = vadd.f32 0.0, %v9105
    %v9107 = vpop.f32.mrb[0].mxu0
    %v9108 = vpop.f32.mrb[0].mxu0
    %v9109 = vadd.f32 0.0, %v9108
    %v9110 = vpop.f32.mrb[0].mxu0
    %9111 = vmatprep.mubr.bf16.mxu0 0
    %9112 = vmatmul.mubr.bf16.gmra.mrb[0].mxu0 %v8983
    %v9113 = vpop.f32.mrb[0].mxu0
    %v9114 = vadd.f32 0.0, %v9113
    %v9115 = vpop.f32.mrb[0].mxu0
    %v9116 = vpop.f32.mrb[0].mxu0
    %v9117 = vadd.f32 0.0, %v9116
    %v9118 = vpop.f32.mrb[0].mxu0
    %9119 = vmatprep.mubr.bf16.mxu0 0
    %9120 = vmatmul.mubr.bf16.gmra.mrb[0].mxu0 %v8986
    %v9121 = vpop.f32.mrb[0].mxu0
    %v9122 = vadd.f32 0.0, %v9121
    %v9123 = vpop.f32.mrb[0].mxu0
    %v9124 = vpop.f32.mrb[0].mxu0
    %v9125 = vadd.f32 0.0, %v9124
    %v9126 = vpop.f32.mrb[0].mxu0
    %9127 = vmatprep.mubr.bf16.mxu0 0
    %9128 = vmatmul.mubr.bf16.gmra.mrb[0].mxu0 %v8989
    %v9129 = vpop.f32.mrb[0].mxu0
    %v9130 = vadd.f32 0.0, %v9129
    %v9131 = vpop.f32.mrb[0].mxu0
    %v9132 = vpop.f32.mrb[0].mxu0
    %v9133 = vadd.f32 0.0, %v9132
    %v9134 = vpop.f32.mrb[0].mxu0
    %9135 = vdwg.mxu0
    %v9136 = vadd.f32 %v8846, %v9026
    %v9137 = vadd.f32 %v8847, %v9029
    %v9138 = vadd.f32 %v8848, %v9034
    %v9139 = vadd.f32 %v8849, %v9037
    %v9140 = vadd.f32 %v8850, %v9042
    %v9141 = vadd.f32 %v8851, %v9045
    %v9142 = vadd.f32 %v8852, %v9050
    %v9143 = vadd.f32 %v8853, %v9053
    %v9144 = vadd.f32 %v8854, %v9058
    %v9145 = vadd.f32 %v8855, %v9061
    %v9146 = vadd.f32 %v8856, %v9066
    %v9147 = vadd.f32 %v8857, %v9069
    %v9148 = vadd.f32 %v8858, %v9074
    %v9149 = vadd.f32 %v8859, %v9077
    %v9150 = vadd.f32 %v8860, %v9082
    %v9151 = vadd.f32 %v8861, %v9085
    %v9152 = vadd.f32 %v8862, %v9090
    %v9153 = vadd.f32 %v8863, %v9093
    %v9154 = vadd.f32 %v8864, %v9098
    %v9155 = vadd.f32 %v8865, %v9101
    %v9156 = vadd.f32 %v8866, %v9106
    %v9157 = vadd.f32 %v8867, %v9109
    %v9158 = vadd.f32 %v8868, %v9114
    %v9159 = vadd.f32 %v8869, %v9117
    %v9160 = vadd.f32 %v8870, %v9122
    %v9161 = vadd.f32 %v8871, %v9125
    %v9162 = vadd.f32 %v8872, %v9130
    %v9163 = vadd.f32 %v8873, %v9133
    %v9164 = vld [vmem:[#allocation4 + $0x30] sm:$0xff]
    %v9165 = vld [vmem:[#allocation4 + $0x38] sm:$0xff]
    %v9166 = vld [vmem:[#allocation4 + $0x40] sm:$0xff]
    %v9167 = vld [vmem:[#allocation4 + $0x48] sm:$0xff]
    %v9168 = vld [vmem:[#allocation4 + $0x50] sm:$0xff]
    %v9169 = vld [vmem:[#allocation4 + $0x58] sm:$0xff]
    %v9170 = vld [vmem:[#allocation4 + $0x60] sm:$0xff]
    %v9171 = vld [vmem:[#allocation4 + $0x68] sm:$0xff]
    %v9172 = vld [vmem:[#allocation4 + $0x70] sm:$0xff]
    %v9173 = vld [vmem:[#allocation4 + $0x78] sm:$0xff]
    %v9174 = vld [vmem:[#allocation4 + $0x80] sm:$0xff]
    %v9175 = vld [vmem:[#allocation4 + $0x88] sm:$0xff]
    %v9176 = vld [vmem:[#allocation4 + $0x90] sm:$0xff]
    %v9177 = vld [vmem:[#allocation4 + $0x98] sm:$0xff]
    %v9178 = vld [vmem:[#allocation4 + $0xa0] sm:$0xff]
    %v9179 = vld [vmem:[#allocation4 + $0xa8] sm:$0xff]
    %v9180 = vld [vmem:[#allocation4 + $0xb0] sm:$0xff]
    %v9181 = vld [vmem:[#allocation4 + $0xb8] sm:$0xff]
    %v9182 = vld [vmem:[#allocation4 + $0xc0] sm:$0xff]
    %v9183 = vld [vmem:[#allocation4 + $0xc8] sm:$0xff]
    %v9184 = vld [vmem:[#allocation4 + $0xd0] sm:$0xff]
    %v9185 = vld [vmem:[#allocation4 + $0xd8] sm:$0xff]
    %v9186 = vld [vmem:[#allocation4 + $0xe0] sm:$0xff]
    %v9187 = vld [vmem:[#allocation4 + $0xe8] sm:$0xff]
    %v9188 = vld [vmem:[#allocation4 + $0xf0] sm:$0xff]
    %v9189 = vld [vmem:[#allocation4 + $0xf8] sm:$0xff]
    %v9190 = vld [vmem:[#allocation4 + $0x100] sm:$0xff]
    %v9191 = vld [vmem:[#allocation4 + $0x108] sm:$0xff]
    %v9192 = vpack.c.bf16 %v9165, %v9164
    %v9193 = vpack.c.bf16 %v9167, %v9166
    %v9194 = vpack.c.bf16 %v9169, %v9168
    %v9195 = vpack.c.bf16 %v9171, %v9170
    %v9196 = vpack.c.bf16 %v9173, %v9172
    %v9197 = vpack.c.bf16 %v9175, %v9174
    %v9198 = vpack.c.bf16 %v9177, %v9176
    %v9199 = vpack.c.bf16 %v9179, %v9178
    %v9200 = vpack.c.bf16 %v9181, %v9180
    %v9201 = vpack.c.bf16 %v9183, %v9182
    %v9202 = vpack.c.bf16 %v9185, %v9184
    %v9203 = vpack.c.bf16 %v9187, %v9186
    %v9204 = vpack.c.bf16 %v9189, %v9188
    %v9205 = vpack.c.bf16 %v9191, %v9190
    %s9206 = scalar_lea.vmem %s5, 256
    %v9207 = vld [vmem:[%s9206] sm:$0xf]
    %v9208 = vld [vmem:[%s9206 + $0x4] sm:$0xf]
    %v9209 = vld [vmem:[%s9206 + $0x8] sm:$0xf]
    %v9210 = vld [vmem:[%s9206 + $0xc] sm:$0xf]
    %v9211 = vld [vmem:[%s9206 + $0x10] sm:$0xf]
    %v9212 = vld [vmem:[%s9206 + $0x14] sm:$0xf]
    %v9213 = vld [vmem:[%s9206 + $0x18] sm:$0xf]
    %v9214 = vld [vmem:[%s9206 + $0x1c] sm:$0xf]
    %v9223 = vunpack.c.l.b16 %v9207
    %v9224 = vunpack.c.l.b16 %v9208
    %v9225 = vunpack.c.l.b16 %v9209
    %v9226 = vunpack.c.l.b16 %v9210
    %v9227 = vunpack.c.l.b16 %v9211
    %v9228 = vunpack.c.l.b16 %v9212
    %v9229 = vunpack.c.l.b16 %v9213
    %v9230 = vunpack.c.l.b16 %v9214
    %v9231 = vpack.c.b16 %v9224, %v9223
    %v9232 = vpack.c.b16 %v9226, %v9225
    %v9233 = vpack.c.b16 %v9228, %v9227
    %v9234 = vpack.c.b16 %v9230, %v9229
    %v9240 = vsel %vm76, %v9192, 0
    %v9243 = vsel %vm76, %v9193, 0
    %v9246 = vsel %vm76, %v9194, 0
    %v9249 = vsel %vm76, %v9195, 0
    %v9252 = vsel %vm76, %v9196, 0
    %v9255 = vsel %vm76, %v9197, 0
    %v9258 = vsel %vm76, %v9198, 0
    %v9261 = vsel %vm76, %v9199, 0
    %v9264 = vsel %vm76, %v9200, 0
    %v9267 = vsel %vm76, %v9201, 0
    %v9270 = vsel %vm76, %v9202, 0
    %v9273 = vsel %vm76, %v9203, 0
    %v9276 = vsel %vm76, %v9204, 0
    %v9279 = vsel %vm76, %v9205, 0
    %9281 = vmatprep.subr.bf16.mxu0 0
    %9282 = vmatpush1.bf16.msra.mxu0 %v9231
    %9283 = vmatprep.subr.bf16.mxu0 0
    %9284 = vmatpush1.bf16.msra.mxu0 %v9232
    %9285 = vmatprep.subr.bf16.mxu0 0
    %9286 = vmatpush1.bf16.msra.mxu0 %v9233
    %9287 = vmatprep.subr.bf16.mxu0 0
    %9288 = vmatpush1.bf16.msra.mxu0 %v9234
    %9289 = vmatprep.subr.bf16.mxu0 0
    %9290 = vmatpush1.bf16.msra.mxu0 0
    %9291 = vmatprep.subr.bf16.mxu0 0
    %9292 = vmatpush1.bf16.msra.mxu0 0
    %9293 = vmatprep.subr.bf16.mxu0 0
    %9294 = vmatpush1.bf16.msra.mxu0 0
    %9295 = vmatprep.subr.bf16.mxu0 0
    %9296 = vmatpush1.bf16.msra.mxu0 0
    %9297 = vmatprep.subr.bf16.mxu0 0
    %9298 = vmatpush1.bf16.msra.mxu0 0
    %9299 = vmatprep.subr.bf16.mxu0 0
    %9300 = vmatpush1.bf16.msra.mxu0 0
    %9301 = vmatprep.subr.bf16.mxu0 0
    %9302 = vmatpush1.bf16.msra.mxu0 0
    %9303 = vmatprep.subr.bf16.mxu0 0
    %9304 = vmatpush1.bf16.msra.mxu0 0
    %9305 = vmatprep.subr.bf16.mxu0 0
    %9306 = vmatpush1.bf16.msra.mxu0 0
    %9307 = vmatprep.subr.bf16.mxu0 0
    %9308 = vmatpush1.bf16.msra.mxu0 0
    %9309 = vmatprep.subr.bf16.mxu0 0
    %9310 = vmatpush1.bf16.msra.mxu0 0
    %9311 = vmatprep.subr.bf16.mxu0 0
    %9312 = vmatpush1.bf16.msra.mxu0 0
    %9313 = vmatprep.mubr.bf16.mxu0 0
    %9314 = vmatmul.mubr.bf16.gmra.mrb[0].mxu0 %v9240
    %v9315 = vpop.f32.mrb[0].mxu0
    %v9316 = vadd.f32 0.0, %v9315
    %v9317 = vpop.f32.mrb[0].mxu0
    %v9318 = vpop.f32.mrb[0].mxu0
    %v9319 = vadd.f32 0.0, %v9318
    %v9320 = vpop.f32.mrb[0].mxu0
    %9321 = vmatprep.mubr.bf16.mxu0 0
    %9322 = vmatmul.mubr.bf16.gmra.mrb[0].mxu0 %v9243
    %v9323 = vpop.f32.mrb[0].mxu0
    %v9324 = vadd.f32 0.0, %v9323
    %v9325 = vpop.f32.mrb[0].mxu0
    %v9326 = vpop.f32.mrb[0].mxu0
    %v9327 = vadd.f32 0.0, %v9326
    %v9328 = vpop.f32.mrb[0].mxu0
    %9329 = vmatprep.mubr.bf16.mxu0 0
    %9330 = vmatmul.mubr.bf16.gmra.mrb[0].mxu0 %v9246
    %v9331 = vpop.f32.mrb[0].mxu0
    %v9332 = vadd.f32 0.0, %v9331
    %v9333 = vpop.f32.mrb[0].mxu0
    %v9334 = vpop.f32.mrb[0].mxu0
    %v9335 = vadd.f32 0.0, %v9334
    %v9336 = vpop.f32.mrb[0].mxu0
    %9337 = vmatprep.mubr.bf16.mxu0 0
    %9338 = vmatmul.mubr.bf16.gmra.mrb[0].mxu0 %v9249
    %v9339 = vpop.f32.mrb[0].mxu0
    %v9340 = vadd.f32 0.0, %v9339
    %v9341 = vpop.f32.mrb[0].mxu0
    %v9342 = vpop.f32.mrb[0].mxu0
    %v9343 = vadd.f32 0.0, %v9342
    %v9344 = vpop.f32.mrb[0].mxu0
    %9345 = vmatprep.mubr.bf16.mxu0 0
    %9346 = vmatmul.mubr.bf16.gmra.mrb[0].mxu0 %v9252
    %v9347 = vpop.f32.mrb[0].mxu0
    %v9348 = vadd.f32 0.0, %v9347
    %v9349 = vpop.f32.mrb[0].mxu0
    %v9350 = vpop.f32.mrb[0].mxu0
    %v9351 = vadd.f32 0.0, %v9350
    %v9352 = vpop.f32.mrb[0].mxu0
    %9353 = vmatprep.mubr.bf16.mxu0 0
    %9354 = vmatmul.mubr.bf16.gmra.mrb[0].mxu0 %v9255
    %v9355 = vpop.f32.mrb[0].mxu0
    %v9356 = vadd.f32 0.0, %v9355
    %v9357 = vpop.f32.mrb[0].mxu0
    %v9358 = vpop.f32.mrb[0].mxu0
    %v9359 = vadd.f32 0.0, %v9358
    %v9360 = vpop.f32.mrb[0].mxu0
    %9361 = vmatprep.mubr.bf16.mxu0 0
    %9362 = vmatmul.mubr.bf16.gmra.mrb[0].mxu0 %v9258
    %v9363 = vpop.f32.mrb[0].mxu0
    %v9364 = vadd.f32 0.0, %v9363
    %v9365 = vpop.f32.mrb[0].mxu0
    %v9366 = vpop.f32.mrb[0].mxu0
    %v9367 = vadd.f32 0.0, %v9366
    %v9368 = vpop.f32.mrb[0].mxu0
    %9369 = vmatprep.mubr.bf16.mxu0 0
    %9370 = vmatmul.mubr.bf16.gmra.mrb[0].mxu0 %v9261
    %v9371 = vpop.f32.mrb[0].mxu0
    %v9372 = vadd.f32 0.0, %v9371
    %v9373 = vpop.f32.mrb[0].mxu0
    %v9374 = vpop.f32.mrb[0].mxu0
    %v9375 = vadd.f32 0.0, %v9374
    %v9376 = vpop.f32.mrb[0].mxu0
    %9377 = vmatprep.mubr.bf16.mxu0 0
    %9378 = vmatmul.mubr.bf16.gmra.mrb[0].mxu0 %v9264
    %v9379 = vpop.f32.mrb[0].mxu0
    %v9380 = vadd.f32 0.0, %v9379
    %v9381 = vpop.f32.mrb[0].mxu0
    %v9382 = vpop.f32.mrb[0].mxu0
    %v9383 = vadd.f32 0.0, %v9382
    %v9384 = vpop.f32.mrb[0].mxu0
    %9385 = vmatprep.mubr.bf16.mxu0 0
    %9386 = vmatmul.mubr.bf16.gmra.mrb[0].mxu0 %v9267
    %v9387 = vpop.f32.mrb[0].mxu0
    %v9388 = vadd.f32 0.0, %v9387
    %v9389 = vpop.f32.mrb[0].mxu0
    %v9390 = vpop.f32.mrb[0].mxu0
    %v9391 = vadd.f32 0.0, %v9390
    %v9392 = vpop.f32.mrb[0].mxu0
    %9393 = vmatprep.mubr.bf16.mxu0 0
    %9394 = vmatmul.mubr.bf16.gmra.mrb[0].mxu0 %v9270
    %v9395 = vpop.f32.mrb[0].mxu0
    %v9396 = vadd.f32 0.0, %v9395
    %v9397 = vpop.f32.mrb[0].mxu0
    %v9398 = vpop.f32.mrb[0].mxu0
    %v9399 = vadd.f32 0.0, %v9398
    %v9400 = vpop.f32.mrb[0].mxu0
    %9401 = vmatprep.mubr.bf16.mxu0 0
    %9402 = vmatmul.mubr.bf16.gmra.mrb[0].mxu0 %v9273
    %v9403 = vpop.f32.mrb[0].mxu0
    %v9404 = vadd.f32 0.0, %v9403
    %v9405 = vpop.f32.mrb[0].mxu0
    %v9406 = vpop.f32.mrb[0].mxu0
    %v9407 = vadd.f32 0.0, %v9406
    %v9408 = vpop.f32.mrb[0].mxu0
    %9409 = vmatprep.mubr.bf16.mxu0 0
    %9410 = vmatmul.mubr.bf16.gmra.mrb[0].mxu0 %v9276
    %v9411 = vpop.f32.mrb[0].mxu0
    %v9412 = vadd.f32 0.0, %v9411
    %v9413 = vpop.f32.mrb[0].mxu0
    %v9414 = vpop.f32.mrb[0].mxu0
    %v9415 = vadd.f32 0.0, %v9414
    %v9416 = vpop.f32.mrb[0].mxu0
    %9417 = vmatprep.mubr.bf16.mxu0 0
    %9418 = vmatmul.mubr.bf16.gmra.mrb[0].mxu0 %v9279
    %v9419 = vpop.f32.mrb[0].mxu0
    %v9420 = vadd.f32 0.0, %v9419
    %v9421 = vpop.f32.mrb[0].mxu0
    %v9422 = vpop.f32.mrb[0].mxu0
    %v9423 = vadd.f32 0.0, %v9422
    %v9424 = vpop.f32.mrb[0].mxu0
    %9425 = vdwg.mxu0
    %v9426 = vadd.f32 %v9136, %v9316
    %v9427 = vadd.f32 %v9137, %v9319
    %v9428 = vadd.f32 %v9138, %v9324
    %v9429 = vadd.f32 %v9139, %v9327
    %v9430 = vadd.f32 %v9140, %v9332
    %v9431 = vadd.f32 %v9141, %v9335
    %v9432 = vadd.f32 %v9142, %v9340
    %v9433 = vadd.f32 %v9143, %v9343
    %v9434 = vadd.f32 %v9144, %v9348
    %v9435 = vadd.f32 %v9145, %v9351
    %v9436 = vadd.f32 %v9146, %v9356
    %v9437 = vadd.f32 %v9147, %v9359
    %v9438 = vadd.f32 %v9148, %v9364
    %v9439 = vadd.f32 %v9149, %v9367
    %v9440 = vadd.f32 %v9150, %v9372
    %v9441 = vadd.f32 %v9151, %v9375
    %v9442 = vadd.f32 %v9152, %v9380
    %v9443 = vadd.f32 %v9153, %v9383
    %v9444 = vadd.f32 %v9154, %v9388
    %v9445 = vadd.f32 %v9155, %v9391
    %v9446 = vadd.f32 %v9156, %v9396
    %v9447 = vadd.f32 %v9157, %v9399
    %v9448 = vadd.f32 %v9158, %v9404
    %v9449 = vadd.f32 %v9159, %v9407
    %v9450 = vadd.f32 %v9160, %v9412
    %v9451 = vadd.f32 %v9161, %v9415
    %v9452 = vadd.f32 %v9162, %v9420
    %v9453 = vadd.f32 %v9163, %v9423
    %v9454 = vld [vmem:[%s6] sm:$0x1]
    %v9456 = vlaneseq
    %v9457 = vshrl.u32 %v9456, 7
    %v9458 = vsub.s32 0, %v9457
    %v9459 = vrot.slane %v9454, %v9458
    %v9461 = vadd.f32 %v9426, %v9459
    %v9462 = vadd.f32 %v9427, %v9459
    %v9463 = vadd.f32 %v9428, %v9459
    %v9464 = vadd.f32 %v9429, %v9459
    %v9465 = vadd.f32 %v9430, %v9459
    %v9466 = vadd.f32 %v9431, %v9459
    %v9467 = vadd.f32 %v9432, %v9459
    %v9468 = vadd.f32 %v9433, %v9459
    %v9469 = vadd.f32 %v9434, %v9459
    %v9470 = vadd.f32 %v9435, %v9459
    %v9471 = vadd.f32 %v9436, %v9459
    %v9472 = vadd.f32 %v9437, %v9459
    %v9473 = vadd.f32 %v9438, %v9459
    %v9474 = vadd.f32 %v9439, %v9459
    %v9475 = vadd.f32 %v9440, %v9459
    %v9476 = vadd.f32 %v9441, %v9459
    %v9477 = vadd.f32 %v9442, %v9459
    %v9478 = vadd.f32 %v9443, %v9459
    %v9479 = vadd.f32 %v9444, %v9459
    %v9480 = vadd.f32 %v9445, %v9459
    %v9481 = vadd.f32 %v9446, %v9459
    %v9482 = vadd.f32 %v9447, %v9459
    %v9483 = vadd.f32 %v9448, %v9459
    %v9484 = vadd.f32 %v9449, %v9459
    %v9485 = vadd.f32 %v9450, %v9459
    %v9486 = vadd.f32 %v9451, %v9459
    %v9487 = vadd.f32 %v9452, %v9459
    %v9488 = vadd.f32 %v9453, %v9459
    %v9489 = vmax.f32 %v9461, 0.0
    %v9490 = vmax.f32 %v9462, 0.0
    %v9491 = vmax.f32 %v9463, 0.0
    %v9492 = vmax.f32 %v9464, 0.0
    %v9493 = vmax.f32 %v9465, 0.0
    %v9494 = vmax.f32 %v9466, 0.0
    %v9495 = vmax.f32 %v9467, 0.0
    %v9496 = vmax.f32 %v9468, 0.0
    %v9497 = vmax.f32 %v9469, 0.0
    %v9498 = vmax.f32 %v9470, 0.0
    %v9499 = vmax.f32 %v9471, 0.0
    %v9500 = vmax.f32 %v9472, 0.0
    %v9501 = vmax.f32 %v9473, 0.0
    %v9502 = vmax.f32 %v9474, 0.0
    %v9503 = vmax.f32 %v9475, 0.0
    %v9504 = vmax.f32 %v9476, 0.0
    %v9505 = vmax.f32 %v9477, 0.0
    %v9506 = vmax.f32 %v9478, 0.0
    %v9507 = vmax.f32 %v9479, 0.0
    %v9508 = vmax.f32 %v9480, 0.0
    %v9509 = vmax.f32 %v9481, 0.0
    %v9510 = vmax.f32 %v9482, 0.0
    %v9511 = vmax.f32 %v9483, 0.0
    %v9512 = vmax.f32 %v9484, 0.0
    %v9513 = vmax.f32 %v9485, 0.0
    %v9514 = vmax.f32 %v9486, 0.0
    %v9515 = vmax.f32 %v9487, 0.0
    %v9516 = vmax.f32 %v9488, 0.0
    %9517 = vst.msk [vmem:[#allocation5] sm:$0xff] %vm76, %v9489
    %9518 = vst.msk [vmem:[#allocation5 + $0x8] sm:$0xff] %vm76, %v9490
    %9519 = vst.msk [vmem:[#allocation5 + $0x10] sm:$0xff] %vm76, %v9491
    %9520 = vst.msk [vmem:[#allocation5 + $0x18] sm:$0xff] %vm76, %v9492
    %9521 = vst.msk [vmem:[#allocation5 + $0x20] sm:$0xff] %vm76, %v9493
    %9522 = vst.msk [vmem:[#allocation5 + $0x28] sm:$0xff] %vm76, %v9494
    %9523 = vst.msk [vmem:[#allocation5 + $0x30] sm:$0xff] %vm76, %v9495
    %9524 = vst.msk [vmem:[#allocation5 + $0x38] sm:$0xff] %vm76, %v9496
    %9525 = vst.msk [vmem:[#allocation5 + $0x40] sm:$0xff] %vm76, %v9497
    %9526 = vst.msk [vmem:[#allocation5 + $0x48] sm:$0xff] %vm76, %v9498
    %9527 = vst.msk [vmem:[#allocation5 + $0x50] sm:$0xff] %vm76, %v9499
    %9528 = vst.msk [vmem:[#allocation5 + $0x58] sm:$0xff] %vm76, %v9500
    %9529 = vst.msk [vmem:[#allocation5 + $0x60] sm:$0xff] %vm76, %v9501
    %9530 = vst.msk [vmem:[#allocation5 + $0x68] sm:$0xff] %vm76, %v9502
    %9531 = vst.msk [vmem:[#allocation5 + $0x70] sm:$0xff] %vm76, %v9503
    %9532 = vst.msk [vmem:[#allocation5 + $0x78] sm:$0xff] %vm76, %v9504
    %9533 = vst.msk [vmem:[#allocation5 + $0x80] sm:$0xff] %vm76, %v9505
    %9534 = vst.msk [vmem:[#allocation5 + $0x88] sm:$0xff] %vm76, %v9506
    %9535 = vst.msk [vmem:[#allocation5 + $0x90] sm:$0xff] %vm76, %v9507
    %9536 = vst.msk [vmem:[#allocation5 + $0x98] sm:$0xff] %vm76, %v9508
    %9537 = vst.msk [vmem:[#allocation5 + $0xa0] sm:$0xff] %vm76, %v9509
    %9538 = vst.msk [vmem:[#allocation5 + $0xa8] sm:$0xff] %vm76, %v9510
    %9539 = vst.msk [vmem:[#allocation5 + $0xb0] sm:$0xff] %vm76, %v9511
    %9540 = vst.msk [vmem:[#allocation5 + $0xb8] sm:$0xff] %vm76, %v9512
    %9541 = vst.msk [vmem:[#allocation5 + $0xc0] sm:$0xff] %vm76, %v9513
    %9542 = vst.msk [vmem:[#allocation5 + $0xc8] sm:$0xff] %vm76, %v9514
    %9543 = vst.msk [vmem:[#allocation5 + $0xd0] sm:$0xff] %vm76, %v9515
    %9544 = vst.msk [vmem:[#allocation5 + $0xd8] sm:$0xff] %vm76, %v9516
    %v9545 = vld [vmem:[#allocation5] sm:$0x1]
    %vm9546 = vcmask 516096
    %9547 = vst.msk [vmem:[#allocation6] sm:$0x1] %vm9546, %v9545
    %v9548 = vld [vmem:[#allocation5 + $0xc0] sm:$0x1]
    %9549 = vst.msk [vmem:[#allocation6 + $0x1] sm:$0x1] %vm9546, %v9548
    %v9550 = vld [vmem:[#allocation5 + $0x2] sm:$0x1]
    %9551 = vst.msk [vmem:[#allocation6 + $0x2] sm:$0x1] %vm9546, %v9550
    %v9552 = vld [vmem:[#allocation5 + $0xc2] sm:$0x1]
    %9553 = vst.msk [vmem:[#allocation6 + $0x3] sm:$0x1] %vm9546, %v9552
    %v9554 = vld [vmem:[#allocation5 + $0x16] sm:$0x1]
    %9555 = vst.msk [vmem:[#allocation6 + $0x4] sm:$0x1] %vm9546, %v9554
    %v9556 = vld [vmem:[#allocation5 + $0xd6] sm:$0x1]
    %9557 = vst.msk [vmem:[#allocation6 + $0x5] sm:$0x1] %vm9546, %v9556
    %v9558 = vld [vmem:[#allocation5 + $0x18] sm:$0x1]
    %9559 = vst.msk [vmem:[#allocation6 + $0x6] sm:$0x1] %vm9546, %v9558
    %v9560 = vld [vmem:[#allocation5 + $0xd8] sm:$0x1]
    %9561 = vst.msk [vmem:[#allocation6 + $0x7] sm:$0x1] %vm9546, %v9560
    %v9562 = vld [vmem:[#allocation6] sm:$0x3]
    %v9563 = vpack.c.bf16 %v9562, %v9562
    %v9564 = vld [vmem:[%s7] sm:$0xf]
    %v9565 = vld [vmem:[%s7 + $0x4] sm:$0xf]
    %v9566 = vld [vmem:[%s7 + $0x8] sm:$0xf]
    %v9567 = vld [vmem:[%s7 + $0xc] sm:$0xf]
    %v9568 = vld [vmem:[%s7 + $0x10] sm:$0xf]
    %v9569 = vld [vmem:[%s7 + $0x14] sm:$0xf]
    %v9570 = vld [vmem:[%s7 + $0x18] sm:$0xf]
    %v9571 = vld [vmem:[%s7 + $0x1c] sm:$0xf]
    %v9572 = vld [vmem:[#allocation6 + $0x2] sm:$0x3]
    %v9573 = vpack.c.bf16 %v9572, %v9572
    %v9574 = vld [vmem:[%s7 + $0x20] sm:$0xf]
    %v9575 = vld [vmem:[%s7 + $0x24] sm:$0xf]
    %v9576 = vld [vmem:[%s7 + $0x28] sm:$0xf]
    %v9577 = vld [vmem:[%s7 + $0x2c] sm:$0xf]
    %v9578 = vld [vmem:[%s7 + $0x30] sm:$0xf]
    %v9579 = vld [vmem:[%s7 + $0x34] sm:$0xf]
    %v9580 = vld [vmem:[%s7 + $0x38] sm:$0xf]
    %v9581 = vld [vmem:[%s7 + $0x3c] sm:$0xf]
    %v9590 = vunpack.c.l.b16 %v9574
    %v9591 = vunpack.c.l.b16 %v9575
    %v9592 = vunpack.c.l.b16 %v9576
    %v9593 = vunpack.c.l.b16 %v9577
    %v9594 = vunpack.c.l.b16 %v9578
    %v9595 = vunpack.c.l.b16 %v9579
    %v9596 = vunpack.c.l.b16 %v9580
    %v9597 = vunpack.c.l.b16 %v9581
    %v9598 = vpack.c.b16 %v9591, %v9590
    %v9599 = vpack.c.b16 %v9593, %v9592
    %v9600 = vpack.c.b16 %v9595, %v9594
    %v9601 = vpack.c.b16 %v9597, %v9596
    %v9607 = vsel %vm76, %v9573, 0
    %9609 = vmatprep.subr.bf16.mxu0 0
    %9610 = vmatpush1.bf16.msra.mxu0 %v9598
    %9611 = vmatprep.subr.bf16.mxu0 0
    %9612 = vmatpush1.bf16.msra.mxu0 %v9599
    %9613 = vmatprep.subr.bf16.mxu0 0
    %9614 = vmatpush1.bf16.msra.mxu0 %v9600
    %9615 = vmatprep.subr.bf16.mxu0 0
    %9616 = vmatpush1.bf16.msra.mxu0 %v9601
    %9617 = vmatprep.subr.bf16.mxu0 0
    %9618 = vmatpush1.bf16.msra.mxu0 0
    %9619 = vmatprep.subr.bf16.mxu0 0
    %9620 = vmatpush1.bf16.msra.mxu0 0
    %9621 = vmatprep.subr.bf16.mxu0 0
    %9622 = vmatpush1.bf16.msra.mxu0 0
    %9623 = vmatprep.subr.bf16.mxu0 0
    %9624 = vmatpush1.bf16.msra.mxu0 0
    %9625 = vmatprep.subr.bf16.mxu0 0
    %9626 = vmatpush1.bf16.msra.mxu0 0
    %9627 = vmatprep.subr.bf16.mxu0 0
    %9628 = vmatpush1.bf16.msra.mxu0 0
    %9629 = vmatprep.subr.bf16.mxu0 0
    %9630 = vmatpush1.bf16.msra.mxu0 0
    %9631 = vmatprep.subr.bf16.mxu0 0
    %9632 = vmatpush1.bf16.msra.mxu0 0
    %9633 = vmatprep.subr.bf16.mxu0 0
    %9634 = vmatpush1.bf16.msra.mxu0 0
    %9635 = vmatprep.subr.bf16.mxu0 0
    %9636 = vmatpush1.bf16.msra.mxu0 0
    %9637 = vmatprep.subr.bf16.mxu0 0
    %9638 = vmatpush1.bf16.msra.mxu0 0
    %9639 = vmatprep.subr.bf16.mxu0 0
    %9640 = vmatpush1.bf16.msra.mxu0 0
    %9641 = vmatprep.mubr.bf16.mxu0 0
    %9642 = vmatmul.mubr.bf16.gmra.mrb[0].mxu0 %v9607
    %v9643 = vpop.f32.mrb[0].mxu0
    %v9644 = vadd.f32 0.0, %v9643
    %v9645 = vpop.f32.mrb[0].mxu0
    %v9646 = vpop.f32.mrb[0].mxu0
    %v9647 = vpop.f32.mrb[0].mxu0
    %9648 = vdwg.mxu0
    %v9657 = vunpack.c.l.b16 %v9564
    %v9658 = vunpack.c.l.b16 %v9565
    %v9659 = vunpack.c.l.b16 %v9566
    %v9660 = vunpack.c.l.b16 %v9567
    %v9661 = vunpack.c.l.b16 %v9568
    %v9662 = vunpack.c.l.b16 %v9569
    %v9663 = vunpack.c.l.b16 %v9570
    %v9664 = vunpack.c.l.b16 %v9571
    %v9665 = vpack.c.b16 %v9658, %v9657
    %v9666 = vpack.c.b16 %v9660, %v9659
    %v9667 = vpack.c.b16 %v9662, %v9661
    %v9668 = vpack.c.b16 %v9664, %v9663
    %v9674 = vsel %vm76, %v9563, 0
    %9676 = vmatprep.subr.bf16.mxu0 0
    %9677 = vmatpush1.bf16.msra.mxu0 %v9665
    %9678 = vmatprep.subr.bf16.mxu0 0
    %9679 = vmatpush1.bf16.msra.mxu0 %v9666
    %9680 = vmatprep.subr.bf16.mxu0 0
    %9681 = vmatpush1.bf16.msra.mxu0 %v9667
    %9682 = vmatprep.subr.bf16.mxu0 0
    %9683 = vmatpush1.bf16.msra.mxu0 %v9668
    %9684 = vmatprep.subr.bf16.mxu0 0
    %9685 = vmatpush1.bf16.msra.mxu0 0
    %9686 = vmatprep.subr.bf16.mxu0 0
    %9687 = vmatpush1.bf16.msra.mxu0 0
    %9688 = vmatprep.subr.bf16.mxu0 0
    %9689 = vmatpush1.bf16.msra.mxu0 0
    %9690 = vmatprep.subr.bf16.mxu0 0
    %9691 = vmatpush1.bf16.msra.mxu0 0
    %9692 = vmatprep.subr.bf16.mxu0 0
    %9693 = vmatpush1.bf16.msra.mxu0 0
    %9694 = vmatprep.subr.bf16.mxu0 0
    %9695 = vmatpush1.bf16.msra.mxu0 0
    %9696 = vmatprep.subr.bf16.mxu0 0
    %9697 = vmatpush1.bf16.msra.mxu0 0
    %9698 = vmatprep.subr.bf16.mxu0 0
    %9699 = vmatpush1.bf16.msra.mxu0 0
    %9700 = vmatprep.subr.bf16.mxu0 0
    %9701 = vmatpush1.bf16.msra.mxu0 0
    %9702 = vmatprep.subr.bf16.mxu0 0
    %9703 = vmatpush1.bf16.msra.mxu0 0
    %9704 = vmatprep.subr.bf16.mxu0 0
    %9705 = vmatpush1.bf16.msra.mxu0 0
    %9706 = vmatprep.subr.bf16.mxu0 0
    %9707 = vmatpush1.bf16.msra.mxu0 0
    %9708 = vmatprep.mubr.bf16.mxu0 0
    %9709 = vmatmul.mubr.bf16.gmra.mrb[0].mxu0 %v9674
    %v9710 = vpop.f32.mrb[0].mxu0
    %v9711 = vadd.f32 %v9644, %v9710
    %v9712 = vpop.f32.mrb[0].mxu0
    %v9713 = vpop.f32.mrb[0].mxu0
    %v9714 = vpop.f32.mrb[0].mxu0
    %9715 = vdwg.mxu0
    %v9716 = vld [vmem:[#allocation6 + $0x4] sm:$0x3]
    %v9717 = vpack.c.bf16 %v9716, %v9716
    %v9718 = vld [vmem:[%s7 + $0x40] sm:$0xf]
    %v9719 = vld [vmem:[%s7 + $0x44] sm:$0xf]
    %v9720 = vld [vmem:[%s7 + $0x48] sm:$0xf]
    %v9721 = vld [vmem:[%s7 + $0x4c] sm:$0xf]
    %v9722 = vld [vmem:[%s7 + $0x50] sm:$0xf]
    %v9723 = vld [vmem:[%s7 + $0x54] sm:$0xf]
    %v9724 = vld [vmem:[%s7 + $0x58] sm:$0xf]
    %v9725 = vld [vmem:[%s7 + $0x5c] sm:$0xf]
    %v9734 = vunpack.c.l.b16 %v9718
    %v9735 = vunpack.c.l.b16 %v9719
    %v9736 = vunpack.c.l.b16 %v9720
    %v9737 = vunpack.c.l.b16 %v9721
    %v9738 = vunpack.c.l.b16 %v9722
    %v9739 = vunpack.c.l.b16 %v9723
    %v9740 = vunpack.c.l.b16 %v9724
    %v9741 = vunpack.c.l.b16 %v9725
    %v9742 = vpack.c.b16 %v9735, %v9734
    %v9743 = vpack.c.b16 %v9737, %v9736
    %v9744 = vpack.c.b16 %v9739, %v9738
    %v9745 = vpack.c.b16 %v9741, %v9740
    %v9751 = vsel %vm76, %v9717, 0
    %9753 = vmatprep.subr.bf16.mxu0 0
    %9754 = vmatpush1.bf16.msra.mxu0 %v9742
    %9755 = vmatprep.subr.bf16.mxu0 0
    %9756 = vmatpush1.bf16.msra.mxu0 %v9743
    %9757 = vmatprep.subr.bf16.mxu0 0
    %9758 = vmatpush1.bf16.msra.mxu0 %v9744
    %9759 = vmatprep.subr.bf16.mxu0 0
    %9760 = vmatpush1.bf16.msra.mxu0 %v9745
    %9761 = vmatprep.subr.bf16.mxu0 0
    %9762 = vmatpush1.bf16.msra.mxu0 0
    %9763 = vmatprep.subr.bf16.mxu0 0
    %9764 = vmatpush1.bf16.msra.mxu0 0
    %9765 = vmatprep.subr.bf16.mxu0 0
    %9766 = vmatpush1.bf16.msra.mxu0 0
    %9767 = vmatprep.subr.bf16.mxu0 0
    %9768 = vmatpush1.bf16.msra.mxu0 0
    %9769 = vmatprep.subr.bf16.mxu0 0
    %9770 = vmatpush1.bf16.msra.mxu0 0
    %9771 = vmatprep.subr.bf16.mxu0 0
    %9772 = vmatpush1.bf16.msra.mxu0 0
    %9773 = vmatprep.subr.bf16.mxu0 0
    %9774 = vmatpush1.bf16.msra.mxu0 0
    %9775 = vmatprep.subr.bf16.mxu0 0
    %9776 = vmatpush1.bf16.msra.mxu0 0
    %9777 = vmatprep.subr.bf16.mxu0 0
    %9778 = vmatpush1.bf16.msra.mxu0 0
    %9779 = vmatprep.subr.bf16.mxu0 0
    %9780 = vmatpush1.bf16.msra.mxu0 0
    %9781 = vmatprep.subr.bf16.mxu0 0
    %9782 = vmatpush1.bf16.msra.mxu0 0
    %9783 = vmatprep.subr.bf16.mxu0 0
    %9784 = vmatpush1.bf16.msra.mxu0 0
    %9785 = vmatprep.mubr.bf16.mxu0 0
    %9786 = vmatmul.mubr.bf16.gmra.mrb[0].mxu0 %v9751
    %v9787 = vpop.f32.mrb[0].mxu0
    %v9788 = vadd.f32 0.0, %v9787
    %v9789 = vpop.f32.mrb[0].mxu0
    %v9790 = vpop.f32.mrb[0].mxu0
    %v9791 = vpop.f32.mrb[0].mxu0
    %9792 = vdwg.mxu0
    %v9793 = vadd.f32 %v9711, %v9788
    %v9794 = vld [vmem:[#allocation6 + $0x6] sm:$0x3]
    %v9795 = vpack.c.bf16 %v9794, %v9794
    %v9796 = vld [vmem:[%s7 + $0x60] sm:$0xf]
    %v9797 = vld [vmem:[%s7 + $0x64] sm:$0xf]
    %v9798 = vld [vmem:[%s7 + $0x68] sm:$0xf]
    %v9799 = vld [vmem:[%s7 + $0x6c] sm:$0xf]
    %v9800 = vld [vmem:[%s7 + $0x70] sm:$0xf]
    %v9801 = vld [vmem:[%s7 + $0x74] sm:$0xf]
    %v9802 = vld [vmem:[%s7 + $0x78] sm:$0xf]
    %v9803 = vld [vmem:[%s7 + $0x7c] sm:$0xf]
    %v9812 = vunpack.c.l.b16 %v9796
    %v9813 = vunpack.c.l.b16 %v9797
    %v9814 = vunpack.c.l.b16 %v9798
    %v9815 = vunpack.c.l.b16 %v9799
    %v9816 = vunpack.c.l.b16 %v9800
    %v9817 = vunpack.c.l.b16 %v9801
    %v9818 = vunpack.c.l.b16 %v9802
    %v9819 = vunpack.c.l.b16 %v9803
    %v9820 = vpack.c.b16 %v9813, %v9812
    %v9821 = vpack.c.b16 %v9815, %v9814
    %v9822 = vpack.c.b16 %v9817, %v9816
    %v9823 = vpack.c.b16 %v9819, %v9818
    %v9829 = vsel %vm76, %v9795, 0
    %9831 = vmatprep.subr.bf16.mxu0 0
    %9832 = vmatpush1.bf16.msra.mxu0 %v9820
    %9833 = vmatprep.subr.bf16.mxu0 0
    %9834 = vmatpush1.bf16.msra.mxu0 %v9821
    %9835 = vmatprep.subr.bf16.mxu0 0
    %9836 = vmatpush1.bf16.msra.mxu0 %v9822
    %9837 = vmatprep.subr.bf16.mxu0 0
    %9838 = vmatpush1.bf16.msra.mxu0 %v9823
    %9839 = vmatprep.subr.bf16.mxu0 0
    %9840 = vmatpush1.bf16.msra.mxu0 0
    %9841 = vmatprep.subr.bf16.mxu0 0
    %9842 = vmatpush1.bf16.msra.mxu0 0
    %9843 = vmatprep.subr.bf16.mxu0 0
    %9844 = vmatpush1.bf16.msra.mxu0 0
    %9845 = vmatprep.subr.bf16.mxu0 0
    %9846 = vmatpush1.bf16.msra.mxu0 0
    %9847 = vmatprep.subr.bf16.mxu0 0
    %9848 = vmatpush1.bf16.msra.mxu0 0
    %9849 = vmatprep.subr.bf16.mxu0 0
    %9850 = vmatpush1.bf16.msra.mxu0 0
    %9851 = vmatprep.subr.bf16.mxu0 0
    %9852 = vmatpush1.bf16.msra.mxu0 0
    %9853 = vmatprep.subr.bf16.mxu0 0
    %9854 = vmatpush1.bf16.msra.mxu0 0
    %9855 = vmatprep.subr.bf16.mxu0 0
    %9856 = vmatpush1.bf16.msra.mxu0 0
    %9857 = vmatprep.subr.bf16.mxu0 0
    %9858 = vmatpush1.bf16.msra.mxu0 0
    %9859 = vmatprep.subr.bf16.mxu0 0
    %9860 = vmatpush1.bf16.msra.mxu0 0
    %9861 = vmatprep.subr.bf16.mxu0 0
    %9862 = vmatpush1.bf16.msra.mxu0 0
    %9863 = vmatprep.mubr.bf16.mxu0 0
    %9864 = vmatmul.mubr.bf16.gmra.mrb[0].mxu0 %v9829
    %v9865 = vpop.f32.mrb[0].mxu0
    %v9866 = vadd.f32 0.0, %v9865
    %v9867 = vpop.f32.mrb[0].mxu0
    %v9868 = vpop.f32.mrb[0].mxu0
    %v9869 = vpop.f32.mrb[0].mxu0
    %9870 = vdwg.mxu0
    %v9871 = vadd.f32 %v9793, %v9866
    %v9872 = vld [vmem:[%s8] sm:$0x1]
    %v9874 = vlaneseq
    %v9875 = vshrl.u32 %v9874, 7
    %v9876 = vsub.s32 0, %v9875
    %v9877 = vrot.slane %v9872, %v9876
    %v9879 = vadd.f32 %v9871, %v9877
    %v9880 = vmax.f32 %v9879, 0.0
    %v9881 = vpack.c.bf16 %v9880, %v9880
    %v9882 = vld [vmem:[%s9] sm:$0xf]
    %v9883 = vld [vmem:[%s9 + $0x4] sm:$0xf]
    %v9884 = vld [vmem:[%s9 + $0x8] sm:$0xf]
    %v9885 = vld [vmem:[%s9 + $0xc] sm:$0xf]
    %v9886 = vld [vmem:[%s10] sm:$0x1]
    %v9888 = vlaneseq
    %v9889 = vshrl.u32 %v9888, 7
    %v9890 = vsub.s32 0, %v9889
    %v9891 = vrot.slane %v9886, %v9890
    %v9897 = vunpack.c.l.b16 %v9882
    %v9898 = vunpack.c.l.b16 %v9883
    %v9899 = vunpack.c.l.b16 %v9884
    %v9900 = vunpack.c.l.b16 %v9885
    %v9901 = vpack.c.b16 %v9898, %v9897
    %v9902 = vpack.c.b16 %v9900, %v9899
    %v9906 = vsel %vm1670, %v9881, 0
    %9908 = vmatprep.subr.bf16.mxu0 0
    %9909 = vmatpush1.bf16.msra.mxu0 %v9901
    %9910 = vmatprep.subr.bf16.mxu0 0
    %9911 = vmatpush1.bf16.msra.mxu0 %v9902
    %9912 = vmatprep.subr.bf16.mxu0 0
    %9913 = vmatpush1.bf16.msra.mxu0 0
    %9914 = vmatprep.subr.bf16.mxu0 0
    %9915 = vmatpush1.bf16.msra.mxu0 0
    %9916 = vmatprep.subr.bf16.mxu0 0
    %9917 = vmatpush1.bf16.msra.mxu0 0
    %9918 = vmatprep.subr.bf16.mxu0 0
    %9919 = vmatpush1.bf16.msra.mxu0 0
    %9920 = vmatprep.subr.bf16.mxu0 0
    %9921 = vmatpush1.bf16.msra.mxu0 0
    %9922 = vmatprep.subr.bf16.mxu0 0
    %9923 = vmatpush1.bf16.msra.mxu0 0
    %9924 = vmatprep.subr.bf16.mxu0 0
    %9925 = vmatpush1.bf16.msra.mxu0 0
    %9926 = vmatprep.subr.bf16.mxu0 0
    %9927 = vmatpush1.bf16.msra.mxu0 0
    %9928 = vmatprep.subr.bf16.mxu0 0
    %9929 = vmatpush1.bf16.msra.mxu0 0
    %9930 = vmatprep.subr.bf16.mxu0 0
    %9931 = vmatpush1.bf16.msra.mxu0 0
    %9932 = vmatprep.subr.bf16.mxu0 0
    %9933 = vmatpush1.bf16.msra.mxu0 0
    %9934 = vmatprep.subr.bf16.mxu0 0
    %9935 = vmatpush1.bf16.msra.mxu0 0
    %9936 = vmatprep.subr.bf16.mxu0 0
    %9937 = vmatpush1.bf16.msra.mxu0 0
    %9938 = vmatprep.subr.bf16.mxu0 0
    %9939 = vmatpush1.bf16.msra.mxu0 0
    %9940 = vmatprep.mubr.bf16.mxu0 0
    %9941 = vmatmul.mubr.bf16.gmra.mrb[0].mxu0 %v9906
    %v9942 = vpop.f32.mrb[0].mxu0
    %v9943 = vadd.f32 %v9891, %v9942
    %v9944 = vpop.f32.mrb[0].mxu0
    %v9945 = vpop.f32.mrb[0].mxu0
    %v9946 = vpop.f32.mrb[0].mxu0
    %9947 = vdwg.mxu0
    %vm9948 = vcmask 25600
    %9949 = vst.msk [vmem:[#allocation7] sm:$0x3] %vm9948, %v9943
    // Predicated region
    $region46: #{nature_cnn_forward.1} parent=1 // pred_check
      _
    $region47: #{nature_cnn_forward.1} parent=1 // pred_check_branch
      %9951 = sbr.rel (0) target = $region49
    $region48: #{nature_cnn_forward.1} parent=1 // pred_region
      %s9953 = ssub.s32 32, 32
      %9954 = vsyncadd [#allocation8], %s9953
      %s9956 = sshll.u32 [#allocation7], 4
      %s9957 = int_to_ptr.vmem [resolvable:$true] %s9956
      %9959 = dma.vmem_to_hbm [thread:$0]  %s9957, 32, %s11, [#allocation8]
    $region49: #{nature_cnn_forward.1} parent=1 // pred_fallthru
      _
    // Predicated region
    $region50: #{nature_cnn_forward.1} parent=1 // pred_check
      _
    $region51: #{nature_cnn_forward.1} parent=1 // pred_check_branch
      %9961 = sbr.rel (0) target = $region53
    $region52: #{nature_cnn_forward.1} parent=1 // pred_region
      %9962 = dma.done [#allocation8], 32
    $region53: #{nature_cnn_forward.1} parent=1 // pred_fallthru
      _
    %9963 = vsyncpa [#allocation8], 1

</llo_original>
